<compile_context>
chip_gen: v7x
topology: tpu7x:2x2x1
jax: 0.10.0
libtpu: 0.0.40
codegen_flags: <defaults>
</compile_context>

<pallas_src>
import functools

import numpy as np

import jax
import jax.numpy as jnp
from jax.experimental import pallas as pl
from jax.experimental.pallas import tpu as pltpu


# ----------------------------------------------------------------------------
# Pallas kernels
# ----------------------------------------------------------------------------
def _conv_kernel(x_ref, w_ref, b_ref, o_ref, *, K, act):
    """One sample of a conv layer.

    x_ref: (Hp + K - 1, Wp*Cin)  row-flattened, spatially padded input
    w_ref: (K, Wp*Cin, OW*Cout)  pre-built block-Toeplitz weights (one per ky)
    b_ref: (1, OW*Cout)          bias tiled across output columns
    o_ref: (Hp, OW*Cout)         one output row per input-row position
                                 (only rows r = stride*oh are valid; the
                                 wrapper slices them out).
    """
    R = o_ref.shape[0]
    acc = jnp.dot(x_ref[pl.ds(0, R), :], w_ref[0],
                  preferred_element_type=jnp.float32)
    for ky in range(1, K):
        acc = acc + jnp.dot(x_ref[pl.ds(ky, R), :], w_ref[ky],
                            preferred_element_type=jnp.float32)
    acc = acc + b_ref[...]
    if act == "leaky_relu":
        acc = jnp.where(acc >= 0, acc, 0.2 * acc)   # nn.LeakyReLU(0.2)
    elif act == "relu":
        acc = jnp.maximum(acc, 0.0)
    # act == "none": identity
    o_ref[...] = acc


def _head_kernel(flat_ref, wml_ref, bml_ref, eps_ref, wfc_ref, bfc_ref,
                 mu_ref, lv_ref, z_ref, d_ref, *, zdim):
    """Fused mean/logvar heads + reparameterization + decoder fc."""
    h = jnp.dot(flat_ref[...], wml_ref[...],
                preferred_element_type=jnp.float32) + bml_ref[...]
    mu = h[:, :zdim]
    lv = h[:, zdim:]
    # Reproduces the PyTorch arg swap in `self.sample(mu, lv)`:
    #   sample(log_var, mean) -> std = exp(0.5*mu), z = eps*std + lv
    z = eps_ref[...] * jnp.exp(0.5 * mu) + lv
    d = jnp.dot(z, wfc_ref[...],
                preferred_element_type=jnp.float32) + bfc_ref[...]
    mu_ref[...] = mu
    lv_ref[...] = lv
    z_ref[...] = z
    d_ref[...] = d


# ----------------------------------------------------------------------------
# Layer wrappers
# ----------------------------------------------------------------------------
def conv_layer(x, T, b, m):
    """x: (N, H, W, Cin) NHWC -> (N, OH, OW, Cout) NHWC.

    T, b were pre-built at init for exactly this layer's geometry.
    m: static dict with K, pad, stride, dilate, Cout, act.
    """
    N, H, W, Cin = x.shape
    K, pad, stride, dil, Cout = m["K"], m["pad"], m["stride"], m["dilate"], m["Cout"]

    if dil > 1:  # input dilation for ConvTranspose2d with stride>1 (tiny array)
        Hd, Wd = (H - 1) * dil + 1, (W - 1) * dil + 1
        x = jnp.zeros((N, Hd, Wd, Cin), x.dtype).at[:, ::dil, ::dil, :].set(x)
        H, W = Hd, Wd

    Hp, Wp = H + 2 * pad, W + 2 * pad
    OH = (Hp - K) // stride + 1
    OW = (Wp - K) // stride + 1

    # spatial padding + K-1 extra zero rows so the in-kernel sliding window
    # never reads out of bounds (rows past the valid ones are discarded).
    x = jnp.pad(x, ((0, 0), (pad, pad + K - 1), (pad, pad), (0, 0)))
    xr = x.reshape(N, Hp + K - 1, Wp * Cin)

    assert T.shape == (K, Wp * Cin, OW * Cout)

    out = pl.pallas_call(
        functools.partial(_conv_kernel, K=K, act=m["act"]),
        out_shape=jax.ShapeDtypeStruct((N, Hp, OW * Cout), jnp.float32),
        grid=(N,),
        in_specs=[
            pl.BlockSpec((None, Hp + K - 1, Wp * Cin), lambda n: (n, 0, 0)),
            pl.BlockSpec((K, Wp * Cin, OW * Cout), lambda n: (0, 0, 0)),
            pl.BlockSpec((1, OW * Cout), lambda n: (0, 0)),
        ],
        out_specs=pl.BlockSpec((None, Hp, OW * Cout), lambda n: (n, 0, 0)),
        compiler_params=pltpu.CompilerParams(
            dimension_semantics=("parallel",)),
    )(xr, T, b)

    # keep only valid output rows (r = stride*oh) and restore NHWC.
    out = out.reshape(N, Hp, OW, Cout)[:, : stride * (OH - 1) + 1 : stride]
    return out


def heads_and_sample(flat, eps, params, zdim, hidden):
    N = flat.shape[0]
    return pl.pallas_call(
        functools.partial(_head_kernel, zdim=zdim),
        out_shape=(jax.ShapeDtypeStruct((N, zdim), jnp.float32),
                   jax.ShapeDtypeStruct((N, zdim), jnp.float32),
                   jax.ShapeDtypeStruct((N, zdim), jnp.float32),
                   jax.ShapeDtypeStruct((N, hidden), jnp.float32)),
    )(flat, params["w_heads"], params["b_heads"], eps,
      params["w_fc"], params["b_fc"])


# ----------------------------------------------------------------------------
# Init: build block-Toeplitz weights once (pre-laid-out, nothing done per step)
# ----------------------------------------------------------------------------
def _toeplitz(w_hwio, Wp, OW, stride):
    """Expand an HWIO conv weight into K matrices of shape (Wp*Cin, OW*Cout).

    out[r, ow*Cout+co] = sum_ky x[r+ky, :, :] @ T[ky]  reproduces the conv
    (output column stride is baked into T; output row stride is handled by the
    wrapper slicing valid rows).
    """
    K, _, Cin, Cout = w_hwio.shape
    T = np.zeros((K, Wp * Cin, OW * Cout), np.float32)
    for ky in range(K):
        for ow in range(OW):
            for kx in range(K):
                wi = stride * ow + kx
                if wi < Wp:
                    T[ky, wi * Cin:(wi + 1) * Cin,
                      ow * Cout:(ow + 1) * Cout] = w_hwio[ky, kx]
    return jnp.asarray(T)


def make_params(key, input_shape, latent_dim, n_channels, kernel):
    C, K = n_channels, kernel
    keys = iter(jax.random.split(key, 11))

    def nrm(shape, fan_in):
        return np.asarray(jax.random.normal(next(keys), shape, jnp.float32)
                          ) / np.sqrt(fan_in)

    # ---- encoder: Conv2d(cin, cout, K, stride, padding) ----
    enc_cfg = [(1, C, 1, 1), (C, C, 1, 1), (C, C, 2, 1), (C, 1, 1, 1)]
    h, w = input_shape
    enc_params, enc_meta = [], []
    for (cin, cout, stride, pad) in enc_cfg:
        hp, wp = h + 2 * pad, w + 2 * pad
        oh, ow = (hp - K) // stride + 1, (wp - K) // stride + 1
        w_oihw = nrm((cout, cin, K, K), cin * K * K)   # PyTorch Conv2d layout
        bias = np.zeros((cout,), np.float32)
        hwio = np.transpose(w_oihw, (2, 3, 1, 0))
        enc_params.append((_toeplitz(hwio, wp, ow, stride),
                           jnp.asarray(np.tile(bias, ow)[None, :])))
        enc_meta.append(dict(K=K, pad=pad, stride=stride, dilate=1,
                             Cout=cout, act="leaky_relu"))
        h, w = oh, ow
    final_hw = (h, w)
    hidden = h * w          # encoder's last layer has 1 channel

    # ---- heads (mean ‖ logvar fused) + fc, pre-transposed ----
    zd = latent_dim
    mean_w = nrm((zd, hidden), hidden); mean_b = np.zeros((zd,), np.float32)
    logv_w = nrm((zd, hidden), hidden); logv_b = np.zeros((zd,), np.float32)
    fc_w = nrm((hidden, zd), zd);       fc_b = np.zeros((hidden,), np.float32)
    w_heads = jnp.asarray(np.concatenate([mean_w.T, logv_w.T], axis=1))  # (hidden, 2z)
    b_heads = jnp.asarray(np.concatenate([mean_b, logv_b])[None, :])     # (1, 2z)
    w_fc = jnp.asarray(fc_w.T)                                           # (z, hidden)
    b_fc = jnp.asarray(fc_b[None, :])                                    # (1, hidden)

    # ---- decoder: ConvTranspose2d(cin, cout, K, stride, padding) ----
    dec_cfg = [(1, C, 1, 1), (C, C, 2, 1), (C, C, 1, 1), (C, 1, 1, 1)]
    dec_act = ["relu", "relu", "relu", "none"]
    dec_params, dec_meta = [], []
    for (cin, cout, stride, pad), act in zip(dec_cfg, dec_act):
        hd, wd = (h - 1) * stride + 1, (w - 1) * stride + 1   # dilated input
        cpad = K - 1 - pad                                    # equivalent conv pad
        hp, wp = hd + 2 * cpad, wd + 2 * cpad
        oh, ow = hp - K + 1, wp - K + 1
        w_t = nrm((cin, cout, K, K), cin * K * K)  # PyTorch ConvT layout (Cin,Cout,K,K)
        bias = np.zeros((cout,), np.float32)
        # equivalent conv weight: flip spatially, channels -> HWIO
        hwio = np.transpose(w_t[:, :, ::-1, ::-1], (2, 3, 0, 1))
        dec_params.append((_toeplitz(hwio, wp, ow, 1),
                           jnp.asarray(np.tile(bias, ow)[None, :])))
        dec_meta.append(dict(K=K, pad=cpad, stride=1, dilate=stride,
                             Cout=cout, act=act))
        h, w = oh, ow

    params = dict(enc=enc_params, dec=dec_params,
                  w_heads=w_heads, b_heads=b_heads, w_fc=w_fc, b_fc=b_fc)
    meta = dict(enc=enc_meta, dec=dec_meta, final_hw=final_hw,
                hidden=hidden, zdim=zd, input_shape=tuple(input_shape))
    return params, meta


# ----------------------------------------------------------------------------
# Forward
# ----------------------------------------------------------------------------
def cvae_forward(params, x_nchw, eps, *, meta):
    # single NCHW -> NHWC transpose (Cin = 1, effectively a reshape)
    x = jnp.transpose(x_nchw, (0, 2, 3, 1)).astype(jnp.float32)

    # ------------------ encode ------------------
    h = x
    for (T, b), m in zip(params["enc"], meta["enc"]):
        h = conv_layer(h, T, b, m)
    N = h.shape[0]
    flat = h.reshape(N, -1)   # last encoder channel count is 1 -> same order as torch Flatten

    mu, lv, z, d = heads_and_sample(flat, eps, params,
                                    meta["zdim"], meta["hidden"])

    # ------------------ decode ------------------
    fh, fw = meta["final_hw"]
    d = d.reshape(N, fh, fw, 1)     # C = 1 -> same order as torch view(-1, *final_size)
    for (T, b), m in zip(params["dec"], meta["dec"]):
        d = conv_layer(d, T, b, m)

    recon = d.reshape(N, *meta["input_shape"])
    return recon, mu, lv, z


# ----------------------------------------------------------------------------
if __name__ == "__main__":
    # input_shape must be odd so the decoder output size round-trips to the
    # input size (implicitly required by the module's final reshape).
    input_shape = (17, 17)
    latent_dim = 8
    n_channels = 8
    kernel = 5
    batch = 2

    key = jax.random.PRNGKey(0)
    k_params, k_x, k_eps = jax.random.split(key, 3)

    params, meta = make_params(k_params, input_shape, latent_dim,
                               n_channels, kernel)

    x = jax.random.normal(k_x, (batch, 1, *input_shape), jnp.float32)
    # torch.randn_like(std) replaced by a deterministic host-side normal draw.
    eps = jax.random.normal(k_eps, (batch, latent_dim), jnp.float32)

    fwd = jax.jit(functools.partial(cvae_forward, meta=meta))
    recon, mu, lv, z = fwd(params, x, eps)
    jax.block_until_ready((recon, mu, lv, z))

    assert recon.shape == (batch, *input_shape), recon.shape
    assert mu.shape == (batch, latent_dim)
    assert lv.shape == (batch, latent_dim)
    assert z.shape == (batch, latent_dim)
    assert bool(jnp.all(jnp.isfinite(recon)))
    print("KERNEL_OK")
</pallas_src>

<mosaic_0001>
module attributes {stable_mosaic.version = 11 : i64} {
  func.func @_conv_kernel(%arg0: i32, %arg1: memref<1x23x19xf32, #tpu.memory_space<vmem>>, %arg2: memref<5x19x120xf32, #tpu.memory_space<vmem>>, %arg3: memref<1x120xf32, #tpu.memory_space<vmem>>, %arg4: memref<1x19x120xf32, #tpu.memory_space<vmem>>) attributes {dimension_semantics = [#tpu.dimension_semantics<parallel>], iteration_bounds = array<i64: 2>, scalar_prefetch = 0 : i64, scratch_operands = 0 : i64, tpu.core_type = #tpu.core_type<tc>, window_params = [{transform_indices = @transform_0, window_bounds = array<i64: 1, 23, 19>}, {pipeline_mode = #tpu.pipeline_mode<synchronous>, transform_indices = @transform_1, window_bounds = array<i64: 5, 19, 120>}, {pipeline_mode = #tpu.pipeline_mode<synchronous>, transform_indices = @transform_2, window_bounds = array<i64: 1, 120>}, {transform_indices = @transform_3, window_bounds = array<i64: 1, 19, 120>}]} {
    %c0 = arith.constant 0 : index
    %c0_0 = arith.constant 0 : index
    %c0_1 = arith.constant 0 : index
    %0 = vector.load %arg1[%c0, %c0_0, %c0_1] : memref<1x23x19xf32, #tpu.memory_space<vmem>>, vector<1x19x19xf32>
    %1 = vector.shape_cast %0 : vector<1x19x19xf32> to vector<19x19xf32>
    %c0_2 = arith.constant 0 : index
    %c0_3 = arith.constant 0 : index
    %c0_4 = arith.constant 0 : index
    %2 = vector.load %arg2[%c0_2, %c0_3, %c0_4] : memref<5x19x120xf32, #tpu.memory_space<vmem>>, vector<1x19x120xf32>
    %3 = vector.shape_cast %2 : vector<1x19x120xf32> to vector<19x120xf32>
    %cst = arith.constant dense<0.000000e+00> : vector<19x120xf32>
    %4 = tpu.matmul %1, %3, %cst {dimension_numbers = #tpu.dot_dimension_numbers<[1], [0], [0], [1], [0, 0, 1, 1], [], []>} : vector<19x19xf32>, vector<19x120xf32>, vector<19x120xf32> -> vector<19x120xf32>
    %c0_5 = arith.constant 0 : index
    %c1 = arith.constant 1 : index
    %c0_6 = arith.constant 0 : index
    %5 = vector.load %arg1[%c0_5, %c1, %c0_6] : memref<1x23x19xf32, #tpu.memory_space<vmem>>, vector<1x19x19xf32>
    %6 = vector.shape_cast %5 : vector<1x19x19xf32> to vector<19x19xf32>
    %c1_7 = arith.constant 1 : index
    %c0_8 = arith.constant 0 : index
    %c0_9 = arith.constant 0 : index
    %7 = vector.load %arg2[%c1_7, %c0_8, %c0_9] : memref<5x19x120xf32, #tpu.memory_space<vmem>>, vector<1x19x120xf32>
    %8 = vector.shape_cast %7 : vector<1x19x120xf32> to vector<19x120xf32>
    %cst_10 = arith.constant dense<0.000000e+00> : vector<19x120xf32>
    %9 = tpu.matmul %6, %8, %cst_10 {dimension_numbers = #tpu.dot_dimension_numbers<[1], [0], [0], [1], [0, 0, 1, 1], [], []>} : vector<19x19xf32>, vector<19x120xf32>, vector<19x120xf32> -> vector<19x120xf32>
    %10 = arith.addf %4, %9 : vector<19x120xf32>
    %c0_11 = arith.constant 0 : index
    %c2 = arith.constant 2 : index
    %c0_12 = arith.constant 0 : index
    %11 = vector.load %arg1[%c0_11, %c2, %c0_12] : memref<1x23x19xf32, #tpu.memory_space<vmem>>, vector<1x19x19xf32>
    %12 = vector.shape_cast %11 : vector<1x19x19xf32> to vector<19x19xf32>
    %c2_13 = arith.constant 2 : index
    %c0_14 = arith.constant 0 : index
    %c0_15 = arith.constant 0 : index
    %13 = vector.load %arg2[%c2_13, %c0_14, %c0_15] : memref<5x19x120xf32, #tpu.memory_space<vmem>>, vector<1x19x120xf32>
    %14 = vector.shape_cast %13 : vector<1x19x120xf32> to vector<19x120xf32>
    %cst_16 = arith.constant dense<0.000000e+00> : vector<19x120xf32>
    %15 = tpu.matmul %12, %14, %cst_16 {dimension_numbers = #tpu.dot_dimension_numbers<[1], [0], [0], [1], [0, 0, 1, 1], [], []>} : vector<19x19xf32>, vector<19x120xf32>, vector<19x120xf32> -> vector<19x120xf32>
    %16 = arith.addf %10, %15 : vector<19x120xf32>
    %c0_17 = arith.constant 0 : index
    %c3 = arith.constant 3 : index
    %c0_18 = arith.constant 0 : index
    %17 = vector.load %arg1[%c0_17, %c3, %c0_18] : memref<1x23x19xf32, #tpu.memory_space<vmem>>, vector<1x19x19xf32>
    %18 = vector.shape_cast %17 : vector<1x19x19xf32> to vector<19x19xf32>
    %c3_19 = arith.constant 3 : index
    %c0_20 = arith.constant 0 : index
    %c0_21 = arith.constant 0 : index
    %19 = vector.load %arg2[%c3_19, %c0_20, %c0_21] : memref<5x19x120xf32, #tpu.memory_space<vmem>>, vector<1x19x120xf32>
    %20 = vector.shape_cast %19 : vector<1x19x120xf32> to vector<19x120xf32>
    %cst_22 = arith.constant dense<0.000000e+00> : vector<19x120xf32>
    %21 = tpu.matmul %18, %20, %cst_22 {dimension_numbers = #tpu.dot_dimension_numbers<[1], [0], [0], [1], [0, 0, 1, 1], [], []>} : vector<19x19xf32>, vector<19x120xf32>, vector<19x120xf32> -> vector<19x120xf32>
    %22 = arith.addf %16, %21 : vector<19x120xf32>
    %c0_23 = arith.constant 0 : index
    %c4 = arith.constant 4 : index
    %c0_24 = arith.constant 0 : index
    %23 = vector.load %arg1[%c0_23, %c4, %c0_24] : memref<1x23x19xf32, #tpu.memory_space<vmem>>, vector<1x19x19xf32>
    %24 = vector.shape_cast %23 : vector<1x19x19xf32> to vector<19x19xf32>
    %c4_25 = arith.constant 4 : index
    %c0_26 = arith.constant 0 : index
    %c0_27 = arith.constant 0 : index
    %25 = vector.load %arg2[%c4_25, %c0_26, %c0_27] : memref<5x19x120xf32, #tpu.memory_space<vmem>>, vector<1x19x120xf32>
    %26 = vector.shape_cast %25 : vector<1x19x120xf32> to vector<19x120xf32>
    %cst_28 = arith.constant dense<0.000000e+00> : vector<19x120xf32>
    %27 = tpu.matmul %24, %26, %cst_28 {dimension_numbers = #tpu.dot_dimension_numbers<[1], [0], [0], [1], [0, 0, 1, 1], [], []>} : vector<19x19xf32>, vector<19x120xf32>, vector<19x120xf32> -> vector<19x120xf32>
    %28 = arith.addf %22, %27 : vector<19x120xf32>
    %c0_29 = arith.constant 0 : index
    %c0_30 = arith.constant 0 : index
    %29 = vector.load %arg3[%c0_29, %c0_30] : memref<1x120xf32, #tpu.memory_space<vmem>>, vector<1x120xf32>
    %30 = vector.broadcast %29 : vector<1x120xf32> to vector<19x120xf32>
    %31 = arith.addf %28, %30 : vector<19x120xf32>
    %cst_31 = arith.constant 0.000000e+00 : f32
    %32 = vector.broadcast %cst_31 : f32 to vector<19x120xf32>
    %33 = arith.cmpf oge, %31, %32 : vector<19x120xf32>
    %cst_32 = arith.constant 2.000000e-01 : f32
    %34 = vector.broadcast %cst_32 : f32 to vector<19x120xf32>
    %35 = arith.mulf %34, %31 : vector<19x120xf32>
    %36 = arith.select %33, %31, %35 : vector<19x120xi1>, vector<19x120xf32>
    %c0_33 = arith.constant 0 : index
    %c0_34 = arith.constant 0 : index
    %c0_35 = arith.constant 0 : index
    %37 = vector.load %arg4[%c0_33, %c0_34, %c0_35] : memref<1x19x120xf32, #tpu.memory_space<vmem>>, vector<1x19x120xf32>
    %38 = vector.shape_cast %37 : vector<1x19x120xf32> to vector<19x120xf32>
    %39 = vector.shape_cast %36 : vector<19x120xf32> to vector<1x19x120xf32>
    tpu.vector_store %arg4[%c0_33, %c0_34, %c0_35], %39 {strides = array<i32>} : memref<1x19x120xf32, #tpu.memory_space<vmem>>, vector<1x19x120xf32>,
    return
  }
  func.func @transform_0(%arg0: i32) -> (i32, i32, i32) {
    %c0_i32 = arith.constant 0 : i32
    %c0_i32_0 = arith.constant 0 : i32
    %c0_i32_1 = arith.constant 0 : i32
    return %arg0, %c0_i32, %c0_i32_0 : i32, i32, i32
  }
  func.func @transform_1(%arg0: i32) -> (i32, i32, i32) {
    %c0_i32 = arith.constant 0 : i32
    %c0_i32_0 = arith.constant 0 : i32
    %c0_i32_1 = arith.constant 0 : i32
    %c0_i32_2 = arith.constant 0 : i32
    return %c0_i32, %c0_i32_0, %c0_i32_1 : i32, i32, i32
  }
  func.func @transform_2(%arg0: i32) -> (i32, i32) {
    %c0_i32 = arith.constant 0 : i32
    %c0_i32_0 = arith.constant 0 : i32
    %c0_i32_1 = arith.constant 0 : i32
    return %c0_i32, %c0_i32_0 : i32, i32
  }
  func.func @transform_3(%arg0: i32) -> (i32, i32, i32) {
    %c0_i32 = arith.constant 0 : i32
    %c0_i32_0 = arith.constant 0 : i32
    %c0_i32_1 = arith.constant 0 : i32
    return %arg0, %c0_i32, %c0_i32_0 : i32, i32, i32
  }
}

module attributes {stable_mosaic.version = 11 : i64} {
  func.func @_conv_kernel(%arg0: i32, %arg1: memref<1x21x136xf32, #tpu.memory_space<vmem>>, %arg2: memref<5x136x104xf32, #tpu.memory_space<vmem>>, %arg3: memref<1x104xf32, #tpu.memory_space<vmem>>, %arg4: memref<1x17x104xf32, #tpu.memory_space<vmem>>) attributes {dimension_semantics = [#tpu.dimension_semantics<parallel>], iteration_bounds = array<i64: 2>, scalar_prefetch = 0 : i64, scratch_operands = 0 : i64, tpu.core_type = #tpu.core_type<tc>, window_params = [{transform_indices = @transform_0, window_bounds = array<i64: 1, 21, 136>}, {pipeline_mode = #tpu.pipeline_mode<synchronous>, transform_indices = @transform_1, window_bounds = array<i64: 5, 136, 104>}, {pipeline_mode = #tpu.pipeline_mode<synchronous>, transform_indices = @transform_2, window_bounds = array<i64: 1, 104>}, {transform_indices = @transform_3, window_bounds = array<i64: 1, 17, 104>}]} {
    %c0 = arith.constant 0 : index
    %c0_0 = arith.constant 0 : index
    %c0_1 = arith.constant 0 : index
    %0 = vector.load %arg1[%c0, %c0_0, %c0_1] : memref<1x21x136xf32, #tpu.memory_space<vmem>>, vector<1x17x136xf32>
    %1 = vector.shape_cast %0 : vector<1x17x136xf32> to vector<17x136xf32>
    %c0_2 = arith.constant 0 : index
    %c0_3 = arith.constant 0 : index
    %c0_4 = arith.constant 0 : index
    %2 = vector.load %arg2[%c0_2, %c0_3, %c0_4] : memref<5x136x104xf32, #tpu.memory_space<vmem>>, vector<1x136x104xf32>
    %3 = vector.shape_cast %2 : vector<1x136x104xf32> to vector<136x104xf32>
    %cst = arith.constant dense<0.000000e+00> : vector<17x104xf32>
    %4 = tpu.matmul %1, %3, %cst {dimension_numbers = #tpu.dot_dimension_numbers<[1], [0], [0], [1], [0, 0, 1, 1], [], []>} : vector<17x136xf32>, vector<136x104xf32>, vector<17x104xf32> -> vector<17x104xf32>
    %c0_5 = arith.constant 0 : index
    %c1 = arith.constant 1 : index
    %c0_6 = arith.constant 0 : index
    %5 = vector.load %arg1[%c0_5, %c1, %c0_6] : memref<1x21x136xf32, #tpu.memory_space<vmem>>, vector<1x17x136xf32>
    %6 = vector.shape_cast %5 : vector<1x17x136xf32> to vector<17x136xf32>
    %c1_7 = arith.constant 1 : index
    %c0_8 = arith.constant 0 : index
    %c0_9 = arith.constant 0 : index
    %7 = vector.load %arg2[%c1_7, %c0_8, %c0_9] : memref<5x136x104xf32, #tpu.memory_space<vmem>>, vector<1x136x104xf32>
    %8 = vector.shape_cast %7 : vector<1x136x104xf32> to vector<136x104xf32>
    %cst_10 = arith.constant dense<0.000000e+00> : vector<17x104xf32>
    %9 = tpu.matmul %6, %8, %cst_10 {dimension_numbers = #tpu.dot_dimension_numbers<[1], [0], [0], [1], [0, 0, 1, 1], [], []>} : vector<17x136xf32>, vector<136x104xf32>, vector<17x104xf32> -> vector<17x104xf32>
    %10 = arith.addf %4, %9 : vector<17x104xf32>
    %c0_11 = arith.constant 0 : index
    %c2 = arith.constant 2 : index
    %c0_12 = arith.constant 0 : index
    %11 = vector.load %arg1[%c0_11, %c2, %c0_12] : memref<1x21x136xf32, #tpu.memory_space<vmem>>, vector<1x17x136xf32>
    %12 = vector.shape_cast %11 : vector<1x17x136xf32> to vector<17x136xf32>
    %c2_13 = arith.constant 2 : index
    %c0_14 = arith.constant 0 : index
    %c0_15 = arith.constant 0 : index
    %13 = vector.load %arg2[%c2_13, %c0_14, %c0_15] : memref<5x136x104xf32, #tpu.memory_space<vmem>>, vector<1x136x104xf32>
    %14 = vector.shape_cast %13 : vector<1x136x104xf32> to vector<136x104xf32>
    %cst_16 = arith.constant dense<0.000000e+00> : vector<17x104xf32>
    %15 = tpu.matmul %12, %14, %cst_16 {dimension_numbers = #tpu.dot_dimension_numbers<[1], [0], [0], [1], [0, 0, 1, 1], [], []>} : vector<17x136xf32>, vector<136x104xf32>, vector<17x104xf32> -> vector<17x104xf32>
    %16 = arith.addf %10, %15 : vector<17x104xf32>
    %c0_17 = arith.constant 0 : index
    %c3 = arith.constant 3 : index
    %c0_18 = arith.constant 0 : index
    %17 = vector.load %arg1[%c0_17, %c3, %c0_18] : memref<1x21x136xf32, #tpu.memory_space<vmem>>, vector<1x17x136xf32>
    %18 = vector.shape_cast %17 : vector<1x17x136xf32> to vector<17x136xf32>
    %c3_19 = arith.constant 3 : index
    %c0_20 = arith.constant 0 : index
    %c0_21 = arith.constant 0 : index
    %19 = vector.load %arg2[%c3_19, %c0_20, %c0_21] : memref<5x136x104xf32, #tpu.memory_space<vmem>>, vector<1x136x104xf32>
    %20 = vector.shape_cast %19 : vector<1x136x104xf32> to vector<136x104xf32>
    %cst_22 = arith.constant dense<0.000000e+00> : vector<17x104xf32>
    %21 = tpu.matmul %18, %20, %cst_22 {dimension_numbers = #tpu.dot_dimension_numbers<[1], [0], [0], [1], [0, 0, 1, 1], [], []>} : vector<17x136xf32>, vector<136x104xf32>, vector<17x104xf32> -> vector<17x104xf32>
    %22 = arith.addf %16, %21 : vector<17x104xf32>
    %c0_23 = arith.constant 0 : index
    %c4 = arith.constant 4 : index
    %c0_24 = arith.constant 0 : index
    %23 = vector.load %arg1[%c0_23, %c4, %c0_24] : memref<1x21x136xf32, #tpu.memory_space<vmem>>, vector<1x17x136xf32>
    %24 = vector.shape_cast %23 : vector<1x17x136xf32> to vector<17x136xf32>
    %c4_25 = arith.constant 4 : index
    %c0_26 = arith.constant 0 : index
    %c0_27 = arith.constant 0 : index
    %25 = vector.load %arg2[%c4_25, %c0_26, %c0_27] : memref<5x136x104xf32, #tpu.memory_space<vmem>>, vector<1x136x104xf32>
    %26 = vector.shape_cast %25 : vector<1x136x104xf32> to vector<136x104xf32>
    %cst_28 = arith.constant dense<0.000000e+00> : vector<17x104xf32>
    %27 = tpu.matmul %24, %26, %cst_28 {dimension_numbers = #tpu.dot_dimension_numbers<[1], [0], [0], [1], [0, 0, 1, 1], [], []>} : vector<17x136xf32>, vector<136x104xf32>, vector<17x104xf32> -> vector<17x104xf32>
    %28 = arith.addf %22, %27 : vector<17x104xf32>
    %c0_29 = arith.constant 0 : index
    %c0_30 = arith.constant 0 : index
    %29 = vector.load %arg3[%c0_29, %c0_30] : memref<1x104xf32, #tpu.memory_space<vmem>>, vector<1x104xf32>
    %30 = vector.broadcast %29 : vector<1x104xf32> to vector<17x104xf32>
    %31 = arith.addf %28, %30 : vector<17x104xf32>
    %cst_31 = arith.constant 0.000000e+00 : f32
    %32 = vector.broadcast %cst_31 : f32 to vector<17x104xf32>
    %33 = arith.cmpf oge, %31, %32 : vector<17x104xf32>
    %cst_32 = arith.constant 2.000000e-01 : f32
    %34 = vector.broadcast %cst_32 : f32 to vector<17x104xf32>
    %35 = arith.mulf %34, %31 : vector<17x104xf32>
    %36 = arith.select %33, %31, %35 : vector<17x104xi1>, vector<17x104xf32>
    %c0_33 = arith.constant 0 : index
    %c0_34 = arith.constant 0 : index
    %c0_35 = arith.constant 0 : index
    %37 = vector.load %arg4[%c0_33, %c0_34, %c0_35] : memref<1x17x104xf32, #tpu.memory_space<vmem>>, vector<1x17x104xf32>
    %38 = vector.shape_cast %37 : vector<1x17x104xf32> to vector<17x104xf32>
    %39 = vector.shape_cast %36 : vector<17x104xf32> to vector<1x17x104xf32>
    tpu.vector_store %arg4[%c0_33, %c0_34, %c0_35], %39 {strides = array<i32>} : memref<1x17x104xf32, #tpu.memory_space<vmem>>, vector<1x17x104xf32>,
    return
  }
  func.func @transform_0(%arg0: i32) -> (i32, i32, i32) {
    %c0_i32 = arith.constant 0 : i32
    %c0_i32_0 = arith.constant 0 : i32
    %c0_i32_1 = arith.constant 0 : i32
    return %arg0, %c0_i32, %c0_i32_0 : i32, i32, i32
  }
  func.func @transform_1(%arg0: i32) -> (i32, i32, i32) {
    %c0_i32 = arith.constant 0 : i32
    %c0_i32_0 = arith.constant 0 : i32
    %c0_i32_1 = arith.constant 0 : i32
    %c0_i32_2 = arith.constant 0 : i32
    return %c0_i32, %c0_i32_0, %c0_i32_1 : i32, i32, i32
  }
  func.func @transform_2(%arg0: i32) -> (i32, i32) {
    %c0_i32 = arith.constant 0 : i32
    %c0_i32_0 = arith.constant 0 : i32
    %c0_i32_1 = arith.constant 0 : i32
    return %c0_i32, %c0_i32_0 : i32, i32
  }
  func.func @transform_3(%arg0: i32) -> (i32, i32, i32) {
    %c0_i32 = arith.constant 0 : i32
    %c0_i32_0 = arith.constant 0 : i32
    %c0_i32_1 = arith.constant 0 : i32
    return %arg0, %c0_i32, %c0_i32_0 : i32, i32, i32
  }
}

module attributes {stable_mosaic.version = 11 : i64} {
  func.func @_conv_kernel(%arg0: i32, %arg1: memref<1x19x120xf32, #tpu.memory_space<vmem>>, %arg2: memref<5x120x48xf32, #tpu.memory_space<vmem>>, %arg3: memref<1x48xf32, #tpu.memory_space<vmem>>, %arg4: memref<1x15x48xf32, #tpu.memory_space<vmem>>) attributes {dimension_semantics = [#tpu.dimension_semantics<parallel>], iteration_bounds = array<i64: 2>, scalar_prefetch = 0 : i64, scratch_operands = 0 : i64, tpu.core_type = #tpu.core_type<tc>, window_params = [{transform_indices = @transform_0, window_bounds = array<i64: 1, 19, 120>}, {pipeline_mode = #tpu.pipeline_mode<synchronous>, transform_indices = @transform_1, window_bounds = array<i64: 5, 120, 48>}, {pipeline_mode = #tpu.pipeline_mode<synchronous>, transform_indices = @transform_2, window_bounds = array<i64: 1, 48>}, {transform_indices = @transform_3, window_bounds = array<i64: 1, 15, 48>}]} {
    %c0 = arith.constant 0 : index
    %c0_0 = arith.constant 0 : index
    %c0_1 = arith.constant 0 : index
    %0 = vector.load %arg1[%c0, %c0_0, %c0_1] : memref<1x19x120xf32, #tpu.memory_space<vmem>>, vector<1x15x120xf32>
    %1 = vector.shape_cast %0 : vector<1x15x120xf32> to vector<15x120xf32>
    %c0_2 = arith.constant 0 : index
    %c0_3 = arith.constant 0 : index
    %c0_4 = arith.constant 0 : index
    %2 = vector.load %arg2[%c0_2, %c0_3, %c0_4] : memref<5x120x48xf32, #tpu.memory_space<vmem>>, vector<1x120x48xf32>
    %3 = vector.shape_cast %2 : vector<1x120x48xf32> to vector<120x48xf32>
    %cst = arith.constant dense<0.000000e+00> : vector<15x48xf32>
    %4 = tpu.matmul %1, %3, %cst {dimension_numbers = #tpu.dot_dimension_numbers<[1], [0], [0], [1], [0, 0, 1, 1], [], []>} : vector<15x120xf32>, vector<120x48xf32>, vector<15x48xf32> -> vector<15x48xf32>
    %c0_5 = arith.constant 0 : index
    %c1 = arith.constant 1 : index
    %c0_6 = arith.constant 0 : index
    %5 = vector.load %arg1[%c0_5, %c1, %c0_6] : memref<1x19x120xf32, #tpu.memory_space<vmem>>, vector<1x15x120xf32>
    %6 = vector.shape_cast %5 : vector<1x15x120xf32> to vector<15x120xf32>
    %c1_7 = arith.constant 1 : index
    %c0_8 = arith.constant 0 : index
    %c0_9 = arith.constant 0 : index
    %7 = vector.load %arg2[%c1_7, %c0_8, %c0_9] : memref<5x120x48xf32, #tpu.memory_space<vmem>>, vector<1x120x48xf32>
    %8 = vector.shape_cast %7 : vector<1x120x48xf32> to vector<120x48xf32>
    %cst_10 = arith.constant dense<0.000000e+00> : vector<15x48xf32>
    %9 = tpu.matmul %6, %8, %cst_10 {dimension_numbers = #tpu.dot_dimension_numbers<[1], [0], [0], [1], [0, 0, 1, 1], [], []>} : vector<15x120xf32>, vector<120x48xf32>, vector<15x48xf32> -> vector<15x48xf32>
    %10 = arith.addf %4, %9 : vector<15x48xf32>
    %c0_11 = arith.constant 0 : index
    %c2 = arith.constant 2 : index
    %c0_12 = arith.constant 0 : index
    %11 = vector.load %arg1[%c0_11, %c2, %c0_12] : memref<1x19x120xf32, #tpu.memory_space<vmem>>, vector<1x15x120xf32>
    %12 = vector.shape_cast %11 : vector<1x15x120xf32> to vector<15x120xf32>
    %c2_13 = arith.constant 2 : index
    %c0_14 = arith.constant 0 : index
    %c0_15 = arith.constant 0 : index
    %13 = vector.load %arg2[%c2_13, %c0_14, %c0_15] : memref<5x120x48xf32, #tpu.memory_space<vmem>>, vector<1x120x48xf32>
    %14 = vector.shape_cast %13 : vector<1x120x48xf32> to vector<120x48xf32>
    %cst_16 = arith.constant dense<0.000000e+00> : vector<15x48xf32>
    %15 = tpu.matmul %12, %14, %cst_16 {dimension_numbers = #tpu.dot_dimension_numbers<[1], [0], [0], [1], [0, 0, 1, 1], [], []>} : vector<15x120xf32>, vector<120x48xf32>, vector<15x48xf32> -> vector<15x48xf32>
    %16 = arith.addf %10, %15 : vector<15x48xf32>
    %c0_17 = arith.constant 0 : index
    %c3 = arith.constant 3 : index
    %c0_18 = arith.constant 0 : index
    %17 = vector.load %arg1[%c0_17, %c3, %c0_18] : memref<1x19x120xf32, #tpu.memory_space<vmem>>, vector<1x15x120xf32>
    %18 = vector.shape_cast %17 : vector<1x15x120xf32> to vector<15x120xf32>
    %c3_19 = arith.constant 3 : index
    %c0_20 = arith.constant 0 : index
    %c0_21 = arith.constant 0 : index
    %19 = vector.load %arg2[%c3_19, %c0_20, %c0_21] : memref<5x120x48xf32, #tpu.memory_space<vmem>>, vector<1x120x48xf32>
    %20 = vector.shape_cast %19 : vector<1x120x48xf32> to vector<120x48xf32>
    %cst_22 = arith.constant dense<0.000000e+00> : vector<15x48xf32>
    %21 = tpu.matmul %18, %20, %cst_22 {dimension_numbers = #tpu.dot_dimension_numbers<[1], [0], [0], [1], [0, 0, 1, 1], [], []>} : vector<15x120xf32>, vector<120x48xf32>, vector<15x48xf32> -> vector<15x48xf32>
    %22 = arith.addf %16, %21 : vector<15x48xf32>
    %c0_23 = arith.constant 0 : index
    %c4 = arith.constant 4 : index
    %c0_24 = arith.constant 0 : index
    %23 = vector.load %arg1[%c0_23, %c4, %c0_24] : memref<1x19x120xf32, #tpu.memory_space<vmem>>, vector<1x15x120xf32>
    %24 = vector.shape_cast %23 : vector<1x15x120xf32> to vector<15x120xf32>
    %c4_25 = arith.constant 4 : index
    %c0_26 = arith.constant 0 : index
    %c0_27 = arith.constant 0 : index
    %25 = vector.load %arg2[%c4_25, %c0_26, %c0_27] : memref<5x120x48xf32, #tpu.memory_space<vmem>>, vector<1x120x48xf32>
    %26 = vector.shape_cast %25 : vector<1x120x48xf32> to vector<120x48xf32>
    %cst_28 = arith.constant dense<0.000000e+00> : vector<15x48xf32>
    %27 = tpu.matmul %24, %26, %cst_28 {dimension_numbers = #tpu.dot_dimension_numbers<[1], [0], [0], [1], [0, 0, 1, 1], [], []>} : vector<15x120xf32>, vector<120x48xf32>, vector<15x48xf32> -> vector<15x48xf32>
    %28 = arith.addf %22, %27 : vector<15x48xf32>
    %c0_29 = arith.constant 0 : index
    %c0_30 = arith.constant 0 : index
    %29 = vector.load %arg3[%c0_29, %c0_30] : memref<1x48xf32, #tpu.memory_space<vmem>>, vector<1x48xf32>
    %30 = vector.broadcast %29 : vector<1x48xf32> to vector<15x48xf32>
    %31 = arith.addf %28, %30 : vector<15x48xf32>
    %cst_31 = arith.constant 0.000000e+00 : f32
    %32 = vector.broadcast %cst_31 : f32 to vector<15x48xf32>
    %33 = arith.cmpf oge, %31, %32 : vector<15x48xf32>
    %cst_32 = arith.constant 2.000000e-01 : f32
    %34 = vector.broadcast %cst_32 : f32 to vector<15x48xf32>
    %35 = arith.mulf %34, %31 : vector<15x48xf32>
    %36 = arith.select %33, %31, %35 : vector<15x48xi1>, vector<15x48xf32>
    %c0_33 = arith.constant 0 : index
    %c0_34 = arith.constant 0 : index
    %c0_35 = arith.constant 0 : index
    %37 = vector.load %arg4[%c0_33, %c0_34, %c0_35] : memref<1x15x48xf32, #tpu.memory_space<vmem>>, vector<1x15x48xf32>
    %38 = vector.shape_cast %37 : vector<1x15x48xf32> to vector<15x48xf32>
    %39 = vector.shape_cast %36 : vector<15x48xf32> to vector<1x15x48xf32>
    tpu.vector_store %arg4[%c0_33, %c0_34, %c0_35], %39 {strides = array<i32>} : memref<1x15x48xf32, #tpu.memory_space<vmem>>, vector<1x15x48xf32>,
    return
  }
  func.func @transform_0(%arg0: i32) -> (i32, i32, i32) {
    %c0_i32 = arith.constant 0 : i32
    %c0_i32_0 = arith.constant 0 : i32
    %c0_i32_1 = arith.constant 0 : i32
    return %arg0, %c0_i32, %c0_i32_0 : i32, i32, i32
  }
  func.func @transform_1(%arg0: i32) -> (i32, i32, i32) {
    %c0_i32 = arith.constant 0 : i32
    %c0_i32_0 = arith.constant 0 : i32
    %c0_i32_1 = arith.constant 0 : i32
    %c0_i32_2 = arith.constant 0 : i32
    return %c0_i32, %c0_i32_0, %c0_i32_1 : i32, i32, i32
  }
  func.func @transform_2(%arg0: i32) -> (i32, i32) {
    %c0_i32 = arith.constant 0 : i32
    %c0_i32_0 = arith.constant 0 : i32
    %c0_i32_1 = arith.constant 0 : i32
    return %c0_i32, %c0_i32_0 : i32, i32
  }
  func.func @transform_3(%arg0: i32) -> (i32, i32, i32) {
    %c0_i32 = arith.constant 0 : i32
    %c0_i32_0 = arith.constant 0 : i32
    %c0_i32_1 = arith.constant 0 : i32
    return %arg0, %c0_i32, %c0_i32_0 : i32, i32, i32
  }
}

module attributes {stable_mosaic.version = 11 : i64} {
  func.func @_conv_kernel(%arg0: i32, %arg1: memref<1x12x64xf32, #tpu.memory_space<vmem>>, %arg2: memref<5x64x4xf32, #tpu.memory_space<vmem>>, %arg3: memref<1x4xf32, #tpu.memory_space<vmem>>, %arg4: memref<1x8x4xf32, #tpu.memory_space<vmem>>) attributes {dimension_semantics = [#tpu.dimension_semantics<parallel>], iteration_bounds = array<i64: 2>, scalar_prefetch = 0 : i64, scratch_operands = 0 : i64, tpu.core_type = #tpu.core_type<tc>, window_params = [{transform_indices = @transform_0, window_bounds = array<i64: 1, 12, 64>}, {pipeline_mode = #tpu.pipeline_mode<synchronous>, transform_indices = @transform_1, window_bounds = array<i64: 5, 64, 4>}, {pipeline_mode = #tpu.pipeline_mode<synchronous>, transform_indices = @transform_2, window_bounds = array<i64: 1, 4>}, {transform_indices = @transform_3, window_bounds = array<i64: 1, 8, 4>}]} {
    %c0 = arith.constant 0 : index
    %c0_0 = arith.constant 0 : index
    %c0_1 = arith.constant 0 : index
    %0 = vector.load %arg1[%c0, %c0_0, %c0_1] : memref<1x12x64xf32, #tpu.memory_space<vmem>>, vector<1x8x64xf32>
    %1 = vector.shape_cast %0 : vector<1x8x64xf32> to vector<8x64xf32>
    %c0_2 = arith.constant 0 : index
    %c0_3 = arith.constant 0 : index
    %c0_4 = arith.constant 0 : index
    %2 = vector.load %arg2[%c0_2, %c0_3, %c0_4] : memref<5x64x4xf32, #tpu.memory_space<vmem>>, vector<1x64x4xf32>
    %3 = vector.shape_cast %2 : vector<1x64x4xf32> to vector<64x4xf32>
    %cst = arith.constant dense<0.000000e+00> : vector<8x4xf32>
    %4 = tpu.matmul %1, %3, %cst {dimension_numbers = #tpu.dot_dimension_numbers<[1], [0], [0], [1], [0, 0, 1, 1], [], []>} : vector<8x64xf32>, vector<64x4xf32>, vector<8x4xf32> -> vector<8x4xf32>
    %c0_5 = arith.constant 0 : index
    %c1 = arith.constant 1 : index
    %c0_6 = arith.constant 0 : index
    %5 = vector.load %arg1[%c0_5, %c1, %c0_6] : memref<1x12x64xf32, #tpu.memory_space<vmem>>, vector<1x8x64xf32>
    %6 = vector.shape_cast %5 : vector<1x8x64xf32> to vector<8x64xf32>
    %c1_7 = arith.constant 1 : index
    %c0_8 = arith.constant 0 : index
    %c0_9 = arith.constant 0 : index
    %7 = vector.load %arg2[%c1_7, %c0_8, %c0_9] : memref<5x64x4xf32, #tpu.memory_space<vmem>>, vector<1x64x4xf32>
    %8 = vector.shape_cast %7 : vector<1x64x4xf32> to vector<64x4xf32>
    %cst_10 = arith.constant dense<0.000000e+00> : vector<8x4xf32>
    %9 = tpu.matmul %6, %8, %cst_10 {dimension_numbers = #tpu.dot_dimension_numbers<[1], [0], [0], [1], [0, 0, 1, 1], [], []>} : vector<8x64xf32>, vector<64x4xf32>, vector<8x4xf32> -> vector<8x4xf32>
    %10 = arith.addf %4, %9 : vector<8x4xf32>
    %c0_11 = arith.constant 0 : index
    %c2 = arith.constant 2 : index
    %c0_12 = arith.constant 0 : index
    %11 = vector.load %arg1[%c0_11, %c2, %c0_12] : memref<1x12x64xf32, #tpu.memory_space<vmem>>, vector<1x8x64xf32>
    %12 = vector.shape_cast %11 : vector<1x8x64xf32> to vector<8x64xf32>
    %c2_13 = arith.constant 2 : index
    %c0_14 = arith.constant 0 : index
    %c0_15 = arith.constant 0 : index
    %13 = vector.load %arg2[%c2_13, %c0_14, %c0_15] : memref<5x64x4xf32, #tpu.memory_space<vmem>>, vector<1x64x4xf32>
    %14 = vector.shape_cast %13 : vector<1x64x4xf32> to vector<64x4xf32>
    %cst_16 = arith.constant dense<0.000000e+00> : vector<8x4xf32>
    %15 = tpu.matmul %12, %14, %cst_16 {dimension_numbers = #tpu.dot_dimension_numbers<[1], [0], [0], [1], [0, 0, 1, 1], [], []>} : vector<8x64xf32>, vector<64x4xf32>, vector<8x4xf32> -> vector<8x4xf32>
    %16 = arith.addf %10, %15 : vector<8x4xf32>
    %c0_17 = arith.constant 0 : index
    %c3 = arith.constant 3 : index
    %c0_18 = arith.constant 0 : index
    %17 = vector.load %arg1[%c0_17, %c3, %c0_18] : memref<1x12x64xf32, #tpu.memory_space<vmem>>, vector<1x8x64xf32>
    %18 = vector.shape_cast %17 : vector<1x8x64xf32> to vector<8x64xf32>
    %c3_19 = arith.constant 3 : index
    %c0_20 = arith.constant 0 : index
    %c0_21 = arith.constant 0 : index
    %19 = vector.load %arg2[%c3_19, %c0_20, %c0_21] : memref<5x64x4xf32, #tpu.memory_space<vmem>>, vector<1x64x4xf32>
    %20 = vector.shape_cast %19 : vector<1x64x4xf32> to vector<64x4xf32>
    %cst_22 = arith.constant dense<0.000000e+00> : vector<8x4xf32>
    %21 = tpu.matmul %18, %20, %cst_22 {dimension_numbers = #tpu.dot_dimension_numbers<[1], [0], [0], [1], [0, 0, 1, 1], [], []>} : vector<8x64xf32>, vector<64x4xf32>, vector<8x4xf32> -> vector<8x4xf32>
    %22 = arith.addf %16, %21 : vector<8x4xf32>
    %c0_23 = arith.constant 0 : index
    %c4 = arith.constant 4 : index
    %c0_24 = arith.constant 0 : index
    %23 = vector.load %arg1[%c0_23, %c4, %c0_24] : memref<1x12x64xf32, #tpu.memory_space<vmem>>, vector<1x8x64xf32>
    %24 = vector.shape_cast %23 : vector<1x8x64xf32> to vector<8x64xf32>
    %c4_25 = arith.constant 4 : index
    %c0_26 = arith.constant 0 : index
    %c0_27 = arith.constant 0 : index
    %25 = vector.load %arg2[%c4_25, %c0_26, %c0_27] : memref<5x64x4xf32, #tpu.memory_space<vmem>>, vector<1x64x4xf32>
    %26 = vector.shape_cast %25 : vector<1x64x4xf32> to vector<64x4xf32>
    %cst_28 = arith.constant dense<0.000000e+00> : vector<8x4xf32>
    %27 = tpu.matmul %24, %26, %cst_28 {dimension_numbers = #tpu.dot_dimension_numbers<[1], [0], [0], [1], [0, 0, 1, 1], [], []>} : vector<8x64xf32>, vector<64x4xf32>, vector<8x4xf32> -> vector<8x4xf32>
    %28 = arith.addf %22, %27 : vector<8x4xf32>
    %c0_29 = arith.constant 0 : index
    %c0_30 = arith.constant 0 : index
    %29 = vector.load %arg3[%c0_29, %c0_30] : memref<1x4xf32, #tpu.memory_space<vmem>>, vector<1x4xf32>
    %30 = vector.broadcast %29 : vector<1x4xf32> to vector<8x4xf32>
    %31 = arith.addf %28, %30 : vector<8x4xf32>
    %cst_31 = arith.constant 0.000000e+00 : f32
    %32 = vector.broadcast %cst_31 : f32 to vector<8x4xf32>
    %33 = arith.cmpf oge, %31, %32 : vector<8x4xf32>
    %cst_32 = arith.constant 2.000000e-01 : f32
    %34 = vector.broadcast %cst_32 : f32 to vector<8x4xf32>
    %35 = arith.mulf %34, %31 : vector<8x4xf32>
    %36 = arith.select %33, %31, %35 : vector<8x4xi1>, vector<8x4xf32>
    %c0_33 = arith.constant 0 : index
    %c0_34 = arith.constant 0 : index
    %c0_35 = arith.constant 0 : index
    %37 = vector.load %arg4[%c0_33, %c0_34, %c0_35] : memref<1x8x4xf32, #tpu.memory_space<vmem>>, vector<1x8x4xf32>
    %38 = vector.shape_cast %37 : vector<1x8x4xf32> to vector<8x4xf32>
    %39 = vector.shape_cast %36 : vector<8x4xf32> to vector<1x8x4xf32>
    tpu.vector_store %arg4[%c0_33, %c0_34, %c0_35], %39 {strides = array<i32>} : memref<1x8x4xf32, #tpu.memory_space<vmem>>, vector<1x8x4xf32>,
    return
  }
  func.func @transform_0(%arg0: i32) -> (i32, i32, i32) {
    %c0_i32 = arith.constant 0 : i32
    %c0_i32_0 = arith.constant 0 : i32
    %c0_i32_1 = arith.constant 0 : i32
    return %arg0, %c0_i32, %c0_i32_0 : i32, i32, i32
  }
  func.func @transform_1(%arg0: i32) -> (i32, i32, i32) {
    %c0_i32 = arith.constant 0 : i32
    %c0_i32_0 = arith.constant 0 : i32
    %c0_i32_1 = arith.constant 0 : i32
    %c0_i32_2 = arith.constant 0 : i32
    return %c0_i32, %c0_i32_0, %c0_i32_1 : i32, i32, i32
  }
  func.func @transform_2(%arg0: i32) -> (i32, i32) {
    %c0_i32 = arith.constant 0 : i32
    %c0_i32_0 = arith.constant 0 : i32
    %c0_i32_1 = arith.constant 0 : i32
    return %c0_i32, %c0_i32_0 : i32, i32
  }
  func.func @transform_3(%arg0: i32) -> (i32, i32, i32) {
    %c0_i32 = arith.constant 0 : i32
    %c0_i32_0 = arith.constant 0 : i32
    %c0_i32_1 = arith.constant 0 : i32
    return %arg0, %c0_i32, %c0_i32_0 : i32, i32, i32
  }
}

module attributes {stable_mosaic.version = 11 : i64} {
  func.func @_head_kernel(%arg0: memref<2x16xf32, #tpu.memory_space<vmem>>, %arg1: memref<16x16xf32, #tpu.memory_space<vmem>>, %arg2: memref<1x16xf32, #tpu.memory_space<vmem>>, %arg3: memref<2x8xf32, #tpu.memory_space<vmem>>, %arg4: memref<8x16xf32, #tpu.memory_space<vmem>>, %arg5: memref<1x16xf32, #tpu.memory_space<vmem>>, %arg6: memref<2x8xf32, #tpu.memory_space<vmem>>, %arg7: memref<2x8xf32, #tpu.memory_space<vmem>>, %arg8: memref<2x8xf32, #tpu.memory_space<vmem>>, %arg9: memref<2x16xf32, #tpu.memory_space<vmem>>) attributes {dimension_semantics = [], scalar_prefetch = 0 : i64, scratch_operands = 0 : i64, tpu.core_type = #tpu.core_type<tc>} {
    %c0 = arith.constant 0 : index
    %c0_0 = arith.constant 0 : index
    %0 = vector.load %arg0[%c0, %c0_0] : memref<2x16xf32, #tpu.memory_space<vmem>>, vector<2x16xf32>
    %c0_1 = arith.constant 0 : index
    %c0_2 = arith.constant 0 : index
    %1 = vector.load %arg1[%c0_1, %c0_2] : memref<16x16xf32, #tpu.memory_space<vmem>>, vector<16x16xf32>
    %cst = arith.constant dense<0.000000e+00> : vector<2x16xf32>
    %2 = tpu.matmul %0, %1, %cst {dimension_numbers = #tpu.dot_dimension_numbers<[1], [0], [0], [1], [0, 0, 1, 1], [], []>} : vector<2x16xf32>, vector<16x16xf32>, vector<2x16xf32> -> vector<2x16xf32>
    %c0_3 = arith.constant 0 : index
    %c0_4 = arith.constant 0 : index
    %3 = vector.load %arg2[%c0_3, %c0_4] : memref<1x16xf32, #tpu.memory_space<vmem>>, vector<1x16xf32>
    %4 = vector.broadcast %3 : vector<1x16xf32> to vector<2x16xf32>
    %5 = arith.addf %2, %4 : vector<2x16xf32>
    %6 = vector.extract_strided_slice %5 {offsets = [0, 0], sizes = [2, 8], strides = [1, 1]} : vector<2x16xf32> to vector<2x8xf32>
    %7 = vector.extract_strided_slice %5 {offsets = [0, 8], sizes = [2, 8], strides = [1, 1]} : vector<2x16xf32> to vector<2x8xf32>
    %c0_5 = arith.constant 0 : index
    %c0_6 = arith.constant 0 : index
    %8 = vector.load %arg3[%c0_5, %c0_6] : memref<2x8xf32, #tpu.memory_space<vmem>>, vector<2x8xf32>
    %cst_7 = arith.constant 5.000000e-01 : f32
    %9 = vector.broadcast %cst_7 : f32 to vector<2x8xf32>
    %10 = arith.mulf %9, %6 : vector<2x8xf32>
    %11 = math.exp %10 : vector<2x8xf32>
    %12 = arith.mulf %8, %11 : vector<2x8xf32>
    %13 = arith.addf %12, %7 : vector<2x8xf32>
    %c0_8 = arith.constant 0 : index
    %c0_9 = arith.constant 0 : index
    %14 = vector.load %arg4[%c0_8, %c0_9] : memref<8x16xf32, #tpu.memory_space<vmem>>, vector<8x16xf32>
    %cst_10 = arith.constant dense<0.000000e+00> : vector<2x16xf32>
    %15 = tpu.matmul %13, %14, %cst_10 {dimension_numbers = #tpu.dot_dimension_numbers<[1], [0], [0], [1], [0, 0, 1, 1], [], []>} : vector<2x8xf32>, vector<8x16xf32>, vector<2x16xf32> -> vector<2x16xf32>
    %c0_11 = arith.constant 0 : index
    %c0_12 = arith.constant 0 : index
    %16 = vector.load %arg5[%c0_11, %c0_12] : memref<1x16xf32, #tpu.memory_space<vmem>>, vector<1x16xf32>
    %17 = vector.broadcast %16 : vector<1x16xf32> to vector<2x16xf32>
    %18 = arith.addf %15, %17 : vector<2x16xf32>
    %c0_13 = arith.constant 0 : index
    %c0_14 = arith.constant 0 : index
    %19 = vector.load %arg6[%c0_13, %c0_14] : memref<2x8xf32, #tpu.memory_space<vmem>>, vector<2x8xf32>
    tpu.vector_store %arg6[%c0_13, %c0_14], %6 {strides = array<i32>} : memref<2x8xf32, #tpu.memory_space<vmem>>, vector<2x8xf32>,
    %c0_15 = arith.constant 0 : index
    %c0_16 = arith.constant 0 : index
    %20 = vector.load %arg7[%c0_15, %c0_16] : memref<2x8xf32, #tpu.memory_space<vmem>>, vector<2x8xf32>
    tpu.vector_store %arg7[%c0_15, %c0_16], %7 {strides = array<i32>} : memref<2x8xf32, #tpu.memory_space<vmem>>, vector<2x8xf32>,
    %c0_17 = arith.constant 0 : index
    %c0_18 = arith.constant 0 : index
    %21 = vector.load %arg8[%c0_17, %c0_18] : memref<2x8xf32, #tpu.memory_space<vmem>>, vector<2x8xf32>
    tpu.vector_store %arg8[%c0_17, %c0_18], %13 {strides = array<i32>} : memref<2x8xf32, #tpu.memory_space<vmem>>, vector<2x8xf32>,
    %c0_19 = arith.constant 0 : index
    %c0_20 = arith.constant 0 : index
    %22 = vector.load %arg9[%c0_19, %c0_20] : memref<2x16xf32, #tpu.memory_space<vmem>>, vector<2x16xf32>
    tpu.vector_store %arg9[%c0_19, %c0_20], %18 {strides = array<i32>} : memref<2x16xf32, #tpu.memory_space<vmem>>, vector<2x16xf32>,
    return
  }
}

module attributes {stable_mosaic.version = 11 : i64} {
  func.func @_conv_kernel(%arg0: i32, %arg1: memref<1x14x10xf32, #tpu.memory_space<vmem>>, %arg2: memref<5x10x48xf32, #tpu.memory_space<vmem>>, %arg3: memref<1x48xf32, #tpu.memory_space<vmem>>, %arg4: memref<1x10x48xf32, #tpu.memory_space<vmem>>) attributes {dimension_semantics = [#tpu.dimension_semantics<parallel>], iteration_bounds = array<i64: 2>, scalar_prefetch = 0 : i64, scratch_operands = 0 : i64, tpu.core_type = #tpu.core_type<tc>, window_params = [{transform_indices = @transform_0, window_bounds = array<i64: 1, 14, 10>}, {pipeline_mode = #tpu.pipeline_mode<synchronous>, transform_indices = @transform_1, window_bounds = array<i64: 5, 10, 48>}, {pipeline_mode = #tpu.pipeline_mode<synchronous>, transform_indices = @transform_2, window_bounds = array<i64: 1, 48>}, {transform_indices = @transform_3, window_bounds = array<i64: 1, 10, 48>}]} {
    %c0 = arith.constant 0 : index
    %c0_0 = arith.constant 0 : index
    %c0_1 = arith.constant 0 : index
    %0 = vector.load %arg1[%c0, %c0_0, %c0_1] : memref<1x14x10xf32, #tpu.memory_space<vmem>>, vector<1x10x10xf32>
    %1 = vector.shape_cast %0 : vector<1x10x10xf32> to vector<10x10xf32>
    %c0_2 = arith.constant 0 : index
    %c0_3 = arith.constant 0 : index
    %c0_4 = arith.constant 0 : index
    %2 = vector.load %arg2[%c0_2, %c0_3, %c0_4] : memref<5x10x48xf32, #tpu.memory_space<vmem>>, vector<1x10x48xf32>
    %3 = vector.shape_cast %2 : vector<1x10x48xf32> to vector<10x48xf32>
    %cst = arith.constant dense<0.000000e+00> : vector<10x48xf32>
    %4 = tpu.matmul %1, %3, %cst {dimension_numbers = #tpu.dot_dimension_numbers<[1], [0], [0], [1], [0, 0, 1, 1], [], []>} : vector<10x10xf32>, vector<10x48xf32>, vector<10x48xf32> -> vector<10x48xf32>
    %c0_5 = arith.constant 0 : index
    %c1 = arith.constant 1 : index
    %c0_6 = arith.constant 0 : index
    %5 = vector.load %arg1[%c0_5, %c1, %c0_6] : memref<1x14x10xf32, #tpu.memory_space<vmem>>, vector<1x10x10xf32>
    %6 = vector.shape_cast %5 : vector<1x10x10xf32> to vector<10x10xf32>
    %c1_7 = arith.constant 1 : index
    %c0_8 = arith.constant 0 : index
    %c0_9 = arith.constant 0 : index
    %7 = vector.load %arg2[%c1_7, %c0_8, %c0_9] : memref<5x10x48xf32, #tpu.memory_space<vmem>>, vector<1x10x48xf32>
    %8 = vector.shape_cast %7 : vector<1x10x48xf32> to vector<10x48xf32>
    %cst_10 = arith.constant dense<0.000000e+00> : vector<10x48xf32>
    %9 = tpu.matmul %6, %8, %cst_10 {dimension_numbers = #tpu.dot_dimension_numbers<[1], [0], [0], [1], [0, 0, 1, 1], [], []>} : vector<10x10xf32>, vector<10x48xf32>, vector<10x48xf32> -> vector<10x48xf32>
    %10 = arith.addf %4, %9 : vector<10x48xf32>
    %c0_11 = arith.constant 0 : index
    %c2 = arith.constant 2 : index
    %c0_12 = arith.constant 0 : index
    %11 = vector.load %arg1[%c0_11, %c2, %c0_12] : memref<1x14x10xf32, #tpu.memory_space<vmem>>, vector<1x10x10xf32>
    %12 = vector.shape_cast %11 : vector<1x10x10xf32> to vector<10x10xf32>
    %c2_13 = arith.constant 2 : index
    %c0_14 = arith.constant 0 : index
    %c0_15 = arith.constant 0 : index
    %13 = vector.load %arg2[%c2_13, %c0_14, %c0_15] : memref<5x10x48xf32, #tpu.memory_space<vmem>>, vector<1x10x48xf32>
    %14 = vector.shape_cast %13 : vector<1x10x48xf32> to vector<10x48xf32>
    %cst_16 = arith.constant dense<0.000000e+00> : vector<10x48xf32>
    %15 = tpu.matmul %12, %14, %cst_16 {dimension_numbers = #tpu.dot_dimension_numbers<[1], [0], [0], [1], [0, 0, 1, 1], [], []>} : vector<10x10xf32>, vector<10x48xf32>, vector<10x48xf32> -> vector<10x48xf32>
    %16 = arith.addf %10, %15 : vector<10x48xf32>
    %c0_17 = arith.constant 0 : index
    %c3 = arith.constant 3 : index
    %c0_18 = arith.constant 0 : index
    %17 = vector.load %arg1[%c0_17, %c3, %c0_18] : memref<1x14x10xf32, #tpu.memory_space<vmem>>, vector<1x10x10xf32>
    %18 = vector.shape_cast %17 : vector<1x10x10xf32> to vector<10x10xf32>
    %c3_19 = arith.constant 3 : index
    %c0_20 = arith.constant 0 : index
    %c0_21 = arith.constant 0 : index
    %19 = vector.load %arg2[%c3_19, %c0_20, %c0_21] : memref<5x10x48xf32, #tpu.memory_space<vmem>>, vector<1x10x48xf32>
    %20 = vector.shape_cast %19 : vector<1x10x48xf32> to vector<10x48xf32>
    %cst_22 = arith.constant dense<0.000000e+00> : vector<10x48xf32>
    %21 = tpu.matmul %18, %20, %cst_22 {dimension_numbers = #tpu.dot_dimension_numbers<[1], [0], [0], [1], [0, 0, 1, 1], [], []>} : vector<10x10xf32>, vector<10x48xf32>, vector<10x48xf32> -> vector<10x48xf32>
    %22 = arith.addf %16, %21 : vector<10x48xf32>
    %c0_23 = arith.constant 0 : index
    %c4 = arith.constant 4 : index
    %c0_24 = arith.constant 0 : index
    %23 = vector.load %arg1[%c0_23, %c4, %c0_24] : memref<1x14x10xf32, #tpu.memory_space<vmem>>, vector<1x10x10xf32>
    %24 = vector.shape_cast %23 : vector<1x10x10xf32> to vector<10x10xf32>
    %c4_25 = arith.constant 4 : index
    %c0_26 = arith.constant 0 : index
    %c0_27 = arith.constant 0 : index
    %25 = vector.load %arg2[%c4_25, %c0_26, %c0_27] : memref<5x10x48xf32, #tpu.memory_space<vmem>>, vector<1x10x48xf32>
    %26 = vector.shape_cast %25 : vector<1x10x48xf32> to vector<10x48xf32>
    %cst_28 = arith.constant dense<0.000000e+00> : vector<10x48xf32>
    %27 = tpu.matmul %24, %26, %cst_28 {dimension_numbers = #tpu.dot_dimension_numbers<[1], [0], [0], [1], [0, 0, 1, 1], [], []>} : vector<10x10xf32>, vector<10x48xf32>, vector<10x48xf32> -> vector<10x48xf32>
    %28 = arith.addf %22, %27 : vector<10x48xf32>
    %c0_29 = arith.constant 0 : index
    %c0_30 = arith.constant 0 : index
    %29 = vector.load %arg3[%c0_29, %c0_30] : memref<1x48xf32, #tpu.memory_space<vmem>>, vector<1x48xf32>
    %30 = vector.broadcast %29 : vector<1x48xf32> to vector<10x48xf32>
    %31 = arith.addf %28, %30 : vector<10x48xf32>
    %cst_31 = arith.constant 0.000000e+00 : f32
    %32 = vector.broadcast %cst_31 : f32 to vector<10x48xf32>
    %33 = arith.maximumf %31, %32 : vector<10x48xf32>
    %c0_32 = arith.constant 0 : index
    %c0_33 = arith.constant 0 : index
    %c0_34 = arith.constant 0 : index
    %34 = vector.load %arg4[%c0_32, %c0_33, %c0_34] : memref<1x10x48xf32, #tpu.memory_space<vmem>>, vector<1x10x48xf32>
    %35 = vector.shape_cast %34 : vector<1x10x48xf32> to vector<10x48xf32>
    %36 = vector.shape_cast %33 : vector<10x48xf32> to vector<1x10x48xf32>
    tpu.vector_store %arg4[%c0_32, %c0_33, %c0_34], %36 {strides = array<i32>} : memref<1x10x48xf32, #tpu.memory_space<vmem>>, vector<1x10x48xf32>,
    return
  }
  func.func @transform_0(%arg0: i32) -> (i32, i32, i32) {
    %c0_i32 = arith.constant 0 : i32
    %c0_i32_0 = arith.constant 0 : i32
    %c0_i32_1 = arith.constant 0 : i32
    return %arg0, %c0_i32, %c0_i32_0 : i32, i32, i32
  }
  func.func @transform_1(%arg0: i32) -> (i32, i32, i32) {
    %c0_i32 = arith.constant 0 : i32
    %c0_i32_0 = arith.constant 0 : i32
    %c0_i32_1 = arith.constant 0 : i32
    %c0_i32_2 = arith.constant 0 : i32
    return %c0_i32, %c0_i32_0, %c0_i32_1 : i32, i32, i32
  }
  func.func @transform_2(%arg0: i32) -> (i32, i32) {
    %c0_i32 = arith.constant 0 : i32
    %c0_i32_0 = arith.constant 0 : i32
    %c0_i32_1 = arith.constant 0 : i32
    return %c0_i32, %c0_i32_0 : i32, i32
  }
  func.func @transform_3(%arg0: i32) -> (i32, i32, i32) {
    %c0_i32 = arith.constant 0 : i32
    %c0_i32_0 = arith.constant 0 : i32
    %c0_i32_1 = arith.constant 0 : i32
    return %arg0, %c0_i32, %c0_i32_0 : i32, i32, i32
  }
}

module attributes {stable_mosaic.version = 11 : i64} {
  func.func @_conv_kernel(%arg0: i32, %arg1: memref<1x21x136xf32, #tpu.memory_space<vmem>>, %arg2: memref<5x136x104xf32, #tpu.memory_space<vmem>>, %arg3: memref<1x104xf32, #tpu.memory_space<vmem>>, %arg4: memref<1x17x104xf32, #tpu.memory_space<vmem>>) attributes {dimension_semantics = [#tpu.dimension_semantics<parallel>], iteration_bounds = array<i64: 2>, scalar_prefetch = 0 : i64, scratch_operands = 0 : i64, tpu.core_type = #tpu.core_type<tc>, window_params = [{transform_indices = @transform_0, window_bounds = array<i64: 1, 21, 136>}, {pipeline_mode = #tpu.pipeline_mode<synchronous>, transform_indices = @transform_1, window_bounds = array<i64: 5, 136, 104>}, {pipeline_mode = #tpu.pipeline_mode<synchronous>, transform_indices = @transform_2, window_bounds = array<i64: 1, 104>}, {transform_indices = @transform_3, window_bounds = array<i64: 1, 17, 104>}]} {
    %c0 = arith.constant 0 : index
    %c0_0 = arith.constant 0 : index
    %c0_1 = arith.constant 0 : index
    %0 = vector.load %arg1[%c0, %c0_0, %c0_1] : memref<1x21x136xf32, #tpu.memory_space<vmem>>, vector<1x17x136xf32>
    %1 = vector.shape_cast %0 : vector<1x17x136xf32> to vector<17x136xf32>
    %c0_2 = arith.constant 0 : index
    %c0_3 = arith.constant 0 : index
    %c0_4 = arith.constant 0 : index
    %2 = vector.load %arg2[%c0_2, %c0_3, %c0_4] : memref<5x136x104xf32, #tpu.memory_space<vmem>>, vector<1x136x104xf32>
    %3 = vector.shape_cast %2 : vector<1x136x104xf32> to vector<136x104xf32>
    %cst = arith.constant dense<0.000000e+00> : vector<17x104xf32>
    %4 = tpu.matmul %1, %3, %cst {dimension_numbers = #tpu.dot_dimension_numbers<[1], [0], [0], [1], [0, 0, 1, 1], [], []>} : vector<17x136xf32>, vector<136x104xf32>, vector<17x104xf32> -> vector<17x104xf32>
    %c0_5 = arith.constant 0 : index
    %c1 = arith.constant 1 : index
    %c0_6 = arith.constant 0 : index
    %5 = vector.load %arg1[%c0_5, %c1, %c0_6] : memref<1x21x136xf32, #tpu.memory_space<vmem>>, vector<1x17x136xf32>
    %6 = vector.shape_cast %5 : vector<1x17x136xf32> to vector<17x136xf32>
    %c1_7 = arith.constant 1 : index
    %c0_8 = arith.constant 0 : index
    %c0_9 = arith.constant 0 : index
    %7 = vector.load %arg2[%c1_7, %c0_8, %c0_9] : memref<5x136x104xf32, #tpu.memory_space<vmem>>, vector<1x136x104xf32>
    %8 = vector.shape_cast %7 : vector<1x136x104xf32> to vector<136x104xf32>
    %cst_10 = arith.constant dense<0.000000e+00> : vector<17x104xf32>
    %9 = tpu.matmul %6, %8, %cst_10 {dimension_numbers = #tpu.dot_dimension_numbers<[1], [0], [0], [1], [0, 0, 1, 1], [], []>} : vector<17x136xf32>, vector<136x104xf32>, vector<17x104xf32> -> vector<17x104xf32>
    %10 = arith.addf %4, %9 : vector<17x104xf32>
    %c0_11 = arith.constant 0 : index
    %c2 = arith.constant 2 : index
    %c0_12 = arith.constant 0 : index
    %11 = vector.load %arg1[%c0_11, %c2, %c0_12] : memref<1x21x136xf32, #tpu.memory_space<vmem>>, vector<1x17x136xf32>
    %12 = vector.shape_cast %11 : vector<1x17x136xf32> to vector<17x136xf32>
    %c2_13 = arith.constant 2 : index
    %c0_14 = arith.constant 0 : index
    %c0_15 = arith.constant 0 : index
    %13 = vector.load %arg2[%c2_13, %c0_14, %c0_15] : memref<5x136x104xf32, #tpu.memory_space<vmem>>, vector<1x136x104xf32>
    %14 = vector.shape_cast %13 : vector<1x136x104xf32> to vector<136x104xf32>
    %cst_16 = arith.constant dense<0.000000e+00> : vector<17x104xf32>
    %15 = tpu.matmul %12, %14, %cst_16 {dimension_numbers = #tpu.dot_dimension_numbers<[1], [0], [0], [1], [0, 0, 1, 1], [], []>} : vector<17x136xf32>, vector<136x104xf32>, vector<17x104xf32> -> vector<17x104xf32>
    %16 = arith.addf %10, %15 : vector<17x104xf32>
    %c0_17 = arith.constant 0 : index
    %c3 = arith.constant 3 : index
    %c0_18 = arith.constant 0 : index
    %17 = vector.load %arg1[%c0_17, %c3, %c0_18] : memref<1x21x136xf32, #tpu.memory_space<vmem>>, vector<1x17x136xf32>
    %18 = vector.shape_cast %17 : vector<1x17x136xf32> to vector<17x136xf32>
    %c3_19 = arith.constant 3 : index
    %c0_20 = arith.constant 0 : index
    %c0_21 = arith.constant 0 : index
    %19 = vector.load %arg2[%c3_19, %c0_20, %c0_21] : memref<5x136x104xf32, #tpu.memory_space<vmem>>, vector<1x136x104xf32>
    %20 = vector.shape_cast %19 : vector<1x136x104xf32> to vector<136x104xf32>
    %cst_22 = arith.constant dense<0.000000e+00> : vector<17x104xf32>
    %21 = tpu.matmul %18, %20, %cst_22 {dimension_numbers = #tpu.dot_dimension_numbers<[1], [0], [0], [1], [0, 0, 1, 1], [], []>} : vector<17x136xf32>, vector<136x104xf32>, vector<17x104xf32> -> vector<17x104xf32>
    %22 = arith.addf %16, %21 : vector<17x104xf32>
    %c0_23 = arith.constant 0 : index
    %c4 = arith.constant 4 : index
    %c0_24 = arith.constant 0 : index
    %23 = vector.load %arg1[%c0_23, %c4, %c0_24] : memref<1x21x136xf32, #tpu.memory_space<vmem>>, vector<1x17x136xf32>
    %24 = vector.shape_cast %23 : vector<1x17x136xf32> to vector<17x136xf32>
    %c4_25 = arith.constant 4 : index
    %c0_26 = arith.constant 0 : index
    %c0_27 = arith.constant 0 : index
    %25 = vector.load %arg2[%c4_25, %c0_26, %c0_27] : memref<5x136x104xf32, #tpu.memory_space<vmem>>, vector<1x136x104xf32>
    %26 = vector.shape_cast %25 : vector<1x136x104xf32> to vector<136x104xf32>
    %cst_28 = arith.constant dense<0.000000e+00> : vector<17x104xf32>
    %27 = tpu.matmul %24, %26, %cst_28 {dimension_numbers = #tpu.dot_dimension_numbers<[1], [0], [0], [1], [0, 0, 1, 1], [], []>} : vector<17x136xf32>, vector<136x104xf32>, vector<17x104xf32> -> vector<17x104xf32>
    %28 = arith.addf %22, %27 : vector<17x104xf32>
    %c0_29 = arith.constant 0 : index
    %c0_30 = arith.constant 0 : index
    %29 = vector.load %arg3[%c0_29, %c0_30] : memref<1x104xf32, #tpu.memory_space<vmem>>, vector<1x104xf32>
    %30 = vector.broadcast %29 : vector<1x104xf32> to vector<17x104xf32>
    %31 = arith.addf %28, %30 : vector<17x104xf32>
    %cst_31 = arith.constant 0.000000e+00 : f32
    %32 = vector.broadcast %cst_31 : f32 to vector<17x104xf32>
    %33 = arith.maximumf %31, %32 : vector<17x104xf32>
    %c0_32 = arith.constant 0 : index
    %c0_33 = arith.constant 0 : index
    %c0_34 = arith.constant 0 : index
    %34 = vector.load %arg4[%c0_32, %c0_33, %c0_34] : memref<1x17x104xf32, #tpu.memory_space<vmem>>, vector<1x17x104xf32>
    %35 = vector.shape_cast %34 : vector<1x17x104xf32> to vector<17x104xf32>
    %36 = vector.shape_cast %33 : vector<17x104xf32> to vector<1x17x104xf32>
    tpu.vector_store %arg4[%c0_32, %c0_33, %c0_34], %36 {strides = array<i32>} : memref<1x17x104xf32, #tpu.memory_space<vmem>>, vector<1x17x104xf32>,
    return
  }
  func.func @transform_0(%arg0: i32) -> (i32, i32, i32) {
    %c0_i32 = arith.constant 0 : i32
    %c0_i32_0 = arith.constant 0 : i32
    %c0_i32_1 = arith.constant 0 : i32
    return %arg0, %c0_i32, %c0_i32_0 : i32, i32, i32
  }
  func.func @transform_1(%arg0: i32) -> (i32, i32, i32) {
    %c0_i32 = arith.constant 0 : i32
    %c0_i32_0 = arith.constant 0 : i32
    %c0_i32_1 = arith.constant 0 : i32
    %c0_i32_2 = arith.constant 0 : i32
    return %c0_i32, %c0_i32_0, %c0_i32_1 : i32, i32, i32
  }
  func.func @transform_2(%arg0: i32) -> (i32, i32) {
    %c0_i32 = arith.constant 0 : i32
    %c0_i32_0 = arith.constant 0 : i32
    %c0_i32_1 = arith.constant 0 : i32
    return %c0_i32, %c0_i32_0 : i32, i32
  }
  func.func @transform_3(%arg0: i32) -> (i32, i32, i32) {
    %c0_i32 = arith.constant 0 : i32
    %c0_i32_0 = arith.constant 0 : i32
    %c0_i32_1 = arith.constant 0 : i32
    return %arg0, %c0_i32, %c0_i32_0 : i32, i32, i32
  }
}

module attributes {stable_mosaic.version = 11 : i64} {
  func.func @_conv_kernel(%arg0: i32, %arg1: memref<1x23x152xf32, #tpu.memory_space<vmem>>, %arg2: memref<5x152x120xf32, #tpu.memory_space<vmem>>, %arg3: memref<1x120xf32, #tpu.memory_space<vmem>>, %arg4: memref<1x19x120xf32, #tpu.memory_space<vmem>>) attributes {dimension_semantics = [#tpu.dimension_semantics<parallel>], iteration_bounds = array<i64: 2>, scalar_prefetch = 0 : i64, scratch_operands = 0 : i64, tpu.core_type = #tpu.core_type<tc>, window_params = [{transform_indices = @transform_0, window_bounds = array<i64: 1, 23, 152>}, {pipeline_mode = #tpu.pipeline_mode<synchronous>, transform_indices = @transform_1, window_bounds = array<i64: 5, 152, 120>}, {pipeline_mode = #tpu.pipeline_mode<synchronous>, transform_indices = @transform_2, window_bounds = array<i64: 1, 120>}, {transform_indices = @transform_3, window_bounds = array<i64: 1, 19, 120>}]} {
    %c0 = arith.constant 0 : index
    %c0_0 = arith.constant 0 : index
    %c0_1 = arith.constant 0 : index
    %0 = vector.load %arg1[%c0, %c0_0, %c0_1] : memref<1x23x152xf32, #tpu.memory_space<vmem>>, vector<1x19x152xf32>
    %1 = vector.shape_cast %0 : vector<1x19x152xf32> to vector<19x152xf32>
    %c0_2 = arith.constant 0 : index
    %c0_3 = arith.constant 0 : index
    %c0_4 = arith.constant 0 : index
    %2 = vector.load %arg2[%c0_2, %c0_3, %c0_4] : memref<5x152x120xf32, #tpu.memory_space<vmem>>, vector<1x152x120xf32>
    %3 = vector.shape_cast %2 : vector<1x152x120xf32> to vector<152x120xf32>
    %cst = arith.constant dense<0.000000e+00> : vector<19x120xf32>
    %4 = tpu.matmul %1, %3, %cst {dimension_numbers = #tpu.dot_dimension_numbers<[1], [0], [0], [1], [0, 0, 1, 1], [], []>} : vector<19x152xf32>, vector<152x120xf32>, vector<19x120xf32> -> vector<19x120xf32>
    %c0_5 = arith.constant 0 : index
    %c1 = arith.constant 1 : index
    %c0_6 = arith.constant 0 : index
    %5 = vector.load %arg1[%c0_5, %c1, %c0_6] : memref<1x23x152xf32, #tpu.memory_space<vmem>>, vector<1x19x152xf32>
    %6 = vector.shape_cast %5 : vector<1x19x152xf32> to vector<19x152xf32>
    %c1_7 = arith.constant 1 : index
    %c0_8 = arith.constant 0 : index
    %c0_9 = arith.constant 0 : index
    %7 = vector.load %arg2[%c1_7, %c0_8, %c0_9] : memref<5x152x120xf32, #tpu.memory_space<vmem>>, vector<1x152x120xf32>
    %8 = vector.shape_cast %7 : vector<1x152x120xf32> to vector<152x120xf32>
    %cst_10 = arith.constant dense<0.000000e+00> : vector<19x120xf32>
    %9 = tpu.matmul %6, %8, %cst_10 {dimension_numbers = #tpu.dot_dimension_numbers<[1], [0], [0], [1], [0, 0, 1, 1], [], []>} : vector<19x152xf32>, vector<152x120xf32>, vector<19x120xf32> -> vector<19x120xf32>
    %10 = arith.addf %4, %9 : vector<19x120xf32>
    %c0_11 = arith.constant 0 : index
    %c2 = arith.constant 2 : index
    %c0_12 = arith.constant 0 : index
    %11 = vector.load %arg1[%c0_11, %c2, %c0_12] : memref<1x23x152xf32, #tpu.memory_space<vmem>>, vector<1x19x152xf32>
    %12 = vector.shape_cast %11 : vector<1x19x152xf32> to vector<19x152xf32>
    %c2_13 = arith.constant 2 : index
    %c0_14 = arith.constant 0 : index
    %c0_15 = arith.constant 0 : index
    %13 = vector.load %arg2[%c2_13, %c0_14, %c0_15] : memref<5x152x120xf32, #tpu.memory_space<vmem>>, vector<1x152x120xf32>
    %14 = vector.shape_cast %13 : vector<1x152x120xf32> to vector<152x120xf32>
    %cst_16 = arith.constant dense<0.000000e+00> : vector<19x120xf32>
    %15 = tpu.matmul %12, %14, %cst_16 {dimension_numbers = #tpu.dot_dimension_numbers<[1], [0], [0], [1], [0, 0, 1, 1], [], []>} : vector<19x152xf32>, vector<152x120xf32>, vector<19x120xf32> -> vector<19x120xf32>
    %16 = arith.addf %10, %15 : vector<19x120xf32>
    %c0_17 = arith.constant 0 : index
    %c3 = arith.constant 3 : index
    %c0_18 = arith.constant 0 : index
    %17 = vector.load %arg1[%c0_17, %c3, %c0_18] : memref<1x23x152xf32, #tpu.memory_space<vmem>>, vector<1x19x152xf32>
    %18 = vector.shape_cast %17 : vector<1x19x152xf32> to vector<19x152xf32>
    %c3_19 = arith.constant 3 : index
    %c0_20 = arith.constant 0 : index
    %c0_21 = arith.constant 0 : index
    %19 = vector.load %arg2[%c3_19, %c0_20, %c0_21] : memref<5x152x120xf32, #tpu.memory_space<vmem>>, vector<1x152x120xf32>
    %20 = vector.shape_cast %19 : vector<1x152x120xf32> to vector<152x120xf32>
    %cst_22 = arith.constant dense<0.000000e+00> : vector<19x120xf32>
    %21 = tpu.matmul %18, %20, %cst_22 {dimension_numbers = #tpu.dot_dimension_numbers<[1], [0], [0], [1], [0, 0, 1, 1], [], []>} : vector<19x152xf32>, vector<152x120xf32>, vector<19x120xf32> -> vector<19x120xf32>
    %22 = arith.addf %16, %21 : vector<19x120xf32>
    %c0_23 = arith.constant 0 : index
    %c4 = arith.constant 4 : index
    %c0_24 = arith.constant 0 : index
    %23 = vector.load %arg1[%c0_23, %c4, %c0_24] : memref<1x23x152xf32, #tpu.memory_space<vmem>>, vector<1x19x152xf32>
    %24 = vector.shape_cast %23 : vector<1x19x152xf32> to vector<19x152xf32>
    %c4_25 = arith.constant 4 : index
    %c0_26 = arith.constant 0 : index
    %c0_27 = arith.constant 0 : index
    %25 = vector.load %arg2[%c4_25, %c0_26, %c0_27] : memref<5x152x120xf32, #tpu.memory_space<vmem>>, vector<1x152x120xf32>
    %26 = vector.shape_cast %25 : vector<1x152x120xf32> to vector<152x120xf32>
    %cst_28 = arith.constant dense<0.000000e+00> : vector<19x120xf32>
    %27 = tpu.matmul %24, %26, %cst_28 {dimension_numbers = #tpu.dot_dimension_numbers<[1], [0], [0], [1], [0, 0, 1, 1], [], []>} : vector<19x152xf32>, vector<152x120xf32>, vector<19x120xf32> -> vector<19x120xf32>
    %28 = arith.addf %22, %27 : vector<19x120xf32>
    %c0_29 = arith.constant 0 : index
    %c0_30 = arith.constant 0 : index
    %29 = vector.load %arg3[%c0_29, %c0_30] : memref<1x120xf32, #tpu.memory_space<vmem>>, vector<1x120xf32>
    %30 = vector.broadcast %29 : vector<1x120xf32> to vector<19x120xf32>
    %31 = arith.addf %28, %30 : vector<19x120xf32>
    %cst_31 = arith.constant 0.000000e+00 : f32
    %32 = vector.broadcast %cst_31 : f32 to vector<19x120xf32>
    %33 = arith.maximumf %31, %32 : vector<19x120xf32>
    %c0_32 = arith.constant 0 : index
    %c0_33 = arith.constant 0 : index
    %c0_34 = arith.constant 0 : index
    %34 = vector.load %arg4[%c0_32, %c0_33, %c0_34] : memref<1x19x120xf32, #tpu.memory_space<vmem>>, vector<1x19x120xf32>
    %35 = vector.shape_cast %34 : vector<1x19x120xf32> to vector<19x120xf32>
    %36 = vector.shape_cast %33 : vector<19x120xf32> to vector<1x19x120xf32>
    tpu.vector_store %arg4[%c0_32, %c0_33, %c0_34], %36 {strides = array<i32>} : memref<1x19x120xf32, #tpu.memory_space<vmem>>, vector<1x19x120xf32>,
    return
  }
  func.func @transform_0(%arg0: i32) -> (i32, i32, i32) {
    %c0_i32 = arith.constant 0 : i32
    %c0_i32_0 = arith.constant 0 : i32
    %c0_i32_1 = arith.constant 0 : i32
    return %arg0, %c0_i32, %c0_i32_0 : i32, i32, i32
  }
  func.func @transform_1(%arg0: i32) -> (i32, i32, i32) {
    %c0_i32 = arith.constant 0 : i32
    %c0_i32_0 = arith.constant 0 : i32
    %c0_i32_1 = arith.constant 0 : i32
    %c0_i32_2 = arith.constant 0 : i32
    return %c0_i32, %c0_i32_0, %c0_i32_1 : i32, i32, i32
  }
  func.func @transform_2(%arg0: i32) -> (i32, i32) {
    %c0_i32 = arith.constant 0 : i32
    %c0_i32_0 = arith.constant 0 : i32
    %c0_i32_1 = arith.constant 0 : i32
    return %c0_i32, %c0_i32_0 : i32, i32
  }
  func.func @transform_3(%arg0: i32) -> (i32, i32, i32) {
    %c0_i32 = arith.constant 0 : i32
    %c0_i32_0 = arith.constant 0 : i32
    %c0_i32_1 = arith.constant 0 : i32
    return %arg0, %c0_i32, %c0_i32_0 : i32, i32, i32
  }
}

module attributes {stable_mosaic.version = 11 : i64} {
  func.func @_conv_kernel(%arg0: i32, %arg1: memref<1x25x168xf32, #tpu.memory_space<vmem>>, %arg2: memref<5x168x17xf32, #tpu.memory_space<vmem>>, %arg3: memref<1x17xf32, #tpu.memory_space<vmem>>, %arg4: memref<1x21x17xf32, #tpu.memory_space<vmem>>) attributes {dimension_semantics = [#tpu.dimension_semantics<parallel>], iteration_bounds = array<i64: 2>, scalar_prefetch = 0 : i64, scratch_operands = 0 : i64, tpu.core_type = #tpu.core_type<tc>, window_params = [{transform_indices = @transform_0, window_bounds = array<i64: 1, 25, 168>}, {pipeline_mode = #tpu.pipeline_mode<synchronous>, transform_indices = @transform_1, window_bounds = array<i64: 5, 168, 17>}, {pipeline_mode = #tpu.pipeline_mode<synchronous>, transform_indices = @transform_2, window_bounds = array<i64: 1, 17>}, {transform_indices = @transform_3, window_bounds = array<i64: 1, 21, 17>}]} {
    %c0 = arith.constant 0 : index
    %c0_0 = arith.constant 0 : index
    %c0_1 = arith.constant 0 : index
    %0 = vector.load %arg1[%c0, %c0_0, %c0_1] : memref<1x25x168xf32, #tpu.memory_space<vmem>>, vector<1x21x168xf32>
    %1 = vector.shape_cast %0 : vector<1x21x168xf32> to vector<21x168xf32>
    %c0_2 = arith.constant 0 : index
    %c0_3 = arith.constant 0 : index
    %c0_4 = arith.constant 0 : index
    %2 = vector.load %arg2[%c0_2, %c0_3, %c0_4] : memref<5x168x17xf32, #tpu.memory_space<vmem>>, vector<1x168x17xf32>
    %3 = vector.shape_cast %2 : vector<1x168x17xf32> to vector<168x17xf32>
    %cst = arith.constant dense<0.000000e+00> : vector<21x17xf32>
    %4 = tpu.matmul %1, %3, %cst {dimension_numbers = #tpu.dot_dimension_numbers<[1], [0], [0], [1], [0, 0, 1, 1], [], []>} : vector<21x168xf32>, vector<168x17xf32>, vector<21x17xf32> -> vector<21x17xf32>
    %c0_5 = arith.constant 0 : index
    %c1 = arith.constant 1 : index
    %c0_6 = arith.constant 0 : index
    %5 = vector.load %arg1[%c0_5, %c1, %c0_6] : memref<1x25x168xf32, #tpu.memory_space<vmem>>, vector<1x21x168xf32>
    %6 = vector.shape_cast %5 : vector<1x21x168xf32> to vector<21x168xf32>
    %c1_7 = arith.constant 1 : index
    %c0_8 = arith.constant 0 : index
    %c0_9 = arith.constant 0 : index
    %7 = vector.load %arg2[%c1_7, %c0_8, %c0_9] : memref<5x168x17xf32, #tpu.memory_space<vmem>>, vector<1x168x17xf32>
    %8 = vector.shape_cast %7 : vector<1x168x17xf32> to vector<168x17xf32>
    %cst_10 = arith.constant dense<0.000000e+00> : vector<21x17xf32>
    %9 = tpu.matmul %6, %8, %cst_10 {dimension_numbers = #tpu.dot_dimension_numbers<[1], [0], [0], [1], [0, 0, 1, 1], [], []>} : vector<21x168xf32>, vector<168x17xf32>, vector<21x17xf32> -> vector<21x17xf32>
    %10 = arith.addf %4, %9 : vector<21x17xf32>
    %c0_11 = arith.constant 0 : index
    %c2 = arith.constant 2 : index
    %c0_12 = arith.constant 0 : index
    %11 = vector.load %arg1[%c0_11, %c2, %c0_12] : memref<1x25x168xf32, #tpu.memory_space<vmem>>, vector<1x21x168xf32>
    %12 = vector.shape_cast %11 : vector<1x21x168xf32> to vector<21x168xf32>
    %c2_13 = arith.constant 2 : index
    %c0_14 = arith.constant 0 : index
    %c0_15 = arith.constant 0 : index
    %13 = vector.load %arg2[%c2_13, %c0_14, %c0_15] : memref<5x168x17xf32, #tpu.memory_space<vmem>>, vector<1x168x17xf32>
    %14 = vector.shape_cast %13 : vector<1x168x17xf32> to vector<168x17xf32>
    %cst_16 = arith.constant dense<0.000000e+00> : vector<21x17xf32>
    %15 = tpu.matmul %12, %14, %cst_16 {dimension_numbers = #tpu.dot_dimension_numbers<[1], [0], [0], [1], [0, 0, 1, 1], [], []>} : vector<21x168xf32>, vector<168x17xf32>, vector<21x17xf32> -> vector<21x17xf32>
    %16 = arith.addf %10, %15 : vector<21x17xf32>
    %c0_17 = arith.constant 0 : index
    %c3 = arith.constant 3 : index
    %c0_18 = arith.constant 0 : index
    %17 = vector.load %arg1[%c0_17, %c3, %c0_18] : memref<1x25x168xf32, #tpu.memory_space<vmem>>, vector<1x21x168xf32>
    %18 = vector.shape_cast %17 : vector<1x21x168xf32> to vector<21x168xf32>
    %c3_19 = arith.constant 3 : index
    %c0_20 = arith.constant 0 : index
    %c0_21 = arith.constant 0 : index
    %19 = vector.load %arg2[%c3_19, %c0_20, %c0_21] : memref<5x168x17xf32, #tpu.memory_space<vmem>>, vector<1x168x17xf32>
    %20 = vector.shape_cast %19 : vector<1x168x17xf32> to vector<168x17xf32>
    %cst_22 = arith.constant dense<0.000000e+00> : vector<21x17xf32>
    %21 = tpu.matmul %18, %20, %cst_22 {dimension_numbers = #tpu.dot_dimension_numbers<[1], [0], [0], [1], [0, 0, 1, 1], [], []>} : vector<21x168xf32>, vector<168x17xf32>, vector<21x17xf32> -> vector<21x17xf32>
    %22 = arith.addf %16, %21 : vector<21x17xf32>
    %c0_23 = arith.constant 0 : index
    %c4 = arith.constant 4 : index
    %c0_24 = arith.constant 0 : index
    %23 = vector.load %arg1[%c0_23, %c4, %c0_24] : memref<1x25x168xf32, #tpu.memory_space<vmem>>, vector<1x21x168xf32>
    %24 = vector.shape_cast %23 : vector<1x21x168xf32> to vector<21x168xf32>
    %c4_25 = arith.constant 4 : index
    %c0_26 = arith.constant 0 : index
    %c0_27 = arith.constant 0 : index
    %25 = vector.load %arg2[%c4_25, %c0_26, %c0_27] : memref<5x168x17xf32, #tpu.memory_space<vmem>>, vector<1x168x17xf32>
    %26 = vector.shape_cast %25 : vector<1x168x17xf32> to vector<168x17xf32>
    %cst_28 = arith.constant dense<0.000000e+00> : vector<21x17xf32>
    %27 = tpu.matmul %24, %26, %cst_28 {dimension_numbers = #tpu.dot_dimension_numbers<[1], [0], [0], [1], [0, 0, 1, 1], [], []>} : vector<21x168xf32>, vector<168x17xf32>, vector<21x17xf32> -> vector<21x17xf32>
    %28 = arith.addf %22, %27 : vector<21x17xf32>
    %c0_29 = arith.constant 0 : index
    %c0_30 = arith.constant 0 : index
    %29 = vector.load %arg3[%c0_29, %c0_30] : memref<1x17xf32, #tpu.memory_space<vmem>>, vector<1x17xf32>
    %30 = vector.broadcast %29 : vector<1x17xf32> to vector<21x17xf32>
    %31 = arith.addf %28, %30 : vector<21x17xf32>
    %c0_31 = arith.constant 0 : index
    %c0_32 = arith.constant 0 : index
    %c0_33 = arith.constant 0 : index
    %32 = vector.load %arg4[%c0_31, %c0_32, %c0_33] : memref<1x21x17xf32, #tpu.memory_space<vmem>>, vector<1x21x17xf32>
    %33 = vector.shape_cast %32 : vector<1x21x17xf32> to vector<21x17xf32>
    %34 = vector.shape_cast %31 : vector<21x17xf32> to vector<1x21x17xf32>
    tpu.vector_store %arg4[%c0_31, %c0_32, %c0_33], %34 {strides = array<i32>} : memref<1x21x17xf32, #tpu.memory_space<vmem>>, vector<1x21x17xf32>,
    return
  }
  func.func @transform_0(%arg0: i32) -> (i32, i32, i32) {
    %c0_i32 = arith.constant 0 : i32
    %c0_i32_0 = arith.constant 0 : i32
    %c0_i32_1 = arith.constant 0 : i32
    return %arg0, %c0_i32, %c0_i32_0 : i32, i32, i32
  }
  func.func @transform_1(%arg0: i32) -> (i32, i32, i32) {
    %c0_i32 = arith.constant 0 : i32
    %c0_i32_0 = arith.constant 0 : i32
    %c0_i32_1 = arith.constant 0 : i32
    %c0_i32_2 = arith.constant 0 : i32
    return %c0_i32, %c0_i32_0, %c0_i32_1 : i32, i32, i32
  }
  func.func @transform_2(%arg0: i32) -> (i32, i32) {
    %c0_i32 = arith.constant 0 : i32
    %c0_i32_0 = arith.constant 0 : i32
    %c0_i32_1 = arith.constant 0 : i32
    return %c0_i32, %c0_i32_0 : i32, i32
  }
  func.func @transform_3(%arg0: i32) -> (i32, i32, i32) {
    %c0_i32 = arith.constant 0 : i32
    %c0_i32_0 = arith.constant 0 : i32
    %c0_i32_1 = arith.constant 0 : i32
    return %arg0, %c0_i32, %c0_i32_0 : i32, i32, i32
  }
}

</mosaic_0001>

<llo_original>
// kernel: cvae_forward.9
$region0: #{cvae_forward.9}
  #allocation0 [shape = 'u32[]', space=smem, size = 0x4, offset = 0x4, fixed_abs, tag = 'smem constant byte address 0x4 - core index']
  #allocation1 [shape = 'u32[144,128]{1,0:T(1,128)}', space=vmem, size = 0x12000, scoped, tag = 'internal scratch']
  %s0 = inlined_call_operand.vmem [shape: f32[2,23,19], index: 0, kind: input, shape index: {}]
  %s1 = inlined_call_operand.vmem [shape: f32[5,19,120], index: 1, kind: input, shape index: {}]
  %s2 = inlined_call_operand.vmem [shape: f32[1,120], index: 2, kind: input, shape index: {}]
  %s3 = inlined_call_operand.vmem [shape: f32[2,19,120], index: 3, kind: output, shape index: {}]
  %s4 = sld [smem:[#allocation0]]
  $region45: #{cvae_forward.9} parent=0
    _
  %s6 = ssub.s32 1, %s4
  %s7 = scalar_select 0, %s6, %s4
  loop: start=0, step=1, limit=4
  $region2: #{cvae_forward.9} parent=0 // loop_pre_header
    _
  $region3: #{cvae_forward.9} parent=0 // loop_header
    %s9 = sphi 0, %s13
    %p10 = scmp.ge.s32.totalorder %s9, 4
    %s19 = sphi 0, %s21
    %s22 = sphi 0, %s19
    %s23 = sphi 0, %s22
    %s39 = sphi 0, %s23
    %s43 = sphi 0, %s43
    %s45 = sphi 0, %s43
    %s46 = sphi 0, %s45
    %s60 = sphi 0, %s46
    %s64 = sphi 0, %s64
    %s66 = sphi 0, %s64
    %s67 = sphi 0, %s66
    %s81 = sphi 0, %s67
    %s87 = sphi 0, %s89
    %s90 = sphi 0, %s87
    %s91 = sphi 0, %s90
    %s107 = sphi 0, %s91
  $region4: #{cvae_forward.9} parent=0 // loop_header_branch
    %12 = sbr.rel (%p10) target = $region8
  $region5: #{cvae_forward.9} parent=0 // loop_body
    %s14 = ssub.s32 %s9, 1
    %s15 = ssub.s32 %s9, 2
    %s16 = sadd.s32 %s9, 1
    %s17 = ssub.s32 %s9, %s16
    %p18 = scmp.eq.s32.totalorder %s17, 0
    %s20 = sadd.s32 %s19, 1
    %s21 = scalar_select %p18, %s19, %s20
    %p24 = pneg %p18
    %p25 = scmp.eq.s32.totalorder %s9, 1
    %p26 = por %p24, %p25
    %p27 = scmp.ne.s32.totalorder %s19, %s22
    %p28 = scmp.eq.s32.totalorder %s9, 0
    %p29 = por %p27, %p28
    %p30 = scmp.ne.s32.totalorder %s19, %s22
    %p31 = scmp.eq.s32.totalorder %s14, 1
    %p32 = por %p30, %p31
    %p33 = scmp.ne.s32.totalorder %s22, %s23
    %p34 = scmp.eq.s32.totalorder %s14, 0
    %p35 = por %p33, %p34
    %p36 = scmp.ne.s32.totalorder %s22, %s23
    %p37 = scmp.eq.s32.totalorder %s15, 1
    %p38 = por %p36, %p37
    %p40 = scmp.ne.s32.totalorder %s23, %s39
    %p41 = scmp.eq.s32.totalorder %s15, 0
    %p42 = por %p40, %p41
    %s44 = sadd.s32 %s43, 1
    %p47 = scmp.eq.s32.totalorder %s9, 1
    %p48 = scmp.ne.s32.totalorder %s43, %s45
    %p49 = scmp.eq.s32.totalorder %s9, 0
    %p50 = por %p48, %p49
    %p51 = scmp.ne.s32.totalorder %s43, %s45
    %p52 = scmp.eq.s32.totalorder %s14, 1
    %p53 = por %p51, %p52
    %p54 = scmp.ne.s32.totalorder %s45, %s46
    %p55 = scmp.eq.s32.totalorder %s14, 0
    %p56 = por %p54, %p55
    %p57 = scmp.ne.s32.totalorder %s45, %s46
    %p58 = scmp.eq.s32.totalorder %s15, 1
    %p59 = por %p57, %p58
    %p61 = scmp.ne.s32.totalorder %s46, %s60
    %p62 = scmp.eq.s32.totalorder %s15, 0
    %p63 = por %p61, %p62
    %s65 = sadd.s32 %s64, 1
    %p68 = scmp.eq.s32.totalorder %s9, 1
    %p69 = scmp.ne.s32.totalorder %s64, %s66
    %p70 = scmp.eq.s32.totalorder %s9, 0
    %p71 = por %p69, %p70
    %p72 = scmp.ne.s32.totalorder %s64, %s66
    %p73 = scmp.eq.s32.totalorder %s14, 1
    %p74 = por %p72, %p73
    %p75 = scmp.ne.s32.totalorder %s66, %s67
    %p76 = scmp.eq.s32.totalorder %s14, 0
    %p77 = por %p75, %p76
    %p78 = scmp.ne.s32.totalorder %s66, %s67
    %p79 = scmp.eq.s32.totalorder %s15, 1
    %p80 = por %p78, %p79
    %p82 = scmp.ne.s32.totalorder %s67, %s81
    %p83 = scmp.eq.s32.totalorder %s15, 0
    %p84 = por %p82, %p83
    %s85 = ssub.s32 %s9, %s16
    %p86 = scmp.eq.s32.totalorder %s85, 0
    %s88 = sadd.s32 %s87, 1
    %s89 = scalar_select %p86, %s87, %s88
    %p92 = pneg %p86
    %p93 = scmp.eq.s32.totalorder %s9, 1
    %p94 = por %p92, %p93
    %p95 = scmp.ne.s32.totalorder %s87, %s90
    %p96 = scmp.eq.s32.totalorder %s9, 0
    %p97 = por %p95, %p96
    %p98 = scmp.ne.s32.totalorder %s87, %s90
    %p99 = scmp.eq.s32.totalorder %s14, 1
    %p100 = por %p98, %p99
    %p101 = scmp.ne.s32.totalorder %s90, %s91
    %p102 = scmp.eq.s32.totalorder %s14, 0
    %p103 = por %p101, %p102
    %p104 = scmp.ne.s32.totalorder %s90, %s91
    %p105 = scmp.eq.s32.totalorder %s15, 1
    %p106 = por %p104, %p105
    %p108 = scmp.ne.s32.totalorder %s91, %s107
    %p109 = scmp.eq.s32.totalorder %s15, 0
    %p110 = por %p108, %p109
    %p111 = scmp.le.s32.totalorder 1, %s9
    %p112 = scmp.lt.s32.totalorder %s9, 3
    %p113 = pnand %p111, %p112
    %p114 = pneg %p113
    // Predicated region
    $region9: #{cvae_forward.9} parent=5 // pred_check
      _
    $region10: #{cvae_forward.9} parent=5 // pred_check_branch
      %116 = sbr.rel (%p113) target = $region12
    $region11: #{cvae_forward.9} parent=5 // pred_region
      %s117 = ssub.s32 %s9, 1
      // Predicated region
      $region13: #{cvae_forward.9} parent=11 // pred_check
        %p118 = pneg %p56
      $region14: #{cvae_forward.9} parent=11 // pred_check_branch
        %120 = sbr.rel (%p118) target = $region16
      $region15: #{cvae_forward.9} parent=11 // pred_region
        _
      $region16: #{cvae_forward.9} parent=11 // pred_fallthru
        _
      // Predicated region
      $region17: #{cvae_forward.9} parent=11 // pred_check
        %p121 = pneg %p77
      $region18: #{cvae_forward.9} parent=11 // pred_check_branch
        %123 = sbr.rel (%p121) target = $region20
      $region19: #{cvae_forward.9} parent=11 // pred_region
        _
      $region20: #{cvae_forward.9} parent=11 // pred_fallthru
        _
    $region12: #{cvae_forward.9} parent=5 // pred_fallthru
      _
    %p124 = scmp.lt.s32.totalorder %s9, 2
    // Predicated region
    $region21: #{cvae_forward.9} parent=5 // pred_check
      %p125 = pneg %p124
    $region22: #{cvae_forward.9} parent=5 // pred_check_branch
      %127 = sbr.rel (%p125) target = $region24
    $region23: #{cvae_forward.9} parent=5 // pred_region
      // Predicated region
      $region25: #{cvae_forward.9} parent=23 // pred_check
        %p128 = pneg %p29
      $region26: #{cvae_forward.9} parent=23 // pred_check_branch
        %130 = sbr.rel (%p128) target = $region28
      $region27: #{cvae_forward.9} parent=23 // pred_region
        %p131 = scmp.lt.s32.totalorder %s9, 1
        %s132 = scalar_select %p131, %s9, 1
        %s133 = smul.addr %s132, 3
        %s134 = smul.addr %s133, 8
        %s135 = scalar_lea.vmem %s0, %s134
      $region28: #{cvae_forward.9} parent=23 // pred_fallthru
        _
    $region24: #{cvae_forward.9} parent=5 // pred_fallthru
      _
    %p136 = scmp.le.s32.totalorder 1, %s9
    %p137 = scmp.lt.s32.totalorder %s9, 3
    %p138 = pnand %p136, %p137
    %p139 = pneg %p138
    // Predicated region
    $region29: #{cvae_forward.9} parent=5 // pred_check
      _
    $region30: #{cvae_forward.9} parent=5 // pred_check_branch
      %141 = sbr.rel (%p138) target = $region32
    $region31: #{cvae_forward.9} parent=5 // pred_region
      %s142 = ssub.s32 %s9, 1
      %p143 = scmp.lt.s32.totalorder %s14, 1
      %s144 = scalar_select %p143, %s14, 1
      %s145 = smul.addr %s144, 3
      %s146 = smul.addr %s145, 8
      %s147 = scalar_lea.vmem %s0, %s146
      %p148 = pneg %p35
      %p149 = pneg %p32
      %p150 = pneg %p56
      %p151 = pneg %p53
      %p152 = pneg %p77
      %p153 = pneg %p74
      %p154 = pneg %p103
      %p155 = pneg %p100
      %p156 = scmp.lt.s32.totalorder %s14, 1
      %s157 = scalar_select %p156, %s14, 1
      %s158 = smul.addr %s157, 3
      %s159 = smul.addr %s158, 8
      %s160 = scalar_lea.vmem %s3, %s159
      %p161 = scmp.lt.s32.totalorder %s14, 1
      %s162 = scalar_select %p161, %s14, 1
      %s163 = smul.addr %s162, 3
      %s164 = smul.addr %s163, 8
      %s165 = scalar_lea.vmem %s0, %s164
      %p166 = scmp.lt.s32.totalorder %s14, 1
      %s167 = scalar_select %p166, %s14, 1
      %s168 = smul.addr %s167, 3
      %s169 = smul.addr %s168, 8
      %s170 = scalar_lea.vmem %s3, %s169
      %v171 = vld [vmem:[%s165] sm:$0xff]
      %v172 = vld [vmem:[%s165 + $0x8] sm:$0xff]
      %v173 = vld [vmem:[%s165 + $0x10] sm:$0x7]
      %v174 = vld [vmem:[%s1] sm:$0xff]
      %v175 = vld [vmem:[%s1 + $0x8] sm:$0xff]
      %v176 = vld [vmem:[%s1 + $0x10] sm:$0x7]
      %v177 = vld [vmem:[%s165 + $0x1] sm:$0xff]
      %v178 = vld [vmem:[%s165 + $0x9] sm:$0xff]
      %v179 = vld [vmem:[%s165 + $0x11] sm:$0x7]
      %s180 = scalar_lea.vmem %s1, 24
      %v181 = vld [vmem:[%s180] sm:$0xff]
      %v182 = vld [vmem:[%s180 + $0x8] sm:$0xff]
      %v183 = vld [vmem:[%s180 + $0x10] sm:$0x7]
      %vm184 = vcmask 154624
      %v186 = vsel %vm184, %v177, 0
      %v189 = vsel %vm184, %v178, 0
      %v192 = vsel %vm184, %v179, 0
      %vm194 = vcmask 1042432
      %v196 = vsel %vm194, %v183, 0
      %198 = vmatprep.subr.mxu0 0.0
      %199 = vmatpush1.msra.mxu0 %v181
      %200 = vmatprep.subr.mxu0 0.0
      %201 = vmatpush1.msra.mxu0 %v182
      %202 = vmatprep.subr.mxu0 0.0
      %203 = vmatpush1.msra.mxu0 %v196
      %204 = vmatprep.subr.mxu0 0.0
      %205 = vmatpush1.msra.mxu0 0.0
      %206 = vmatprep.subr.mxu0 0.0
      %207 = vmatpush1.msra.mxu0 0.0
      %208 = vmatprep.subr.mxu0 0.0
      %209 = vmatpush1.msra.mxu0 0.0
      %210 = vmatprep.subr.mxu0 0.0
      %211 = vmatpush1.msra.mxu0 0.0
      %212 = vmatprep.subr.mxu0 0.0
      %213 = vmatpush1.msra.mxu0 0.0
      %214 = vmatprep.subr.mxu0 0.0
      %215 = vmatpush1.msra.mxu0 0.0
      %216 = vmatprep.subr.mxu0 0.0
      %217 = vmatpush1.msra.mxu0 0.0
      %218 = vmatprep.subr.mxu0 0.0
      %219 = vmatpush1.msra.mxu0 0.0
      %220 = vmatprep.subr.mxu0 0.0
      %221 = vmatpush1.msra.mxu0 0.0
      %222 = vmatprep.subr.mxu0 0.0
      %223 = vmatpush1.msra.mxu0 0.0
      %224 = vmatprep.subr.mxu0 0.0
      %225 = vmatpush1.msra.mxu0 0.0
      %226 = vmatprep.subr.mxu0 0.0
      %227 = vmatpush1.msra.mxu0 0.0
      %228 = vmatprep.subr.mxu0 0.0
      %229 = vmatpush1.msra.mxu0 0.0
      %230 = vmatprep.subr.mxu0 0.0
      %231 = vmatpush1.msra.mxu0 0.0
      %232 = vmatprep.subr.mxu0 0.0
      %233 = vmatpush1.msra.mxu0 0.0
      %234 = vmatprep.subr.mxu0 0.0
      %235 = vmatpush1.msra.mxu0 0.0
      %236 = vmatprep.subr.mxu0 0.0
      %237 = vmatpush1.msra.mxu0 0.0
      %238 = vmatprep.subr.mxu0 0.0
      %239 = vmatpush1.msra.mxu0 0.0
      %240 = vmatprep.subr.mxu0 0.0
      %241 = vmatpush1.msra.mxu0 0.0
      %242 = vmatprep.subr.mxu0 0.0
      %243 = vmatpush1.msra.mxu0 0.0
      %244 = vmatprep.subr.mxu0 0.0
      %245 = vmatpush1.msra.mxu0 0.0
      %246 = vmatprep.subr.mxu0 0.0
      %247 = vmatpush1.msra.mxu0 0.0
      %248 = vmatprep.subr.mxu0 0.0
      %249 = vmatpush1.msra.mxu0 0.0
      %250 = vmatprep.subr.mxu0 0.0
      %251 = vmatpush1.msra.mxu0 0.0
      %252 = vmatprep.subr.mxu0 0.0
      %253 = vmatpush1.msra.mxu0 0.0
      %254 = vmatprep.subr.mxu0 0.0
      %255 = vmatpush1.msra.mxu0 0.0
      %256 = vmatprep.subr.mxu0 0.0
      %257 = vmatpush1.msra.mxu0 0.0
      %258 = vmatprep.subr.mxu0 0.0
      %259 = vmatpush1.msra.mxu0 0.0
      %260 = vmatprep.subr.mxu0 0.0
      %261 = vmatpush1.msra.mxu0 0.0
      %262 = vmatprep.mubr.f32.mxu0 0.0
      %263 = vmatmul.mubr.f32.gmra.mrb[0].mxu0 %v186
      %v264 = vpop.f32.mrb[0].mxu0
      %v265 = vadd.f32 0.0, %v264
      %v266 = vpop.f32.mrb[0].mxu0
      %267 = vmatprep.mubr.f32.mxu0 0.0
      %268 = vmatmul.mubr.f32.gmra.mrb[0].mxu0 %v189
      %v269 = vpop.f32.mrb[0].mxu0
      %v270 = vadd.f32 0.0, %v269
      %v271 = vpop.f32.mrb[0].mxu0
      %272 = vmatprep.mubr.f32.mxu0 0.0
      %273 = vmatmul.mubr.f32.gmra.mrb[0].mxu0 %v192
      %v274 = vpop.f32.mrb[0].mxu0
      %v275 = vadd.f32 0.0, %v274
      %v276 = vpop.f32.mrb[0].mxu0
      %277 = vdwg.mxu0
      %v279 = vsel %vm184, %v171, 0
      %v282 = vsel %vm184, %v172, 0
      %v285 = vsel %vm184, %v173, 0
      %v288 = vsel %vm194, %v176, 0
      %290 = vmatprep.subr.mxu0 0.0
      %291 = vmatpush1.msra.mxu0 %v174
      %292 = vmatprep.subr.mxu0 0.0
      %293 = vmatpush1.msra.mxu0 %v175
      %294 = vmatprep.subr.mxu0 0.0
      %295 = vmatpush1.msra.mxu0 %v288
      %296 = vmatprep.subr.mxu0 0.0
      %297 = vmatpush1.msra.mxu0 0.0
      %298 = vmatprep.subr.mxu0 0.0
      %299 = vmatpush1.msra.mxu0 0.0
      %300 = vmatprep.subr.mxu0 0.0
      %301 = vmatpush1.msra.mxu0 0.0
      %302 = vmatprep.subr.mxu0 0.0
      %303 = vmatpush1.msra.mxu0 0.0
      %304 = vmatprep.subr.mxu0 0.0
      %305 = vmatpush1.msra.mxu0 0.0
      %306 = vmatprep.subr.mxu0 0.0
      %307 = vmatpush1.msra.mxu0 0.0
      %308 = vmatprep.subr.mxu0 0.0
      %309 = vmatpush1.msra.mxu0 0.0
      %310 = vmatprep.subr.mxu0 0.0
      %311 = vmatpush1.msra.mxu0 0.0
      %312 = vmatprep.subr.mxu0 0.0
      %313 = vmatpush1.msra.mxu0 0.0
      %314 = vmatprep.subr.mxu0 0.0
      %315 = vmatpush1.msra.mxu0 0.0
      %316 = vmatprep.subr.mxu0 0.0
      %317 = vmatpush1.msra.mxu0 0.0
      %318 = vmatprep.subr.mxu0 0.0
      %319 = vmatpush1.msra.mxu0 0.0
      %320 = vmatprep.subr.mxu0 0.0
      %321 = vmatpush1.msra.mxu0 0.0
      %322 = vmatprep.subr.mxu0 0.0
      %323 = vmatpush1.msra.mxu0 0.0
      %324 = vmatprep.subr.mxu0 0.0
      %325 = vmatpush1.msra.mxu0 0.0
      %326 = vmatprep.subr.mxu0 0.0
      %327 = vmatpush1.msra.mxu0 0.0
      %328 = vmatprep.subr.mxu0 0.0
      %329 = vmatpush1.msra.mxu0 0.0
      %330 = vmatprep.subr.mxu0 0.0
      %331 = vmatpush1.msra.mxu0 0.0
      %332 = vmatprep.subr.mxu0 0.0
      %333 = vmatpush1.msra.mxu0 0.0
      %334 = vmatprep.subr.mxu0 0.0
      %335 = vmatpush1.msra.mxu0 0.0
      %336 = vmatprep.subr.mxu0 0.0
      %337 = vmatpush1.msra.mxu0 0.0
      %338 = vmatprep.subr.mxu0 0.0
      %339 = vmatpush1.msra.mxu0 0.0
      %340 = vmatprep.subr.mxu0 0.0
      %341 = vmatpush1.msra.mxu0 0.0
      %342 = vmatprep.subr.mxu0 0.0
      %343 = vmatpush1.msra.mxu0 0.0
      %344 = vmatprep.subr.mxu0 0.0
      %345 = vmatpush1.msra.mxu0 0.0
      %346 = vmatprep.subr.mxu0 0.0
      %347 = vmatpush1.msra.mxu0 0.0
      %348 = vmatprep.subr.mxu0 0.0
      %349 = vmatpush1.msra.mxu0 0.0
      %350 = vmatprep.subr.mxu0 0.0
      %351 = vmatpush1.msra.mxu0 0.0
      %352 = vmatprep.subr.mxu0 0.0
      %353 = vmatpush1.msra.mxu0 0.0
      %354 = vmatprep.mubr.f32.mxu0 0.0
      %355 = vmatmul.mubr.f32.gmra.mrb[0].mxu0 %v279
      %v356 = vpop.f32.mrb[0].mxu0
      %v357 = vadd.f32 %v265, %v356
      %v358 = vpop.f32.mrb[0].mxu0
      %359 = vmatprep.mubr.f32.mxu0 0.0
      %360 = vmatmul.mubr.f32.gmra.mrb[0].mxu0 %v282
      %v361 = vpop.f32.mrb[0].mxu0
      %v362 = vadd.f32 %v270, %v361
      %v363 = vpop.f32.mrb[0].mxu0
      %364 = vmatprep.mubr.f32.mxu0 0.0
      %365 = vmatmul.mubr.f32.gmra.mrb[0].mxu0 %v285
      %v366 = vpop.f32.mrb[0].mxu0
      %v367 = vadd.f32 %v275, %v366
      %v368 = vpop.f32.mrb[0].mxu0
      %369 = vdwg.mxu0
      %v370 = vld [vmem:[%s165 + $0x2] sm:$0xff]
      %v371 = vld [vmem:[%s165 + $0xa] sm:$0xff]
      %v372 = vld [vmem:[%s165 + $0x12] sm:$0x7]
      %s373 = scalar_lea.vmem %s1, 48
      %v374 = vld [vmem:[%s373] sm:$0xff]
      %v375 = vld [vmem:[%s373 + $0x8] sm:$0xff]
      %v376 = vld [vmem:[%s373 + $0x10] sm:$0x7]
      %v378 = vsel %vm184, %v370, 0
      %v381 = vsel %vm184, %v371, 0
      %v384 = vsel %vm184, %v372, 0
      %v387 = vsel %vm194, %v376, 0
      %389 = vmatprep.subr.mxu0 0.0
      %390 = vmatpush1.msra.mxu0 %v374
      %391 = vmatprep.subr.mxu0 0.0
      %392 = vmatpush1.msra.mxu0 %v375
      %393 = vmatprep.subr.mxu0 0.0
      %394 = vmatpush1.msra.mxu0 %v387
      %395 = vmatprep.subr.mxu0 0.0
      %396 = vmatpush1.msra.mxu0 0.0
      %397 = vmatprep.subr.mxu0 0.0
      %398 = vmatpush1.msra.mxu0 0.0
      %399 = vmatprep.subr.mxu0 0.0
      %400 = vmatpush1.msra.mxu0 0.0
      %401 = vmatprep.subr.mxu0 0.0
      %402 = vmatpush1.msra.mxu0 0.0
      %403 = vmatprep.subr.mxu0 0.0
      %404 = vmatpush1.msra.mxu0 0.0
      %405 = vmatprep.subr.mxu0 0.0
      %406 = vmatpush1.msra.mxu0 0.0
      %407 = vmatprep.subr.mxu0 0.0
      %408 = vmatpush1.msra.mxu0 0.0
      %409 = vmatprep.subr.mxu0 0.0
      %410 = vmatpush1.msra.mxu0 0.0
      %411 = vmatprep.subr.mxu0 0.0
      %412 = vmatpush1.msra.mxu0 0.0
      %413 = vmatprep.subr.mxu0 0.0
      %414 = vmatpush1.msra.mxu0 0.0
      %415 = vmatprep.subr.mxu0 0.0
      %416 = vmatpush1.msra.mxu0 0.0
      %417 = vmatprep.subr.mxu0 0.0
      %418 = vmatpush1.msra.mxu0 0.0
      %419 = vmatprep.subr.mxu0 0.0
      %420 = vmatpush1.msra.mxu0 0.0
      %421 = vmatprep.subr.mxu0 0.0
      %422 = vmatpush1.msra.mxu0 0.0
      %423 = vmatprep.subr.mxu0 0.0
      %424 = vmatpush1.msra.mxu0 0.0
      %425 = vmatprep.subr.mxu0 0.0
      %426 = vmatpush1.msra.mxu0 0.0
      %427 = vmatprep.subr.mxu0 0.0
      %428 = vmatpush1.msra.mxu0 0.0
      %429 = vmatprep.subr.mxu0 0.0
      %430 = vmatpush1.msra.mxu0 0.0
      %431 = vmatprep.subr.mxu0 0.0
      %432 = vmatpush1.msra.mxu0 0.0
      %433 = vmatprep.subr.mxu0 0.0
      %434 = vmatpush1.msra.mxu0 0.0
      %435 = vmatprep.subr.mxu0 0.0
      %436 = vmatpush1.msra.mxu0 0.0
      %437 = vmatprep.subr.mxu0 0.0
      %438 = vmatpush1.msra.mxu0 0.0
      %439 = vmatprep.subr.mxu0 0.0
      %440 = vmatpush1.msra.mxu0 0.0
      %441 = vmatprep.subr.mxu0 0.0
      %442 = vmatpush1.msra.mxu0 0.0
      %443 = vmatprep.subr.mxu0 0.0
      %444 = vmatpush1.msra.mxu0 0.0
      %445 = vmatprep.subr.mxu0 0.0
      %446 = vmatpush1.msra.mxu0 0.0
      %447 = vmatprep.subr.mxu0 0.0
      %448 = vmatpush1.msra.mxu0 0.0
      %449 = vmatprep.subr.mxu0 0.0
      %450 = vmatpush1.msra.mxu0 0.0
      %451 = vmatprep.subr.mxu0 0.0
      %452 = vmatpush1.msra.mxu0 0.0
      %453 = vmatprep.mubr.f32.mxu0 0.0
      %454 = vmatmul.mubr.f32.gmra.mrb[0].mxu0 %v378
      %v455 = vpop.f32.mrb[0].mxu0
      %v456 = vadd.f32 0.0, %v455
      %v457 = vpop.f32.mrb[0].mxu0
      %458 = vmatprep.mubr.f32.mxu0 0.0
      %459 = vmatmul.mubr.f32.gmra.mrb[0].mxu0 %v381
      %v460 = vpop.f32.mrb[0].mxu0
      %v461 = vadd.f32 0.0, %v460
      %v462 = vpop.f32.mrb[0].mxu0
      %463 = vmatprep.mubr.f32.mxu0 0.0
      %464 = vmatmul.mubr.f32.gmra.mrb[0].mxu0 %v384
      %v465 = vpop.f32.mrb[0].mxu0
      %v466 = vadd.f32 0.0, %v465
      %v467 = vpop.f32.mrb[0].mxu0
      %468 = vdwg.mxu0
      %v469 = vadd.f32 %v357, %v456
      %v470 = vadd.f32 %v362, %v461
      %v471 = vadd.f32 %v367, %v466
      %v472 = vld [vmem:[%s165 + $0x3] sm:$0xff]
      %v473 = vld [vmem:[%s165 + $0xb] sm:$0xff]
      %v474 = vld [vmem:[%s165 + $0x13] sm:$0x7]
      %s475 = scalar_lea.vmem %s1, 72
      %v476 = vld [vmem:[%s475] sm:$0xff]
      %v477 = vld [vmem:[%s475 + $0x8] sm:$0xff]
      %v478 = vld [vmem:[%s475 + $0x10] sm:$0x7]
      %v480 = vsel %vm184, %v472, 0
      %v483 = vsel %vm184, %v473, 0
      %v486 = vsel %vm184, %v474, 0
      %v489 = vsel %vm194, %v478, 0
      %491 = vmatprep.subr.mxu0 0.0
      %492 = vmatpush1.msra.mxu0 %v476
      %493 = vmatprep.subr.mxu0 0.0
      %494 = vmatpush1.msra.mxu0 %v477
      %495 = vmatprep.subr.mxu0 0.0
      %496 = vmatpush1.msra.mxu0 %v489
      %497 = vmatprep.subr.mxu0 0.0
      %498 = vmatpush1.msra.mxu0 0.0
      %499 = vmatprep.subr.mxu0 0.0
      %500 = vmatpush1.msra.mxu0 0.0
      %501 = vmatprep.subr.mxu0 0.0
      %502 = vmatpush1.msra.mxu0 0.0
      %503 = vmatprep.subr.mxu0 0.0
      %504 = vmatpush1.msra.mxu0 0.0
      %505 = vmatprep.subr.mxu0 0.0
      %506 = vmatpush1.msra.mxu0 0.0
      %507 = vmatprep.subr.mxu0 0.0
      %508 = vmatpush1.msra.mxu0 0.0
      %509 = vmatprep.subr.mxu0 0.0
      %510 = vmatpush1.msra.mxu0 0.0
      %511 = vmatprep.subr.mxu0 0.0
      %512 = vmatpush1.msra.mxu0 0.0
      %513 = vmatprep.subr.mxu0 0.0
      %514 = vmatpush1.msra.mxu0 0.0
      %515 = vmatprep.subr.mxu0 0.0
      %516 = vmatpush1.msra.mxu0 0.0
      %517 = vmatprep.subr.mxu0 0.0
      %518 = vmatpush1.msra.mxu0 0.0
      %519 = vmatprep.subr.mxu0 0.0
      %520 = vmatpush1.msra.mxu0 0.0
      %521 = vmatprep.subr.mxu0 0.0
      %522 = vmatpush1.msra.mxu0 0.0
      %523 = vmatprep.subr.mxu0 0.0
      %524 = vmatpush1.msra.mxu0 0.0
      %525 = vmatprep.subr.mxu0 0.0
      %526 = vmatpush1.msra.mxu0 0.0
      %527 = vmatprep.subr.mxu0 0.0
      %528 = vmatpush1.msra.mxu0 0.0
      %529 = vmatprep.subr.mxu0 0.0
      %530 = vmatpush1.msra.mxu0 0.0
      %531 = vmatprep.subr.mxu0 0.0
      %532 = vmatpush1.msra.mxu0 0.0
      %533 = vmatprep.subr.mxu0 0.0
      %534 = vmatpush1.msra.mxu0 0.0
      %535 = vmatprep.subr.mxu0 0.0
      %536 = vmatpush1.msra.mxu0 0.0
      %537 = vmatprep.subr.mxu0 0.0
      %538 = vmatpush1.msra.mxu0 0.0
      %539 = vmatprep.subr.mxu0 0.0
      %540 = vmatpush1.msra.mxu0 0.0
      %541 = vmatprep.subr.mxu0 0.0
      %542 = vmatpush1.msra.mxu0 0.0
      %543 = vmatprep.subr.mxu0 0.0
      %544 = vmatpush1.msra.mxu0 0.0
      %545 = vmatprep.subr.mxu0 0.0
      %546 = vmatpush1.msra.mxu0 0.0
      %547 = vmatprep.subr.mxu0 0.0
      %548 = vmatpush1.msra.mxu0 0.0
      %549 = vmatprep.subr.mxu0 0.0
      %550 = vmatpush1.msra.mxu0 0.0
      %551 = vmatprep.subr.mxu0 0.0
      %552 = vmatpush1.msra.mxu0 0.0
      %553 = vmatprep.subr.mxu0 0.0
      %554 = vmatpush1.msra.mxu0 0.0
      %555 = vmatprep.mubr.f32.mxu0 0.0
      %556 = vmatmul.mubr.f32.gmra.mrb[0].mxu0 %v480
      %v557 = vpop.f32.mrb[0].mxu0
      %v558 = vadd.f32 0.0, %v557
      %v559 = vpop.f32.mrb[0].mxu0
      %560 = vmatprep.mubr.f32.mxu0 0.0
      %561 = vmatmul.mubr.f32.gmra.mrb[0].mxu0 %v483
      %v562 = vpop.f32.mrb[0].mxu0
      %v563 = vadd.f32 0.0, %v562
      %v564 = vpop.f32.mrb[0].mxu0
      %565 = vmatprep.mubr.f32.mxu0 0.0
      %566 = vmatmul.mubr.f32.gmra.mrb[0].mxu0 %v486
      %v567 = vpop.f32.mrb[0].mxu0
      %v568 = vadd.f32 0.0, %v567
      %v569 = vpop.f32.mrb[0].mxu0
      %570 = vdwg.mxu0
      %v571 = vadd.f32 %v469, %v558
      %v572 = vadd.f32 %v470, %v563
      %v573 = vadd.f32 %v471, %v568
      %v574 = vld [vmem:[%s165 + $0x4] sm:$0xff]
      %v575 = vld [vmem:[%s165 + $0xc] sm:$0xff]
      %v576 = vld [vmem:[%s165 + $0x14] sm:$0x7]
      %s577 = scalar_lea.vmem %s1, 96
      %v578 = vld [vmem:[%s577] sm:$0xff]
      %v579 = vld [vmem:[%s577 + $0x8] sm:$0xff]
      %v580 = vld [vmem:[%s577 + $0x10] sm:$0x7]
      %v582 = vsel %vm184, %v574, 0
      %v585 = vsel %vm184, %v575, 0
      %v588 = vsel %vm184, %v576, 0
      %v591 = vsel %vm194, %v580, 0
      %593 = vmatprep.subr.mxu0 0.0
      %594 = vmatpush1.msra.mxu0 %v578
      %595 = vmatprep.subr.mxu0 0.0
      %596 = vmatpush1.msra.mxu0 %v579
      %597 = vmatprep.subr.mxu0 0.0
      %598 = vmatpush1.msra.mxu0 %v591
      %599 = vmatprep.subr.mxu0 0.0
      %600 = vmatpush1.msra.mxu0 0.0
      %601 = vmatprep.subr.mxu0 0.0
      %602 = vmatpush1.msra.mxu0 0.0
      %603 = vmatprep.subr.mxu0 0.0
      %604 = vmatpush1.msra.mxu0 0.0
      %605 = vmatprep.subr.mxu0 0.0
      %606 = vmatpush1.msra.mxu0 0.0
      %607 = vmatprep.subr.mxu0 0.0
      %608 = vmatpush1.msra.mxu0 0.0
      %609 = vmatprep.subr.mxu0 0.0
      %610 = vmatpush1.msra.mxu0 0.0
      %611 = vmatprep.subr.mxu0 0.0
      %612 = vmatpush1.msra.mxu0 0.0
      %613 = vmatprep.subr.mxu0 0.0
      %614 = vmatpush1.msra.mxu0 0.0
      %615 = vmatprep.subr.mxu0 0.0
      %616 = vmatpush1.msra.mxu0 0.0
      %617 = vmatprep.subr.mxu0 0.0
      %618 = vmatpush1.msra.mxu0 0.0
      %619 = vmatprep.subr.mxu0 0.0
      %620 = vmatpush1.msra.mxu0 0.0
      %621 = vmatprep.subr.mxu0 0.0
      %622 = vmatpush1.msra.mxu0 0.0
      %623 = vmatprep.subr.mxu0 0.0
      %624 = vmatpush1.msra.mxu0 0.0
      %625 = vmatprep.subr.mxu0 0.0
      %626 = vmatpush1.msra.mxu0 0.0
      %627 = vmatprep.subr.mxu0 0.0
      %628 = vmatpush1.msra.mxu0 0.0
      %629 = vmatprep.subr.mxu0 0.0
      %630 = vmatpush1.msra.mxu0 0.0
      %631 = vmatprep.subr.mxu0 0.0
      %632 = vmatpush1.msra.mxu0 0.0
      %633 = vmatprep.subr.mxu0 0.0
      %634 = vmatpush1.msra.mxu0 0.0
      %635 = vmatprep.subr.mxu0 0.0
      %636 = vmatpush1.msra.mxu0 0.0
      %637 = vmatprep.subr.mxu0 0.0
      %638 = vmatpush1.msra.mxu0 0.0
      %639 = vmatprep.subr.mxu0 0.0
      %640 = vmatpush1.msra.mxu0 0.0
      %641 = vmatprep.subr.mxu0 0.0
      %642 = vmatpush1.msra.mxu0 0.0
      %643 = vmatprep.subr.mxu0 0.0
      %644 = vmatpush1.msra.mxu0 0.0
      %645 = vmatprep.subr.mxu0 0.0
      %646 = vmatpush1.msra.mxu0 0.0
      %647 = vmatprep.subr.mxu0 0.0
      %648 = vmatpush1.msra.mxu0 0.0
      %649 = vmatprep.subr.mxu0 0.0
      %650 = vmatpush1.msra.mxu0 0.0
      %651 = vmatprep.subr.mxu0 0.0
      %652 = vmatpush1.msra.mxu0 0.0
      %653 = vmatprep.subr.mxu0 0.0
      %654 = vmatpush1.msra.mxu0 0.0
      %655 = vmatprep.subr.mxu0 0.0
      %656 = vmatpush1.msra.mxu0 0.0
      %657 = vmatprep.mubr.f32.mxu0 0.0
      %658 = vmatmul.mubr.f32.gmra.mrb[0].mxu0 %v582
      %v659 = vpop.f32.mrb[0].mxu0
      %v660 = vadd.f32 0.0, %v659
      %v661 = vpop.f32.mrb[0].mxu0
      %662 = vmatprep.mubr.f32.mxu0 0.0
      %663 = vmatmul.mubr.f32.gmra.mrb[0].mxu0 %v585
      %v664 = vpop.f32.mrb[0].mxu0
      %v665 = vadd.f32 0.0, %v664
      %v666 = vpop.f32.mrb[0].mxu0
      %667 = vmatprep.mubr.f32.mxu0 0.0
      %668 = vmatmul.mubr.f32.gmra.mrb[0].mxu0 %v588
      %v669 = vpop.f32.mrb[0].mxu0
      %v670 = vadd.f32 0.0, %v669
      %v671 = vpop.f32.mrb[0].mxu0
      %672 = vdwg.mxu0
      %v673 = vadd.f32 %v571, %v660
      %v674 = vadd.f32 %v572, %v665
      %v675 = vadd.f32 %v573, %v670
      %v676 = vld [vmem:[%s2] sm:$0x1]
      %v678 = vlaneseq
      %v679 = vshrl.u32 %v678, 7
      %v680 = vsub.s32 0, %v679
      %v681 = vrot.slane %v676, %v680
      %v683 = vadd.f32 %v673, %v681
      %v684 = vadd.f32 %v674, %v681
      %v685 = vadd.f32 %v675, %v681
      %vm686 = vcmp.ge.f32.partialorder %v683, 0.0
      %vm687 = vcmp.ge.f32.partialorder %v684, 0.0
      %vm688 = vcmp.ge.f32.partialorder %v685, 0.0
      %v689 = vmul.f32 %v683, 0.2
      %v690 = vmul.f32 %v684, 0.2
      %v691 = vmul.f32 %v685, 0.2
      %v692 = vsel %vm686, %v683, %v689
      %v693 = vsel %vm687, %v684, %v690
      %v694 = vsel %vm688, %v685, %v691
      %vm695 = vcmask 982016
      %696 = vst.msk [vmem:[%s170] sm:$0xff] %vm695, %v692
      %697 = vst.msk [vmem:[%s170 + $0x8] sm:$0xff] %vm695, %v693
      %vm698 = vcmask 976896
      %699 = vst.msk [vmem:[%s170 + $0x10] sm:$0x7] %vm698, %v694
      %p700 = scmp.lt.s32.totalorder %s14, 1
      %s701 = scalar_select %p700, %s14, 1
      %s702 = smul.addr %s701, 3
      %s703 = smul.addr %s702, 8
      %s704 = scalar_lea.vmem %s3, %s703
      // Predicated region
      $region33: #{cvae_forward.9} parent=31 // pred_check
        %p705 = pneg %p100
      $region34: #{cvae_forward.9} parent=31 // pred_check_branch
        %707 = sbr.rel (%p705) target = $region36
      $region35: #{cvae_forward.9} parent=31 // pred_region
        _
      $region36: #{cvae_forward.9} parent=31 // pred_fallthru
        _
    $region32: #{cvae_forward.9} parent=5 // pred_fallthru
      _
    %p708 = scmp.le.s32.totalorder 2, %s9
    // Predicated region
    $region37: #{cvae_forward.9} parent=5 // pred_check
      %p709 = pneg %p708
    $region38: #{cvae_forward.9} parent=5 // pred_check_branch
      %711 = sbr.rel (%p709) target = $region40
    $region39: #{cvae_forward.9} parent=5 // pred_region
      %s712 = ssub.s32 %s9, 2
      // Predicated region
      $region41: #{cvae_forward.9} parent=39 // pred_check
        %p713 = pneg %p106
      $region42: #{cvae_forward.9} parent=39 // pred_check_branch
        %715 = sbr.rel (%p713) target = $region44
      $region43: #{cvae_forward.9} parent=39 // pred_region
        %p716 = scmp.lt.s32.totalorder %s15, 1
        %s717 = scalar_select %p716, %s15, 1
        %s718 = smul.addr %s717, 3
        %s719 = smul.addr %s718, 8
        %s720 = scalar_lea.vmem %s3, %s719
      $region44: #{cvae_forward.9} parent=39 // pred_fallthru
        _
    $region40: #{cvae_forward.9} parent=5 // pred_fallthru
      _
  $region6: #{cvae_forward.9} parent=0 // loop_footer
    %s13 = sadd.s32 1, %s9
  $region7: #{cvae_forward.9} parent=0 // loop_footer_branch
    %8 = sbr.rel target = $region3
  $region8: #{cvae_forward.9} parent=0 // loop_exit
    _

// kernel: cvae_forward.10
$region0: #{cvae_forward.10}
  #allocation0 [shape = 'u32[]', space=smem, size = 0x4, offset = 0x4, fixed_abs, tag = 'smem constant byte address 0x4 - core index']
  #allocation1 [shape = 'u32[144,128]{1,0:T(1,128)}', space=vmem, size = 0x12000, scoped, tag = 'internal scratch']
  %s0 = inlined_call_operand.vmem [shape: f32[2,21,136], index: 0, kind: input, shape index: {}]
  %s1 = inlined_call_operand.vmem [shape: f32[5,136,104], index: 1, kind: input, shape index: {}]
  %s2 = inlined_call_operand.vmem [shape: f32[1,104], index: 2, kind: input, shape index: {}]
  %s3 = inlined_call_operand.vmem [shape: f32[2,17,104], index: 3, kind: output, shape index: {}]
  %s4 = sld [smem:[#allocation0]]
  $region45: #{cvae_forward.10} parent=0
    _
  %s6 = ssub.s32 1, %s4
  %s7 = scalar_select 0, %s6, %s4
  loop: start=0, step=1, limit=4
  $region2: #{cvae_forward.10} parent=0 // loop_pre_header
    _
  $region3: #{cvae_forward.10} parent=0 // loop_header
    %s9 = sphi 0, %s13
    %p10 = scmp.ge.s32.totalorder %s9, 4
    %s19 = sphi 0, %s21
    %s22 = sphi 0, %s19
    %s23 = sphi 0, %s22
    %s39 = sphi 0, %s23
    %s43 = sphi 0, %s43
    %s45 = sphi 0, %s43
    %s46 = sphi 0, %s45
    %s60 = sphi 0, %s46
    %s64 = sphi 0, %s64
    %s66 = sphi 0, %s64
    %s67 = sphi 0, %s66
    %s81 = sphi 0, %s67
    %s87 = sphi 0, %s89
    %s90 = sphi 0, %s87
    %s91 = sphi 0, %s90
    %s107 = sphi 0, %s91
  $region4: #{cvae_forward.10} parent=0 // loop_header_branch
    %12 = sbr.rel (%p10) target = $region8
  $region5: #{cvae_forward.10} parent=0 // loop_body
    %s14 = ssub.s32 %s9, 1
    %s15 = ssub.s32 %s9, 2
    %s16 = sadd.s32 %s9, 1
    %s17 = ssub.s32 %s9, %s16
    %p18 = scmp.eq.s32.totalorder %s17, 0
    %s20 = sadd.s32 %s19, 1
    %s21 = scalar_select %p18, %s19, %s20
    %p24 = pneg %p18
    %p25 = scmp.eq.s32.totalorder %s9, 1
    %p26 = por %p24, %p25
    %p27 = scmp.ne.s32.totalorder %s19, %s22
    %p28 = scmp.eq.s32.totalorder %s9, 0
    %p29 = por %p27, %p28
    %p30 = scmp.ne.s32.totalorder %s19, %s22
    %p31 = scmp.eq.s32.totalorder %s14, 1
    %p32 = por %p30, %p31
    %p33 = scmp.ne.s32.totalorder %s22, %s23
    %p34 = scmp.eq.s32.totalorder %s14, 0
    %p35 = por %p33, %p34
    %p36 = scmp.ne.s32.totalorder %s22, %s23
    %p37 = scmp.eq.s32.totalorder %s15, 1
    %p38 = por %p36, %p37
    %p40 = scmp.ne.s32.totalorder %s23, %s39
    %p41 = scmp.eq.s32.totalorder %s15, 0
    %p42 = por %p40, %p41
    %s44 = sadd.s32 %s43, 1
    %p47 = scmp.eq.s32.totalorder %s9, 1
    %p48 = scmp.ne.s32.totalorder %s43, %s45
    %p49 = scmp.eq.s32.totalorder %s9, 0
    %p50 = por %p48, %p49
    %p51 = scmp.ne.s32.totalorder %s43, %s45
    %p52 = scmp.eq.s32.totalorder %s14, 1
    %p53 = por %p51, %p52
    %p54 = scmp.ne.s32.totalorder %s45, %s46
    %p55 = scmp.eq.s32.totalorder %s14, 0
    %p56 = por %p54, %p55
    %p57 = scmp.ne.s32.totalorder %s45, %s46
    %p58 = scmp.eq.s32.totalorder %s15, 1
    %p59 = por %p57, %p58
    %p61 = scmp.ne.s32.totalorder %s46, %s60
    %p62 = scmp.eq.s32.totalorder %s15, 0
    %p63 = por %p61, %p62
    %s65 = sadd.s32 %s64, 1
    %p68 = scmp.eq.s32.totalorder %s9, 1
    %p69 = scmp.ne.s32.totalorder %s64, %s66
    %p70 = scmp.eq.s32.totalorder %s9, 0
    %p71 = por %p69, %p70
    %p72 = scmp.ne.s32.totalorder %s64, %s66
    %p73 = scmp.eq.s32.totalorder %s14, 1
    %p74 = por %p72, %p73
    %p75 = scmp.ne.s32.totalorder %s66, %s67
    %p76 = scmp.eq.s32.totalorder %s14, 0
    %p77 = por %p75, %p76
    %p78 = scmp.ne.s32.totalorder %s66, %s67
    %p79 = scmp.eq.s32.totalorder %s15, 1
    %p80 = por %p78, %p79
    %p82 = scmp.ne.s32.totalorder %s67, %s81
    %p83 = scmp.eq.s32.totalorder %s15, 0
    %p84 = por %p82, %p83
    %s85 = ssub.s32 %s9, %s16
    %p86 = scmp.eq.s32.totalorder %s85, 0
    %s88 = sadd.s32 %s87, 1
    %s89 = scalar_select %p86, %s87, %s88
    %p92 = pneg %p86
    %p93 = scmp.eq.s32.totalorder %s9, 1
    %p94 = por %p92, %p93
    %p95 = scmp.ne.s32.totalorder %s87, %s90
    %p96 = scmp.eq.s32.totalorder %s9, 0
    %p97 = por %p95, %p96
    %p98 = scmp.ne.s32.totalorder %s87, %s90
    %p99 = scmp.eq.s32.totalorder %s14, 1
    %p100 = por %p98, %p99
    %p101 = scmp.ne.s32.totalorder %s90, %s91
    %p102 = scmp.eq.s32.totalorder %s14, 0
    %p103 = por %p101, %p102
    %p104 = scmp.ne.s32.totalorder %s90, %s91
    %p105 = scmp.eq.s32.totalorder %s15, 1
    %p106 = por %p104, %p105
    %p108 = scmp.ne.s32.totalorder %s91, %s107
    %p109 = scmp.eq.s32.totalorder %s15, 0
    %p110 = por %p108, %p109
    %p111 = scmp.le.s32.totalorder 1, %s9
    %p112 = scmp.lt.s32.totalorder %s9, 3
    %p113 = pnand %p111, %p112
    %p114 = pneg %p113
    // Predicated region
    $region9: #{cvae_forward.10} parent=5 // pred_check
      _
    $region10: #{cvae_forward.10} parent=5 // pred_check_branch
      %116 = sbr.rel (%p113) target = $region12
    $region11: #{cvae_forward.10} parent=5 // pred_region
      %s117 = ssub.s32 %s9, 1
      // Predicated region
      $region13: #{cvae_forward.10} parent=11 // pred_check
        %p118 = pneg %p56
      $region14: #{cvae_forward.10} parent=11 // pred_check_branch
        %120 = sbr.rel (%p118) target = $region16
      $region15: #{cvae_forward.10} parent=11 // pred_region
        _
      $region16: #{cvae_forward.10} parent=11 // pred_fallthru
        _
      // Predicated region
      $region17: #{cvae_forward.10} parent=11 // pred_check
        %p121 = pneg %p77
      $region18: #{cvae_forward.10} parent=11 // pred_check_branch
        %123 = sbr.rel (%p121) target = $region20
      $region19: #{cvae_forward.10} parent=11 // pred_region
        _
      $region20: #{cvae_forward.10} parent=11 // pred_fallthru
        _
    $region12: #{cvae_forward.10} parent=5 // pred_fallthru
      _
    %p124 = scmp.lt.s32.totalorder %s9, 2
    // Predicated region
    $region21: #{cvae_forward.10} parent=5 // pred_check
      %p125 = pneg %p124
    $region22: #{cvae_forward.10} parent=5 // pred_check_branch
      %127 = sbr.rel (%p125) target = $region24
    $region23: #{cvae_forward.10} parent=5 // pred_region
      // Predicated region
      $region25: #{cvae_forward.10} parent=23 // pred_check
        %p128 = pneg %p29
      $region26: #{cvae_forward.10} parent=23 // pred_check_branch
        %130 = sbr.rel (%p128) target = $region28
      $region27: #{cvae_forward.10} parent=23 // pred_region
        %p131 = scmp.lt.s32.totalorder %s9, 1
        %s132 = scalar_select %p131, %s9, 1
        %s133 = smul.addr %s132, 6
        %s134 = smul.addr %s133, 8
        %s135 = scalar_lea.vmem %s0, %s134
      $region28: #{cvae_forward.10} parent=23 // pred_fallthru
        _
    $region24: #{cvae_forward.10} parent=5 // pred_fallthru
      _
    %p136 = scmp.le.s32.totalorder 1, %s9
    %p137 = scmp.lt.s32.totalorder %s9, 3
    %p138 = pnand %p136, %p137
    %p139 = pneg %p138
    // Predicated region
    $region29: #{cvae_forward.10} parent=5 // pred_check
      _
    $region30: #{cvae_forward.10} parent=5 // pred_check_branch
      %141 = sbr.rel (%p138) target = $region32
    $region31: #{cvae_forward.10} parent=5 // pred_region
      %s142 = ssub.s32 %s9, 1
      %p143 = scmp.lt.s32.totalorder %s14, 1
      %s144 = scalar_select %p143, %s14, 1
      %s145 = smul.addr %s144, 6
      %s146 = smul.addr %s145, 8
      %s147 = scalar_lea.vmem %s0, %s146
      %p148 = pneg %p35
      %p149 = pneg %p32
      %p150 = pneg %p56
      %p151 = pneg %p53
      %p152 = pneg %p77
      %p153 = pneg %p74
      %p154 = pneg %p103
      %p155 = pneg %p100
      %p156 = scmp.lt.s32.totalorder %s14, 1
      %s157 = scalar_select %p156, %s14, 1
      %s158 = smul.addr %s157, 3
      %s159 = smul.addr %s158, 8
      %s160 = scalar_lea.vmem %s3, %s159
      %p161 = scmp.lt.s32.totalorder %s14, 1
      %s162 = scalar_select %p161, %s14, 1
      %s163 = smul.addr %s162, 6
      %s164 = smul.addr %s163, 8
      %s165 = scalar_lea.vmem %s0, %s164
      %p166 = scmp.lt.s32.totalorder %s14, 1
      %s167 = scalar_select %p166, %s14, 1
      %s168 = smul.addr %s167, 3
      %s169 = smul.addr %s168, 8
      %s170 = scalar_lea.vmem %s3, %s169
      %v171 = vld [vmem:[%s165] sm:$0xff]
      %v172 = vld [vmem:[%s165 + $0x8] sm:$0xff]
      %v173 = vld [vmem:[%s165 + $0x10] sm:$0xff]
      %v174 = vld [vmem:[%s165 + $0x18] sm:$0xff]
      %v175 = vld [vmem:[%s165 + $0x20] sm:$0x1]
      %v176 = vld [vmem:[%s165 + $0x28] sm:$0x1]
      %v177 = vld [vmem:[%s1] sm:$0xff]
      %v178 = vld [vmem:[%s1 + $0x8] sm:$0xff]
      %v179 = vld [vmem:[%s1 + $0x10] sm:$0xff]
      %v180 = vld [vmem:[%s1 + $0x18] sm:$0xff]
      %v181 = vld [vmem:[%s1 + $0x20] sm:$0xff]
      %v182 = vld [vmem:[%s1 + $0x28] sm:$0xff]
      %v183 = vld [vmem:[%s1 + $0x30] sm:$0xff]
      %v184 = vld [vmem:[%s1 + $0x38] sm:$0xff]
      %v185 = vld [vmem:[%s1 + $0x40] sm:$0xff]
      %v186 = vld [vmem:[%s1 + $0x48] sm:$0xff]
      %v187 = vld [vmem:[%s1 + $0x50] sm:$0xff]
      %v188 = vld [vmem:[%s1 + $0x58] sm:$0xff]
      %v189 = vld [vmem:[%s1 + $0x60] sm:$0xff]
      %v190 = vld [vmem:[%s1 + $0x68] sm:$0xff]
      %v191 = vld [vmem:[%s1 + $0x70] sm:$0xff]
      %v192 = vld [vmem:[%s1 + $0x78] sm:$0xff]
      %v193 = vld [vmem:[%s1 + $0x80] sm:$0xff]
      %v194 = vld [vmem:[%s165] sm:$0xfe]
      %v195 = vld [vmem:[%s165 + $0x8] sm:$0xfe]
      %v196 = vld [vmem:[%s165 + $0x20] sm:$0x3]
      %v197 = vld [vmem:[%s165 + $0x28] sm:$0x3]
      %s198 = scalar_lea.vmem %s1, 136
      %v199 = vld [vmem:[%s198] sm:$0xff]
      %v200 = vld [vmem:[%s198 + $0x8] sm:$0xff]
      %v201 = vld [vmem:[%s198 + $0x10] sm:$0xff]
      %v202 = vld [vmem:[%s198 + $0x18] sm:$0xff]
      %v203 = vld [vmem:[%s198 + $0x20] sm:$0xff]
      %v204 = vld [vmem:[%s198 + $0x28] sm:$0xff]
      %v205 = vld [vmem:[%s198 + $0x30] sm:$0xff]
      %v206 = vld [vmem:[%s198 + $0x38] sm:$0xff]
      %v207 = vld [vmem:[%s198 + $0x40] sm:$0xff]
      %v208 = vld [vmem:[%s198 + $0x48] sm:$0xff]
      %v209 = vld [vmem:[%s198 + $0x50] sm:$0xff]
      %v210 = vld [vmem:[%s198 + $0x58] sm:$0xff]
      %v211 = vld [vmem:[%s198 + $0x60] sm:$0xff]
      %v212 = vld [vmem:[%s198 + $0x68] sm:$0xff]
      %v213 = vld [vmem:[%s198 + $0x70] sm:$0xff]
      %v214 = vld [vmem:[%s198 + $0x78] sm:$0xff]
      %v215 = vld [vmem:[%s198 + $0x80] sm:$0xff]
      %vm222 = vcmask 1046528
      %v223 = vrot.slane %v194, 1
      %v224 = vrot.slane %v173, 1
      %v225 = vsel %vm222, %v223, %v224
      %v226 = vrot.slane %v195, 1
      %v227 = vrot.slane %v174, 1
      %v228 = vsel %vm222, %v226, %v227
      %v229 = vrot.slane %v196, 1
      %v230 = vsel %vm222, %v224, %v229
      %v231 = vrot.slane %v197, 1
      %v232 = vsel %vm222, %v227, %v231
      %vm236 = vcmask 64512
      %v237 = vsel %vm236, %v228, 0
      %v239 = vsel %vm236, %v232, 0
      %v241 = vsel %vm236, %v231, 0
      %243 = vmatprep.subr.mxu0 0.0
      %244 = vmatpush1.msra.mxu0 %v199
      %245 = vmatprep.subr.mxu0 0.0
      %246 = vmatpush1.msra.mxu0 %v200
      %247 = vmatprep.subr.mxu0 0.0
      %248 = vmatpush1.msra.mxu0 %v201
      %249 = vmatprep.subr.mxu0 0.0
      %250 = vmatpush1.msra.mxu0 %v202
      %251 = vmatprep.subr.mxu0 0.0
      %252 = vmatpush1.msra.mxu0 %v203
      %253 = vmatprep.subr.mxu0 0.0
      %254 = vmatpush1.msra.mxu0 %v204
      %255 = vmatprep.subr.mxu0 0.0
      %256 = vmatpush1.msra.mxu0 %v205
      %257 = vmatprep.subr.mxu0 0.0
      %258 = vmatpush1.msra.mxu0 %v206
      %259 = vmatprep.subr.mxu0 0.0
      %260 = vmatpush1.msra.mxu0 %v207
      %261 = vmatprep.subr.mxu0 0.0
      %262 = vmatpush1.msra.mxu0 %v208
      %263 = vmatprep.subr.mxu0 0.0
      %264 = vmatpush1.msra.mxu0 %v209
      %265 = vmatprep.subr.mxu0 0.0
      %266 = vmatpush1.msra.mxu0 %v210
      %267 = vmatprep.subr.mxu0 0.0
      %268 = vmatpush1.msra.mxu0 %v211
      %269 = vmatprep.subr.mxu0 0.0
      %270 = vmatpush1.msra.mxu0 %v212
      %271 = vmatprep.subr.mxu0 0.0
      %272 = vmatpush1.msra.mxu0 %v213
      %273 = vmatprep.subr.mxu0 0.0
      %274 = vmatpush1.msra.mxu0 %v214
      %275 = vmatprep.subr.mxu0 0.0
      %276 = vmatpush1.msra.mxu0 %v215
      %277 = vmatprep.subr.mxu0 0.0
      %278 = vmatpush1.msra.mxu0 0.0
      %279 = vmatprep.subr.mxu0 0.0
      %280 = vmatpush1.msra.mxu0 0.0
      %281 = vmatprep.subr.mxu0 0.0
      %282 = vmatpush1.msra.mxu0 0.0
      %283 = vmatprep.subr.mxu0 0.0
      %284 = vmatpush1.msra.mxu0 0.0
      %285 = vmatprep.subr.mxu0 0.0
      %286 = vmatpush1.msra.mxu0 0.0
      %287 = vmatprep.subr.mxu0 0.0
      %288 = vmatpush1.msra.mxu0 0.0
      %289 = vmatprep.subr.mxu0 0.0
      %290 = vmatpush1.msra.mxu0 0.0
      %291 = vmatprep.subr.mxu0 0.0
      %292 = vmatpush1.msra.mxu0 0.0
      %293 = vmatprep.subr.mxu0 0.0
      %294 = vmatpush1.msra.mxu0 0.0
      %295 = vmatprep.subr.mxu0 0.0
      %296 = vmatpush1.msra.mxu0 0.0
      %297 = vmatprep.subr.mxu0 0.0
      %298 = vmatpush1.msra.mxu0 0.0
      %299 = vmatprep.subr.mxu0 0.0
      %300 = vmatpush1.msra.mxu0 0.0
      %301 = vmatprep.subr.mxu0 0.0
      %302 = vmatpush1.msra.mxu0 0.0
      %303 = vmatprep.subr.mxu0 0.0
      %304 = vmatpush1.msra.mxu0 0.0
      %305 = vmatprep.subr.mxu0 0.0
      %306 = vmatpush1.msra.mxu0 0.0
      %307 = vmatprep.mubr.f32.mxu0 %v237
      %308 = vmatmul.mubr.f32.gmra.mrb[0].mxu0 %v225
      %v309 = vpop.f32.mrb[0].mxu0
      %v310 = vadd.f32 0.0, %v309
      %v311 = vpop.f32.mrb[0].mxu0
      %312 = vmatprep.mubr.f32.mxu0 %v239
      %313 = vmatmul.mubr.f32.gmra.mrb[0].mxu0 %v230
      %v314 = vpop.f32.mrb[0].mxu0
      %v315 = vadd.f32 0.0, %v314
      %v316 = vpop.f32.mrb[0].mxu0
      %317 = vmatprep.mubr.f32.mxu0 %v241
      %318 = vmatmul.mubr.f32.gmra.mrb[0].mxu0 %v229
      %v319 = vpop.f32.mrb[0].mxu0
      %v320 = vadd.f32 0.0, %v319
      %v321 = vpop.f32.mrb[0].mxu0
      %322 = vdwg.mxu0
      %v324 = vsel %vm236, %v172, 0
      %v326 = vsel %vm236, %v174, 0
      %v329 = vsel %vm236, %v176, 0
      %331 = vmatprep.subr.mxu0 0.0
      %332 = vmatpush1.msra.mxu0 %v177
      %333 = vmatprep.subr.mxu0 0.0
      %334 = vmatpush1.msra.mxu0 %v178
      %335 = vmatprep.subr.mxu0 0.0
      %336 = vmatpush1.msra.mxu0 %v179
      %337 = vmatprep.subr.mxu0 0.0
      %338 = vmatpush1.msra.mxu0 %v180
      %339 = vmatprep.subr.mxu0 0.0
      %340 = vmatpush1.msra.mxu0 %v181
      %341 = vmatprep.subr.mxu0 0.0
      %342 = vmatpush1.msra.mxu0 %v182
      %343 = vmatprep.subr.mxu0 0.0
      %344 = vmatpush1.msra.mxu0 %v183
      %345 = vmatprep.subr.mxu0 0.0
      %346 = vmatpush1.msra.mxu0 %v184
      %347 = vmatprep.subr.mxu0 0.0
      %348 = vmatpush1.msra.mxu0 %v185
      %349 = vmatprep.subr.mxu0 0.0
      %350 = vmatpush1.msra.mxu0 %v186
      %351 = vmatprep.subr.mxu0 0.0
      %352 = vmatpush1.msra.mxu0 %v187
      %353 = vmatprep.subr.mxu0 0.0
      %354 = vmatpush1.msra.mxu0 %v188
      %355 = vmatprep.subr.mxu0 0.0
      %356 = vmatpush1.msra.mxu0 %v189
      %357 = vmatprep.subr.mxu0 0.0
      %358 = vmatpush1.msra.mxu0 %v190
      %359 = vmatprep.subr.mxu0 0.0
      %360 = vmatpush1.msra.mxu0 %v191
      %361 = vmatprep.subr.mxu0 0.0
      %362 = vmatpush1.msra.mxu0 %v192
      %363 = vmatprep.subr.mxu0 0.0
      %364 = vmatpush1.msra.mxu0 %v193
      %365 = vmatprep.subr.mxu0 0.0
      %366 = vmatpush1.msra.mxu0 0.0
      %367 = vmatprep.subr.mxu0 0.0
      %368 = vmatpush1.msra.mxu0 0.0
      %369 = vmatprep.subr.mxu0 0.0
      %370 = vmatpush1.msra.mxu0 0.0
      %371 = vmatprep.subr.mxu0 0.0
      %372 = vmatpush1.msra.mxu0 0.0
      %373 = vmatprep.subr.mxu0 0.0
      %374 = vmatpush1.msra.mxu0 0.0
      %375 = vmatprep.subr.mxu0 0.0
      %376 = vmatpush1.msra.mxu0 0.0
      %377 = vmatprep.subr.mxu0 0.0
      %378 = vmatpush1.msra.mxu0 0.0
      %379 = vmatprep.subr.mxu0 0.0
      %380 = vmatpush1.msra.mxu0 0.0
      %381 = vmatprep.subr.mxu0 0.0
      %382 = vmatpush1.msra.mxu0 0.0
      %383 = vmatprep.subr.mxu0 0.0
      %384 = vmatpush1.msra.mxu0 0.0
      %385 = vmatprep.subr.mxu0 0.0
      %386 = vmatpush1.msra.mxu0 0.0
      %387 = vmatprep.subr.mxu0 0.0
      %388 = vmatpush1.msra.mxu0 0.0
      %389 = vmatprep.subr.mxu0 0.0
      %390 = vmatpush1.msra.mxu0 0.0
      %391 = vmatprep.subr.mxu0 0.0
      %392 = vmatpush1.msra.mxu0 0.0
      %393 = vmatprep.subr.mxu0 0.0
      %394 = vmatpush1.msra.mxu0 0.0
      %395 = vmatprep.mubr.f32.mxu0 %v324
      %396 = vmatmul.mubr.f32.gmra.mrb[0].mxu0 %v171
      %v397 = vpop.f32.mrb[0].mxu0
      %v398 = vadd.f32 %v310, %v397
      %v399 = vpop.f32.mrb[0].mxu0
      %400 = vmatprep.mubr.f32.mxu0 %v326
      %401 = vmatmul.mubr.f32.gmra.mrb[0].mxu0 %v173
      %v402 = vpop.f32.mrb[0].mxu0
      %v403 = vadd.f32 %v315, %v402
      %v404 = vpop.f32.mrb[0].mxu0
      %405 = vmatprep.mubr.f32.mxu0 %v329
      %406 = vmatmul.mubr.f32.gmra.mrb[0].mxu0 %v175
      %v407 = vpop.f32.mrb[0].mxu0
      %v408 = vadd.f32 %v320, %v407
      %v409 = vpop.f32.mrb[0].mxu0
      %410 = vdwg.mxu0
      %v411 = vld [vmem:[%s165] sm:$0xfc]
      %v412 = vld [vmem:[%s165 + $0x8] sm:$0xfc]
      %v413 = vld [vmem:[%s165 + $0x20] sm:$0x7]
      %v414 = vld [vmem:[%s165 + $0x28] sm:$0x7]
      %s415 = scalar_lea.vmem %s1, 272
      %v416 = vld [vmem:[%s415] sm:$0xff]
      %v417 = vld [vmem:[%s415 + $0x8] sm:$0xff]
      %v418 = vld [vmem:[%s415 + $0x10] sm:$0xff]
      %v419 = vld [vmem:[%s415 + $0x18] sm:$0xff]
      %v420 = vld [vmem:[%s415 + $0x20] sm:$0xff]
      %v421 = vld [vmem:[%s415 + $0x28] sm:$0xff]
      %v422 = vld [vmem:[%s415 + $0x30] sm:$0xff]
      %v423 = vld [vmem:[%s415 + $0x38] sm:$0xff]
      %v424 = vld [vmem:[%s415 + $0x40] sm:$0xff]
      %v425 = vld [vmem:[%s415 + $0x48] sm:$0xff]
      %v426 = vld [vmem:[%s415 + $0x50] sm:$0xff]
      %v427 = vld [vmem:[%s415 + $0x58] sm:$0xff]
      %v428 = vld [vmem:[%s415 + $0x60] sm:$0xff]
      %v429 = vld [vmem:[%s415 + $0x68] sm:$0xff]
      %v430 = vld [vmem:[%s415 + $0x70] sm:$0xff]
      %v431 = vld [vmem:[%s415 + $0x78] sm:$0xff]
      %v432 = vld [vmem:[%s415 + $0x80] sm:$0xff]
      %vm437 = vcmask 1045504
      %v438 = vrot.slane %v411, 2
      %v439 = vrot.slane %v173, 2
      %v440 = vsel %vm437, %v438, %v439
      %v441 = vrot.slane %v412, 2
      %v442 = vrot.slane %v174, 2
      %v443 = vsel %vm437, %v441, %v442
      %v444 = vrot.slane %v413, 2
      %v445 = vsel %vm437, %v439, %v444
      %v446 = vrot.slane %v414, 2
      %v447 = vsel %vm437, %v442, %v446
      %v451 = vsel %vm236, %v443, 0
      %v453 = vsel %vm236, %v447, 0
      %v455 = vsel %vm236, %v446, 0
      %457 = vmatprep.subr.mxu0 0.0
      %458 = vmatpush1.msra.mxu0 %v416
      %459 = vmatprep.subr.mxu0 0.0
      %460 = vmatpush1.msra.mxu0 %v417
      %461 = vmatprep.subr.mxu0 0.0
      %462 = vmatpush1.msra.mxu0 %v418
      %463 = vmatprep.subr.mxu0 0.0
      %464 = vmatpush1.msra.mxu0 %v419
      %465 = vmatprep.subr.mxu0 0.0
      %466 = vmatpush1.msra.mxu0 %v420
      %467 = vmatprep.subr.mxu0 0.0
      %468 = vmatpush1.msra.mxu0 %v421
      %469 = vmatprep.subr.mxu0 0.0
      %470 = vmatpush1.msra.mxu0 %v422
      %471 = vmatprep.subr.mxu0 0.0
      %472 = vmatpush1.msra.mxu0 %v423
      %473 = vmatprep.subr.mxu0 0.0
      %474 = vmatpush1.msra.mxu0 %v424
      %475 = vmatprep.subr.mxu0 0.0
      %476 = vmatpush1.msra.mxu0 %v425
      %477 = vmatprep.subr.mxu0 0.0
      %478 = vmatpush1.msra.mxu0 %v426
      %479 = vmatprep.subr.mxu0 0.0
      %480 = vmatpush1.msra.mxu0 %v427
      %481 = vmatprep.subr.mxu0 0.0
      %482 = vmatpush1.msra.mxu0 %v428
      %483 = vmatprep.subr.mxu0 0.0
      %484 = vmatpush1.msra.mxu0 %v429
      %485 = vmatprep.subr.mxu0 0.0
      %486 = vmatpush1.msra.mxu0 %v430
      %487 = vmatprep.subr.mxu0 0.0
      %488 = vmatpush1.msra.mxu0 %v431
      %489 = vmatprep.subr.mxu0 0.0
      %490 = vmatpush1.msra.mxu0 %v432
      %491 = vmatprep.subr.mxu0 0.0
      %492 = vmatpush1.msra.mxu0 0.0
      %493 = vmatprep.subr.mxu0 0.0
      %494 = vmatpush1.msra.mxu0 0.0
      %495 = vmatprep.subr.mxu0 0.0
      %496 = vmatpush1.msra.mxu0 0.0
      %497 = vmatprep.subr.mxu0 0.0
      %498 = vmatpush1.msra.mxu0 0.0
      %499 = vmatprep.subr.mxu0 0.0
      %500 = vmatpush1.msra.mxu0 0.0
      %501 = vmatprep.subr.mxu0 0.0
      %502 = vmatpush1.msra.mxu0 0.0
      %503 = vmatprep.subr.mxu0 0.0
      %504 = vmatpush1.msra.mxu0 0.0
      %505 = vmatprep.subr.mxu0 0.0
      %506 = vmatpush1.msra.mxu0 0.0
      %507 = vmatprep.subr.mxu0 0.0
      %508 = vmatpush1.msra.mxu0 0.0
      %509 = vmatprep.subr.mxu0 0.0
      %510 = vmatpush1.msra.mxu0 0.0
      %511 = vmatprep.subr.mxu0 0.0
      %512 = vmatpush1.msra.mxu0 0.0
      %513 = vmatprep.subr.mxu0 0.0
      %514 = vmatpush1.msra.mxu0 0.0
      %515 = vmatprep.subr.mxu0 0.0
      %516 = vmatpush1.msra.mxu0 0.0
      %517 = vmatprep.subr.mxu0 0.0
      %518 = vmatpush1.msra.mxu0 0.0
      %519 = vmatprep.subr.mxu0 0.0
      %520 = vmatpush1.msra.mxu0 0.0
      %521 = vmatprep.mubr.f32.mxu0 %v451
      %522 = vmatmul.mubr.f32.gmra.mrb[0].mxu0 %v440
      %v523 = vpop.f32.mrb[0].mxu0
      %v524 = vadd.f32 0.0, %v523
      %v525 = vpop.f32.mrb[0].mxu0
      %526 = vmatprep.mubr.f32.mxu0 %v453
      %527 = vmatmul.mubr.f32.gmra.mrb[0].mxu0 %v445
      %v528 = vpop.f32.mrb[0].mxu0
      %v529 = vadd.f32 0.0, %v528
      %v530 = vpop.f32.mrb[0].mxu0
      %531 = vmatprep.mubr.f32.mxu0 %v455
      %532 = vmatmul.mubr.f32.gmra.mrb[0].mxu0 %v444
      %v533 = vpop.f32.mrb[0].mxu0
      %v534 = vadd.f32 0.0, %v533
      %v535 = vpop.f32.mrb[0].mxu0
      %536 = vdwg.mxu0
      %v537 = vadd.f32 %v398, %v524
      %v538 = vadd.f32 %v403, %v529
      %v539 = vadd.f32 %v408, %v534
      %v540 = vld [vmem:[%s165] sm:$0xf8]
      %v541 = vld [vmem:[%s165 + $0x8] sm:$0xf8]
      %v542 = vld [vmem:[%s165 + $0x20] sm:$0xf]
      %v543 = vld [vmem:[%s165 + $0x28] sm:$0xf]
      %s544 = scalar_lea.vmem %s1, 408
      %v545 = vld [vmem:[%s544] sm:$0xff]
      %v546 = vld [vmem:[%s544 + $0x8] sm:$0xff]
      %v547 = vld [vmem:[%s544 + $0x10] sm:$0xff]
      %v548 = vld [vmem:[%s544 + $0x18] sm:$0xff]
      %v549 = vld [vmem:[%s544 + $0x20] sm:$0xff]
      %v550 = vld [vmem:[%s544 + $0x28] sm:$0xff]
      %v551 = vld [vmem:[%s544 + $0x30] sm:$0xff]
      %v552 = vld [vmem:[%s544 + $0x38] sm:$0xff]
      %v553 = vld [vmem:[%s544 + $0x40] sm:$0xff]
      %v554 = vld [vmem:[%s544 + $0x48] sm:$0xff]
      %v555 = vld [vmem:[%s544 + $0x50] sm:$0xff]
      %v556 = vld [vmem:[%s544 + $0x58] sm:$0xff]
      %v557 = vld [vmem:[%s544 + $0x60] sm:$0xff]
      %v558 = vld [vmem:[%s544 + $0x68] sm:$0xff]
      %v559 = vld [vmem:[%s544 + $0x70] sm:$0xff]
      %v560 = vld [vmem:[%s544 + $0x78] sm:$0xff]
      %v561 = vld [vmem:[%s544 + $0x80] sm:$0xff]
      %vm566 = vcmask 1044480
      %v567 = vrot.slane %v540, 3
      %v568 = vrot.slane %v173, 3
      %v569 = vsel %vm566, %v567, %v568
      %v570 = vrot.slane %v541, 3
      %v571 = vrot.slane %v174, 3
      %v572 = vsel %vm566, %v570, %v571
      %v573 = vrot.slane %v542, 3
      %v574 = vsel %vm566, %v568, %v573
      %v575 = vrot.slane %v543, 3
      %v576 = vsel %vm566, %v571, %v575
      %v580 = vsel %vm236, %v572, 0
      %v582 = vsel %vm236, %v576, 0
      %v584 = vsel %vm236, %v575, 0
      %586 = vmatprep.subr.mxu0 0.0
      %587 = vmatpush1.msra.mxu0 %v545
      %588 = vmatprep.subr.mxu0 0.0
      %589 = vmatpush1.msra.mxu0 %v546
      %590 = vmatprep.subr.mxu0 0.0
      %591 = vmatpush1.msra.mxu0 %v547
      %592 = vmatprep.subr.mxu0 0.0
      %593 = vmatpush1.msra.mxu0 %v548
      %594 = vmatprep.subr.mxu0 0.0
      %595 = vmatpush1.msra.mxu0 %v549
      %596 = vmatprep.subr.mxu0 0.0
      %597 = vmatpush1.msra.mxu0 %v550
      %598 = vmatprep.subr.mxu0 0.0
      %599 = vmatpush1.msra.mxu0 %v551
      %600 = vmatprep.subr.mxu0 0.0
      %601 = vmatpush1.msra.mxu0 %v552
      %602 = vmatprep.subr.mxu0 0.0
      %603 = vmatpush1.msra.mxu0 %v553
      %604 = vmatprep.subr.mxu0 0.0
      %605 = vmatpush1.msra.mxu0 %v554
      %606 = vmatprep.subr.mxu0 0.0
      %607 = vmatpush1.msra.mxu0 %v555
      %608 = vmatprep.subr.mxu0 0.0
      %609 = vmatpush1.msra.mxu0 %v556
      %610 = vmatprep.subr.mxu0 0.0
      %611 = vmatpush1.msra.mxu0 %v557
      %612 = vmatprep.subr.mxu0 0.0
      %613 = vmatpush1.msra.mxu0 %v558
      %614 = vmatprep.subr.mxu0 0.0
      %615 = vmatpush1.msra.mxu0 %v559
      %616 = vmatprep.subr.mxu0 0.0
      %617 = vmatpush1.msra.mxu0 %v560
      %618 = vmatprep.subr.mxu0 0.0
      %619 = vmatpush1.msra.mxu0 %v561
      %620 = vmatprep.subr.mxu0 0.0
      %621 = vmatpush1.msra.mxu0 0.0
      %622 = vmatprep.subr.mxu0 0.0
      %623 = vmatpush1.msra.mxu0 0.0
      %624 = vmatprep.subr.mxu0 0.0
      %625 = vmatpush1.msra.mxu0 0.0
      %626 = vmatprep.subr.mxu0 0.0
      %627 = vmatpush1.msra.mxu0 0.0
      %628 = vmatprep.subr.mxu0 0.0
      %629 = vmatpush1.msra.mxu0 0.0
      %630 = vmatprep.subr.mxu0 0.0
      %631 = vmatpush1.msra.mxu0 0.0
      %632 = vmatprep.subr.mxu0 0.0
      %633 = vmatpush1.msra.mxu0 0.0
      %634 = vmatprep.subr.mxu0 0.0
      %635 = vmatpush1.msra.mxu0 0.0
      %636 = vmatprep.subr.mxu0 0.0
      %637 = vmatpush1.msra.mxu0 0.0
      %638 = vmatprep.subr.mxu0 0.0
      %639 = vmatpush1.msra.mxu0 0.0
      %640 = vmatprep.subr.mxu0 0.0
      %641 = vmatpush1.msra.mxu0 0.0
      %642 = vmatprep.subr.mxu0 0.0
      %643 = vmatpush1.msra.mxu0 0.0
      %644 = vmatprep.subr.mxu0 0.0
      %645 = vmatpush1.msra.mxu0 0.0
      %646 = vmatprep.subr.mxu0 0.0
      %647 = vmatpush1.msra.mxu0 0.0
      %648 = vmatprep.subr.mxu0 0.0
      %649 = vmatpush1.msra.mxu0 0.0
      %650 = vmatprep.mubr.f32.mxu0 %v580
      %651 = vmatmul.mubr.f32.gmra.mrb[0].mxu0 %v569
      %v652 = vpop.f32.mrb[0].mxu0
      %v653 = vadd.f32 0.0, %v652
      %v654 = vpop.f32.mrb[0].mxu0
      %655 = vmatprep.mubr.f32.mxu0 %v582
      %656 = vmatmul.mubr.f32.gmra.mrb[0].mxu0 %v574
      %v657 = vpop.f32.mrb[0].mxu0
      %v658 = vadd.f32 0.0, %v657
      %v659 = vpop.f32.mrb[0].mxu0
      %660 = vmatprep.mubr.f32.mxu0 %v584
      %661 = vmatmul.mubr.f32.gmra.mrb[0].mxu0 %v573
      %v662 = vpop.f32.mrb[0].mxu0
      %v663 = vadd.f32 0.0, %v662
      %v664 = vpop.f32.mrb[0].mxu0
      %665 = vdwg.mxu0
      %v666 = vadd.f32 %v537, %v653
      %v667 = vadd.f32 %v538, %v658
      %v668 = vadd.f32 %v539, %v663
      %v669 = vld [vmem:[%s165] sm:$0xf0]
      %v670 = vld [vmem:[%s165 + $0x8] sm:$0xf0]
      %v671 = vld [vmem:[%s165 + $0x20] sm:$0x1f]
      %v672 = vld [vmem:[%s165 + $0x28] sm:$0x1f]
      %s673 = scalar_lea.vmem %s1, 544
      %v674 = vld [vmem:[%s673] sm:$0xff]
      %v675 = vld [vmem:[%s673 + $0x8] sm:$0xff]
      %v676 = vld [vmem:[%s673 + $0x10] sm:$0xff]
      %v677 = vld [vmem:[%s673 + $0x18] sm:$0xff]
      %v678 = vld [vmem:[%s673 + $0x20] sm:$0xff]
      %v679 = vld [vmem:[%s673 + $0x28] sm:$0xff]
      %v680 = vld [vmem:[%s673 + $0x30] sm:$0xff]
      %v681 = vld [vmem:[%s673 + $0x38] sm:$0xff]
      %v682 = vld [vmem:[%s673 + $0x40] sm:$0xff]
      %v683 = vld [vmem:[%s673 + $0x48] sm:$0xff]
      %v684 = vld [vmem:[%s673 + $0x50] sm:$0xff]
      %v685 = vld [vmem:[%s673 + $0x58] sm:$0xff]
      %v686 = vld [vmem:[%s673 + $0x60] sm:$0xff]
      %v687 = vld [vmem:[%s673 + $0x68] sm:$0xff]
      %v688 = vld [vmem:[%s673 + $0x70] sm:$0xff]
      %v689 = vld [vmem:[%s673 + $0x78] sm:$0xff]
      %v690 = vld [vmem:[%s673 + $0x80] sm:$0xff]
      %vm695 = vcmask 1043456
      %v696 = vrot.slane %v669, 4
      %v697 = vrot.slane %v173, 4
      %v698 = vsel %vm695, %v696, %v697
      %v699 = vrot.slane %v670, 4
      %v700 = vrot.slane %v174, 4
      %v701 = vsel %vm695, %v699, %v700
      %v702 = vrot.slane %v671, 4
      %v703 = vsel %vm695, %v697, %v702
      %v704 = vrot.slane %v672, 4
      %v705 = vsel %vm695, %v700, %v704
      %v709 = vsel %vm236, %v701, 0
      %v711 = vsel %vm236, %v705, 0
      %v713 = vsel %vm236, %v704, 0
      %715 = vmatprep.subr.mxu0 0.0
      %716 = vmatpush1.msra.mxu0 %v674
      %717 = vmatprep.subr.mxu0 0.0
      %718 = vmatpush1.msra.mxu0 %v675
      %719 = vmatprep.subr.mxu0 0.0
      %720 = vmatpush1.msra.mxu0 %v676
      %721 = vmatprep.subr.mxu0 0.0
      %722 = vmatpush1.msra.mxu0 %v677
      %723 = vmatprep.subr.mxu0 0.0
      %724 = vmatpush1.msra.mxu0 %v678
      %725 = vmatprep.subr.mxu0 0.0
      %726 = vmatpush1.msra.mxu0 %v679
      %727 = vmatprep.subr.mxu0 0.0
      %728 = vmatpush1.msra.mxu0 %v680
      %729 = vmatprep.subr.mxu0 0.0
      %730 = vmatpush1.msra.mxu0 %v681
      %731 = vmatprep.subr.mxu0 0.0
      %732 = vmatpush1.msra.mxu0 %v682
      %733 = vmatprep.subr.mxu0 0.0
      %734 = vmatpush1.msra.mxu0 %v683
      %735 = vmatprep.subr.mxu0 0.0
      %736 = vmatpush1.msra.mxu0 %v684
      %737 = vmatprep.subr.mxu0 0.0
      %738 = vmatpush1.msra.mxu0 %v685
      %739 = vmatprep.subr.mxu0 0.0
      %740 = vmatpush1.msra.mxu0 %v686
      %741 = vmatprep.subr.mxu0 0.0
      %742 = vmatpush1.msra.mxu0 %v687
      %743 = vmatprep.subr.mxu0 0.0
      %744 = vmatpush1.msra.mxu0 %v688
      %745 = vmatprep.subr.mxu0 0.0
      %746 = vmatpush1.msra.mxu0 %v689
      %747 = vmatprep.subr.mxu0 0.0
      %748 = vmatpush1.msra.mxu0 %v690
      %749 = vmatprep.subr.mxu0 0.0
      %750 = vmatpush1.msra.mxu0 0.0
      %751 = vmatprep.subr.mxu0 0.0
      %752 = vmatpush1.msra.mxu0 0.0
      %753 = vmatprep.subr.mxu0 0.0
      %754 = vmatpush1.msra.mxu0 0.0
      %755 = vmatprep.subr.mxu0 0.0
      %756 = vmatpush1.msra.mxu0 0.0
      %757 = vmatprep.subr.mxu0 0.0
      %758 = vmatpush1.msra.mxu0 0.0
      %759 = vmatprep.subr.mxu0 0.0
      %760 = vmatpush1.msra.mxu0 0.0
      %761 = vmatprep.subr.mxu0 0.0
      %762 = vmatpush1.msra.mxu0 0.0
      %763 = vmatprep.subr.mxu0 0.0
      %764 = vmatpush1.msra.mxu0 0.0
      %765 = vmatprep.subr.mxu0 0.0
      %766 = vmatpush1.msra.mxu0 0.0
      %767 = vmatprep.subr.mxu0 0.0
      %768 = vmatpush1.msra.mxu0 0.0
      %769 = vmatprep.subr.mxu0 0.0
      %770 = vmatpush1.msra.mxu0 0.0
      %771 = vmatprep.subr.mxu0 0.0
      %772 = vmatpush1.msra.mxu0 0.0
      %773 = vmatprep.subr.mxu0 0.0
      %774 = vmatpush1.msra.mxu0 0.0
      %775 = vmatprep.subr.mxu0 0.0
      %776 = vmatpush1.msra.mxu0 0.0
      %777 = vmatprep.subr.mxu0 0.0
      %778 = vmatpush1.msra.mxu0 0.0
      %779 = vmatprep.mubr.f32.mxu0 %v709
      %780 = vmatmul.mubr.f32.gmra.mrb[0].mxu0 %v698
      %v781 = vpop.f32.mrb[0].mxu0
      %v782 = vadd.f32 0.0, %v781
      %v783 = vpop.f32.mrb[0].mxu0
      %784 = vmatprep.mubr.f32.mxu0 %v711
      %785 = vmatmul.mubr.f32.gmra.mrb[0].mxu0 %v703
      %v786 = vpop.f32.mrb[0].mxu0
      %v787 = vadd.f32 0.0, %v786
      %v788 = vpop.f32.mrb[0].mxu0
      %789 = vmatprep.mubr.f32.mxu0 %v713
      %790 = vmatmul.mubr.f32.gmra.mrb[0].mxu0 %v702
      %v791 = vpop.f32.mrb[0].mxu0
      %v792 = vadd.f32 0.0, %v791
      %v793 = vpop.f32.mrb[0].mxu0
      %794 = vdwg.mxu0
      %v795 = vadd.f32 %v666, %v782
      %v796 = vadd.f32 %v667, %v787
      %v797 = vadd.f32 %v668, %v792
      %v798 = vld [vmem:[%s2] sm:$0x1]
      %v800 = vlaneseq
      %v801 = vshrl.u32 %v800, 7
      %v802 = vsub.s32 0, %v801
      %v803 = vrot.slane %v798, %v802
      %v805 = vadd.f32 %v795, %v803
      %v806 = vadd.f32 %v796, %v803
      %v807 = vadd.f32 %v797, %v803
      %vm808 = vcmp.ge.f32.partialorder %v805, 0.0
      %vm809 = vcmp.ge.f32.partialorder %v806, 0.0
      %vm810 = vcmp.ge.f32.partialorder %v807, 0.0
      %v811 = vmul.f32 %v805, 0.2
      %v812 = vmul.f32 %v806, 0.2
      %v813 = vmul.f32 %v807, 0.2
      %v814 = vsel %vm808, %v805, %v811
      %v815 = vsel %vm809, %v806, %v812
      %v816 = vsel %vm810, %v807, %v813
      %vm817 = vcmask 850944
      %818 = vst.msk [vmem:[%s170] sm:$0xff] %vm817, %v814
      %819 = vst.msk [vmem:[%s170 + $0x8] sm:$0xff] %vm817, %v815
      %vm820 = vcmask 843776
      %821 = vst.msk [vmem:[%s170 + $0x10] sm:$0x1] %vm820, %v816
      %p822 = scmp.lt.s32.totalorder %s14, 1
      %s823 = scalar_select %p822, %s14, 1
      %s824 = smul.addr %s823, 3
      %s825 = smul.addr %s824, 8
      %s826 = scalar_lea.vmem %s3, %s825
      // Predicated region
      $region33: #{cvae_forward.10} parent=31 // pred_check
        %p827 = pneg %p100
      $region34: #{cvae_forward.10} parent=31 // pred_check_branch
        %829 = sbr.rel (%p827) target = $region36
      $region35: #{cvae_forward.10} parent=31 // pred_region
        _
      $region36: #{cvae_forward.10} parent=31 // pred_fallthru
        _
    $region32: #{cvae_forward.10} parent=5 // pred_fallthru
      _
    %p830 = scmp.le.s32.totalorder 2, %s9
    // Predicated region
    $region37: #{cvae_forward.10} parent=5 // pred_check
      %p831 = pneg %p830
    $region38: #{cvae_forward.10} parent=5 // pred_check_branch
      %833 = sbr.rel (%p831) target = $region40
    $region39: #{cvae_forward.10} parent=5 // pred_region
      %s834 = ssub.s32 %s9, 2
      // Predicated region
      $region41: #{cvae_forward.10} parent=39 // pred_check
        %p835 = pneg %p106
      $region42: #{cvae_forward.10} parent=39 // pred_check_branch
        %837 = sbr.rel (%p835) target = $region44
      $region43: #{cvae_forward.10} parent=39 // pred_region
        %p838 = scmp.lt.s32.totalorder %s15, 1
        %s839 = scalar_select %p838, %s15, 1
        %s840 = smul.addr %s839, 3
        %s841 = smul.addr %s840, 8
        %s842 = scalar_lea.vmem %s3, %s841
      $region44: #{cvae_forward.10} parent=39 // pred_fallthru
        _
    $region40: #{cvae_forward.10} parent=5 // pred_fallthru
      _
  $region6: #{cvae_forward.10} parent=0 // loop_footer
    %s13 = sadd.s32 1, %s9
  $region7: #{cvae_forward.10} parent=0 // loop_footer_branch
    %8 = sbr.rel target = $region3
  $region8: #{cvae_forward.10} parent=0 // loop_exit
    _

// kernel: cvae_forward.11
$region0: #{cvae_forward.11}
  #allocation0 [shape = 'u32[]', space=smem, size = 0x4, offset = 0x4, fixed_abs, tag = 'smem constant byte address 0x4 - core index']
  #allocation1 [shape = 'u32[144,128]{1,0:T(1,128)}', space=vmem, size = 0x12000, scoped, tag = 'internal scratch']
  %s0 = inlined_call_operand.vmem [shape: f32[2,19,120], index: 0, kind: input, shape index: {}]
  %s1 = inlined_call_operand.vmem [shape: f32[5,120,48], index: 1, kind: input, shape index: {}]
  %s2 = inlined_call_operand.vmem [shape: f32[1,48], index: 2, kind: input, shape index: {}]
  %s3 = inlined_call_operand.vmem [shape: f32[2,15,48], index: 3, kind: output, shape index: {}]
  %s4 = sld [smem:[#allocation0]]
  $region45: #{cvae_forward.11} parent=0
    _
  %s6 = ssub.s32 1, %s4
  %s7 = scalar_select 0, %s6, %s4
  loop: start=0, step=1, limit=4
  $region2: #{cvae_forward.11} parent=0 // loop_pre_header
    _
  $region3: #{cvae_forward.11} parent=0 // loop_header
    %s9 = sphi 0, %s13
    %p10 = scmp.ge.s32.totalorder %s9, 4
    %s19 = sphi 0, %s21
    %s22 = sphi 0, %s19
    %s23 = sphi 0, %s22
    %s39 = sphi 0, %s23
    %s43 = sphi 0, %s43
    %s45 = sphi 0, %s43
    %s46 = sphi 0, %s45
    %s60 = sphi 0, %s46
    %s64 = sphi 0, %s64
    %s66 = sphi 0, %s64
    %s67 = sphi 0, %s66
    %s81 = sphi 0, %s67
    %s87 = sphi 0, %s89
    %s90 = sphi 0, %s87
    %s91 = sphi 0, %s90
    %s107 = sphi 0, %s91
  $region4: #{cvae_forward.11} parent=0 // loop_header_branch
    %12 = sbr.rel (%p10) target = $region8
  $region5: #{cvae_forward.11} parent=0 // loop_body
    %s14 = ssub.s32 %s9, 1
    %s15 = ssub.s32 %s9, 2
    %s16 = sadd.s32 %s9, 1
    %s17 = ssub.s32 %s9, %s16
    %p18 = scmp.eq.s32.totalorder %s17, 0
    %s20 = sadd.s32 %s19, 1
    %s21 = scalar_select %p18, %s19, %s20
    %p24 = pneg %p18
    %p25 = scmp.eq.s32.totalorder %s9, 1
    %p26 = por %p24, %p25
    %p27 = scmp.ne.s32.totalorder %s19, %s22
    %p28 = scmp.eq.s32.totalorder %s9, 0
    %p29 = por %p27, %p28
    %p30 = scmp.ne.s32.totalorder %s19, %s22
    %p31 = scmp.eq.s32.totalorder %s14, 1
    %p32 = por %p30, %p31
    %p33 = scmp.ne.s32.totalorder %s22, %s23
    %p34 = scmp.eq.s32.totalorder %s14, 0
    %p35 = por %p33, %p34
    %p36 = scmp.ne.s32.totalorder %s22, %s23
    %p37 = scmp.eq.s32.totalorder %s15, 1
    %p38 = por %p36, %p37
    %p40 = scmp.ne.s32.totalorder %s23, %s39
    %p41 = scmp.eq.s32.totalorder %s15, 0
    %p42 = por %p40, %p41
    %s44 = sadd.s32 %s43, 1
    %p47 = scmp.eq.s32.totalorder %s9, 1
    %p48 = scmp.ne.s32.totalorder %s43, %s45
    %p49 = scmp.eq.s32.totalorder %s9, 0
    %p50 = por %p48, %p49
    %p51 = scmp.ne.s32.totalorder %s43, %s45
    %p52 = scmp.eq.s32.totalorder %s14, 1
    %p53 = por %p51, %p52
    %p54 = scmp.ne.s32.totalorder %s45, %s46
    %p55 = scmp.eq.s32.totalorder %s14, 0
    %p56 = por %p54, %p55
    %p57 = scmp.ne.s32.totalorder %s45, %s46
    %p58 = scmp.eq.s32.totalorder %s15, 1
    %p59 = por %p57, %p58
    %p61 = scmp.ne.s32.totalorder %s46, %s60
    %p62 = scmp.eq.s32.totalorder %s15, 0
    %p63 = por %p61, %p62
    %s65 = sadd.s32 %s64, 1
    %p68 = scmp.eq.s32.totalorder %s9, 1
    %p69 = scmp.ne.s32.totalorder %s64, %s66
    %p70 = scmp.eq.s32.totalorder %s9, 0
    %p71 = por %p69, %p70
    %p72 = scmp.ne.s32.totalorder %s64, %s66
    %p73 = scmp.eq.s32.totalorder %s14, 1
    %p74 = por %p72, %p73
    %p75 = scmp.ne.s32.totalorder %s66, %s67
    %p76 = scmp.eq.s32.totalorder %s14, 0
    %p77 = por %p75, %p76
    %p78 = scmp.ne.s32.totalorder %s66, %s67
    %p79 = scmp.eq.s32.totalorder %s15, 1
    %p80 = por %p78, %p79
    %p82 = scmp.ne.s32.totalorder %s67, %s81
    %p83 = scmp.eq.s32.totalorder %s15, 0
    %p84 = por %p82, %p83
    %s85 = ssub.s32 %s9, %s16
    %p86 = scmp.eq.s32.totalorder %s85, 0
    %s88 = sadd.s32 %s87, 1
    %s89 = scalar_select %p86, %s87, %s88
    %p92 = pneg %p86
    %p93 = scmp.eq.s32.totalorder %s9, 1
    %p94 = por %p92, %p93
    %p95 = scmp.ne.s32.totalorder %s87, %s90
    %p96 = scmp.eq.s32.totalorder %s9, 0
    %p97 = por %p95, %p96
    %p98 = scmp.ne.s32.totalorder %s87, %s90
    %p99 = scmp.eq.s32.totalorder %s14, 1
    %p100 = por %p98, %p99
    %p101 = scmp.ne.s32.totalorder %s90, %s91
    %p102 = scmp.eq.s32.totalorder %s14, 0
    %p103 = por %p101, %p102
    %p104 = scmp.ne.s32.totalorder %s90, %s91
    %p105 = scmp.eq.s32.totalorder %s15, 1
    %p106 = por %p104, %p105
    %p108 = scmp.ne.s32.totalorder %s91, %s107
    %p109 = scmp.eq.s32.totalorder %s15, 0
    %p110 = por %p108, %p109
    %p111 = scmp.le.s32.totalorder 1, %s9
    %p112 = scmp.lt.s32.totalorder %s9, 3
    %p113 = pnand %p111, %p112
    %p114 = pneg %p113
    // Predicated region
    $region9: #{cvae_forward.11} parent=5 // pred_check
      _
    $region10: #{cvae_forward.11} parent=5 // pred_check_branch
      %116 = sbr.rel (%p113) target = $region12
    $region11: #{cvae_forward.11} parent=5 // pred_region
      %s117 = ssub.s32 %s9, 1
      // Predicated region
      $region13: #{cvae_forward.11} parent=11 // pred_check
        %p118 = pneg %p56
      $region14: #{cvae_forward.11} parent=11 // pred_check_branch
        %120 = sbr.rel (%p118) target = $region16
      $region15: #{cvae_forward.11} parent=11 // pred_region
        _
      $region16: #{cvae_forward.11} parent=11 // pred_fallthru
        _
      // Predicated region
      $region17: #{cvae_forward.11} parent=11 // pred_check
        %p121 = pneg %p77
      $region18: #{cvae_forward.11} parent=11 // pred_check_branch
        %123 = sbr.rel (%p121) target = $region20
      $region19: #{cvae_forward.11} parent=11 // pred_region
        _
      $region20: #{cvae_forward.11} parent=11 // pred_fallthru
        _
    $region12: #{cvae_forward.11} parent=5 // pred_fallthru
      _
    %p124 = scmp.lt.s32.totalorder %s9, 2
    // Predicated region
    $region21: #{cvae_forward.11} parent=5 // pred_check
      %p125 = pneg %p124
    $region22: #{cvae_forward.11} parent=5 // pred_check_branch
      %127 = sbr.rel (%p125) target = $region24
    $region23: #{cvae_forward.11} parent=5 // pred_region
      // Predicated region
      $region25: #{cvae_forward.11} parent=23 // pred_check
        %p128 = pneg %p29
      $region26: #{cvae_forward.11} parent=23 // pred_check_branch
        %130 = sbr.rel (%p128) target = $region28
      $region27: #{cvae_forward.11} parent=23 // pred_region
        %p131 = scmp.lt.s32.totalorder %s9, 1
        %s132 = scalar_select %p131, %s9, 1
        %s133 = smul.addr %s132, 3
        %s134 = smul.addr %s133, 8
        %s135 = scalar_lea.vmem %s0, %s134
      $region28: #{cvae_forward.11} parent=23 // pred_fallthru
        _
    $region24: #{cvae_forward.11} parent=5 // pred_fallthru
      _
    %p136 = scmp.le.s32.totalorder 1, %s9
    %p137 = scmp.lt.s32.totalorder %s9, 3
    %p138 = pnand %p136, %p137
    %p139 = pneg %p138
    // Predicated region
    $region29: #{cvae_forward.11} parent=5 // pred_check
      _
    $region30: #{cvae_forward.11} parent=5 // pred_check_branch
      %141 = sbr.rel (%p138) target = $region32
    $region31: #{cvae_forward.11} parent=5 // pred_region
      %s142 = ssub.s32 %s9, 1
      %p143 = scmp.lt.s32.totalorder %s14, 1
      %s144 = scalar_select %p143, %s14, 1
      %s145 = smul.addr %s144, 3
      %s146 = smul.addr %s145, 8
      %s147 = scalar_lea.vmem %s0, %s146
      %p148 = pneg %p35
      %p149 = pneg %p32
      %p150 = pneg %p56
      %p151 = pneg %p53
      %p152 = pneg %p77
      %p153 = pneg %p74
      %p154 = pneg %p103
      %p155 = pneg %p100
      %p156 = scmp.lt.s32.totalorder %s14, 1
      %s157 = scalar_select %p156, %s14, 1
      %s158 = smul.addr %s157, 2
      %s159 = smul.addr %s158, 8
      %s160 = scalar_lea.vmem %s3, %s159
      %p161 = scmp.lt.s32.totalorder %s14, 1
      %s162 = scalar_select %p161, %s14, 1
      %s163 = smul.addr %s162, 3
      %s164 = smul.addr %s163, 8
      %s165 = scalar_lea.vmem %s0, %s164
      %p166 = scmp.lt.s32.totalorder %s14, 1
      %s167 = scalar_select %p166, %s14, 1
      %s168 = smul.addr %s167, 2
      %s169 = smul.addr %s168, 8
      %s170 = scalar_lea.vmem %s3, %s169
      %v171 = vld [vmem:[%s165] sm:$0xff]
      %v172 = vld [vmem:[%s165 + $0x8] sm:$0x7f]
      %v173 = vld [vmem:[%s1] sm:$0xff]
      %v174 = vld [vmem:[%s1 + $0x8] sm:$0xff]
      %v175 = vld [vmem:[%s1 + $0x10] sm:$0xff]
      %v176 = vld [vmem:[%s1 + $0x18] sm:$0xff]
      %v177 = vld [vmem:[%s1 + $0x20] sm:$0xff]
      %v178 = vld [vmem:[%s1 + $0x28] sm:$0xff]
      %v179 = vld [vmem:[%s1 + $0x30] sm:$0xff]
      %v180 = vld [vmem:[%s1 + $0x38] sm:$0xff]
      %v181 = vld [vmem:[%s1 + $0x40] sm:$0xff]
      %v182 = vld [vmem:[%s1 + $0x48] sm:$0xff]
      %v183 = vld [vmem:[%s1 + $0x50] sm:$0xff]
      %v184 = vld [vmem:[%s1 + $0x58] sm:$0xff]
      %v185 = vld [vmem:[%s1 + $0x60] sm:$0xff]
      %v186 = vld [vmem:[%s1 + $0x68] sm:$0xff]
      %v187 = vld [vmem:[%s1 + $0x70] sm:$0xff]
      %v188 = vld [vmem:[%s165 + $0x1] sm:$0xff]
      %v189 = vld [vmem:[%s165 + $0x9] sm:$0x7f]
      %s190 = scalar_lea.vmem %s1, 120
      %v191 = vld [vmem:[%s190] sm:$0xff]
      %v192 = vld [vmem:[%s190 + $0x8] sm:$0xff]
      %v193 = vld [vmem:[%s190 + $0x10] sm:$0xff]
      %v194 = vld [vmem:[%s190 + $0x18] sm:$0xff]
      %v195 = vld [vmem:[%s190 + $0x20] sm:$0xff]
      %v196 = vld [vmem:[%s190 + $0x28] sm:$0xff]
      %v197 = vld [vmem:[%s190 + $0x30] sm:$0xff]
      %v198 = vld [vmem:[%s190 + $0x38] sm:$0xff]
      %v199 = vld [vmem:[%s190 + $0x40] sm:$0xff]
      %v200 = vld [vmem:[%s190 + $0x48] sm:$0xff]
      %v201 = vld [vmem:[%s190 + $0x50] sm:$0xff]
      %v202 = vld [vmem:[%s190 + $0x58] sm:$0xff]
      %v203 = vld [vmem:[%s190 + $0x60] sm:$0xff]
      %v204 = vld [vmem:[%s190 + $0x68] sm:$0xff]
      %v205 = vld [vmem:[%s190 + $0x70] sm:$0xff]
      %vm206 = vcmask 982016
      %v208 = vsel %vm206, %v188, 0
      %v211 = vsel %vm206, %v189, 0
      %213 = vmatprep.subr.mxu0 0.0
      %214 = vmatpush1.msra.mxu0 %v191
      %215 = vmatprep.subr.mxu0 0.0
      %216 = vmatpush1.msra.mxu0 %v192
      %217 = vmatprep.subr.mxu0 0.0
      %218 = vmatpush1.msra.mxu0 %v193
      %219 = vmatprep.subr.mxu0 0.0
      %220 = vmatpush1.msra.mxu0 %v194
      %221 = vmatprep.subr.mxu0 0.0
      %222 = vmatpush1.msra.mxu0 %v195
      %223 = vmatprep.subr.mxu0 0.0
      %224 = vmatpush1.msra.mxu0 %v196
      %225 = vmatprep.subr.mxu0 0.0
      %226 = vmatpush1.msra.mxu0 %v197
      %227 = vmatprep.subr.mxu0 0.0
      %228 = vmatpush1.msra.mxu0 %v198
      %229 = vmatprep.subr.mxu0 0.0
      %230 = vmatpush1.msra.mxu0 %v199
      %231 = vmatprep.subr.mxu0 0.0
      %232 = vmatpush1.msra.mxu0 %v200
      %233 = vmatprep.subr.mxu0 0.0
      %234 = vmatpush1.msra.mxu0 %v201
      %235 = vmatprep.subr.mxu0 0.0
      %236 = vmatpush1.msra.mxu0 %v202
      %237 = vmatprep.subr.mxu0 0.0
      %238 = vmatpush1.msra.mxu0 %v203
      %239 = vmatprep.subr.mxu0 0.0
      %240 = vmatpush1.msra.mxu0 %v204
      %241 = vmatprep.subr.mxu0 0.0
      %242 = vmatpush1.msra.mxu0 %v205
      %243 = vmatprep.subr.mxu0 0.0
      %244 = vmatpush1.msra.mxu0 0.0
      %245 = vmatprep.subr.mxu0 0.0
      %246 = vmatpush1.msra.mxu0 0.0
      %247 = vmatprep.subr.mxu0 0.0
      %248 = vmatpush1.msra.mxu0 0.0
      %249 = vmatprep.subr.mxu0 0.0
      %250 = vmatpush1.msra.mxu0 0.0
      %251 = vmatprep.subr.mxu0 0.0
      %252 = vmatpush1.msra.mxu0 0.0
      %253 = vmatprep.subr.mxu0 0.0
      %254 = vmatpush1.msra.mxu0 0.0
      %255 = vmatprep.subr.mxu0 0.0
      %256 = vmatpush1.msra.mxu0 0.0
      %257 = vmatprep.subr.mxu0 0.0
      %258 = vmatpush1.msra.mxu0 0.0
      %259 = vmatprep.subr.mxu0 0.0
      %260 = vmatpush1.msra.mxu0 0.0
      %261 = vmatprep.subr.mxu0 0.0
      %262 = vmatpush1.msra.mxu0 0.0
      %263 = vmatprep.subr.mxu0 0.0
      %264 = vmatpush1.msra.mxu0 0.0
      %265 = vmatprep.subr.mxu0 0.0
      %266 = vmatpush1.msra.mxu0 0.0
      %267 = vmatprep.subr.mxu0 0.0
      %268 = vmatpush1.msra.mxu0 0.0
      %269 = vmatprep.subr.mxu0 0.0
      %270 = vmatpush1.msra.mxu0 0.0
      %271 = vmatprep.subr.mxu0 0.0
      %272 = vmatpush1.msra.mxu0 0.0
      %273 = vmatprep.subr.mxu0 0.0
      %274 = vmatpush1.msra.mxu0 0.0
      %275 = vmatprep.subr.mxu0 0.0
      %276 = vmatpush1.msra.mxu0 0.0
      %277 = vmatprep.mubr.f32.mxu0 0.0
      %278 = vmatmul.mubr.f32.gmra.mrb[0].mxu0 %v208
      %v279 = vpop.f32.mrb[0].mxu0
      %v280 = vadd.f32 0.0, %v279
      %v281 = vpop.f32.mrb[0].mxu0
      %282 = vmatprep.mubr.f32.mxu0 0.0
      %283 = vmatmul.mubr.f32.gmra.mrb[0].mxu0 %v211
      %v284 = vpop.f32.mrb[0].mxu0
      %v285 = vadd.f32 0.0, %v284
      %v286 = vpop.f32.mrb[0].mxu0
      %287 = vdwg.mxu0
      %v289 = vsel %vm206, %v171, 0
      %v292 = vsel %vm206, %v172, 0
      %294 = vmatprep.subr.mxu0 0.0
      %295 = vmatpush1.msra.mxu0 %v173
      %296 = vmatprep.subr.mxu0 0.0
      %297 = vmatpush1.msra.mxu0 %v174
      %298 = vmatprep.subr.mxu0 0.0
      %299 = vmatpush1.msra.mxu0 %v175
      %300 = vmatprep.subr.mxu0 0.0
      %301 = vmatpush1.msra.mxu0 %v176
      %302 = vmatprep.subr.mxu0 0.0
      %303 = vmatpush1.msra.mxu0 %v177
      %304 = vmatprep.subr.mxu0 0.0
      %305 = vmatpush1.msra.mxu0 %v178
      %306 = vmatprep.subr.mxu0 0.0
      %307 = vmatpush1.msra.mxu0 %v179
      %308 = vmatprep.subr.mxu0 0.0
      %309 = vmatpush1.msra.mxu0 %v180
      %310 = vmatprep.subr.mxu0 0.0
      %311 = vmatpush1.msra.mxu0 %v181
      %312 = vmatprep.subr.mxu0 0.0
      %313 = vmatpush1.msra.mxu0 %v182
      %314 = vmatprep.subr.mxu0 0.0
      %315 = vmatpush1.msra.mxu0 %v183
      %316 = vmatprep.subr.mxu0 0.0
      %317 = vmatpush1.msra.mxu0 %v184
      %318 = vmatprep.subr.mxu0 0.0
      %319 = vmatpush1.msra.mxu0 %v185
      %320 = vmatprep.subr.mxu0 0.0
      %321 = vmatpush1.msra.mxu0 %v186
      %322 = vmatprep.subr.mxu0 0.0
      %323 = vmatpush1.msra.mxu0 %v187
      %324 = vmatprep.subr.mxu0 0.0
      %325 = vmatpush1.msra.mxu0 0.0
      %326 = vmatprep.subr.mxu0 0.0
      %327 = vmatpush1.msra.mxu0 0.0
      %328 = vmatprep.subr.mxu0 0.0
      %329 = vmatpush1.msra.mxu0 0.0
      %330 = vmatprep.subr.mxu0 0.0
      %331 = vmatpush1.msra.mxu0 0.0
      %332 = vmatprep.subr.mxu0 0.0
      %333 = vmatpush1.msra.mxu0 0.0
      %334 = vmatprep.subr.mxu0 0.0
      %335 = vmatpush1.msra.mxu0 0.0
      %336 = vmatprep.subr.mxu0 0.0
      %337 = vmatpush1.msra.mxu0 0.0
      %338 = vmatprep.subr.mxu0 0.0
      %339 = vmatpush1.msra.mxu0 0.0
      %340 = vmatprep.subr.mxu0 0.0
      %341 = vmatpush1.msra.mxu0 0.0
      %342 = vmatprep.subr.mxu0 0.0
      %343 = vmatpush1.msra.mxu0 0.0
      %344 = vmatprep.subr.mxu0 0.0
      %345 = vmatpush1.msra.mxu0 0.0
      %346 = vmatprep.subr.mxu0 0.0
      %347 = vmatpush1.msra.mxu0 0.0
      %348 = vmatprep.subr.mxu0 0.0
      %349 = vmatpush1.msra.mxu0 0.0
      %350 = vmatprep.subr.mxu0 0.0
      %351 = vmatpush1.msra.mxu0 0.0
      %352 = vmatprep.subr.mxu0 0.0
      %353 = vmatpush1.msra.mxu0 0.0
      %354 = vmatprep.subr.mxu0 0.0
      %355 = vmatpush1.msra.mxu0 0.0
      %356 = vmatprep.subr.mxu0 0.0
      %357 = vmatpush1.msra.mxu0 0.0
      %358 = vmatprep.mubr.f32.mxu0 0.0
      %359 = vmatmul.mubr.f32.gmra.mrb[0].mxu0 %v289
      %v360 = vpop.f32.mrb[0].mxu0
      %v361 = vadd.f32 %v280, %v360
      %v362 = vpop.f32.mrb[0].mxu0
      %363 = vmatprep.mubr.f32.mxu0 0.0
      %364 = vmatmul.mubr.f32.gmra.mrb[0].mxu0 %v292
      %v365 = vpop.f32.mrb[0].mxu0
      %v366 = vadd.f32 %v285, %v365
      %v367 = vpop.f32.mrb[0].mxu0
      %368 = vdwg.mxu0
      %v369 = vld [vmem:[%s165 + $0x2] sm:$0xff]
      %v370 = vld [vmem:[%s165 + $0xa] sm:$0x7f]
      %s371 = scalar_lea.vmem %s1, 240
      %v372 = vld [vmem:[%s371] sm:$0xff]
      %v373 = vld [vmem:[%s371 + $0x8] sm:$0xff]
      %v374 = vld [vmem:[%s371 + $0x10] sm:$0xff]
      %v375 = vld [vmem:[%s371 + $0x18] sm:$0xff]
      %v376 = vld [vmem:[%s371 + $0x20] sm:$0xff]
      %v377 = vld [vmem:[%s371 + $0x28] sm:$0xff]
      %v378 = vld [vmem:[%s371 + $0x30] sm:$0xff]
      %v379 = vld [vmem:[%s371 + $0x38] sm:$0xff]
      %v380 = vld [vmem:[%s371 + $0x40] sm:$0xff]
      %v381 = vld [vmem:[%s371 + $0x48] sm:$0xff]
      %v382 = vld [vmem:[%s371 + $0x50] sm:$0xff]
      %v383 = vld [vmem:[%s371 + $0x58] sm:$0xff]
      %v384 = vld [vmem:[%s371 + $0x60] sm:$0xff]
      %v385 = vld [vmem:[%s371 + $0x68] sm:$0xff]
      %v386 = vld [vmem:[%s371 + $0x70] sm:$0xff]
      %v388 = vsel %vm206, %v369, 0
      %v391 = vsel %vm206, %v370, 0
      %393 = vmatprep.subr.mxu0 0.0
      %394 = vmatpush1.msra.mxu0 %v372
      %395 = vmatprep.subr.mxu0 0.0
      %396 = vmatpush1.msra.mxu0 %v373
      %397 = vmatprep.subr.mxu0 0.0
      %398 = vmatpush1.msra.mxu0 %v374
      %399 = vmatprep.subr.mxu0 0.0
      %400 = vmatpush1.msra.mxu0 %v375
      %401 = vmatprep.subr.mxu0 0.0
      %402 = vmatpush1.msra.mxu0 %v376
      %403 = vmatprep.subr.mxu0 0.0
      %404 = vmatpush1.msra.mxu0 %v377
      %405 = vmatprep.subr.mxu0 0.0
      %406 = vmatpush1.msra.mxu0 %v378
      %407 = vmatprep.subr.mxu0 0.0
      %408 = vmatpush1.msra.mxu0 %v379
      %409 = vmatprep.subr.mxu0 0.0
      %410 = vmatpush1.msra.mxu0 %v380
      %411 = vmatprep.subr.mxu0 0.0
      %412 = vmatpush1.msra.mxu0 %v381
      %413 = vmatprep.subr.mxu0 0.0
      %414 = vmatpush1.msra.mxu0 %v382
      %415 = vmatprep.subr.mxu0 0.0
      %416 = vmatpush1.msra.mxu0 %v383
      %417 = vmatprep.subr.mxu0 0.0
      %418 = vmatpush1.msra.mxu0 %v384
      %419 = vmatprep.subr.mxu0 0.0
      %420 = vmatpush1.msra.mxu0 %v385
      %421 = vmatprep.subr.mxu0 0.0
      %422 = vmatpush1.msra.mxu0 %v386
      %423 = vmatprep.subr.mxu0 0.0
      %424 = vmatpush1.msra.mxu0 0.0
      %425 = vmatprep.subr.mxu0 0.0
      %426 = vmatpush1.msra.mxu0 0.0
      %427 = vmatprep.subr.mxu0 0.0
      %428 = vmatpush1.msra.mxu0 0.0
      %429 = vmatprep.subr.mxu0 0.0
      %430 = vmatpush1.msra.mxu0 0.0
      %431 = vmatprep.subr.mxu0 0.0
      %432 = vmatpush1.msra.mxu0 0.0
      %433 = vmatprep.subr.mxu0 0.0
      %434 = vmatpush1.msra.mxu0 0.0
      %435 = vmatprep.subr.mxu0 0.0
      %436 = vmatpush1.msra.mxu0 0.0
      %437 = vmatprep.subr.mxu0 0.0
      %438 = vmatpush1.msra.mxu0 0.0
      %439 = vmatprep.subr.mxu0 0.0
      %440 = vmatpush1.msra.mxu0 0.0
      %441 = vmatprep.subr.mxu0 0.0
      %442 = vmatpush1.msra.mxu0 0.0
      %443 = vmatprep.subr.mxu0 0.0
      %444 = vmatpush1.msra.mxu0 0.0
      %445 = vmatprep.subr.mxu0 0.0
      %446 = vmatpush1.msra.mxu0 0.0
      %447 = vmatprep.subr.mxu0 0.0
      %448 = vmatpush1.msra.mxu0 0.0
      %449 = vmatprep.subr.mxu0 0.0
      %450 = vmatpush1.msra.mxu0 0.0
      %451 = vmatprep.subr.mxu0 0.0
      %452 = vmatpush1.msra.mxu0 0.0
      %453 = vmatprep.subr.mxu0 0.0
      %454 = vmatpush1.msra.mxu0 0.0
      %455 = vmatprep.subr.mxu0 0.0
      %456 = vmatpush1.msra.mxu0 0.0
      %457 = vmatprep.mubr.f32.mxu0 0.0
      %458 = vmatmul.mubr.f32.gmra.mrb[0].mxu0 %v388
      %v459 = vpop.f32.mrb[0].mxu0
      %v460 = vadd.f32 0.0, %v459
      %v461 = vpop.f32.mrb[0].mxu0
      %462 = vmatprep.mubr.f32.mxu0 0.0
      %463 = vmatmul.mubr.f32.gmra.mrb[0].mxu0 %v391
      %v464 = vpop.f32.mrb[0].mxu0
      %v465 = vadd.f32 0.0, %v464
      %v466 = vpop.f32.mrb[0].mxu0
      %467 = vdwg.mxu0
      %v468 = vadd.f32 %v361, %v460
      %v469 = vadd.f32 %v366, %v465
      %v470 = vld [vmem:[%s165 + $0x3] sm:$0xff]
      %v471 = vld [vmem:[%s165 + $0xb] sm:$0x7f]
      %s472 = scalar_lea.vmem %s1, 360
      %v473 = vld [vmem:[%s472] sm:$0xff]
      %v474 = vld [vmem:[%s472 + $0x8] sm:$0xff]
      %v475 = vld [vmem:[%s472 + $0x10] sm:$0xff]
      %v476 = vld [vmem:[%s472 + $0x18] sm:$0xff]
      %v477 = vld [vmem:[%s472 + $0x20] sm:$0xff]
      %v478 = vld [vmem:[%s472 + $0x28] sm:$0xff]
      %v479 = vld [vmem:[%s472 + $0x30] sm:$0xff]
      %v480 = vld [vmem:[%s472 + $0x38] sm:$0xff]
      %v481 = vld [vmem:[%s472 + $0x40] sm:$0xff]
      %v482 = vld [vmem:[%s472 + $0x48] sm:$0xff]
      %v483 = vld [vmem:[%s472 + $0x50] sm:$0xff]
      %v484 = vld [vmem:[%s472 + $0x58] sm:$0xff]
      %v485 = vld [vmem:[%s472 + $0x60] sm:$0xff]
      %v486 = vld [vmem:[%s472 + $0x68] sm:$0xff]
      %v487 = vld [vmem:[%s472 + $0x70] sm:$0xff]
      %v489 = vsel %vm206, %v470, 0
      %v492 = vsel %vm206, %v471, 0
      %494 = vmatprep.subr.mxu0 0.0
      %495 = vmatpush1.msra.mxu0 %v473
      %496 = vmatprep.subr.mxu0 0.0
      %497 = vmatpush1.msra.mxu0 %v474
      %498 = vmatprep.subr.mxu0 0.0
      %499 = vmatpush1.msra.mxu0 %v475
      %500 = vmatprep.subr.mxu0 0.0
      %501 = vmatpush1.msra.mxu0 %v476
      %502 = vmatprep.subr.mxu0 0.0
      %503 = vmatpush1.msra.mxu0 %v477
      %504 = vmatprep.subr.mxu0 0.0
      %505 = vmatpush1.msra.mxu0 %v478
      %506 = vmatprep.subr.mxu0 0.0
      %507 = vmatpush1.msra.mxu0 %v479
      %508 = vmatprep.subr.mxu0 0.0
      %509 = vmatpush1.msra.mxu0 %v480
      %510 = vmatprep.subr.mxu0 0.0
      %511 = vmatpush1.msra.mxu0 %v481
      %512 = vmatprep.subr.mxu0 0.0
      %513 = vmatpush1.msra.mxu0 %v482
      %514 = vmatprep.subr.mxu0 0.0
      %515 = vmatpush1.msra.mxu0 %v483
      %516 = vmatprep.subr.mxu0 0.0
      %517 = vmatpush1.msra.mxu0 %v484
      %518 = vmatprep.subr.mxu0 0.0
      %519 = vmatpush1.msra.mxu0 %v485
      %520 = vmatprep.subr.mxu0 0.0
      %521 = vmatpush1.msra.mxu0 %v486
      %522 = vmatprep.subr.mxu0 0.0
      %523 = vmatpush1.msra.mxu0 %v487
      %524 = vmatprep.subr.mxu0 0.0
      %525 = vmatpush1.msra.mxu0 0.0
      %526 = vmatprep.subr.mxu0 0.0
      %527 = vmatpush1.msra.mxu0 0.0
      %528 = vmatprep.subr.mxu0 0.0
      %529 = vmatpush1.msra.mxu0 0.0
      %530 = vmatprep.subr.mxu0 0.0
      %531 = vmatpush1.msra.mxu0 0.0
      %532 = vmatprep.subr.mxu0 0.0
      %533 = vmatpush1.msra.mxu0 0.0
      %534 = vmatprep.subr.mxu0 0.0
      %535 = vmatpush1.msra.mxu0 0.0
      %536 = vmatprep.subr.mxu0 0.0
      %537 = vmatpush1.msra.mxu0 0.0
      %538 = vmatprep.subr.mxu0 0.0
      %539 = vmatpush1.msra.mxu0 0.0
      %540 = vmatprep.subr.mxu0 0.0
      %541 = vmatpush1.msra.mxu0 0.0
      %542 = vmatprep.subr.mxu0 0.0
      %543 = vmatpush1.msra.mxu0 0.0
      %544 = vmatprep.subr.mxu0 0.0
      %545 = vmatpush1.msra.mxu0 0.0
      %546 = vmatprep.subr.mxu0 0.0
      %547 = vmatpush1.msra.mxu0 0.0
      %548 = vmatprep.subr.mxu0 0.0
      %549 = vmatpush1.msra.mxu0 0.0
      %550 = vmatprep.subr.mxu0 0.0
      %551 = vmatpush1.msra.mxu0 0.0
      %552 = vmatprep.subr.mxu0 0.0
      %553 = vmatpush1.msra.mxu0 0.0
      %554 = vmatprep.subr.mxu0 0.0
      %555 = vmatpush1.msra.mxu0 0.0
      %556 = vmatprep.subr.mxu0 0.0
      %557 = vmatpush1.msra.mxu0 0.0
      %558 = vmatprep.mubr.f32.mxu0 0.0
      %559 = vmatmul.mubr.f32.gmra.mrb[0].mxu0 %v489
      %v560 = vpop.f32.mrb[0].mxu0
      %v561 = vadd.f32 0.0, %v560
      %v562 = vpop.f32.mrb[0].mxu0
      %563 = vmatprep.mubr.f32.mxu0 0.0
      %564 = vmatmul.mubr.f32.gmra.mrb[0].mxu0 %v492
      %v565 = vpop.f32.mrb[0].mxu0
      %v566 = vadd.f32 0.0, %v565
      %v567 = vpop.f32.mrb[0].mxu0
      %568 = vdwg.mxu0
      %v569 = vadd.f32 %v468, %v561
      %v570 = vadd.f32 %v469, %v566
      %v571 = vld [vmem:[%s165 + $0x4] sm:$0xff]
      %v572 = vld [vmem:[%s165 + $0xc] sm:$0x7f]
      %s573 = scalar_lea.vmem %s1, 480
      %v574 = vld [vmem:[%s573] sm:$0xff]
      %v575 = vld [vmem:[%s573 + $0x8] sm:$0xff]
      %v576 = vld [vmem:[%s573 + $0x10] sm:$0xff]
      %v577 = vld [vmem:[%s573 + $0x18] sm:$0xff]
      %v578 = vld [vmem:[%s573 + $0x20] sm:$0xff]
      %v579 = vld [vmem:[%s573 + $0x28] sm:$0xff]
      %v580 = vld [vmem:[%s573 + $0x30] sm:$0xff]
      %v581 = vld [vmem:[%s573 + $0x38] sm:$0xff]
      %v582 = vld [vmem:[%s573 + $0x40] sm:$0xff]
      %v583 = vld [vmem:[%s573 + $0x48] sm:$0xff]
      %v584 = vld [vmem:[%s573 + $0x50] sm:$0xff]
      %v585 = vld [vmem:[%s573 + $0x58] sm:$0xff]
      %v586 = vld [vmem:[%s573 + $0x60] sm:$0xff]
      %v587 = vld [vmem:[%s573 + $0x68] sm:$0xff]
      %v588 = vld [vmem:[%s573 + $0x70] sm:$0xff]
      %v590 = vsel %vm206, %v571, 0
      %v593 = vsel %vm206, %v572, 0
      %595 = vmatprep.subr.mxu0 0.0
      %596 = vmatpush1.msra.mxu0 %v574
      %597 = vmatprep.subr.mxu0 0.0
      %598 = vmatpush1.msra.mxu0 %v575
      %599 = vmatprep.subr.mxu0 0.0
      %600 = vmatpush1.msra.mxu0 %v576
      %601 = vmatprep.subr.mxu0 0.0
      %602 = vmatpush1.msra.mxu0 %v577
      %603 = vmatprep.subr.mxu0 0.0
      %604 = vmatpush1.msra.mxu0 %v578
      %605 = vmatprep.subr.mxu0 0.0
      %606 = vmatpush1.msra.mxu0 %v579
      %607 = vmatprep.subr.mxu0 0.0
      %608 = vmatpush1.msra.mxu0 %v580
      %609 = vmatprep.subr.mxu0 0.0
      %610 = vmatpush1.msra.mxu0 %v581
      %611 = vmatprep.subr.mxu0 0.0
      %612 = vmatpush1.msra.mxu0 %v582
      %613 = vmatprep.subr.mxu0 0.0
      %614 = vmatpush1.msra.mxu0 %v583
      %615 = vmatprep.subr.mxu0 0.0
      %616 = vmatpush1.msra.mxu0 %v584
      %617 = vmatprep.subr.mxu0 0.0
      %618 = vmatpush1.msra.mxu0 %v585
      %619 = vmatprep.subr.mxu0 0.0
      %620 = vmatpush1.msra.mxu0 %v586
      %621 = vmatprep.subr.mxu0 0.0
      %622 = vmatpush1.msra.mxu0 %v587
      %623 = vmatprep.subr.mxu0 0.0
      %624 = vmatpush1.msra.mxu0 %v588
      %625 = vmatprep.subr.mxu0 0.0
      %626 = vmatpush1.msra.mxu0 0.0
      %627 = vmatprep.subr.mxu0 0.0
      %628 = vmatpush1.msra.mxu0 0.0
      %629 = vmatprep.subr.mxu0 0.0
      %630 = vmatpush1.msra.mxu0 0.0
      %631 = vmatprep.subr.mxu0 0.0
      %632 = vmatpush1.msra.mxu0 0.0
      %633 = vmatprep.subr.mxu0 0.0
      %634 = vmatpush1.msra.mxu0 0.0
      %635 = vmatprep.subr.mxu0 0.0
      %636 = vmatpush1.msra.mxu0 0.0
      %637 = vmatprep.subr.mxu0 0.0
      %638 = vmatpush1.msra.mxu0 0.0
      %639 = vmatprep.subr.mxu0 0.0
      %640 = vmatpush1.msra.mxu0 0.0
      %641 = vmatprep.subr.mxu0 0.0
      %642 = vmatpush1.msra.mxu0 0.0
      %643 = vmatprep.subr.mxu0 0.0
      %644 = vmatpush1.msra.mxu0 0.0
      %645 = vmatprep.subr.mxu0 0.0
      %646 = vmatpush1.msra.mxu0 0.0
      %647 = vmatprep.subr.mxu0 0.0
      %648 = vmatpush1.msra.mxu0 0.0
      %649 = vmatprep.subr.mxu0 0.0
      %650 = vmatpush1.msra.mxu0 0.0
      %651 = vmatprep.subr.mxu0 0.0
      %652 = vmatpush1.msra.mxu0 0.0
      %653 = vmatprep.subr.mxu0 0.0
      %654 = vmatpush1.msra.mxu0 0.0
      %655 = vmatprep.subr.mxu0 0.0
      %656 = vmatpush1.msra.mxu0 0.0
      %657 = vmatprep.subr.mxu0 0.0
      %658 = vmatpush1.msra.mxu0 0.0
      %659 = vmatprep.mubr.f32.mxu0 0.0
      %660 = vmatmul.mubr.f32.gmra.mrb[0].mxu0 %v590
      %v661 = vpop.f32.mrb[0].mxu0
      %v662 = vadd.f32 0.0, %v661
      %v663 = vpop.f32.mrb[0].mxu0
      %664 = vmatprep.mubr.f32.mxu0 0.0
      %665 = vmatmul.mubr.f32.gmra.mrb[0].mxu0 %v593
      %v666 = vpop.f32.mrb[0].mxu0
      %v667 = vadd.f32 0.0, %v666
      %v668 = vpop.f32.mrb[0].mxu0
      %669 = vdwg.mxu0
      %v670 = vadd.f32 %v569, %v662
      %v671 = vadd.f32 %v570, %v667
      %v672 = vld [vmem:[%s2] sm:$0x1]
      %v674 = vlaneseq
      %v675 = vshrl.u32 %v674, 7
      %v676 = vsub.s32 0, %v675
      %v677 = vrot.slane %v672, %v676
      %v679 = vadd.f32 %v670, %v677
      %v680 = vadd.f32 %v671, %v677
      %vm681 = vcmp.ge.f32.partialorder %v679, 0.0
      %vm682 = vcmp.ge.f32.partialorder %v680, 0.0
      %v683 = vmul.f32 %v679, 0.2
      %v684 = vmul.f32 %v680, 0.2
      %v685 = vsel %vm681, %v679, %v683
      %v686 = vsel %vm682, %v680, %v684
      %vm687 = vcmask 392192
      %688 = vst.msk [vmem:[%s170] sm:$0xff] %vm687, %v685
      %vm689 = vcmask 391168
      %690 = vst.msk [vmem:[%s170 + $0x8] sm:$0x7f] %vm689, %v686
      %p691 = scmp.lt.s32.totalorder %s14, 1
      %s692 = scalar_select %p691, %s14, 1
      %s693 = smul.addr %s692, 2
      %s694 = smul.addr %s693, 8
      %s695 = scalar_lea.vmem %s3, %s694
      // Predicated region
      $region33: #{cvae_forward.11} parent=31 // pred_check
        %p696 = pneg %p100
      $region34: #{cvae_forward.11} parent=31 // pred_check_branch
        %698 = sbr.rel (%p696) target = $region36
      $region35: #{cvae_forward.11} parent=31 // pred_region
        _
      $region36: #{cvae_forward.11} parent=31 // pred_fallthru
        _
    $region32: #{cvae_forward.11} parent=5 // pred_fallthru
      _
    %p699 = scmp.le.s32.totalorder 2, %s9
    // Predicated region
    $region37: #{cvae_forward.11} parent=5 // pred_check
      %p700 = pneg %p699
    $region38: #{cvae_forward.11} parent=5 // pred_check_branch
      %702 = sbr.rel (%p700) target = $region40
    $region39: #{cvae_forward.11} parent=5 // pred_region
      %s703 = ssub.s32 %s9, 2
      // Predicated region
      $region41: #{cvae_forward.11} parent=39 // pred_check
        %p704 = pneg %p106
      $region42: #{cvae_forward.11} parent=39 // pred_check_branch
        %706 = sbr.rel (%p704) target = $region44
      $region43: #{cvae_forward.11} parent=39 // pred_region
        %p707 = scmp.lt.s32.totalorder %s15, 1
        %s708 = scalar_select %p707, %s15, 1
        %s709 = smul.addr %s708, 2
        %s710 = smul.addr %s709, 8
        %s711 = scalar_lea.vmem %s3, %s710
      $region44: #{cvae_forward.11} parent=39 // pred_fallthru
        _
    $region40: #{cvae_forward.11} parent=5 // pred_fallthru
      _
  $region6: #{cvae_forward.11} parent=0 // loop_footer
    %s13 = sadd.s32 1, %s9
  $region7: #{cvae_forward.11} parent=0 // loop_footer_branch
    %8 = sbr.rel target = $region3
  $region8: #{cvae_forward.11} parent=0 // loop_exit
    _

// kernel: cvae_forward.12
$region0: #{cvae_forward.12}
  #allocation0 [shape = 'u32[]', space=smem, size = 0x4, offset = 0x4, fixed_abs, tag = 'smem constant byte address 0x4 - core index']
  #allocation1 [shape = 'u32[144,128]{1,0:T(1,128)}', space=vmem, size = 0x12000, scoped, tag = 'internal scratch']
  %s0 = inlined_call_operand.vmem [shape: f32[2,12,64], index: 0, kind: input, shape index: {}]
  %s1 = inlined_call_operand.vmem [shape: f32[5,64,4], index: 1, kind: input, shape index: {}]
  %s2 = inlined_call_operand.vmem [shape: f32[1,4], index: 2, kind: input, shape index: {}]
  %s3 = inlined_call_operand.vmem [shape: f32[2,8,4], index: 3, kind: output, shape index: {}]
  %s4 = sld [smem:[#allocation0]]
  $region45: #{cvae_forward.12} parent=0
    _
  %s6 = ssub.s32 1, %s4
  %s7 = scalar_select 0, %s6, %s4
  loop: start=0, step=1, limit=4
  $region2: #{cvae_forward.12} parent=0 // loop_pre_header
    _
  $region3: #{cvae_forward.12} parent=0 // loop_header
    %s9 = sphi 0, %s13
    %p10 = scmp.ge.s32.totalorder %s9, 4
    %s19 = sphi 0, %s21
    %s22 = sphi 0, %s19
    %s23 = sphi 0, %s22
    %s39 = sphi 0, %s23
    %s43 = sphi 0, %s43
    %s45 = sphi 0, %s43
    %s46 = sphi 0, %s45
    %s60 = sphi 0, %s46
    %s64 = sphi 0, %s64
    %s66 = sphi 0, %s64
    %s67 = sphi 0, %s66
    %s81 = sphi 0, %s67
    %s87 = sphi 0, %s89
    %s90 = sphi 0, %s87
    %s91 = sphi 0, %s90
    %s107 = sphi 0, %s91
  $region4: #{cvae_forward.12} parent=0 // loop_header_branch
    %12 = sbr.rel (%p10) target = $region8
  $region5: #{cvae_forward.12} parent=0 // loop_body
    %s14 = ssub.s32 %s9, 1
    %s15 = ssub.s32 %s9, 2
    %s16 = sadd.s32 %s9, 1
    %s17 = ssub.s32 %s9, %s16
    %p18 = scmp.eq.s32.totalorder %s17, 0
    %s20 = sadd.s32 %s19, 1
    %s21 = scalar_select %p18, %s19, %s20
    %p24 = pneg %p18
    %p25 = scmp.eq.s32.totalorder %s9, 1
    %p26 = por %p24, %p25
    %p27 = scmp.ne.s32.totalorder %s19, %s22
    %p28 = scmp.eq.s32.totalorder %s9, 0
    %p29 = por %p27, %p28
    %p30 = scmp.ne.s32.totalorder %s19, %s22
    %p31 = scmp.eq.s32.totalorder %s14, 1
    %p32 = por %p30, %p31
    %p33 = scmp.ne.s32.totalorder %s22, %s23
    %p34 = scmp.eq.s32.totalorder %s14, 0
    %p35 = por %p33, %p34
    %p36 = scmp.ne.s32.totalorder %s22, %s23
    %p37 = scmp.eq.s32.totalorder %s15, 1
    %p38 = por %p36, %p37
    %p40 = scmp.ne.s32.totalorder %s23, %s39
    %p41 = scmp.eq.s32.totalorder %s15, 0
    %p42 = por %p40, %p41
    %s44 = sadd.s32 %s43, 1
    %p47 = scmp.eq.s32.totalorder %s9, 1
    %p48 = scmp.ne.s32.totalorder %s43, %s45
    %p49 = scmp.eq.s32.totalorder %s9, 0
    %p50 = por %p48, %p49
    %p51 = scmp.ne.s32.totalorder %s43, %s45
    %p52 = scmp.eq.s32.totalorder %s14, 1
    %p53 = por %p51, %p52
    %p54 = scmp.ne.s32.totalorder %s45, %s46
    %p55 = scmp.eq.s32.totalorder %s14, 0
    %p56 = por %p54, %p55
    %p57 = scmp.ne.s32.totalorder %s45, %s46
    %p58 = scmp.eq.s32.totalorder %s15, 1
    %p59 = por %p57, %p58
    %p61 = scmp.ne.s32.totalorder %s46, %s60
    %p62 = scmp.eq.s32.totalorder %s15, 0
    %p63 = por %p61, %p62
    %s65 = sadd.s32 %s64, 1
    %p68 = scmp.eq.s32.totalorder %s9, 1
    %p69 = scmp.ne.s32.totalorder %s64, %s66
    %p70 = scmp.eq.s32.totalorder %s9, 0
    %p71 = por %p69, %p70
    %p72 = scmp.ne.s32.totalorder %s64, %s66
    %p73 = scmp.eq.s32.totalorder %s14, 1
    %p74 = por %p72, %p73
    %p75 = scmp.ne.s32.totalorder %s66, %s67
    %p76 = scmp.eq.s32.totalorder %s14, 0
    %p77 = por %p75, %p76
    %p78 = scmp.ne.s32.totalorder %s66, %s67
    %p79 = scmp.eq.s32.totalorder %s15, 1
    %p80 = por %p78, %p79
    %p82 = scmp.ne.s32.totalorder %s67, %s81
    %p83 = scmp.eq.s32.totalorder %s15, 0
    %p84 = por %p82, %p83
    %s85 = ssub.s32 %s9, %s16
    %p86 = scmp.eq.s32.totalorder %s85, 0
    %s88 = sadd.s32 %s87, 1
    %s89 = scalar_select %p86, %s87, %s88
    %p92 = pneg %p86
    %p93 = scmp.eq.s32.totalorder %s9, 1
    %p94 = por %p92, %p93
    %p95 = scmp.ne.s32.totalorder %s87, %s90
    %p96 = scmp.eq.s32.totalorder %s9, 0
    %p97 = por %p95, %p96
    %p98 = scmp.ne.s32.totalorder %s87, %s90
    %p99 = scmp.eq.s32.totalorder %s14, 1
    %p100 = por %p98, %p99
    %p101 = scmp.ne.s32.totalorder %s90, %s91
    %p102 = scmp.eq.s32.totalorder %s14, 0
    %p103 = por %p101, %p102
    %p104 = scmp.ne.s32.totalorder %s90, %s91
    %p105 = scmp.eq.s32.totalorder %s15, 1
    %p106 = por %p104, %p105
    %p108 = scmp.ne.s32.totalorder %s91, %s107
    %p109 = scmp.eq.s32.totalorder %s15, 0
    %p110 = por %p108, %p109
    %p111 = scmp.le.s32.totalorder 1, %s9
    %p112 = scmp.lt.s32.totalorder %s9, 3
    %p113 = pnand %p111, %p112
    %p114 = pneg %p113
    // Predicated region
    $region9: #{cvae_forward.12} parent=5 // pred_check
      _
    $region10: #{cvae_forward.12} parent=5 // pred_check_branch
      %116 = sbr.rel (%p113) target = $region12
    $region11: #{cvae_forward.12} parent=5 // pred_region
      %s117 = ssub.s32 %s9, 1
      // Predicated region
      $region13: #{cvae_forward.12} parent=11 // pred_check
        %p118 = pneg %p56
      $region14: #{cvae_forward.12} parent=11 // pred_check_branch
        %120 = sbr.rel (%p118) target = $region16
      $region15: #{cvae_forward.12} parent=11 // pred_region
        _
      $region16: #{cvae_forward.12} parent=11 // pred_fallthru
        _
      // Predicated region
      $region17: #{cvae_forward.12} parent=11 // pred_check
        %p121 = pneg %p77
      $region18: #{cvae_forward.12} parent=11 // pred_check_branch
        %123 = sbr.rel (%p121) target = $region20
      $region19: #{cvae_forward.12} parent=11 // pred_region
        _
      $region20: #{cvae_forward.12} parent=11 // pred_fallthru
        _
    $region12: #{cvae_forward.12} parent=5 // pred_fallthru
      _
    %p124 = scmp.lt.s32.totalorder %s9, 2
    // Predicated region
    $region21: #{cvae_forward.12} parent=5 // pred_check
      %p125 = pneg %p124
    $region22: #{cvae_forward.12} parent=5 // pred_check_branch
      %127 = sbr.rel (%p125) target = $region24
    $region23: #{cvae_forward.12} parent=5 // pred_region
      // Predicated region
      $region25: #{cvae_forward.12} parent=23 // pred_check
        %p128 = pneg %p29
      $region26: #{cvae_forward.12} parent=23 // pred_check_branch
        %130 = sbr.rel (%p128) target = $region28
      $region27: #{cvae_forward.12} parent=23 // pred_region
        %p131 = scmp.lt.s32.totalorder %s9, 1
        %s132 = scalar_select %p131, %s9, 1
        %s133 = smul.addr %s132, 2
        %s134 = smul.addr %s133, 8
        %s135 = scalar_lea.vmem %s0, %s134
      $region28: #{cvae_forward.12} parent=23 // pred_fallthru
        _
    $region24: #{cvae_forward.12} parent=5 // pred_fallthru
      _
    %p136 = scmp.le.s32.totalorder 1, %s9
    %p137 = scmp.lt.s32.totalorder %s9, 3
    %p138 = pnand %p136, %p137
    %p139 = pneg %p138
    // Predicated region
    $region29: #{cvae_forward.12} parent=5 // pred_check
      _
    $region30: #{cvae_forward.12} parent=5 // pred_check_branch
      %141 = sbr.rel (%p138) target = $region32
    $region31: #{cvae_forward.12} parent=5 // pred_region
      %s142 = ssub.s32 %s9, 1
      %p143 = scmp.lt.s32.totalorder %s14, 1
      %s144 = scalar_select %p143, %s14, 1
      %s145 = smul.addr %s144, 2
      %s146 = smul.addr %s145, 8
      %s147 = scalar_lea.vmem %s0, %s146
      %p148 = pneg %p35
      %p149 = pneg %p32
      %p150 = pneg %p56
      %p151 = pneg %p53
      %p152 = pneg %p77
      %p153 = pneg %p74
      %p154 = pneg %p103
      %p155 = pneg %p100
      %p156 = scmp.lt.s32.totalorder %s14, 1
      %s157 = scalar_select %p156, %s14, 1
      %s158 = smul.addr %s157, 8
      %s159 = scalar_lea.vmem %s3, %s158
      %p160 = scmp.lt.s32.totalorder %s14, 1
      %s161 = scalar_select %p160, %s14, 1
      %s162 = smul.addr %s161, 2
      %s163 = smul.addr %s162, 8
      %s164 = scalar_lea.vmem %s0, %s163
      %p165 = scmp.lt.s32.totalorder %s14, 1
      %s166 = scalar_select %p165, %s14, 1
      %s167 = smul.addr %s166, 8
      %s168 = scalar_lea.vmem %s3, %s167
      %v169 = vld [vmem:[%s164] sm:$0xff]
      %v170 = vld [vmem:[%s1] sm:$0xff]
      %v171 = vld [vmem:[%s1 + $0x8] sm:$0xff]
      %v172 = vld [vmem:[%s1 + $0x10] sm:$0xff]
      %v173 = vld [vmem:[%s1 + $0x18] sm:$0xff]
      %v174 = vld [vmem:[%s1 + $0x20] sm:$0xff]
      %v175 = vld [vmem:[%s1 + $0x28] sm:$0xff]
      %v176 = vld [vmem:[%s1 + $0x30] sm:$0xff]
      %v177 = vld [vmem:[%s1 + $0x38] sm:$0xff]
      %v178 = vld [vmem:[%s164 + $0x1] sm:$0xff]
      %s179 = scalar_lea.vmem %s1, 64
      %v180 = vld [vmem:[%s179] sm:$0xff]
      %v181 = vld [vmem:[%s179 + $0x8] sm:$0xff]
      %v182 = vld [vmem:[%s179 + $0x10] sm:$0xff]
      %v183 = vld [vmem:[%s179 + $0x18] sm:$0xff]
      %v184 = vld [vmem:[%s179 + $0x20] sm:$0xff]
      %v185 = vld [vmem:[%s179 + $0x28] sm:$0xff]
      %v186 = vld [vmem:[%s179 + $0x30] sm:$0xff]
      %v187 = vld [vmem:[%s179 + $0x38] sm:$0xff]
      %vm188 = vcmask 523264
      %v190 = vsel %vm188, %v178, 0
      %192 = vmatprep.subr.mxu0 0.0
      %193 = vmatpush1.msra.mxu0 %v180
      %194 = vmatprep.subr.mxu0 0.0
      %195 = vmatpush1.msra.mxu0 %v181
      %196 = vmatprep.subr.mxu0 0.0
      %197 = vmatpush1.msra.mxu0 %v182
      %198 = vmatprep.subr.mxu0 0.0
      %199 = vmatpush1.msra.mxu0 %v183
      %200 = vmatprep.subr.mxu0 0.0
      %201 = vmatpush1.msra.mxu0 %v184
      %202 = vmatprep.subr.mxu0 0.0
      %203 = vmatpush1.msra.mxu0 %v185
      %204 = vmatprep.subr.mxu0 0.0
      %205 = vmatpush1.msra.mxu0 %v186
      %206 = vmatprep.subr.mxu0 0.0
      %207 = vmatpush1.msra.mxu0 %v187
      %208 = vmatprep.subr.mxu0 0.0
      %209 = vmatpush1.msra.mxu0 0.0
      %210 = vmatprep.subr.mxu0 0.0
      %211 = vmatpush1.msra.mxu0 0.0
      %212 = vmatprep.subr.mxu0 0.0
      %213 = vmatpush1.msra.mxu0 0.0
      %214 = vmatprep.subr.mxu0 0.0
      %215 = vmatpush1.msra.mxu0 0.0
      %216 = vmatprep.subr.mxu0 0.0
      %217 = vmatpush1.msra.mxu0 0.0
      %218 = vmatprep.subr.mxu0 0.0
      %219 = vmatpush1.msra.mxu0 0.0
      %220 = vmatprep.subr.mxu0 0.0
      %221 = vmatpush1.msra.mxu0 0.0
      %222 = vmatprep.subr.mxu0 0.0
      %223 = vmatpush1.msra.mxu0 0.0
      %224 = vmatprep.subr.mxu0 0.0
      %225 = vmatpush1.msra.mxu0 0.0
      %226 = vmatprep.subr.mxu0 0.0
      %227 = vmatpush1.msra.mxu0 0.0
      %228 = vmatprep.subr.mxu0 0.0
      %229 = vmatpush1.msra.mxu0 0.0
      %230 = vmatprep.subr.mxu0 0.0
      %231 = vmatpush1.msra.mxu0 0.0
      %232 = vmatprep.subr.mxu0 0.0
      %233 = vmatpush1.msra.mxu0 0.0
      %234 = vmatprep.subr.mxu0 0.0
      %235 = vmatpush1.msra.mxu0 0.0
      %236 = vmatprep.subr.mxu0 0.0
      %237 = vmatpush1.msra.mxu0 0.0
      %238 = vmatprep.subr.mxu0 0.0
      %239 = vmatpush1.msra.mxu0 0.0
      %240 = vmatprep.subr.mxu0 0.0
      %241 = vmatpush1.msra.mxu0 0.0
      %242 = vmatprep.subr.mxu0 0.0
      %243 = vmatpush1.msra.mxu0 0.0
      %244 = vmatprep.subr.mxu0 0.0
      %245 = vmatpush1.msra.mxu0 0.0
      %246 = vmatprep.subr.mxu0 0.0
      %247 = vmatpush1.msra.mxu0 0.0
      %248 = vmatprep.subr.mxu0 0.0
      %249 = vmatpush1.msra.mxu0 0.0
      %250 = vmatprep.subr.mxu0 0.0
      %251 = vmatpush1.msra.mxu0 0.0
      %252 = vmatprep.subr.mxu0 0.0
      %253 = vmatpush1.msra.mxu0 0.0
      %254 = vmatprep.subr.mxu0 0.0
      %255 = vmatpush1.msra.mxu0 0.0
      %256 = vmatprep.mubr.f32.mxu0 0.0
      %257 = vmatmul.mubr.f32.gmra.mrb[0].mxu0 %v190
      %v258 = vpop.f32.mrb[0].mxu0
      %v259 = vadd.f32 0.0, %v258
      %v260 = vpop.f32.mrb[0].mxu0
      %261 = vdwg.mxu0
      %v263 = vsel %vm188, %v169, 0
      %265 = vmatprep.subr.mxu0 0.0
      %266 = vmatpush1.msra.mxu0 %v170
      %267 = vmatprep.subr.mxu0 0.0
      %268 = vmatpush1.msra.mxu0 %v171
      %269 = vmatprep.subr.mxu0 0.0
      %270 = vmatpush1.msra.mxu0 %v172
      %271 = vmatprep.subr.mxu0 0.0
      %272 = vmatpush1.msra.mxu0 %v173
      %273 = vmatprep.subr.mxu0 0.0
      %274 = vmatpush1.msra.mxu0 %v174
      %275 = vmatprep.subr.mxu0 0.0
      %276 = vmatpush1.msra.mxu0 %v175
      %277 = vmatprep.subr.mxu0 0.0
      %278 = vmatpush1.msra.mxu0 %v176
      %279 = vmatprep.subr.mxu0 0.0
      %280 = vmatpush1.msra.mxu0 %v177
      %281 = vmatprep.subr.mxu0 0.0
      %282 = vmatpush1.msra.mxu0 0.0
      %283 = vmatprep.subr.mxu0 0.0
      %284 = vmatpush1.msra.mxu0 0.0
      %285 = vmatprep.subr.mxu0 0.0
      %286 = vmatpush1.msra.mxu0 0.0
      %287 = vmatprep.subr.mxu0 0.0
      %288 = vmatpush1.msra.mxu0 0.0
      %289 = vmatprep.subr.mxu0 0.0
      %290 = vmatpush1.msra.mxu0 0.0
      %291 = vmatprep.subr.mxu0 0.0
      %292 = vmatpush1.msra.mxu0 0.0
      %293 = vmatprep.subr.mxu0 0.0
      %294 = vmatpush1.msra.mxu0 0.0
      %295 = vmatprep.subr.mxu0 0.0
      %296 = vmatpush1.msra.mxu0 0.0
      %297 = vmatprep.subr.mxu0 0.0
      %298 = vmatpush1.msra.mxu0 0.0
      %299 = vmatprep.subr.mxu0 0.0
      %300 = vmatpush1.msra.mxu0 0.0
      %301 = vmatprep.subr.mxu0 0.0
      %302 = vmatpush1.msra.mxu0 0.0
      %303 = vmatprep.subr.mxu0 0.0
      %304 = vmatpush1.msra.mxu0 0.0
      %305 = vmatprep.subr.mxu0 0.0
      %306 = vmatpush1.msra.mxu0 0.0
      %307 = vmatprep.subr.mxu0 0.0
      %308 = vmatpush1.msra.mxu0 0.0
      %309 = vmatprep.subr.mxu0 0.0
      %310 = vmatpush1.msra.mxu0 0.0
      %311 = vmatprep.subr.mxu0 0.0
      %312 = vmatpush1.msra.mxu0 0.0
      %313 = vmatprep.subr.mxu0 0.0
      %314 = vmatpush1.msra.mxu0 0.0
      %315 = vmatprep.subr.mxu0 0.0
      %316 = vmatpush1.msra.mxu0 0.0
      %317 = vmatprep.subr.mxu0 0.0
      %318 = vmatpush1.msra.mxu0 0.0
      %319 = vmatprep.subr.mxu0 0.0
      %320 = vmatpush1.msra.mxu0 0.0
      %321 = vmatprep.subr.mxu0 0.0
      %322 = vmatpush1.msra.mxu0 0.0
      %323 = vmatprep.subr.mxu0 0.0
      %324 = vmatpush1.msra.mxu0 0.0
      %325 = vmatprep.subr.mxu0 0.0
      %326 = vmatpush1.msra.mxu0 0.0
      %327 = vmatprep.subr.mxu0 0.0
      %328 = vmatpush1.msra.mxu0 0.0
      %329 = vmatprep.mubr.f32.mxu0 0.0
      %330 = vmatmul.mubr.f32.gmra.mrb[0].mxu0 %v263
      %v331 = vpop.f32.mrb[0].mxu0
      %v332 = vadd.f32 %v259, %v331
      %v333 = vpop.f32.mrb[0].mxu0
      %334 = vdwg.mxu0
      %v335 = vld [vmem:[%s164 + $0x2] sm:$0xff]
      %s336 = scalar_lea.vmem %s1, 128
      %v337 = vld [vmem:[%s336] sm:$0xff]
      %v338 = vld [vmem:[%s336 + $0x8] sm:$0xff]
      %v339 = vld [vmem:[%s336 + $0x10] sm:$0xff]
      %v340 = vld [vmem:[%s336 + $0x18] sm:$0xff]
      %v341 = vld [vmem:[%s336 + $0x20] sm:$0xff]
      %v342 = vld [vmem:[%s336 + $0x28] sm:$0xff]
      %v343 = vld [vmem:[%s336 + $0x30] sm:$0xff]
      %v344 = vld [vmem:[%s336 + $0x38] sm:$0xff]
      %v346 = vsel %vm188, %v335, 0
      %348 = vmatprep.subr.mxu0 0.0
      %349 = vmatpush1.msra.mxu0 %v337
      %350 = vmatprep.subr.mxu0 0.0
      %351 = vmatpush1.msra.mxu0 %v338
      %352 = vmatprep.subr.mxu0 0.0
      %353 = vmatpush1.msra.mxu0 %v339
      %354 = vmatprep.subr.mxu0 0.0
      %355 = vmatpush1.msra.mxu0 %v340
      %356 = vmatprep.subr.mxu0 0.0
      %357 = vmatpush1.msra.mxu0 %v341
      %358 = vmatprep.subr.mxu0 0.0
      %359 = vmatpush1.msra.mxu0 %v342
      %360 = vmatprep.subr.mxu0 0.0
      %361 = vmatpush1.msra.mxu0 %v343
      %362 = vmatprep.subr.mxu0 0.0
      %363 = vmatpush1.msra.mxu0 %v344
      %364 = vmatprep.subr.mxu0 0.0
      %365 = vmatpush1.msra.mxu0 0.0
      %366 = vmatprep.subr.mxu0 0.0
      %367 = vmatpush1.msra.mxu0 0.0
      %368 = vmatprep.subr.mxu0 0.0
      %369 = vmatpush1.msra.mxu0 0.0
      %370 = vmatprep.subr.mxu0 0.0
      %371 = vmatpush1.msra.mxu0 0.0
      %372 = vmatprep.subr.mxu0 0.0
      %373 = vmatpush1.msra.mxu0 0.0
      %374 = vmatprep.subr.mxu0 0.0
      %375 = vmatpush1.msra.mxu0 0.0
      %376 = vmatprep.subr.mxu0 0.0
      %377 = vmatpush1.msra.mxu0 0.0
      %378 = vmatprep.subr.mxu0 0.0
      %379 = vmatpush1.msra.mxu0 0.0
      %380 = vmatprep.subr.mxu0 0.0
      %381 = vmatpush1.msra.mxu0 0.0
      %382 = vmatprep.subr.mxu0 0.0
      %383 = vmatpush1.msra.mxu0 0.0
      %384 = vmatprep.subr.mxu0 0.0
      %385 = vmatpush1.msra.mxu0 0.0
      %386 = vmatprep.subr.mxu0 0.0
      %387 = vmatpush1.msra.mxu0 0.0
      %388 = vmatprep.subr.mxu0 0.0
      %389 = vmatpush1.msra.mxu0 0.0
      %390 = vmatprep.subr.mxu0 0.0
      %391 = vmatpush1.msra.mxu0 0.0
      %392 = vmatprep.subr.mxu0 0.0
      %393 = vmatpush1.msra.mxu0 0.0
      %394 = vmatprep.subr.mxu0 0.0
      %395 = vmatpush1.msra.mxu0 0.0
      %396 = vmatprep.subr.mxu0 0.0
      %397 = vmatpush1.msra.mxu0 0.0
      %398 = vmatprep.subr.mxu0 0.0
      %399 = vmatpush1.msra.mxu0 0.0
      %400 = vmatprep.subr.mxu0 0.0
      %401 = vmatpush1.msra.mxu0 0.0
      %402 = vmatprep.subr.mxu0 0.0
      %403 = vmatpush1.msra.mxu0 0.0
      %404 = vmatprep.subr.mxu0 0.0
      %405 = vmatpush1.msra.mxu0 0.0
      %406 = vmatprep.subr.mxu0 0.0
      %407 = vmatpush1.msra.mxu0 0.0
      %408 = vmatprep.subr.mxu0 0.0
      %409 = vmatpush1.msra.mxu0 0.0
      %410 = vmatprep.subr.mxu0 0.0
      %411 = vmatpush1.msra.mxu0 0.0
      %412 = vmatprep.mubr.f32.mxu0 0.0
      %413 = vmatmul.mubr.f32.gmra.mrb[0].mxu0 %v346
      %v414 = vpop.f32.mrb[0].mxu0
      %v415 = vadd.f32 0.0, %v414
      %v416 = vpop.f32.mrb[0].mxu0
      %417 = vdwg.mxu0
      %v418 = vadd.f32 %v332, %v415
      %v419 = vld [vmem:[%s164 + $0x3] sm:$0xff]
      %s420 = scalar_lea.vmem %s1, 192
      %v421 = vld [vmem:[%s420] sm:$0xff]
      %v422 = vld [vmem:[%s420 + $0x8] sm:$0xff]
      %v423 = vld [vmem:[%s420 + $0x10] sm:$0xff]
      %v424 = vld [vmem:[%s420 + $0x18] sm:$0xff]
      %v425 = vld [vmem:[%s420 + $0x20] sm:$0xff]
      %v426 = vld [vmem:[%s420 + $0x28] sm:$0xff]
      %v427 = vld [vmem:[%s420 + $0x30] sm:$0xff]
      %v428 = vld [vmem:[%s420 + $0x38] sm:$0xff]
      %v430 = vsel %vm188, %v419, 0
      %432 = vmatprep.subr.mxu0 0.0
      %433 = vmatpush1.msra.mxu0 %v421
      %434 = vmatprep.subr.mxu0 0.0
      %435 = vmatpush1.msra.mxu0 %v422
      %436 = vmatprep.subr.mxu0 0.0
      %437 = vmatpush1.msra.mxu0 %v423
      %438 = vmatprep.subr.mxu0 0.0
      %439 = vmatpush1.msra.mxu0 %v424
      %440 = vmatprep.subr.mxu0 0.0
      %441 = vmatpush1.msra.mxu0 %v425
      %442 = vmatprep.subr.mxu0 0.0
      %443 = vmatpush1.msra.mxu0 %v426
      %444 = vmatprep.subr.mxu0 0.0
      %445 = vmatpush1.msra.mxu0 %v427
      %446 = vmatprep.subr.mxu0 0.0
      %447 = vmatpush1.msra.mxu0 %v428
      %448 = vmatprep.subr.mxu0 0.0
      %449 = vmatpush1.msra.mxu0 0.0
      %450 = vmatprep.subr.mxu0 0.0
      %451 = vmatpush1.msra.mxu0 0.0
      %452 = vmatprep.subr.mxu0 0.0
      %453 = vmatpush1.msra.mxu0 0.0
      %454 = vmatprep.subr.mxu0 0.0
      %455 = vmatpush1.msra.mxu0 0.0
      %456 = vmatprep.subr.mxu0 0.0
      %457 = vmatpush1.msra.mxu0 0.0
      %458 = vmatprep.subr.mxu0 0.0
      %459 = vmatpush1.msra.mxu0 0.0
      %460 = vmatprep.subr.mxu0 0.0
      %461 = vmatpush1.msra.mxu0 0.0
      %462 = vmatprep.subr.mxu0 0.0
      %463 = vmatpush1.msra.mxu0 0.0
      %464 = vmatprep.subr.mxu0 0.0
      %465 = vmatpush1.msra.mxu0 0.0
      %466 = vmatprep.subr.mxu0 0.0
      %467 = vmatpush1.msra.mxu0 0.0
      %468 = vmatprep.subr.mxu0 0.0
      %469 = vmatpush1.msra.mxu0 0.0
      %470 = vmatprep.subr.mxu0 0.0
      %471 = vmatpush1.msra.mxu0 0.0
      %472 = vmatprep.subr.mxu0 0.0
      %473 = vmatpush1.msra.mxu0 0.0
      %474 = vmatprep.subr.mxu0 0.0
      %475 = vmatpush1.msra.mxu0 0.0
      %476 = vmatprep.subr.mxu0 0.0
      %477 = vmatpush1.msra.mxu0 0.0
      %478 = vmatprep.subr.mxu0 0.0
      %479 = vmatpush1.msra.mxu0 0.0
      %480 = vmatprep.subr.mxu0 0.0
      %481 = vmatpush1.msra.mxu0 0.0
      %482 = vmatprep.subr.mxu0 0.0
      %483 = vmatpush1.msra.mxu0 0.0
      %484 = vmatprep.subr.mxu0 0.0
      %485 = vmatpush1.msra.mxu0 0.0
      %486 = vmatprep.subr.mxu0 0.0
      %487 = vmatpush1.msra.mxu0 0.0
      %488 = vmatprep.subr.mxu0 0.0
      %489 = vmatpush1.msra.mxu0 0.0
      %490 = vmatprep.subr.mxu0 0.0
      %491 = vmatpush1.msra.mxu0 0.0
      %492 = vmatprep.subr.mxu0 0.0
      %493 = vmatpush1.msra.mxu0 0.0
      %494 = vmatprep.subr.mxu0 0.0
      %495 = vmatpush1.msra.mxu0 0.0
      %496 = vmatprep.mubr.f32.mxu0 0.0
      %497 = vmatmul.mubr.f32.gmra.mrb[0].mxu0 %v430
      %v498 = vpop.f32.mrb[0].mxu0
      %v499 = vadd.f32 0.0, %v498
      %v500 = vpop.f32.mrb[0].mxu0
      %501 = vdwg.mxu0
      %v502 = vadd.f32 %v418, %v499
      %v503 = vld [vmem:[%s164 + $0x4] sm:$0xff]
      %s504 = scalar_lea.vmem %s1, 256
      %v505 = vld [vmem:[%s504] sm:$0xff]
      %v506 = vld [vmem:[%s504 + $0x8] sm:$0xff]
      %v507 = vld [vmem:[%s504 + $0x10] sm:$0xff]
      %v508 = vld [vmem:[%s504 + $0x18] sm:$0xff]
      %v509 = vld [vmem:[%s504 + $0x20] sm:$0xff]
      %v510 = vld [vmem:[%s504 + $0x28] sm:$0xff]
      %v511 = vld [vmem:[%s504 + $0x30] sm:$0xff]
      %v512 = vld [vmem:[%s504 + $0x38] sm:$0xff]
      %v514 = vsel %vm188, %v503, 0
      %516 = vmatprep.subr.mxu0 0.0
      %517 = vmatpush1.msra.mxu0 %v505
      %518 = vmatprep.subr.mxu0 0.0
      %519 = vmatpush1.msra.mxu0 %v506
      %520 = vmatprep.subr.mxu0 0.0
      %521 = vmatpush1.msra.mxu0 %v507
      %522 = vmatprep.subr.mxu0 0.0
      %523 = vmatpush1.msra.mxu0 %v508
      %524 = vmatprep.subr.mxu0 0.0
      %525 = vmatpush1.msra.mxu0 %v509
      %526 = vmatprep.subr.mxu0 0.0
      %527 = vmatpush1.msra.mxu0 %v510
      %528 = vmatprep.subr.mxu0 0.0
      %529 = vmatpush1.msra.mxu0 %v511
      %530 = vmatprep.subr.mxu0 0.0
      %531 = vmatpush1.msra.mxu0 %v512
      %532 = vmatprep.subr.mxu0 0.0
      %533 = vmatpush1.msra.mxu0 0.0
      %534 = vmatprep.subr.mxu0 0.0
      %535 = vmatpush1.msra.mxu0 0.0
      %536 = vmatprep.subr.mxu0 0.0
      %537 = vmatpush1.msra.mxu0 0.0
      %538 = vmatprep.subr.mxu0 0.0
      %539 = vmatpush1.msra.mxu0 0.0
      %540 = vmatprep.subr.mxu0 0.0
      %541 = vmatpush1.msra.mxu0 0.0
      %542 = vmatprep.subr.mxu0 0.0
      %543 = vmatpush1.msra.mxu0 0.0
      %544 = vmatprep.subr.mxu0 0.0
      %545 = vmatpush1.msra.mxu0 0.0
      %546 = vmatprep.subr.mxu0 0.0
      %547 = vmatpush1.msra.mxu0 0.0
      %548 = vmatprep.subr.mxu0 0.0
      %549 = vmatpush1.msra.mxu0 0.0
      %550 = vmatprep.subr.mxu0 0.0
      %551 = vmatpush1.msra.mxu0 0.0
      %552 = vmatprep.subr.mxu0 0.0
      %553 = vmatpush1.msra.mxu0 0.0
      %554 = vmatprep.subr.mxu0 0.0
      %555 = vmatpush1.msra.mxu0 0.0
      %556 = vmatprep.subr.mxu0 0.0
      %557 = vmatpush1.msra.mxu0 0.0
      %558 = vmatprep.subr.mxu0 0.0
      %559 = vmatpush1.msra.mxu0 0.0
      %560 = vmatprep.subr.mxu0 0.0
      %561 = vmatpush1.msra.mxu0 0.0
      %562 = vmatprep.subr.mxu0 0.0
      %563 = vmatpush1.msra.mxu0 0.0
      %564 = vmatprep.subr.mxu0 0.0
      %565 = vmatpush1.msra.mxu0 0.0
      %566 = vmatprep.subr.mxu0 0.0
      %567 = vmatpush1.msra.mxu0 0.0
      %568 = vmatprep.subr.mxu0 0.0
      %569 = vmatpush1.msra.mxu0 0.0
      %570 = vmatprep.subr.mxu0 0.0
      %571 = vmatpush1.msra.mxu0 0.0
      %572 = vmatprep.subr.mxu0 0.0
      %573 = vmatpush1.msra.mxu0 0.0
      %574 = vmatprep.subr.mxu0 0.0
      %575 = vmatpush1.msra.mxu0 0.0
      %576 = vmatprep.subr.mxu0 0.0
      %577 = vmatpush1.msra.mxu0 0.0
      %578 = vmatprep.subr.mxu0 0.0
      %579 = vmatpush1.msra.mxu0 0.0
      %580 = vmatprep.mubr.f32.mxu0 0.0
      %581 = vmatmul.mubr.f32.gmra.mrb[0].mxu0 %v514
      %v582 = vpop.f32.mrb[0].mxu0
      %v583 = vadd.f32 0.0, %v582
      %v584 = vpop.f32.mrb[0].mxu0
      %585 = vdwg.mxu0
      %v586 = vadd.f32 %v502, %v583
      %v587 = vld [vmem:[%s2] sm:$0x1]
      %v589 = vlaneseq
      %v590 = vshrl.u32 %v589, 7
      %v591 = vsub.s32 0, %v590
      %v592 = vrot.slane %v587, %v591
      %v594 = vadd.f32 %v586, %v592
      %vm595 = vcmp.ge.f32.partialorder %v594, 0.0
      %v596 = vmul.f32 %v594, 0.2
      %v597 = vsel %vm595, %v594, %v596
      %vm598 = vcmask 31744
      %599 = vst.msk [vmem:[%s168] sm:$0xff] %vm598, %v597
      %p600 = scmp.lt.s32.totalorder %s14, 1
      %s601 = scalar_select %p600, %s14, 1
      %s602 = smul.addr %s601, 8
      %s603 = scalar_lea.vmem %s3, %s602
      // Predicated region
      $region33: #{cvae_forward.12} parent=31 // pred_check
        %p604 = pneg %p100
      $region34: #{cvae_forward.12} parent=31 // pred_check_branch
        %606 = sbr.rel (%p604) target = $region36
      $region35: #{cvae_forward.12} parent=31 // pred_region
        _
      $region36: #{cvae_forward.12} parent=31 // pred_fallthru
        _
    $region32: #{cvae_forward.12} parent=5 // pred_fallthru
      _
    %p607 = scmp.le.s32.totalorder 2, %s9
    // Predicated region
    $region37: #{cvae_forward.12} parent=5 // pred_check
      %p608 = pneg %p607
    $region38: #{cvae_forward.12} parent=5 // pred_check_branch
      %610 = sbr.rel (%p608) target = $region40
    $region39: #{cvae_forward.12} parent=5 // pred_region
      %s611 = ssub.s32 %s9, 2
      // Predicated region
      $region41: #{cvae_forward.12} parent=39 // pred_check
        %p612 = pneg %p106
      $region42: #{cvae_forward.12} parent=39 // pred_check_branch
        %614 = sbr.rel (%p612) target = $region44
      $region43: #{cvae_forward.12} parent=39 // pred_region
        %p615 = scmp.lt.s32.totalorder %s15, 1
        %s616 = scalar_select %p615, %s15, 1
        %s617 = smul.addr %s616, 8
        %s618 = scalar_lea.vmem %s3, %s617
      $region44: #{cvae_forward.12} parent=39 // pred_fallthru
        _
    $region40: #{cvae_forward.12} parent=5 // pred_fallthru
      _
  $region6: #{cvae_forward.12} parent=0 // loop_footer
    %s13 = sadd.s32 1, %s9
  $region7: #{cvae_forward.12} parent=0 // loop_footer_branch
    %8 = sbr.rel target = $region3
  $region8: #{cvae_forward.12} parent=0 // loop_exit
    _

// kernel: cvae_forward.13
$region0: #{cvae_forward.13}
  #allocation0 [shape = 'u32[]', space=smem, size = 0x4, offset = 0x4, fixed_abs, tag = 'smem constant byte address 0x4 - core index']
  #allocation1 [shape = 'u32[144,128]{1,0:T(1,128)}', space=vmem, size = 0x12000, scoped, tag = 'internal scratch']
  %s0 = inlined_call_operand.vmem [shape: f32[2,16], index: 0, kind: input, shape index: {}]
  %s1 = inlined_call_operand.vmem [shape: f32[16,16], index: 1, kind: input, shape index: {}]
  %s2 = inlined_call_operand.vmem [shape: f32[1,16], index: 2, kind: input, shape index: {}]
  %s3 = inlined_call_operand.vmem [shape: f32[2,8], index: 3, kind: input, shape index: {}]
  %s4 = inlined_call_operand.vmem [shape: f32[8,16], index: 4, kind: input, shape index: {}]
  %s5 = inlined_call_operand.vmem [shape: f32[1,16], index: 5, kind: input, shape index: {}]
  %s6 = inlined_call_operand.hbm [shape: f32[2,8], index: 6, kind: output, shape index: {0}]
  %s7 = inlined_call_operand.hbm [shape: f32[2,8], index: 7, kind: output, shape index: {1}]
  %s8 = inlined_call_operand.hbm [shape: f32[2,8], index: 8, kind: output, shape index: {2}]
  %s9 = inlined_call_operand.vmem [shape: f32[2,16], index: 9, kind: output, shape index: {3}]
  %10 = xla_tuple %s6, %s7, %s8, %s9
  %s11 = sld [smem:[#allocation0]]
  $region58: #{cvae_forward.13} parent=0
    _
  %s13 = ssub.s32 1, %s11
  %s14 = scalar_select 0, %s13, %s11
  $region1: #{cvae_forward.13} parent=0
    #allocation2 [shape = 'u8[1024]{0}', space=vmem, size = 0x400, scoped, tag = 'output window, operand 0, single buffered']
    #allocation3 [shape = 's32[1]{0}', space=sflag, size = 0x4, scoped, tag = 'scoped memory for cvae_forward.13']
    #allocation4 [shape = 'u8[1024]{0}', space=vmem, size = 0x400, scoped, tag = 'output window, operand 1, single buffered']
    #allocation5 [shape = 's32[1]{0}', space=sflag, size = 0x4, scoped, tag = 'scoped memory for cvae_forward.13']
    #allocation6 [shape = 'u8[1024]{0}', space=vmem, size = 0x400, scoped, tag = 'output window, operand 2, single buffered']
    %15 = vsyncpa [#allocation3], 0
    %16 = vsyncpa [#allocation5], 0
    // Predicated region
    $region2: #{cvae_forward.13} parent=1 // pred_check
      _
    $region3: #{cvae_forward.13} parent=1 // pred_check_branch
      %18 = sbr.rel (0) target = $region5
    $region4: #{cvae_forward.13} parent=1 // pred_region
      _
    $region5: #{cvae_forward.13} parent=1 // pred_fallthru
      _
    // Predicated region
    $region6: #{cvae_forward.13} parent=1 // pred_check
      _
    $region7: #{cvae_forward.13} parent=1 // pred_check_branch
      %20 = sbr.rel (0) target = $region9
    $region8: #{cvae_forward.13} parent=1 // pred_region
      _
    $region9: #{cvae_forward.13} parent=1 // pred_fallthru
      _
    // Predicated region
    $region10: #{cvae_forward.13} parent=1 // pred_check
      _
    $region11: #{cvae_forward.13} parent=1 // pred_check_branch
      %22 = sbr.rel (0) target = $region13
    $region12: #{cvae_forward.13} parent=1 // pred_region
      _
    $region13: #{cvae_forward.13} parent=1 // pred_fallthru
      _
    // Predicated region
    $region14: #{cvae_forward.13} parent=1 // pred_check
      _
    $region15: #{cvae_forward.13} parent=1 // pred_check_branch
      %24 = sbr.rel (0) target = $region17
    $region16: #{cvae_forward.13} parent=1 // pred_region
      _
    $region17: #{cvae_forward.13} parent=1 // pred_fallthru
      _
    // Predicated region
    $region18: #{cvae_forward.13} parent=1 // pred_check
      _
    $region19: #{cvae_forward.13} parent=1 // pred_check_branch
      %26 = sbr.rel (0) target = $region21
    $region20: #{cvae_forward.13} parent=1 // pred_region
      _
    $region21: #{cvae_forward.13} parent=1 // pred_fallthru
      _
    // Predicated region
    $region22: #{cvae_forward.13} parent=1 // pred_check
      _
    $region23: #{cvae_forward.13} parent=1 // pred_check_branch
      %28 = sbr.rel (0) target = $region25
    $region24: #{cvae_forward.13} parent=1 // pred_region
      _
    $region25: #{cvae_forward.13} parent=1 // pred_fallthru
      _
    %v29 = vld [vmem:[%s0] sm:$0x3]
    %v30 = vld [vmem:[%s1] sm:$0xff]
    %v31 = vld [vmem:[%s1 + $0x8] sm:$0xff]
    %v32 = vld [vmem:[%s2] sm:$0x1]
    %v34 = vlaneseq
    %v35 = vshrl.u32 %v34, 7
    %v36 = vsub.s32 0, %v35
    %v37 = vrot.slane %v32, %v36
    %vm39 = vcmask 130048
    %v41 = vsel %vm39, %v29, 0
    %43 = vmatprep.subr.mxu0 0.0
    %44 = vmatpush1.msra.mxu0 %v30
    %45 = vmatprep.subr.mxu0 0.0
    %46 = vmatpush1.msra.mxu0 %v31
    %47 = vmatprep.subr.mxu0 0.0
    %48 = vmatpush1.msra.mxu0 0.0
    %49 = vmatprep.subr.mxu0 0.0
    %50 = vmatpush1.msra.mxu0 0.0
    %51 = vmatprep.subr.mxu0 0.0
    %52 = vmatpush1.msra.mxu0 0.0
    %53 = vmatprep.subr.mxu0 0.0
    %54 = vmatpush1.msra.mxu0 0.0
    %55 = vmatprep.subr.mxu0 0.0
    %56 = vmatpush1.msra.mxu0 0.0
    %57 = vmatprep.subr.mxu0 0.0
    %58 = vmatpush1.msra.mxu0 0.0
    %59 = vmatprep.subr.mxu0 0.0
    %60 = vmatpush1.msra.mxu0 0.0
    %61 = vmatprep.subr.mxu0 0.0
    %62 = vmatpush1.msra.mxu0 0.0
    %63 = vmatprep.subr.mxu0 0.0
    %64 = vmatpush1.msra.mxu0 0.0
    %65 = vmatprep.subr.mxu0 0.0
    %66 = vmatpush1.msra.mxu0 0.0
    %67 = vmatprep.subr.mxu0 0.0
    %68 = vmatpush1.msra.mxu0 0.0
    %69 = vmatprep.subr.mxu0 0.0
    %70 = vmatpush1.msra.mxu0 0.0
    %71 = vmatprep.subr.mxu0 0.0
    %72 = vmatpush1.msra.mxu0 0.0
    %73 = vmatprep.subr.mxu0 0.0
    %74 = vmatpush1.msra.mxu0 0.0
    %75 = vmatprep.subr.mxu0 0.0
    %76 = vmatpush1.msra.mxu0 0.0
    %77 = vmatprep.subr.mxu0 0.0
    %78 = vmatpush1.msra.mxu0 0.0
    %79 = vmatprep.subr.mxu0 0.0
    %80 = vmatpush1.msra.mxu0 0.0
    %81 = vmatprep.subr.mxu0 0.0
    %82 = vmatpush1.msra.mxu0 0.0
    %83 = vmatprep.subr.mxu0 0.0
    %84 = vmatpush1.msra.mxu0 0.0
    %85 = vmatprep.subr.mxu0 0.0
    %86 = vmatpush1.msra.mxu0 0.0
    %87 = vmatprep.subr.mxu0 0.0
    %88 = vmatpush1.msra.mxu0 0.0
    %89 = vmatprep.subr.mxu0 0.0
    %90 = vmatpush1.msra.mxu0 0.0
    %91 = vmatprep.subr.mxu0 0.0
    %92 = vmatpush1.msra.mxu0 0.0
    %93 = vmatprep.subr.mxu0 0.0
    %94 = vmatpush1.msra.mxu0 0.0
    %95 = vmatprep.subr.mxu0 0.0
    %96 = vmatpush1.msra.mxu0 0.0
    %97 = vmatprep.subr.mxu0 0.0
    %98 = vmatpush1.msra.mxu0 0.0
    %99 = vmatprep.subr.mxu0 0.0
    %100 = vmatpush1.msra.mxu0 0.0
    %101 = vmatprep.subr.mxu0 0.0
    %102 = vmatpush1.msra.mxu0 0.0
    %103 = vmatprep.subr.mxu0 0.0
    %104 = vmatpush1.msra.mxu0 0.0
    %105 = vmatprep.subr.mxu0 0.0
    %106 = vmatpush1.msra.mxu0 0.0
    %107 = vmatprep.mubr.f32.mxu0 0.0
    %108 = vmatmul.mubr.f32.gmra.mrb[0].mxu0 %v41
    %v109 = vpop.f32.mrb[0].mxu0
    %v110 = vadd.f32 %v37, %v109
    %v111 = vpop.f32.mrb[0].mxu0
    %112 = vdwg.mxu0
    %v113 = vld [vmem:[%s3] sm:$0x3]
    %v114 = vmul.f32 %v110, 0.5
    %v115 = vmul.f32 %v114, 1.442695
    %v116 = vpow.pop %v115
    %v117 = vmul.f32 %v113, %v116
    %119 = vrot.lane.b32.xlu0 %v110, 120
    %v120 = vpop.permute.xlu0 %119
    %v122 = vadd.f32 %v117, %v120
    %v123 = vld [vmem:[%s4] sm:$0xff]
    %v124 = vld [vmem:[%s5] sm:$0x1]
    %v126 = vlaneseq
    %v127 = vshrl.u32 %v126, 7
    %v128 = vsub.s32 0, %v127
    %v129 = vrot.slane %v124, %v128
    %vm131 = vcmask 64512
    %v133 = vsel %vm131, %v122, 0
    %135 = vmatprep.subr.mxu0 0.0
    %136 = vmatpush1.msra.mxu0 %v123
    %137 = vmatprep.subr.mxu0 0.0
    %138 = vmatpush1.msra.mxu0 0.0
    %139 = vmatprep.subr.mxu0 0.0
    %140 = vmatpush1.msra.mxu0 0.0
    %141 = vmatprep.subr.mxu0 0.0
    %142 = vmatpush1.msra.mxu0 0.0
    %143 = vmatprep.subr.mxu0 0.0
    %144 = vmatpush1.msra.mxu0 0.0
    %145 = vmatprep.subr.mxu0 0.0
    %146 = vmatpush1.msra.mxu0 0.0
    %147 = vmatprep.subr.mxu0 0.0
    %148 = vmatpush1.msra.mxu0 0.0
    %149 = vmatprep.subr.mxu0 0.0
    %150 = vmatpush1.msra.mxu0 0.0
    %151 = vmatprep.subr.mxu0 0.0
    %152 = vmatpush1.msra.mxu0 0.0
    %153 = vmatprep.subr.mxu0 0.0
    %154 = vmatpush1.msra.mxu0 0.0
    %155 = vmatprep.subr.mxu0 0.0
    %156 = vmatpush1.msra.mxu0 0.0
    %157 = vmatprep.subr.mxu0 0.0
    %158 = vmatpush1.msra.mxu0 0.0
    %159 = vmatprep.subr.mxu0 0.0
    %160 = vmatpush1.msra.mxu0 0.0
    %161 = vmatprep.subr.mxu0 0.0
    %162 = vmatpush1.msra.mxu0 0.0
    %163 = vmatprep.subr.mxu0 0.0
    %164 = vmatpush1.msra.mxu0 0.0
    %165 = vmatprep.subr.mxu0 0.0
    %166 = vmatpush1.msra.mxu0 0.0
    %167 = vmatprep.subr.mxu0 0.0
    %168 = vmatpush1.msra.mxu0 0.0
    %169 = vmatprep.subr.mxu0 0.0
    %170 = vmatpush1.msra.mxu0 0.0
    %171 = vmatprep.subr.mxu0 0.0
    %172 = vmatpush1.msra.mxu0 0.0
    %173 = vmatprep.subr.mxu0 0.0
    %174 = vmatpush1.msra.mxu0 0.0
    %175 = vmatprep.subr.mxu0 0.0
    %176 = vmatpush1.msra.mxu0 0.0
    %177 = vmatprep.subr.mxu0 0.0
    %178 = vmatpush1.msra.mxu0 0.0
    %179 = vmatprep.subr.mxu0 0.0
    %180 = vmatpush1.msra.mxu0 0.0
    %181 = vmatprep.subr.mxu0 0.0
    %182 = vmatpush1.msra.mxu0 0.0
    %183 = vmatprep.subr.mxu0 0.0
    %184 = vmatpush1.msra.mxu0 0.0
    %185 = vmatprep.subr.mxu0 0.0
    %186 = vmatpush1.msra.mxu0 0.0
    %187 = vmatprep.subr.mxu0 0.0
    %188 = vmatpush1.msra.mxu0 0.0
    %189 = vmatprep.subr.mxu0 0.0
    %190 = vmatpush1.msra.mxu0 0.0
    %191 = vmatprep.subr.mxu0 0.0
    %192 = vmatpush1.msra.mxu0 0.0
    %193 = vmatprep.subr.mxu0 0.0
    %194 = vmatpush1.msra.mxu0 0.0
    %195 = vmatprep.subr.mxu0 0.0
    %196 = vmatpush1.msra.mxu0 0.0
    %197 = vmatprep.subr.mxu0 0.0
    %198 = vmatpush1.msra.mxu0 0.0
    %199 = vmatprep.mubr.f32.mxu0 0.0
    %200 = vmatmul.mubr.f32.gmra.mrb[0].mxu0 %v133
    %v201 = vpop.f32.mrb[0].mxu0
    %v202 = vadd.f32 %v129, %v201
    %v203 = vpop.f32.mrb[0].mxu0
    %204 = vdwg.mxu0
    %vm205 = vcmask 58368
    %206 = vst.msk [vmem:[#allocation2] sm:$0x3] %vm205, %v110
    %207 = vst.msk [vmem:[#allocation4] sm:$0x3] %vm205, %v120
    %208 = vst.msk [vmem:[#allocation6] sm:$0x3] %vm205, %v122
    %vm209 = vcmask 123904
    %210 = vst.msk [vmem:[%s9] sm:$0x3] %vm209, %v202
    // Predicated region
    $region26: #{cvae_forward.13} parent=1 // pred_check
      _
    $region27: #{cvae_forward.13} parent=1 // pred_check_branch
      %212 = sbr.rel (0) target = $region29
    $region28: #{cvae_forward.13} parent=1 // pred_region
      %s214 = ssub.s32 32, 32
      %215 = vsyncadd [#allocation3], %s214
      %s217 = sshll.u32 [#allocation2], 4
      %s218 = int_to_ptr.vmem [resolvable:$true] %s217
      %220 = dma.vmem_to_hbm [thread:$0]  %s218, 32, %s6, [#allocation3]
    $region29: #{cvae_forward.13} parent=1 // pred_fallthru
      _
    // Predicated region
    $region30: #{cvae_forward.13} parent=1 // pred_check
      _
    $region31: #{cvae_forward.13} parent=1 // pred_check_branch
      %222 = sbr.rel (0) target = $region33
    $region32: #{cvae_forward.13} parent=1 // pred_region
      %s224 = ssub.s32 32, 32
      %225 = vsyncadd [#allocation5], %s224
      %s227 = sshll.u32 [#allocation4], 4
      %s228 = int_to_ptr.vmem [resolvable:$true] %s227
      %230 = dma.vmem_to_hbm [thread:$0]  %s228, 32, %s7, [#allocation5]
    $region33: #{cvae_forward.13} parent=1 // pred_fallthru
      _
    // Predicated region
    $region34: #{cvae_forward.13} parent=1 // pred_check
      _
    $region35: #{cvae_forward.13} parent=1 // pred_check_branch
      %232 = sbr.rel (0) target = $region37
    $region36: #{cvae_forward.13} parent=1 // pred_region
      %s234 = ssub.s32 32, 32
      %235 = vsyncadd [#allocation5], %s234
      %s237 = sshll.u32 [#allocation6], 4
      %s238 = int_to_ptr.vmem [resolvable:$true] %s237
      %240 = dma.vmem_to_hbm [thread:$0]  %s238, 32, %s8, [#allocation5]
    $region37: #{cvae_forward.13} parent=1 // pred_fallthru
      _
    // Predicated region
    $region38: #{cvae_forward.13} parent=1 // pred_check
      _
    $region39: #{cvae_forward.13} parent=1 // pred_check_branch
      %242 = sbr.rel (0) target = $region41
    $region40: #{cvae_forward.13} parent=1 // pred_region
      _
    $region41: #{cvae_forward.13} parent=1 // pred_fallthru
      _
    // Predicated region
    $region42: #{cvae_forward.13} parent=1 // pred_check
      _
    $region43: #{cvae_forward.13} parent=1 // pred_check_branch
      %244 = sbr.rel (0) target = $region45
    $region44: #{cvae_forward.13} parent=1 // pred_region
      %245 = dma.done [#allocation3], 32
    $region45: #{cvae_forward.13} parent=1 // pred_fallthru
      _
    // Predicated region
    $region46: #{cvae_forward.13} parent=1 // pred_check
      _
    $region47: #{cvae_forward.13} parent=1 // pred_check_branch
      %247 = sbr.rel (0) target = $region49
    $region48: #{cvae_forward.13} parent=1 // pred_region
      %248 = dma.done [#allocation5], 32
    $region49: #{cvae_forward.13} parent=1 // pred_fallthru
      _
    // Predicated region
    $region50: #{cvae_forward.13} parent=1 // pred_check
      _
    $region51: #{cvae_forward.13} parent=1 // pred_check_branch
      %250 = sbr.rel (0) target = $region53
    $region52: #{cvae_forward.13} parent=1 // pred_region
      %251 = dma.done [#allocation5], 32
    $region53: #{cvae_forward.13} parent=1 // pred_fallthru
      _
    // Predicated region
    $region54: #{cvae_forward.13} parent=1 // pred_check
      _
    $region55: #{cvae_forward.13} parent=1 // pred_check_branch
      %253 = sbr.rel (0) target = $region57
    $region56: #{cvae_forward.13} parent=1 // pred_region
      _
    $region57: #{cvae_forward.13} parent=1 // pred_fallthru
      _
    %254 = vsyncpa [#allocation3], 1
    %255 = vsyncpa [#allocation5], 1

// kernel: cvae_forward.14
$region0: #{cvae_forward.14}
  #allocation0 [shape = 'u32[]', space=smem, size = 0x4, offset = 0x4, fixed_abs, tag = 'smem constant byte address 0x4 - core index']
  #allocation1 [shape = 'u32[144,128]{1,0:T(1,128)}', space=vmem, size = 0x12000, scoped, tag = 'internal scratch']
  %s0 = inlined_call_operand.vmem [shape: f32[2,14,10], index: 0, kind: input, shape index: {}]
  %s1 = inlined_call_operand.vmem [shape: f32[5,10,48], index: 1, kind: input, shape index: {}]
  %s2 = inlined_call_operand.vmem [shape: f32[1,48], index: 2, kind: input, shape index: {}]
  %s3 = inlined_call_operand.vmem [shape: f32[2,10,48], index: 3, kind: output, shape index: {}]
  %s4 = sld [smem:[#allocation0]]
  $region45: #{cvae_forward.14} parent=0
    _
  %s6 = ssub.s32 1, %s4
  %s7 = scalar_select 0, %s6, %s4
  loop: start=0, step=1, limit=4
  $region2: #{cvae_forward.14} parent=0 // loop_pre_header
    _
  $region3: #{cvae_forward.14} parent=0 // loop_header
    %s9 = sphi 0, %s13
    %p10 = scmp.ge.s32.totalorder %s9, 4
    %s19 = sphi 0, %s21
    %s22 = sphi 0, %s19
    %s23 = sphi 0, %s22
    %s39 = sphi 0, %s23
    %s43 = sphi 0, %s43
    %s45 = sphi 0, %s43
    %s46 = sphi 0, %s45
    %s60 = sphi 0, %s46
    %s64 = sphi 0, %s64
    %s66 = sphi 0, %s64
    %s67 = sphi 0, %s66
    %s81 = sphi 0, %s67
    %s87 = sphi 0, %s89
    %s90 = sphi 0, %s87
    %s91 = sphi 0, %s90
    %s107 = sphi 0, %s91
  $region4: #{cvae_forward.14} parent=0 // loop_header_branch
    %12 = sbr.rel (%p10) target = $region8
  $region5: #{cvae_forward.14} parent=0 // loop_body
    %s14 = ssub.s32 %s9, 1
    %s15 = ssub.s32 %s9, 2
    %s16 = sadd.s32 %s9, 1
    %s17 = ssub.s32 %s9, %s16
    %p18 = scmp.eq.s32.totalorder %s17, 0
    %s20 = sadd.s32 %s19, 1
    %s21 = scalar_select %p18, %s19, %s20
    %p24 = pneg %p18
    %p25 = scmp.eq.s32.totalorder %s9, 1
    %p26 = por %p24, %p25
    %p27 = scmp.ne.s32.totalorder %s19, %s22
    %p28 = scmp.eq.s32.totalorder %s9, 0
    %p29 = por %p27, %p28
    %p30 = scmp.ne.s32.totalorder %s19, %s22
    %p31 = scmp.eq.s32.totalorder %s14, 1
    %p32 = por %p30, %p31
    %p33 = scmp.ne.s32.totalorder %s22, %s23
    %p34 = scmp.eq.s32.totalorder %s14, 0
    %p35 = por %p33, %p34
    %p36 = scmp.ne.s32.totalorder %s22, %s23
    %p37 = scmp.eq.s32.totalorder %s15, 1
    %p38 = por %p36, %p37
    %p40 = scmp.ne.s32.totalorder %s23, %s39
    %p41 = scmp.eq.s32.totalorder %s15, 0
    %p42 = por %p40, %p41
    %s44 = sadd.s32 %s43, 1
    %p47 = scmp.eq.s32.totalorder %s9, 1
    %p48 = scmp.ne.s32.totalorder %s43, %s45
    %p49 = scmp.eq.s32.totalorder %s9, 0
    %p50 = por %p48, %p49
    %p51 = scmp.ne.s32.totalorder %s43, %s45
    %p52 = scmp.eq.s32.totalorder %s14, 1
    %p53 = por %p51, %p52
    %p54 = scmp.ne.s32.totalorder %s45, %s46
    %p55 = scmp.eq.s32.totalorder %s14, 0
    %p56 = por %p54, %p55
    %p57 = scmp.ne.s32.totalorder %s45, %s46
    %p58 = scmp.eq.s32.totalorder %s15, 1
    %p59 = por %p57, %p58
    %p61 = scmp.ne.s32.totalorder %s46, %s60
    %p62 = scmp.eq.s32.totalorder %s15, 0
    %p63 = por %p61, %p62
    %s65 = sadd.s32 %s64, 1
    %p68 = scmp.eq.s32.totalorder %s9, 1
    %p69 = scmp.ne.s32.totalorder %s64, %s66
    %p70 = scmp.eq.s32.totalorder %s9, 0
    %p71 = por %p69, %p70
    %p72 = scmp.ne.s32.totalorder %s64, %s66
    %p73 = scmp.eq.s32.totalorder %s14, 1
    %p74 = por %p72, %p73
    %p75 = scmp.ne.s32.totalorder %s66, %s67
    %p76 = scmp.eq.s32.totalorder %s14, 0
    %p77 = por %p75, %p76
    %p78 = scmp.ne.s32.totalorder %s66, %s67
    %p79 = scmp.eq.s32.totalorder %s15, 1
    %p80 = por %p78, %p79
    %p82 = scmp.ne.s32.totalorder %s67, %s81
    %p83 = scmp.eq.s32.totalorder %s15, 0
    %p84 = por %p82, %p83
    %s85 = ssub.s32 %s9, %s16
    %p86 = scmp.eq.s32.totalorder %s85, 0
    %s88 = sadd.s32 %s87, 1
    %s89 = scalar_select %p86, %s87, %s88
    %p92 = pneg %p86
    %p93 = scmp.eq.s32.totalorder %s9, 1
    %p94 = por %p92, %p93
    %p95 = scmp.ne.s32.totalorder %s87, %s90
    %p96 = scmp.eq.s32.totalorder %s9, 0
    %p97 = por %p95, %p96
    %p98 = scmp.ne.s32.totalorder %s87, %s90
    %p99 = scmp.eq.s32.totalorder %s14, 1
    %p100 = por %p98, %p99
    %p101 = scmp.ne.s32.totalorder %s90, %s91
    %p102 = scmp.eq.s32.totalorder %s14, 0
    %p103 = por %p101, %p102
    %p104 = scmp.ne.s32.totalorder %s90, %s91
    %p105 = scmp.eq.s32.totalorder %s15, 1
    %p106 = por %p104, %p105
    %p108 = scmp.ne.s32.totalorder %s91, %s107
    %p109 = scmp.eq.s32.totalorder %s15, 0
    %p110 = por %p108, %p109
    %p111 = scmp.le.s32.totalorder 1, %s9
    %p112 = scmp.lt.s32.totalorder %s9, 3
    %p113 = pnand %p111, %p112
    %p114 = pneg %p113
    // Predicated region
    $region9: #{cvae_forward.14} parent=5 // pred_check
      _
    $region10: #{cvae_forward.14} parent=5 // pred_check_branch
      %116 = sbr.rel (%p113) target = $region12
    $region11: #{cvae_forward.14} parent=5 // pred_region
      %s117 = ssub.s32 %s9, 1
      // Predicated region
      $region13: #{cvae_forward.14} parent=11 // pred_check
        %p118 = pneg %p56
      $region14: #{cvae_forward.14} parent=11 // pred_check_branch
        %120 = sbr.rel (%p118) target = $region16
      $region15: #{cvae_forward.14} parent=11 // pred_region
        _
      $region16: #{cvae_forward.14} parent=11 // pred_fallthru
        _
      // Predicated region
      $region17: #{cvae_forward.14} parent=11 // pred_check
        %p121 = pneg %p77
      $region18: #{cvae_forward.14} parent=11 // pred_check_branch
        %123 = sbr.rel (%p121) target = $region20
      $region19: #{cvae_forward.14} parent=11 // pred_region
        _
      $region20: #{cvae_forward.14} parent=11 // pred_fallthru
        _
    $region12: #{cvae_forward.14} parent=5 // pred_fallthru
      _
    %p124 = scmp.lt.s32.totalorder %s9, 2
    // Predicated region
    $region21: #{cvae_forward.14} parent=5 // pred_check
      %p125 = pneg %p124
    $region22: #{cvae_forward.14} parent=5 // pred_check_branch
      %127 = sbr.rel (%p125) target = $region24
    $region23: #{cvae_forward.14} parent=5 // pred_region
      // Predicated region
      $region25: #{cvae_forward.14} parent=23 // pred_check
        %p128 = pneg %p29
      $region26: #{cvae_forward.14} parent=23 // pred_check_branch
        %130 = sbr.rel (%p128) target = $region28
      $region27: #{cvae_forward.14} parent=23 // pred_region
        %p131 = scmp.lt.s32.totalorder %s9, 1
        %s132 = scalar_select %p131, %s9, 1
        %s133 = smul.addr %s132, 2
        %s134 = smul.addr %s133, 8
        %s135 = scalar_lea.vmem %s0, %s134
      $region28: #{cvae_forward.14} parent=23 // pred_fallthru
        _
    $region24: #{cvae_forward.14} parent=5 // pred_fallthru
      _
    %p136 = scmp.le.s32.totalorder 1, %s9
    %p137 = scmp.lt.s32.totalorder %s9, 3
    %p138 = pnand %p136, %p137
    %p139 = pneg %p138
    // Predicated region
    $region29: #{cvae_forward.14} parent=5 // pred_check
      _
    $region30: #{cvae_forward.14} parent=5 // pred_check_branch
      %141 = sbr.rel (%p138) target = $region32
    $region31: #{cvae_forward.14} parent=5 // pred_region
      %s142 = ssub.s32 %s9, 1
      %p143 = scmp.lt.s32.totalorder %s14, 1
      %s144 = scalar_select %p143, %s14, 1
      %s145 = smul.addr %s144, 2
      %s146 = smul.addr %s145, 8
      %s147 = scalar_lea.vmem %s0, %s146
      %p148 = pneg %p35
      %p149 = pneg %p32
      %p150 = pneg %p56
      %p151 = pneg %p53
      %p152 = pneg %p77
      %p153 = pneg %p74
      %p154 = pneg %p103
      %p155 = pneg %p100
      %p156 = scmp.lt.s32.totalorder %s14, 1
      %s157 = scalar_select %p156, %s14, 1
      %s158 = smul.addr %s157, 2
      %s159 = smul.addr %s158, 8
      %s160 = scalar_lea.vmem %s3, %s159
      %p161 = scmp.lt.s32.totalorder %s14, 1
      %s162 = scalar_select %p161, %s14, 1
      %s163 = smul.addr %s162, 2
      %s164 = smul.addr %s163, 8
      %s165 = scalar_lea.vmem %s0, %s164
      %p166 = scmp.lt.s32.totalorder %s14, 1
      %s167 = scalar_select %p166, %s14, 1
      %s168 = smul.addr %s167, 2
      %s169 = smul.addr %s168, 8
      %s170 = scalar_lea.vmem %s3, %s169
      %v171 = vld [vmem:[%s165] sm:$0xff]
      %v172 = vld [vmem:[%s165 + $0x8] sm:$0x3]
      %v173 = vld [vmem:[%s1] sm:$0xff]
      %v174 = vld [vmem:[%s1 + $0x8] sm:$0x3]
      %v175 = vld [vmem:[%s165 + $0x1] sm:$0xff]
      %v176 = vld [vmem:[%s165 + $0x9] sm:$0x3]
      %s177 = scalar_lea.vmem %s1, 16
      %v178 = vld [vmem:[%s177] sm:$0xff]
      %v179 = vld [vmem:[%s177 + $0x8] sm:$0x3]
      %vm180 = vcmask 80896
      %v182 = vsel %vm180, %v175, 0
      %v185 = vsel %vm180, %v176, 0
      %vm187 = vcmask 1041408
      %v189 = vsel %vm187, %v179, 0
      %191 = vmatprep.subr.mxu0 0.0
      %192 = vmatpush1.msra.mxu0 %v178
      %193 = vmatprep.subr.mxu0 0.0
      %194 = vmatpush1.msra.mxu0 %v189
      %195 = vmatprep.subr.mxu0 0.0
      %196 = vmatpush1.msra.mxu0 0.0
      %197 = vmatprep.subr.mxu0 0.0
      %198 = vmatpush1.msra.mxu0 0.0
      %199 = vmatprep.subr.mxu0 0.0
      %200 = vmatpush1.msra.mxu0 0.0
      %201 = vmatprep.subr.mxu0 0.0
      %202 = vmatpush1.msra.mxu0 0.0
      %203 = vmatprep.subr.mxu0 0.0
      %204 = vmatpush1.msra.mxu0 0.0
      %205 = vmatprep.subr.mxu0 0.0
      %206 = vmatpush1.msra.mxu0 0.0
      %207 = vmatprep.subr.mxu0 0.0
      %208 = vmatpush1.msra.mxu0 0.0
      %209 = vmatprep.subr.mxu0 0.0
      %210 = vmatpush1.msra.mxu0 0.0
      %211 = vmatprep.subr.mxu0 0.0
      %212 = vmatpush1.msra.mxu0 0.0
      %213 = vmatprep.subr.mxu0 0.0
      %214 = vmatpush1.msra.mxu0 0.0
      %215 = vmatprep.subr.mxu0 0.0
      %216 = vmatpush1.msra.mxu0 0.0
      %217 = vmatprep.subr.mxu0 0.0
      %218 = vmatpush1.msra.mxu0 0.0
      %219 = vmatprep.subr.mxu0 0.0
      %220 = vmatpush1.msra.mxu0 0.0
      %221 = vmatprep.subr.mxu0 0.0
      %222 = vmatpush1.msra.mxu0 0.0
      %223 = vmatprep.subr.mxu0 0.0
      %224 = vmatpush1.msra.mxu0 0.0
      %225 = vmatprep.subr.mxu0 0.0
      %226 = vmatpush1.msra.mxu0 0.0
      %227 = vmatprep.subr.mxu0 0.0
      %228 = vmatpush1.msra.mxu0 0.0
      %229 = vmatprep.subr.mxu0 0.0
      %230 = vmatpush1.msra.mxu0 0.0
      %231 = vmatprep.subr.mxu0 0.0
      %232 = vmatpush1.msra.mxu0 0.0
      %233 = vmatprep.subr.mxu0 0.0
      %234 = vmatpush1.msra.mxu0 0.0
      %235 = vmatprep.subr.mxu0 0.0
      %236 = vmatpush1.msra.mxu0 0.0
      %237 = vmatprep.subr.mxu0 0.0
      %238 = vmatpush1.msra.mxu0 0.0
      %239 = vmatprep.subr.mxu0 0.0
      %240 = vmatpush1.msra.mxu0 0.0
      %241 = vmatprep.subr.mxu0 0.0
      %242 = vmatpush1.msra.mxu0 0.0
      %243 = vmatprep.subr.mxu0 0.0
      %244 = vmatpush1.msra.mxu0 0.0
      %245 = vmatprep.subr.mxu0 0.0
      %246 = vmatpush1.msra.mxu0 0.0
      %247 = vmatprep.subr.mxu0 0.0
      %248 = vmatpush1.msra.mxu0 0.0
      %249 = vmatprep.subr.mxu0 0.0
      %250 = vmatpush1.msra.mxu0 0.0
      %251 = vmatprep.subr.mxu0 0.0
      %252 = vmatpush1.msra.mxu0 0.0
      %253 = vmatprep.subr.mxu0 0.0
      %254 = vmatpush1.msra.mxu0 0.0
      %255 = vmatprep.mubr.f32.mxu0 0.0
      %256 = vmatmul.mubr.f32.gmra.mrb[0].mxu0 %v182
      %v257 = vpop.f32.mrb[0].mxu0
      %v258 = vadd.f32 0.0, %v257
      %v259 = vpop.f32.mrb[0].mxu0
      %260 = vmatprep.mubr.f32.mxu0 0.0
      %261 = vmatmul.mubr.f32.gmra.mrb[0].mxu0 %v185
      %v262 = vpop.f32.mrb[0].mxu0
      %v263 = vadd.f32 0.0, %v262
      %v264 = vpop.f32.mrb[0].mxu0
      %265 = vdwg.mxu0
      %v267 = vsel %vm180, %v171, 0
      %v270 = vsel %vm180, %v172, 0
      %v273 = vsel %vm187, %v174, 0
      %275 = vmatprep.subr.mxu0 0.0
      %276 = vmatpush1.msra.mxu0 %v173
      %277 = vmatprep.subr.mxu0 0.0
      %278 = vmatpush1.msra.mxu0 %v273
      %279 = vmatprep.subr.mxu0 0.0
      %280 = vmatpush1.msra.mxu0 0.0
      %281 = vmatprep.subr.mxu0 0.0
      %282 = vmatpush1.msra.mxu0 0.0
      %283 = vmatprep.subr.mxu0 0.0
      %284 = vmatpush1.msra.mxu0 0.0
      %285 = vmatprep.subr.mxu0 0.0
      %286 = vmatpush1.msra.mxu0 0.0
      %287 = vmatprep.subr.mxu0 0.0
      %288 = vmatpush1.msra.mxu0 0.0
      %289 = vmatprep.subr.mxu0 0.0
      %290 = vmatpush1.msra.mxu0 0.0
      %291 = vmatprep.subr.mxu0 0.0
      %292 = vmatpush1.msra.mxu0 0.0
      %293 = vmatprep.subr.mxu0 0.0
      %294 = vmatpush1.msra.mxu0 0.0
      %295 = vmatprep.subr.mxu0 0.0
      %296 = vmatpush1.msra.mxu0 0.0
      %297 = vmatprep.subr.mxu0 0.0
      %298 = vmatpush1.msra.mxu0 0.0
      %299 = vmatprep.subr.mxu0 0.0
      %300 = vmatpush1.msra.mxu0 0.0
      %301 = vmatprep.subr.mxu0 0.0
      %302 = vmatpush1.msra.mxu0 0.0
      %303 = vmatprep.subr.mxu0 0.0
      %304 = vmatpush1.msra.mxu0 0.0
      %305 = vmatprep.subr.mxu0 0.0
      %306 = vmatpush1.msra.mxu0 0.0
      %307 = vmatprep.subr.mxu0 0.0
      %308 = vmatpush1.msra.mxu0 0.0
      %309 = vmatprep.subr.mxu0 0.0
      %310 = vmatpush1.msra.mxu0 0.0
      %311 = vmatprep.subr.mxu0 0.0
      %312 = vmatpush1.msra.mxu0 0.0
      %313 = vmatprep.subr.mxu0 0.0
      %314 = vmatpush1.msra.mxu0 0.0
      %315 = vmatprep.subr.mxu0 0.0
      %316 = vmatpush1.msra.mxu0 0.0
      %317 = vmatprep.subr.mxu0 0.0
      %318 = vmatpush1.msra.mxu0 0.0
      %319 = vmatprep.subr.mxu0 0.0
      %320 = vmatpush1.msra.mxu0 0.0
      %321 = vmatprep.subr.mxu0 0.0
      %322 = vmatpush1.msra.mxu0 0.0
      %323 = vmatprep.subr.mxu0 0.0
      %324 = vmatpush1.msra.mxu0 0.0
      %325 = vmatprep.subr.mxu0 0.0
      %326 = vmatpush1.msra.mxu0 0.0
      %327 = vmatprep.subr.mxu0 0.0
      %328 = vmatpush1.msra.mxu0 0.0
      %329 = vmatprep.subr.mxu0 0.0
      %330 = vmatpush1.msra.mxu0 0.0
      %331 = vmatprep.subr.mxu0 0.0
      %332 = vmatpush1.msra.mxu0 0.0
      %333 = vmatprep.subr.mxu0 0.0
      %334 = vmatpush1.msra.mxu0 0.0
      %335 = vmatprep.subr.mxu0 0.0
      %336 = vmatpush1.msra.mxu0 0.0
      %337 = vmatprep.subr.mxu0 0.0
      %338 = vmatpush1.msra.mxu0 0.0
      %339 = vmatprep.mubr.f32.mxu0 0.0
      %340 = vmatmul.mubr.f32.gmra.mrb[0].mxu0 %v267
      %v341 = vpop.f32.mrb[0].mxu0
      %v342 = vadd.f32 %v258, %v341
      %v343 = vpop.f32.mrb[0].mxu0
      %344 = vmatprep.mubr.f32.mxu0 0.0
      %345 = vmatmul.mubr.f32.gmra.mrb[0].mxu0 %v270
      %v346 = vpop.f32.mrb[0].mxu0
      %v347 = vadd.f32 %v263, %v346
      %v348 = vpop.f32.mrb[0].mxu0
      %349 = vdwg.mxu0
      %v350 = vld [vmem:[%s165 + $0x2] sm:$0xff]
      %v351 = vld [vmem:[%s165 + $0xa] sm:$0x3]
      %s352 = scalar_lea.vmem %s1, 32
      %v353 = vld [vmem:[%s352] sm:$0xff]
      %v354 = vld [vmem:[%s352 + $0x8] sm:$0x3]
      %v356 = vsel %vm180, %v350, 0
      %v359 = vsel %vm180, %v351, 0
      %v362 = vsel %vm187, %v354, 0
      %364 = vmatprep.subr.mxu0 0.0
      %365 = vmatpush1.msra.mxu0 %v353
      %366 = vmatprep.subr.mxu0 0.0
      %367 = vmatpush1.msra.mxu0 %v362
      %368 = vmatprep.subr.mxu0 0.0
      %369 = vmatpush1.msra.mxu0 0.0
      %370 = vmatprep.subr.mxu0 0.0
      %371 = vmatpush1.msra.mxu0 0.0
      %372 = vmatprep.subr.mxu0 0.0
      %373 = vmatpush1.msra.mxu0 0.0
      %374 = vmatprep.subr.mxu0 0.0
      %375 = vmatpush1.msra.mxu0 0.0
      %376 = vmatprep.subr.mxu0 0.0
      %377 = vmatpush1.msra.mxu0 0.0
      %378 = vmatprep.subr.mxu0 0.0
      %379 = vmatpush1.msra.mxu0 0.0
      %380 = vmatprep.subr.mxu0 0.0
      %381 = vmatpush1.msra.mxu0 0.0
      %382 = vmatprep.subr.mxu0 0.0
      %383 = vmatpush1.msra.mxu0 0.0
      %384 = vmatprep.subr.mxu0 0.0
      %385 = vmatpush1.msra.mxu0 0.0
      %386 = vmatprep.subr.mxu0 0.0
      %387 = vmatpush1.msra.mxu0 0.0
      %388 = vmatprep.subr.mxu0 0.0
      %389 = vmatpush1.msra.mxu0 0.0
      %390 = vmatprep.subr.mxu0 0.0
      %391 = vmatpush1.msra.mxu0 0.0
      %392 = vmatprep.subr.mxu0 0.0
      %393 = vmatpush1.msra.mxu0 0.0
      %394 = vmatprep.subr.mxu0 0.0
      %395 = vmatpush1.msra.mxu0 0.0
      %396 = vmatprep.subr.mxu0 0.0
      %397 = vmatpush1.msra.mxu0 0.0
      %398 = vmatprep.subr.mxu0 0.0
      %399 = vmatpush1.msra.mxu0 0.0
      %400 = vmatprep.subr.mxu0 0.0
      %401 = vmatpush1.msra.mxu0 0.0
      %402 = vmatprep.subr.mxu0 0.0
      %403 = vmatpush1.msra.mxu0 0.0
      %404 = vmatprep.subr.mxu0 0.0
      %405 = vmatpush1.msra.mxu0 0.0
      %406 = vmatprep.subr.mxu0 0.0
      %407 = vmatpush1.msra.mxu0 0.0
      %408 = vmatprep.subr.mxu0 0.0
      %409 = vmatpush1.msra.mxu0 0.0
      %410 = vmatprep.subr.mxu0 0.0
      %411 = vmatpush1.msra.mxu0 0.0
      %412 = vmatprep.subr.mxu0 0.0
      %413 = vmatpush1.msra.mxu0 0.0
      %414 = vmatprep.subr.mxu0 0.0
      %415 = vmatpush1.msra.mxu0 0.0
      %416 = vmatprep.subr.mxu0 0.0
      %417 = vmatpush1.msra.mxu0 0.0
      %418 = vmatprep.subr.mxu0 0.0
      %419 = vmatpush1.msra.mxu0 0.0
      %420 = vmatprep.subr.mxu0 0.0
      %421 = vmatpush1.msra.mxu0 0.0
      %422 = vmatprep.subr.mxu0 0.0
      %423 = vmatpush1.msra.mxu0 0.0
      %424 = vmatprep.subr.mxu0 0.0
      %425 = vmatpush1.msra.mxu0 0.0
      %426 = vmatprep.subr.mxu0 0.0
      %427 = vmatpush1.msra.mxu0 0.0
      %428 = vmatprep.mubr.f32.mxu0 0.0
      %429 = vmatmul.mubr.f32.gmra.mrb[0].mxu0 %v356
      %v430 = vpop.f32.mrb[0].mxu0
      %v431 = vadd.f32 0.0, %v430
      %v432 = vpop.f32.mrb[0].mxu0
      %433 = vmatprep.mubr.f32.mxu0 0.0
      %434 = vmatmul.mubr.f32.gmra.mrb[0].mxu0 %v359
      %v435 = vpop.f32.mrb[0].mxu0
      %v436 = vadd.f32 0.0, %v435
      %v437 = vpop.f32.mrb[0].mxu0
      %438 = vdwg.mxu0
      %v439 = vadd.f32 %v342, %v431
      %v440 = vadd.f32 %v347, %v436
      %v441 = vld [vmem:[%s165 + $0x3] sm:$0xff]
      %v442 = vld [vmem:[%s165 + $0xb] sm:$0x3]
      %s443 = scalar_lea.vmem %s1, 48
      %v444 = vld [vmem:[%s443] sm:$0xff]
      %v445 = vld [vmem:[%s443 + $0x8] sm:$0x3]
      %v447 = vsel %vm180, %v441, 0
      %v450 = vsel %vm180, %v442, 0
      %v453 = vsel %vm187, %v445, 0
      %455 = vmatprep.subr.mxu0 0.0
      %456 = vmatpush1.msra.mxu0 %v444
      %457 = vmatprep.subr.mxu0 0.0
      %458 = vmatpush1.msra.mxu0 %v453
      %459 = vmatprep.subr.mxu0 0.0
      %460 = vmatpush1.msra.mxu0 0.0
      %461 = vmatprep.subr.mxu0 0.0
      %462 = vmatpush1.msra.mxu0 0.0
      %463 = vmatprep.subr.mxu0 0.0
      %464 = vmatpush1.msra.mxu0 0.0
      %465 = vmatprep.subr.mxu0 0.0
      %466 = vmatpush1.msra.mxu0 0.0
      %467 = vmatprep.subr.mxu0 0.0
      %468 = vmatpush1.msra.mxu0 0.0
      %469 = vmatprep.subr.mxu0 0.0
      %470 = vmatpush1.msra.mxu0 0.0
      %471 = vmatprep.subr.mxu0 0.0
      %472 = vmatpush1.msra.mxu0 0.0
      %473 = vmatprep.subr.mxu0 0.0
      %474 = vmatpush1.msra.mxu0 0.0
      %475 = vmatprep.subr.mxu0 0.0
      %476 = vmatpush1.msra.mxu0 0.0
      %477 = vmatprep.subr.mxu0 0.0
      %478 = vmatpush1.msra.mxu0 0.0
      %479 = vmatprep.subr.mxu0 0.0
      %480 = vmatpush1.msra.mxu0 0.0
      %481 = vmatprep.subr.mxu0 0.0
      %482 = vmatpush1.msra.mxu0 0.0
      %483 = vmatprep.subr.mxu0 0.0
      %484 = vmatpush1.msra.mxu0 0.0
      %485 = vmatprep.subr.mxu0 0.0
      %486 = vmatpush1.msra.mxu0 0.0
      %487 = vmatprep.subr.mxu0 0.0
      %488 = vmatpush1.msra.mxu0 0.0
      %489 = vmatprep.subr.mxu0 0.0
      %490 = vmatpush1.msra.mxu0 0.0
      %491 = vmatprep.subr.mxu0 0.0
      %492 = vmatpush1.msra.mxu0 0.0
      %493 = vmatprep.subr.mxu0 0.0
      %494 = vmatpush1.msra.mxu0 0.0
      %495 = vmatprep.subr.mxu0 0.0
      %496 = vmatpush1.msra.mxu0 0.0
      %497 = vmatprep.subr.mxu0 0.0
      %498 = vmatpush1.msra.mxu0 0.0
      %499 = vmatprep.subr.mxu0 0.0
      %500 = vmatpush1.msra.mxu0 0.0
      %501 = vmatprep.subr.mxu0 0.0
      %502 = vmatpush1.msra.mxu0 0.0
      %503 = vmatprep.subr.mxu0 0.0
      %504 = vmatpush1.msra.mxu0 0.0
      %505 = vmatprep.subr.mxu0 0.0
      %506 = vmatpush1.msra.mxu0 0.0
      %507 = vmatprep.subr.mxu0 0.0
      %508 = vmatpush1.msra.mxu0 0.0
      %509 = vmatprep.subr.mxu0 0.0
      %510 = vmatpush1.msra.mxu0 0.0
      %511 = vmatprep.subr.mxu0 0.0
      %512 = vmatpush1.msra.mxu0 0.0
      %513 = vmatprep.subr.mxu0 0.0
      %514 = vmatpush1.msra.mxu0 0.0
      %515 = vmatprep.subr.mxu0 0.0
      %516 = vmatpush1.msra.mxu0 0.0
      %517 = vmatprep.subr.mxu0 0.0
      %518 = vmatpush1.msra.mxu0 0.0
      %519 = vmatprep.mubr.f32.mxu0 0.0
      %520 = vmatmul.mubr.f32.gmra.mrb[0].mxu0 %v447
      %v521 = vpop.f32.mrb[0].mxu0
      %v522 = vadd.f32 0.0, %v521
      %v523 = vpop.f32.mrb[0].mxu0
      %524 = vmatprep.mubr.f32.mxu0 0.0
      %525 = vmatmul.mubr.f32.gmra.mrb[0].mxu0 %v450
      %v526 = vpop.f32.mrb[0].mxu0
      %v527 = vadd.f32 0.0, %v526
      %v528 = vpop.f32.mrb[0].mxu0
      %529 = vdwg.mxu0
      %v530 = vadd.f32 %v439, %v522
      %v531 = vadd.f32 %v440, %v527
      %v532 = vld [vmem:[%s165 + $0x4] sm:$0xff]
      %v533 = vld [vmem:[%s165 + $0xc] sm:$0x3]
      %s534 = scalar_lea.vmem %s1, 64
      %v535 = vld [vmem:[%s534] sm:$0xff]
      %v536 = vld [vmem:[%s534 + $0x8] sm:$0x3]
      %v538 = vsel %vm180, %v532, 0
      %v541 = vsel %vm180, %v533, 0
      %v544 = vsel %vm187, %v536, 0
      %546 = vmatprep.subr.mxu0 0.0
      %547 = vmatpush1.msra.mxu0 %v535
      %548 = vmatprep.subr.mxu0 0.0
      %549 = vmatpush1.msra.mxu0 %v544
      %550 = vmatprep.subr.mxu0 0.0
      %551 = vmatpush1.msra.mxu0 0.0
      %552 = vmatprep.subr.mxu0 0.0
      %553 = vmatpush1.msra.mxu0 0.0
      %554 = vmatprep.subr.mxu0 0.0
      %555 = vmatpush1.msra.mxu0 0.0
      %556 = vmatprep.subr.mxu0 0.0
      %557 = vmatpush1.msra.mxu0 0.0
      %558 = vmatprep.subr.mxu0 0.0
      %559 = vmatpush1.msra.mxu0 0.0
      %560 = vmatprep.subr.mxu0 0.0
      %561 = vmatpush1.msra.mxu0 0.0
      %562 = vmatprep.subr.mxu0 0.0
      %563 = vmatpush1.msra.mxu0 0.0
      %564 = vmatprep.subr.mxu0 0.0
      %565 = vmatpush1.msra.mxu0 0.0
      %566 = vmatprep.subr.mxu0 0.0
      %567 = vmatpush1.msra.mxu0 0.0
      %568 = vmatprep.subr.mxu0 0.0
      %569 = vmatpush1.msra.mxu0 0.0
      %570 = vmatprep.subr.mxu0 0.0
      %571 = vmatpush1.msra.mxu0 0.0
      %572 = vmatprep.subr.mxu0 0.0
      %573 = vmatpush1.msra.mxu0 0.0
      %574 = vmatprep.subr.mxu0 0.0
      %575 = vmatpush1.msra.mxu0 0.0
      %576 = vmatprep.subr.mxu0 0.0
      %577 = vmatpush1.msra.mxu0 0.0
      %578 = vmatprep.subr.mxu0 0.0
      %579 = vmatpush1.msra.mxu0 0.0
      %580 = vmatprep.subr.mxu0 0.0
      %581 = vmatpush1.msra.mxu0 0.0
      %582 = vmatprep.subr.mxu0 0.0
      %583 = vmatpush1.msra.mxu0 0.0
      %584 = vmatprep.subr.mxu0 0.0
      %585 = vmatpush1.msra.mxu0 0.0
      %586 = vmatprep.subr.mxu0 0.0
      %587 = vmatpush1.msra.mxu0 0.0
      %588 = vmatprep.subr.mxu0 0.0
      %589 = vmatpush1.msra.mxu0 0.0
      %590 = vmatprep.subr.mxu0 0.0
      %591 = vmatpush1.msra.mxu0 0.0
      %592 = vmatprep.subr.mxu0 0.0
      %593 = vmatpush1.msra.mxu0 0.0
      %594 = vmatprep.subr.mxu0 0.0
      %595 = vmatpush1.msra.mxu0 0.0
      %596 = vmatprep.subr.mxu0 0.0
      %597 = vmatpush1.msra.mxu0 0.0
      %598 = vmatprep.subr.mxu0 0.0
      %599 = vmatpush1.msra.mxu0 0.0
      %600 = vmatprep.subr.mxu0 0.0
      %601 = vmatpush1.msra.mxu0 0.0
      %602 = vmatprep.subr.mxu0 0.0
      %603 = vmatpush1.msra.mxu0 0.0
      %604 = vmatprep.subr.mxu0 0.0
      %605 = vmatpush1.msra.mxu0 0.0
      %606 = vmatprep.subr.mxu0 0.0
      %607 = vmatpush1.msra.mxu0 0.0
      %608 = vmatprep.subr.mxu0 0.0
      %609 = vmatpush1.msra.mxu0 0.0
      %610 = vmatprep.mubr.f32.mxu0 0.0
      %611 = vmatmul.mubr.f32.gmra.mrb[0].mxu0 %v538
      %v612 = vpop.f32.mrb[0].mxu0
      %v613 = vadd.f32 0.0, %v612
      %v614 = vpop.f32.mrb[0].mxu0
      %615 = vmatprep.mubr.f32.mxu0 0.0
      %616 = vmatmul.mubr.f32.gmra.mrb[0].mxu0 %v541
      %v617 = vpop.f32.mrb[0].mxu0
      %v618 = vadd.f32 0.0, %v617
      %v619 = vpop.f32.mrb[0].mxu0
      %620 = vdwg.mxu0
      %v621 = vadd.f32 %v530, %v613
      %v622 = vadd.f32 %v531, %v618
      %v623 = vld [vmem:[%s2] sm:$0x1]
      %v625 = vlaneseq
      %v626 = vshrl.u32 %v625, 7
      %v627 = vsub.s32 0, %v626
      %v628 = vrot.slane %v623, %v627
      %v630 = vadd.f32 %v621, %v628
      %v631 = vadd.f32 %v622, %v628
      %v632 = vmax.f32 %v630, 0.0
      %v633 = vmax.f32 %v631, 0.0
      %vm634 = vcmask 392192
      %635 = vst.msk [vmem:[%s170] sm:$0xff] %vm634, %v632
      %vm636 = vcmask 386048
      %637 = vst.msk [vmem:[%s170 + $0x8] sm:$0x3] %vm636, %v633
      %p638 = scmp.lt.s32.totalorder %s14, 1
      %s639 = scalar_select %p638, %s14, 1
      %s640 = smul.addr %s639, 2
      %s641 = smul.addr %s640, 8
      %s642 = scalar_lea.vmem %s3, %s641
      // Predicated region
      $region33: #{cvae_forward.14} parent=31 // pred_check
        %p643 = pneg %p100
      $region34: #{cvae_forward.14} parent=31 // pred_check_branch
        %645 = sbr.rel (%p643) target = $region36
      $region35: #{cvae_forward.14} parent=31 // pred_region
        _
      $region36: #{cvae_forward.14} parent=31 // pred_fallthru
        _
    $region32: #{cvae_forward.14} parent=5 // pred_fallthru
      _
    %p646 = scmp.le.s32.totalorder 2, %s9
    // Predicated region
    $region37: #{cvae_forward.14} parent=5 // pred_check
      %p647 = pneg %p646
    $region38: #{cvae_forward.14} parent=5 // pred_check_branch
      %649 = sbr.rel (%p647) target = $region40
    $region39: #{cvae_forward.14} parent=5 // pred_region
      %s650 = ssub.s32 %s9, 2
      // Predicated region
      $region41: #{cvae_forward.14} parent=39 // pred_check
        %p651 = pneg %p106
      $region42: #{cvae_forward.14} parent=39 // pred_check_branch
        %653 = sbr.rel (%p651) target = $region44
      $region43: #{cvae_forward.14} parent=39 // pred_region
        %p654 = scmp.lt.s32.totalorder %s15, 1
        %s655 = scalar_select %p654, %s15, 1
        %s656 = smul.addr %s655, 2
        %s657 = smul.addr %s656, 8
        %s658 = scalar_lea.vmem %s3, %s657
      $region44: #{cvae_forward.14} parent=39 // pred_fallthru
        _
    $region40: #{cvae_forward.14} parent=5 // pred_fallthru
      _
  $region6: #{cvae_forward.14} parent=0 // loop_footer
    %s13 = sadd.s32 1, %s9
  $region7: #{cvae_forward.14} parent=0 // loop_footer_branch
    %8 = sbr.rel target = $region3
  $region8: #{cvae_forward.14} parent=0 // loop_exit
    _

// kernel: cvae_forward.15
$region0: #{cvae_forward.15}
  #allocation0 [shape = 'u32[]', space=smem, size = 0x4, offset = 0x4, fixed_abs, tag = 'smem constant byte address 0x4 - core index']
  #allocation1 [shape = 'u32[144,128]{1,0:T(1,128)}', space=vmem, size = 0x12000, scoped, tag = 'internal scratch']
  %s0 = inlined_call_operand.vmem [shape: f32[2,21,136], index: 0, kind: input, shape index: {}]
  %s1 = inlined_call_operand.vmem [shape: f32[5,136,104], index: 1, kind: input, shape index: {}]
  %s2 = inlined_call_operand.vmem [shape: f32[1,104], index: 2, kind: input, shape index: {}]
  %s3 = inlined_call_operand.vmem [shape: f32[2,17,104], index: 3, kind: output, shape index: {}]
  %s4 = sld [smem:[#allocation0]]
  $region45: #{cvae_forward.15} parent=0
    _
  %s6 = ssub.s32 1, %s4
  %s7 = scalar_select 0, %s6, %s4
  loop: start=0, step=1, limit=4
  $region2: #{cvae_forward.15} parent=0 // loop_pre_header
    _
  $region3: #{cvae_forward.15} parent=0 // loop_header
    %s9 = sphi 0, %s13
    %p10 = scmp.ge.s32.totalorder %s9, 4
    %s19 = sphi 0, %s21
    %s22 = sphi 0, %s19
    %s23 = sphi 0, %s22
    %s39 = sphi 0, %s23
    %s43 = sphi 0, %s43
    %s45 = sphi 0, %s43
    %s46 = sphi 0, %s45
    %s60 = sphi 0, %s46
    %s64 = sphi 0, %s64
    %s66 = sphi 0, %s64
    %s67 = sphi 0, %s66
    %s81 = sphi 0, %s67
    %s87 = sphi 0, %s89
    %s90 = sphi 0, %s87
    %s91 = sphi 0, %s90
    %s107 = sphi 0, %s91
  $region4: #{cvae_forward.15} parent=0 // loop_header_branch
    %12 = sbr.rel (%p10) target = $region8
  $region5: #{cvae_forward.15} parent=0 // loop_body
    %s14 = ssub.s32 %s9, 1
    %s15 = ssub.s32 %s9, 2
    %s16 = sadd.s32 %s9, 1
    %s17 = ssub.s32 %s9, %s16
    %p18 = scmp.eq.s32.totalorder %s17, 0
    %s20 = sadd.s32 %s19, 1
    %s21 = scalar_select %p18, %s19, %s20
    %p24 = pneg %p18
    %p25 = scmp.eq.s32.totalorder %s9, 1
    %p26 = por %p24, %p25
    %p27 = scmp.ne.s32.totalorder %s19, %s22
    %p28 = scmp.eq.s32.totalorder %s9, 0
    %p29 = por %p27, %p28
    %p30 = scmp.ne.s32.totalorder %s19, %s22
    %p31 = scmp.eq.s32.totalorder %s14, 1
    %p32 = por %p30, %p31
    %p33 = scmp.ne.s32.totalorder %s22, %s23
    %p34 = scmp.eq.s32.totalorder %s14, 0
    %p35 = por %p33, %p34
    %p36 = scmp.ne.s32.totalorder %s22, %s23
    %p37 = scmp.eq.s32.totalorder %s15, 1
    %p38 = por %p36, %p37
    %p40 = scmp.ne.s32.totalorder %s23, %s39
    %p41 = scmp.eq.s32.totalorder %s15, 0
    %p42 = por %p40, %p41
    %s44 = sadd.s32 %s43, 1
    %p47 = scmp.eq.s32.totalorder %s9, 1
    %p48 = scmp.ne.s32.totalorder %s43, %s45
    %p49 = scmp.eq.s32.totalorder %s9, 0
    %p50 = por %p48, %p49
    %p51 = scmp.ne.s32.totalorder %s43, %s45
    %p52 = scmp.eq.s32.totalorder %s14, 1
    %p53 = por %p51, %p52
    %p54 = scmp.ne.s32.totalorder %s45, %s46
    %p55 = scmp.eq.s32.totalorder %s14, 0
    %p56 = por %p54, %p55
    %p57 = scmp.ne.s32.totalorder %s45, %s46
    %p58 = scmp.eq.s32.totalorder %s15, 1
    %p59 = por %p57, %p58
    %p61 = scmp.ne.s32.totalorder %s46, %s60
    %p62 = scmp.eq.s32.totalorder %s15, 0
    %p63 = por %p61, %p62
    %s65 = sadd.s32 %s64, 1
    %p68 = scmp.eq.s32.totalorder %s9, 1
    %p69 = scmp.ne.s32.totalorder %s64, %s66
    %p70 = scmp.eq.s32.totalorder %s9, 0
    %p71 = por %p69, %p70
    %p72 = scmp.ne.s32.totalorder %s64, %s66
    %p73 = scmp.eq.s32.totalorder %s14, 1
    %p74 = por %p72, %p73
    %p75 = scmp.ne.s32.totalorder %s66, %s67
    %p76 = scmp.eq.s32.totalorder %s14, 0
    %p77 = por %p75, %p76
    %p78 = scmp.ne.s32.totalorder %s66, %s67
    %p79 = scmp.eq.s32.totalorder %s15, 1
    %p80 = por %p78, %p79
    %p82 = scmp.ne.s32.totalorder %s67, %s81
    %p83 = scmp.eq.s32.totalorder %s15, 0
    %p84 = por %p82, %p83
    %s85 = ssub.s32 %s9, %s16
    %p86 = scmp.eq.s32.totalorder %s85, 0
    %s88 = sadd.s32 %s87, 1
    %s89 = scalar_select %p86, %s87, %s88
    %p92 = pneg %p86
    %p93 = scmp.eq.s32.totalorder %s9, 1
    %p94 = por %p92, %p93
    %p95 = scmp.ne.s32.totalorder %s87, %s90
    %p96 = scmp.eq.s32.totalorder %s9, 0
    %p97 = por %p95, %p96
    %p98 = scmp.ne.s32.totalorder %s87, %s90
    %p99 = scmp.eq.s32.totalorder %s14, 1
    %p100 = por %p98, %p99
    %p101 = scmp.ne.s32.totalorder %s90, %s91
    %p102 = scmp.eq.s32.totalorder %s14, 0
    %p103 = por %p101, %p102
    %p104 = scmp.ne.s32.totalorder %s90, %s91
    %p105 = scmp.eq.s32.totalorder %s15, 1
    %p106 = por %p104, %p105
    %p108 = scmp.ne.s32.totalorder %s91, %s107
    %p109 = scmp.eq.s32.totalorder %s15, 0
    %p110 = por %p108, %p109
    %p111 = scmp.le.s32.totalorder 1, %s9
    %p112 = scmp.lt.s32.totalorder %s9, 3
    %p113 = pnand %p111, %p112
    %p114 = pneg %p113
    // Predicated region
    $region9: #{cvae_forward.15} parent=5 // pred_check
      _
    $region10: #{cvae_forward.15} parent=5 // pred_check_branch
      %116 = sbr.rel (%p113) target = $region12
    $region11: #{cvae_forward.15} parent=5 // pred_region
      %s117 = ssub.s32 %s9, 1
      // Predicated region
      $region13: #{cvae_forward.15} parent=11 // pred_check
        %p118 = pneg %p56
      $region14: #{cvae_forward.15} parent=11 // pred_check_branch
        %120 = sbr.rel (%p118) target = $region16
      $region15: #{cvae_forward.15} parent=11 // pred_region
        _
      $region16: #{cvae_forward.15} parent=11 // pred_fallthru
        _
      // Predicated region
      $region17: #{cvae_forward.15} parent=11 // pred_check
        %p121 = pneg %p77
      $region18: #{cvae_forward.15} parent=11 // pred_check_branch
        %123 = sbr.rel (%p121) target = $region20
      $region19: #{cvae_forward.15} parent=11 // pred_region
        _
      $region20: #{cvae_forward.15} parent=11 // pred_fallthru
        _
    $region12: #{cvae_forward.15} parent=5 // pred_fallthru
      _
    %p124 = scmp.lt.s32.totalorder %s9, 2
    // Predicated region
    $region21: #{cvae_forward.15} parent=5 // pred_check
      %p125 = pneg %p124
    $region22: #{cvae_forward.15} parent=5 // pred_check_branch
      %127 = sbr.rel (%p125) target = $region24
    $region23: #{cvae_forward.15} parent=5 // pred_region
      // Predicated region
      $region25: #{cvae_forward.15} parent=23 // pred_check
        %p128 = pneg %p29
      $region26: #{cvae_forward.15} parent=23 // pred_check_branch
        %130 = sbr.rel (%p128) target = $region28
      $region27: #{cvae_forward.15} parent=23 // pred_region
        %p131 = scmp.lt.s32.totalorder %s9, 1
        %s132 = scalar_select %p131, %s9, 1
        %s133 = smul.addr %s132, 6
        %s134 = smul.addr %s133, 8
        %s135 = scalar_lea.vmem %s0, %s134
      $region28: #{cvae_forward.15} parent=23 // pred_fallthru
        _
    $region24: #{cvae_forward.15} parent=5 // pred_fallthru
      _
    %p136 = scmp.le.s32.totalorder 1, %s9
    %p137 = scmp.lt.s32.totalorder %s9, 3
    %p138 = pnand %p136, %p137
    %p139 = pneg %p138
    // Predicated region
    $region29: #{cvae_forward.15} parent=5 // pred_check
      _
    $region30: #{cvae_forward.15} parent=5 // pred_check_branch
      %141 = sbr.rel (%p138) target = $region32
    $region31: #{cvae_forward.15} parent=5 // pred_region
      %s142 = ssub.s32 %s9, 1
      %p143 = scmp.lt.s32.totalorder %s14, 1
      %s144 = scalar_select %p143, %s14, 1
      %s145 = smul.addr %s144, 6
      %s146 = smul.addr %s145, 8
      %s147 = scalar_lea.vmem %s0, %s146
      %p148 = pneg %p35
      %p149 = pneg %p32
      %p150 = pneg %p56
      %p151 = pneg %p53
      %p152 = pneg %p77
      %p153 = pneg %p74
      %p154 = pneg %p103
      %p155 = pneg %p100
      %p156 = scmp.lt.s32.totalorder %s14, 1
      %s157 = scalar_select %p156, %s14, 1
      %s158 = smul.addr %s157, 3
      %s159 = smul.addr %s158, 8
      %s160 = scalar_lea.vmem %s3, %s159
      %p161 = scmp.lt.s32.totalorder %s14, 1
      %s162 = scalar_select %p161, %s14, 1
      %s163 = smul.addr %s162, 6
      %s164 = smul.addr %s163, 8
      %s165 = scalar_lea.vmem %s0, %s164
      %p166 = scmp.lt.s32.totalorder %s14, 1
      %s167 = scalar_select %p166, %s14, 1
      %s168 = smul.addr %s167, 3
      %s169 = smul.addr %s168, 8
      %s170 = scalar_lea.vmem %s3, %s169
      %v171 = vld [vmem:[%s165] sm:$0xff]
      %v172 = vld [vmem:[%s165 + $0x8] sm:$0xff]
      %v173 = vld [vmem:[%s165 + $0x10] sm:$0xff]
      %v174 = vld [vmem:[%s165 + $0x18] sm:$0xff]
      %v175 = vld [vmem:[%s165 + $0x20] sm:$0x1]
      %v176 = vld [vmem:[%s165 + $0x28] sm:$0x1]
      %v177 = vld [vmem:[%s1] sm:$0xff]
      %v178 = vld [vmem:[%s1 + $0x8] sm:$0xff]
      %v179 = vld [vmem:[%s1 + $0x10] sm:$0xff]
      %v180 = vld [vmem:[%s1 + $0x18] sm:$0xff]
      %v181 = vld [vmem:[%s1 + $0x20] sm:$0xff]
      %v182 = vld [vmem:[%s1 + $0x28] sm:$0xff]
      %v183 = vld [vmem:[%s1 + $0x30] sm:$0xff]
      %v184 = vld [vmem:[%s1 + $0x38] sm:$0xff]
      %v185 = vld [vmem:[%s1 + $0x40] sm:$0xff]
      %v186 = vld [vmem:[%s1 + $0x48] sm:$0xff]
      %v187 = vld [vmem:[%s1 + $0x50] sm:$0xff]
      %v188 = vld [vmem:[%s1 + $0x58] sm:$0xff]
      %v189 = vld [vmem:[%s1 + $0x60] sm:$0xff]
      %v190 = vld [vmem:[%s1 + $0x68] sm:$0xff]
      %v191 = vld [vmem:[%s1 + $0x70] sm:$0xff]
      %v192 = vld [vmem:[%s1 + $0x78] sm:$0xff]
      %v193 = vld [vmem:[%s1 + $0x80] sm:$0xff]
      %v194 = vld [vmem:[%s165] sm:$0xfe]
      %v195 = vld [vmem:[%s165 + $0x8] sm:$0xfe]
      %v196 = vld [vmem:[%s165 + $0x20] sm:$0x3]
      %v197 = vld [vmem:[%s165 + $0x28] sm:$0x3]
      %s198 = scalar_lea.vmem %s1, 136
      %v199 = vld [vmem:[%s198] sm:$0xff]
      %v200 = vld [vmem:[%s198 + $0x8] sm:$0xff]
      %v201 = vld [vmem:[%s198 + $0x10] sm:$0xff]
      %v202 = vld [vmem:[%s198 + $0x18] sm:$0xff]
      %v203 = vld [vmem:[%s198 + $0x20] sm:$0xff]
      %v204 = vld [vmem:[%s198 + $0x28] sm:$0xff]
      %v205 = vld [vmem:[%s198 + $0x30] sm:$0xff]
      %v206 = vld [vmem:[%s198 + $0x38] sm:$0xff]
      %v207 = vld [vmem:[%s198 + $0x40] sm:$0xff]
      %v208 = vld [vmem:[%s198 + $0x48] sm:$0xff]
      %v209 = vld [vmem:[%s198 + $0x50] sm:$0xff]
      %v210 = vld [vmem:[%s198 + $0x58] sm:$0xff]
      %v211 = vld [vmem:[%s198 + $0x60] sm:$0xff]
      %v212 = vld [vmem:[%s198 + $0x68] sm:$0xff]
      %v213 = vld [vmem:[%s198 + $0x70] sm:$0xff]
      %v214 = vld [vmem:[%s198 + $0x78] sm:$0xff]
      %v215 = vld [vmem:[%s198 + $0x80] sm:$0xff]
      %vm222 = vcmask 1046528
      %v223 = vrot.slane %v194, 1
      %v224 = vrot.slane %v173, 1
      %v225 = vsel %vm222, %v223, %v224
      %v226 = vrot.slane %v195, 1
      %v227 = vrot.slane %v174, 1
      %v228 = vsel %vm222, %v226, %v227
      %v229 = vrot.slane %v196, 1
      %v230 = vsel %vm222, %v224, %v229
      %v231 = vrot.slane %v197, 1
      %v232 = vsel %vm222, %v227, %v231
      %vm236 = vcmask 64512
      %v237 = vsel %vm236, %v228, 0
      %v239 = vsel %vm236, %v232, 0
      %v241 = vsel %vm236, %v231, 0
      %243 = vmatprep.subr.mxu0 0.0
      %244 = vmatpush1.msra.mxu0 %v199
      %245 = vmatprep.subr.mxu0 0.0
      %246 = vmatpush1.msra.mxu0 %v200
      %247 = vmatprep.subr.mxu0 0.0
      %248 = vmatpush1.msra.mxu0 %v201
      %249 = vmatprep.subr.mxu0 0.0
      %250 = vmatpush1.msra.mxu0 %v202
      %251 = vmatprep.subr.mxu0 0.0
      %252 = vmatpush1.msra.mxu0 %v203
      %253 = vmatprep.subr.mxu0 0.0
      %254 = vmatpush1.msra.mxu0 %v204
      %255 = vmatprep.subr.mxu0 0.0
      %256 = vmatpush1.msra.mxu0 %v205
      %257 = vmatprep.subr.mxu0 0.0
      %258 = vmatpush1.msra.mxu0 %v206
      %259 = vmatprep.subr.mxu0 0.0
      %260 = vmatpush1.msra.mxu0 %v207
      %261 = vmatprep.subr.mxu0 0.0
      %262 = vmatpush1.msra.mxu0 %v208
      %263 = vmatprep.subr.mxu0 0.0
      %264 = vmatpush1.msra.mxu0 %v209
      %265 = vmatprep.subr.mxu0 0.0
      %266 = vmatpush1.msra.mxu0 %v210
      %267 = vmatprep.subr.mxu0 0.0
      %268 = vmatpush1.msra.mxu0 %v211
      %269 = vmatprep.subr.mxu0 0.0
      %270 = vmatpush1.msra.mxu0 %v212
      %271 = vmatprep.subr.mxu0 0.0
      %272 = vmatpush1.msra.mxu0 %v213
      %273 = vmatprep.subr.mxu0 0.0
      %274 = vmatpush1.msra.mxu0 %v214
      %275 = vmatprep.subr.mxu0 0.0
      %276 = vmatpush1.msra.mxu0 %v215
      %277 = vmatprep.subr.mxu0 0.0
      %278 = vmatpush1.msra.mxu0 0.0
      %279 = vmatprep.subr.mxu0 0.0
      %280 = vmatpush1.msra.mxu0 0.0
      %281 = vmatprep.subr.mxu0 0.0
      %282 = vmatpush1.msra.mxu0 0.0
      %283 = vmatprep.subr.mxu0 0.0
      %284 = vmatpush1.msra.mxu0 0.0
      %285 = vmatprep.subr.mxu0 0.0
      %286 = vmatpush1.msra.mxu0 0.0
      %287 = vmatprep.subr.mxu0 0.0
      %288 = vmatpush1.msra.mxu0 0.0
      %289 = vmatprep.subr.mxu0 0.0
      %290 = vmatpush1.msra.mxu0 0.0
      %291 = vmatprep.subr.mxu0 0.0
      %292 = vmatpush1.msra.mxu0 0.0
      %293 = vmatprep.subr.mxu0 0.0
      %294 = vmatpush1.msra.mxu0 0.0
      %295 = vmatprep.subr.mxu0 0.0
      %296 = vmatpush1.msra.mxu0 0.0
      %297 = vmatprep.subr.mxu0 0.0
      %298 = vmatpush1.msra.mxu0 0.0
      %299 = vmatprep.subr.mxu0 0.0
      %300 = vmatpush1.msra.mxu0 0.0
      %301 = vmatprep.subr.mxu0 0.0
      %302 = vmatpush1.msra.mxu0 0.0
      %303 = vmatprep.subr.mxu0 0.0
      %304 = vmatpush1.msra.mxu0 0.0
      %305 = vmatprep.subr.mxu0 0.0
      %306 = vmatpush1.msra.mxu0 0.0
      %307 = vmatprep.mubr.f32.mxu0 %v237
      %308 = vmatmul.mubr.f32.gmra.mrb[0].mxu0 %v225
      %v309 = vpop.f32.mrb[0].mxu0
      %v310 = vadd.f32 0.0, %v309
      %v311 = vpop.f32.mrb[0].mxu0
      %312 = vmatprep.mubr.f32.mxu0 %v239
      %313 = vmatmul.mubr.f32.gmra.mrb[0].mxu0 %v230
      %v314 = vpop.f32.mrb[0].mxu0
      %v315 = vadd.f32 0.0, %v314
      %v316 = vpop.f32.mrb[0].mxu0
      %317 = vmatprep.mubr.f32.mxu0 %v241
      %318 = vmatmul.mubr.f32.gmra.mrb[0].mxu0 %v229
      %v319 = vpop.f32.mrb[0].mxu0
      %v320 = vadd.f32 0.0, %v319
      %v321 = vpop.f32.mrb[0].mxu0
      %322 = vdwg.mxu0
      %v324 = vsel %vm236, %v172, 0
      %v326 = vsel %vm236, %v174, 0
      %v329 = vsel %vm236, %v176, 0
      %331 = vmatprep.subr.mxu0 0.0
      %332 = vmatpush1.msra.mxu0 %v177
      %333 = vmatprep.subr.mxu0 0.0
      %334 = vmatpush1.msra.mxu0 %v178
      %335 = vmatprep.subr.mxu0 0.0
      %336 = vmatpush1.msra.mxu0 %v179
      %337 = vmatprep.subr.mxu0 0.0
      %338 = vmatpush1.msra.mxu0 %v180
      %339 = vmatprep.subr.mxu0 0.0
      %340 = vmatpush1.msra.mxu0 %v181
      %341 = vmatprep.subr.mxu0 0.0
      %342 = vmatpush1.msra.mxu0 %v182
      %343 = vmatprep.subr.mxu0 0.0
      %344 = vmatpush1.msra.mxu0 %v183
      %345 = vmatprep.subr.mxu0 0.0
      %346 = vmatpush1.msra.mxu0 %v184
      %347 = vmatprep.subr.mxu0 0.0
      %348 = vmatpush1.msra.mxu0 %v185
      %349 = vmatprep.subr.mxu0 0.0
      %350 = vmatpush1.msra.mxu0 %v186
      %351 = vmatprep.subr.mxu0 0.0
      %352 = vmatpush1.msra.mxu0 %v187
      %353 = vmatprep.subr.mxu0 0.0
      %354 = vmatpush1.msra.mxu0 %v188
      %355 = vmatprep.subr.mxu0 0.0
      %356 = vmatpush1.msra.mxu0 %v189
      %357 = vmatprep.subr.mxu0 0.0
      %358 = vmatpush1.msra.mxu0 %v190
      %359 = vmatprep.subr.mxu0 0.0
      %360 = vmatpush1.msra.mxu0 %v191
      %361 = vmatprep.subr.mxu0 0.0
      %362 = vmatpush1.msra.mxu0 %v192
      %363 = vmatprep.subr.mxu0 0.0
      %364 = vmatpush1.msra.mxu0 %v193
      %365 = vmatprep.subr.mxu0 0.0
      %366 = vmatpush1.msra.mxu0 0.0
      %367 = vmatprep.subr.mxu0 0.0
      %368 = vmatpush1.msra.mxu0 0.0
      %369 = vmatprep.subr.mxu0 0.0
      %370 = vmatpush1.msra.mxu0 0.0
      %371 = vmatprep.subr.mxu0 0.0
      %372 = vmatpush1.msra.mxu0 0.0
      %373 = vmatprep.subr.mxu0 0.0
      %374 = vmatpush1.msra.mxu0 0.0
      %375 = vmatprep.subr.mxu0 0.0
      %376 = vmatpush1.msra.mxu0 0.0
      %377 = vmatprep.subr.mxu0 0.0
      %378 = vmatpush1.msra.mxu0 0.0
      %379 = vmatprep.subr.mxu0 0.0
      %380 = vmatpush1.msra.mxu0 0.0
      %381 = vmatprep.subr.mxu0 0.0
      %382 = vmatpush1.msra.mxu0 0.0
      %383 = vmatprep.subr.mxu0 0.0
      %384 = vmatpush1.msra.mxu0 0.0
      %385 = vmatprep.subr.mxu0 0.0
      %386 = vmatpush1.msra.mxu0 0.0
      %387 = vmatprep.subr.mxu0 0.0
      %388 = vmatpush1.msra.mxu0 0.0
      %389 = vmatprep.subr.mxu0 0.0
      %390 = vmatpush1.msra.mxu0 0.0
      %391 = vmatprep.subr.mxu0 0.0
      %392 = vmatpush1.msra.mxu0 0.0
      %393 = vmatprep.subr.mxu0 0.0
      %394 = vmatpush1.msra.mxu0 0.0
      %395 = vmatprep.mubr.f32.mxu0 %v324
      %396 = vmatmul.mubr.f32.gmra.mrb[0].mxu0 %v171
      %v397 = vpop.f32.mrb[0].mxu0
      %v398 = vadd.f32 %v310, %v397
      %v399 = vpop.f32.mrb[0].mxu0
      %400 = vmatprep.mubr.f32.mxu0 %v326
      %401 = vmatmul.mubr.f32.gmra.mrb[0].mxu0 %v173
      %v402 = vpop.f32.mrb[0].mxu0
      %v403 = vadd.f32 %v315, %v402
      %v404 = vpop.f32.mrb[0].mxu0
      %405 = vmatprep.mubr.f32.mxu0 %v329
      %406 = vmatmul.mubr.f32.gmra.mrb[0].mxu0 %v175
      %v407 = vpop.f32.mrb[0].mxu0
      %v408 = vadd.f32 %v320, %v407
      %v409 = vpop.f32.mrb[0].mxu0
      %410 = vdwg.mxu0
      %v411 = vld [vmem:[%s165] sm:$0xfc]
      %v412 = vld [vmem:[%s165 + $0x8] sm:$0xfc]
      %v413 = vld [vmem:[%s165 + $0x20] sm:$0x7]
      %v414 = vld [vmem:[%s165 + $0x28] sm:$0x7]
      %s415 = scalar_lea.vmem %s1, 272
      %v416 = vld [vmem:[%s415] sm:$0xff]
      %v417 = vld [vmem:[%s415 + $0x8] sm:$0xff]
      %v418 = vld [vmem:[%s415 + $0x10] sm:$0xff]
      %v419 = vld [vmem:[%s415 + $0x18] sm:$0xff]
      %v420 = vld [vmem:[%s415 + $0x20] sm:$0xff]
      %v421 = vld [vmem:[%s415 + $0x28] sm:$0xff]
      %v422 = vld [vmem:[%s415 + $0x30] sm:$0xff]
      %v423 = vld [vmem:[%s415 + $0x38] sm:$0xff]
      %v424 = vld [vmem:[%s415 + $0x40] sm:$0xff]
      %v425 = vld [vmem:[%s415 + $0x48] sm:$0xff]
      %v426 = vld [vmem:[%s415 + $0x50] sm:$0xff]
      %v427 = vld [vmem:[%s415 + $0x58] sm:$0xff]
      %v428 = vld [vmem:[%s415 + $0x60] sm:$0xff]
      %v429 = vld [vmem:[%s415 + $0x68] sm:$0xff]
      %v430 = vld [vmem:[%s415 + $0x70] sm:$0xff]
      %v431 = vld [vmem:[%s415 + $0x78] sm:$0xff]
      %v432 = vld [vmem:[%s415 + $0x80] sm:$0xff]
      %vm437 = vcmask 1045504
      %v438 = vrot.slane %v411, 2
      %v439 = vrot.slane %v173, 2
      %v440 = vsel %vm437, %v438, %v439
      %v441 = vrot.slane %v412, 2
      %v442 = vrot.slane %v174, 2
      %v443 = vsel %vm437, %v441, %v442
      %v444 = vrot.slane %v413, 2
      %v445 = vsel %vm437, %v439, %v444
      %v446 = vrot.slane %v414, 2
      %v447 = vsel %vm437, %v442, %v446
      %v451 = vsel %vm236, %v443, 0
      %v453 = vsel %vm236, %v447, 0
      %v455 = vsel %vm236, %v446, 0
      %457 = vmatprep.subr.mxu0 0.0
      %458 = vmatpush1.msra.mxu0 %v416
      %459 = vmatprep.subr.mxu0 0.0
      %460 = vmatpush1.msra.mxu0 %v417
      %461 = vmatprep.subr.mxu0 0.0
      %462 = vmatpush1.msra.mxu0 %v418
      %463 = vmatprep.subr.mxu0 0.0
      %464 = vmatpush1.msra.mxu0 %v419
      %465 = vmatprep.subr.mxu0 0.0
      %466 = vmatpush1.msra.mxu0 %v420
      %467 = vmatprep.subr.mxu0 0.0
      %468 = vmatpush1.msra.mxu0 %v421
      %469 = vmatprep.subr.mxu0 0.0
      %470 = vmatpush1.msra.mxu0 %v422
      %471 = vmatprep.subr.mxu0 0.0
      %472 = vmatpush1.msra.mxu0 %v423
      %473 = vmatprep.subr.mxu0 0.0
      %474 = vmatpush1.msra.mxu0 %v424
      %475 = vmatprep.subr.mxu0 0.0
      %476 = vmatpush1.msra.mxu0 %v425
      %477 = vmatprep.subr.mxu0 0.0
      %478 = vmatpush1.msra.mxu0 %v426
      %479 = vmatprep.subr.mxu0 0.0
      %480 = vmatpush1.msra.mxu0 %v427
      %481 = vmatprep.subr.mxu0 0.0
      %482 = vmatpush1.msra.mxu0 %v428
      %483 = vmatprep.subr.mxu0 0.0
      %484 = vmatpush1.msra.mxu0 %v429
      %485 = vmatprep.subr.mxu0 0.0
      %486 = vmatpush1.msra.mxu0 %v430
      %487 = vmatprep.subr.mxu0 0.0
      %488 = vmatpush1.msra.mxu0 %v431
      %489 = vmatprep.subr.mxu0 0.0
      %490 = vmatpush1.msra.mxu0 %v432
      %491 = vmatprep.subr.mxu0 0.0
      %492 = vmatpush1.msra.mxu0 0.0
      %493 = vmatprep.subr.mxu0 0.0
      %494 = vmatpush1.msra.mxu0 0.0
      %495 = vmatprep.subr.mxu0 0.0
      %496 = vmatpush1.msra.mxu0 0.0
      %497 = vmatprep.subr.mxu0 0.0
      %498 = vmatpush1.msra.mxu0 0.0
      %499 = vmatprep.subr.mxu0 0.0
      %500 = vmatpush1.msra.mxu0 0.0
      %501 = vmatprep.subr.mxu0 0.0
      %502 = vmatpush1.msra.mxu0 0.0
      %503 = vmatprep.subr.mxu0 0.0
      %504 = vmatpush1.msra.mxu0 0.0
      %505 = vmatprep.subr.mxu0 0.0
      %506 = vmatpush1.msra.mxu0 0.0
      %507 = vmatprep.subr.mxu0 0.0
      %508 = vmatpush1.msra.mxu0 0.0
      %509 = vmatprep.subr.mxu0 0.0
      %510 = vmatpush1.msra.mxu0 0.0
      %511 = vmatprep.subr.mxu0 0.0
      %512 = vmatpush1.msra.mxu0 0.0
      %513 = vmatprep.subr.mxu0 0.0
      %514 = vmatpush1.msra.mxu0 0.0
      %515 = vmatprep.subr.mxu0 0.0
      %516 = vmatpush1.msra.mxu0 0.0
      %517 = vmatprep.subr.mxu0 0.0
      %518 = vmatpush1.msra.mxu0 0.0
      %519 = vmatprep.subr.mxu0 0.0
      %520 = vmatpush1.msra.mxu0 0.0
      %521 = vmatprep.mubr.f32.mxu0 %v451
      %522 = vmatmul.mubr.f32.gmra.mrb[0].mxu0 %v440
      %v523 = vpop.f32.mrb[0].mxu0
      %v524 = vadd.f32 0.0, %v523
      %v525 = vpop.f32.mrb[0].mxu0
      %526 = vmatprep.mubr.f32.mxu0 %v453
      %527 = vmatmul.mubr.f32.gmra.mrb[0].mxu0 %v445
      %v528 = vpop.f32.mrb[0].mxu0
      %v529 = vadd.f32 0.0, %v528
      %v530 = vpop.f32.mrb[0].mxu0
      %531 = vmatprep.mubr.f32.mxu0 %v455
      %532 = vmatmul.mubr.f32.gmra.mrb[0].mxu0 %v444
      %v533 = vpop.f32.mrb[0].mxu0
      %v534 = vadd.f32 0.0, %v533
      %v535 = vpop.f32.mrb[0].mxu0
      %536 = vdwg.mxu0
      %v537 = vadd.f32 %v398, %v524
      %v538 = vadd.f32 %v403, %v529
      %v539 = vadd.f32 %v408, %v534
      %v540 = vld [vmem:[%s165] sm:$0xf8]
      %v541 = vld [vmem:[%s165 + $0x8] sm:$0xf8]
      %v542 = vld [vmem:[%s165 + $0x20] sm:$0xf]
      %v543 = vld [vmem:[%s165 + $0x28] sm:$0xf]
      %s544 = scalar_lea.vmem %s1, 408
      %v545 = vld [vmem:[%s544] sm:$0xff]
      %v546 = vld [vmem:[%s544 + $0x8] sm:$0xff]
      %v547 = vld [vmem:[%s544 + $0x10] sm:$0xff]
      %v548 = vld [vmem:[%s544 + $0x18] sm:$0xff]
      %v549 = vld [vmem:[%s544 + $0x20] sm:$0xff]
      %v550 = vld [vmem:[%s544 + $0x28] sm:$0xff]
      %v551 = vld [vmem:[%s544 + $0x30] sm:$0xff]
      %v552 = vld [vmem:[%s544 + $0x38] sm:$0xff]
      %v553 = vld [vmem:[%s544 + $0x40] sm:$0xff]
      %v554 = vld [vmem:[%s544 + $0x48] sm:$0xff]
      %v555 = vld [vmem:[%s544 + $0x50] sm:$0xff]
      %v556 = vld [vmem:[%s544 + $0x58] sm:$0xff]
      %v557 = vld [vmem:[%s544 + $0x60] sm:$0xff]
      %v558 = vld [vmem:[%s544 + $0x68] sm:$0xff]
      %v559 = vld [vmem:[%s544 + $0x70] sm:$0xff]
      %v560 = vld [vmem:[%s544 + $0x78] sm:$0xff]
      %v561 = vld [vmem:[%s544 + $0x80] sm:$0xff]
      %vm566 = vcmask 1044480
      %v567 = vrot.slane %v540, 3
      %v568 = vrot.slane %v173, 3
      %v569 = vsel %vm566, %v567, %v568
      %v570 = vrot.slane %v541, 3
      %v571 = vrot.slane %v174, 3
      %v572 = vsel %vm566, %v570, %v571
      %v573 = vrot.slane %v542, 3
      %v574 = vsel %vm566, %v568, %v573
      %v575 = vrot.slane %v543, 3
      %v576 = vsel %vm566, %v571, %v575
      %v580 = vsel %vm236, %v572, 0
      %v582 = vsel %vm236, %v576, 0
      %v584 = vsel %vm236, %v575, 0
      %586 = vmatprep.subr.mxu0 0.0
      %587 = vmatpush1.msra.mxu0 %v545
      %588 = vmatprep.subr.mxu0 0.0
      %589 = vmatpush1.msra.mxu0 %v546
      %590 = vmatprep.subr.mxu0 0.0
      %591 = vmatpush1.msra.mxu0 %v547
      %592 = vmatprep.subr.mxu0 0.0
      %593 = vmatpush1.msra.mxu0 %v548
      %594 = vmatprep.subr.mxu0 0.0
      %595 = vmatpush1.msra.mxu0 %v549
      %596 = vmatprep.subr.mxu0 0.0
      %597 = vmatpush1.msra.mxu0 %v550
      %598 = vmatprep.subr.mxu0 0.0
      %599 = vmatpush1.msra.mxu0 %v551
      %600 = vmatprep.subr.mxu0 0.0
      %601 = vmatpush1.msra.mxu0 %v552
      %602 = vmatprep.subr.mxu0 0.0
      %603 = vmatpush1.msra.mxu0 %v553
      %604 = vmatprep.subr.mxu0 0.0
      %605 = vmatpush1.msra.mxu0 %v554
      %606 = vmatprep.subr.mxu0 0.0
      %607 = vmatpush1.msra.mxu0 %v555
      %608 = vmatprep.subr.mxu0 0.0
      %609 = vmatpush1.msra.mxu0 %v556
      %610 = vmatprep.subr.mxu0 0.0
      %611 = vmatpush1.msra.mxu0 %v557
      %612 = vmatprep.subr.mxu0 0.0
      %613 = vmatpush1.msra.mxu0 %v558
      %614 = vmatprep.subr.mxu0 0.0
      %615 = vmatpush1.msra.mxu0 %v559
      %616 = vmatprep.subr.mxu0 0.0
      %617 = vmatpush1.msra.mxu0 %v560
      %618 = vmatprep.subr.mxu0 0.0
      %619 = vmatpush1.msra.mxu0 %v561
      %620 = vmatprep.subr.mxu0 0.0
      %621 = vmatpush1.msra.mxu0 0.0
      %622 = vmatprep.subr.mxu0 0.0
      %623 = vmatpush1.msra.mxu0 0.0
      %624 = vmatprep.subr.mxu0 0.0
      %625 = vmatpush1.msra.mxu0 0.0
      %626 = vmatprep.subr.mxu0 0.0
      %627 = vmatpush1.msra.mxu0 0.0
      %628 = vmatprep.subr.mxu0 0.0
      %629 = vmatpush1.msra.mxu0 0.0
      %630 = vmatprep.subr.mxu0 0.0
      %631 = vmatpush1.msra.mxu0 0.0
      %632 = vmatprep.subr.mxu0 0.0
      %633 = vmatpush1.msra.mxu0 0.0
      %634 = vmatprep.subr.mxu0 0.0
      %635 = vmatpush1.msra.mxu0 0.0
      %636 = vmatprep.subr.mxu0 0.0
      %637 = vmatpush1.msra.mxu0 0.0
      %638 = vmatprep.subr.mxu0 0.0
      %639 = vmatpush1.msra.mxu0 0.0
      %640 = vmatprep.subr.mxu0 0.0
      %641 = vmatpush1.msra.mxu0 0.0
      %642 = vmatprep.subr.mxu0 0.0
      %643 = vmatpush1.msra.mxu0 0.0
      %644 = vmatprep.subr.mxu0 0.0
      %645 = vmatpush1.msra.mxu0 0.0
      %646 = vmatprep.subr.mxu0 0.0
      %647 = vmatpush1.msra.mxu0 0.0
      %648 = vmatprep.subr.mxu0 0.0
      %649 = vmatpush1.msra.mxu0 0.0
      %650 = vmatprep.mubr.f32.mxu0 %v580
      %651 = vmatmul.mubr.f32.gmra.mrb[0].mxu0 %v569
      %v652 = vpop.f32.mrb[0].mxu0
      %v653 = vadd.f32 0.0, %v652
      %v654 = vpop.f32.mrb[0].mxu0
      %655 = vmatprep.mubr.f32.mxu0 %v582
      %656 = vmatmul.mubr.f32.gmra.mrb[0].mxu0 %v574
      %v657 = vpop.f32.mrb[0].mxu0
      %v658 = vadd.f32 0.0, %v657
      %v659 = vpop.f32.mrb[0].mxu0
      %660 = vmatprep.mubr.f32.mxu0 %v584
      %661 = vmatmul.mubr.f32.gmra.mrb[0].mxu0 %v573
      %v662 = vpop.f32.mrb[0].mxu0
      %v663 = vadd.f32 0.0, %v662
      %v664 = vpop.f32.mrb[0].mxu0
      %665 = vdwg.mxu0
      %v666 = vadd.f32 %v537, %v653
      %v667 = vadd.f32 %v538, %v658
      %v668 = vadd.f32 %v539, %v663
      %v669 = vld [vmem:[%s165] sm:$0xf0]
      %v670 = vld [vmem:[%s165 + $0x8] sm:$0xf0]
      %v671 = vld [vmem:[%s165 + $0x20] sm:$0x1f]
      %v672 = vld [vmem:[%s165 + $0x28] sm:$0x1f]
      %s673 = scalar_lea.vmem %s1, 544
      %v674 = vld [vmem:[%s673] sm:$0xff]
      %v675 = vld [vmem:[%s673 + $0x8] sm:$0xff]
      %v676 = vld [vmem:[%s673 + $0x10] sm:$0xff]
      %v677 = vld [vmem:[%s673 + $0x18] sm:$0xff]
      %v678 = vld [vmem:[%s673 + $0x20] sm:$0xff]
      %v679 = vld [vmem:[%s673 + $0x28] sm:$0xff]
      %v680 = vld [vmem:[%s673 + $0x30] sm:$0xff]
      %v681 = vld [vmem:[%s673 + $0x38] sm:$0xff]
      %v682 = vld [vmem:[%s673 + $0x40] sm:$0xff]
      %v683 = vld [vmem:[%s673 + $0x48] sm:$0xff]
      %v684 = vld [vmem:[%s673 + $0x50] sm:$0xff]
      %v685 = vld [vmem:[%s673 + $0x58] sm:$0xff]
      %v686 = vld [vmem:[%s673 + $0x60] sm:$0xff]
      %v687 = vld [vmem:[%s673 + $0x68] sm:$0xff]
      %v688 = vld [vmem:[%s673 + $0x70] sm:$0xff]
      %v689 = vld [vmem:[%s673 + $0x78] sm:$0xff]
      %v690 = vld [vmem:[%s673 + $0x80] sm:$0xff]
      %vm695 = vcmask 1043456
      %v696 = vrot.slane %v669, 4
      %v697 = vrot.slane %v173, 4
      %v698 = vsel %vm695, %v696, %v697
      %v699 = vrot.slane %v670, 4
      %v700 = vrot.slane %v174, 4
      %v701 = vsel %vm695, %v699, %v700
      %v702 = vrot.slane %v671, 4
      %v703 = vsel %vm695, %v697, %v702
      %v704 = vrot.slane %v672, 4
      %v705 = vsel %vm695, %v700, %v704
      %v709 = vsel %vm236, %v701, 0
      %v711 = vsel %vm236, %v705, 0
      %v713 = vsel %vm236, %v704, 0
      %715 = vmatprep.subr.mxu0 0.0
      %716 = vmatpush1.msra.mxu0 %v674
      %717 = vmatprep.subr.mxu0 0.0
      %718 = vmatpush1.msra.mxu0 %v675
      %719 = vmatprep.subr.mxu0 0.0
      %720 = vmatpush1.msra.mxu0 %v676
      %721 = vmatprep.subr.mxu0 0.0
      %722 = vmatpush1.msra.mxu0 %v677
      %723 = vmatprep.subr.mxu0 0.0
      %724 = vmatpush1.msra.mxu0 %v678
      %725 = vmatprep.subr.mxu0 0.0
      %726 = vmatpush1.msra.mxu0 %v679
      %727 = vmatprep.subr.mxu0 0.0
      %728 = vmatpush1.msra.mxu0 %v680
      %729 = vmatprep.subr.mxu0 0.0
      %730 = vmatpush1.msra.mxu0 %v681
      %731 = vmatprep.subr.mxu0 0.0
      %732 = vmatpush1.msra.mxu0 %v682
      %733 = vmatprep.subr.mxu0 0.0
      %734 = vmatpush1.msra.mxu0 %v683
      %735 = vmatprep.subr.mxu0 0.0
      %736 = vmatpush1.msra.mxu0 %v684
      %737 = vmatprep.subr.mxu0 0.0
      %738 = vmatpush1.msra.mxu0 %v685
      %739 = vmatprep.subr.mxu0 0.0
      %740 = vmatpush1.msra.mxu0 %v686
      %741 = vmatprep.subr.mxu0 0.0
      %742 = vmatpush1.msra.mxu0 %v687
      %743 = vmatprep.subr.mxu0 0.0
      %744 = vmatpush1.msra.mxu0 %v688
      %745 = vmatprep.subr.mxu0 0.0
      %746 = vmatpush1.msra.mxu0 %v689
      %747 = vmatprep.subr.mxu0 0.0
      %748 = vmatpush1.msra.mxu0 %v690
      %749 = vmatprep.subr.mxu0 0.0
      %750 = vmatpush1.msra.mxu0 0.0
      %751 = vmatprep.subr.mxu0 0.0
      %752 = vmatpush1.msra.mxu0 0.0
      %753 = vmatprep.subr.mxu0 0.0
      %754 = vmatpush1.msra.mxu0 0.0
      %755 = vmatprep.subr.mxu0 0.0
      %756 = vmatpush1.msra.mxu0 0.0
      %757 = vmatprep.subr.mxu0 0.0
      %758 = vmatpush1.msra.mxu0 0.0
      %759 = vmatprep.subr.mxu0 0.0
      %760 = vmatpush1.msra.mxu0 0.0
      %761 = vmatprep.subr.mxu0 0.0
      %762 = vmatpush1.msra.mxu0 0.0
      %763 = vmatprep.subr.mxu0 0.0
      %764 = vmatpush1.msra.mxu0 0.0
      %765 = vmatprep.subr.mxu0 0.0
      %766 = vmatpush1.msra.mxu0 0.0
      %767 = vmatprep.subr.mxu0 0.0
      %768 = vmatpush1.msra.mxu0 0.0
      %769 = vmatprep.subr.mxu0 0.0
      %770 = vmatpush1.msra.mxu0 0.0
      %771 = vmatprep.subr.mxu0 0.0
      %772 = vmatpush1.msra.mxu0 0.0
      %773 = vmatprep.subr.mxu0 0.0
      %774 = vmatpush1.msra.mxu0 0.0
      %775 = vmatprep.subr.mxu0 0.0
      %776 = vmatpush1.msra.mxu0 0.0
      %777 = vmatprep.subr.mxu0 0.0
      %778 = vmatpush1.msra.mxu0 0.0
      %779 = vmatprep.mubr.f32.mxu0 %v709
      %780 = vmatmul.mubr.f32.gmra.mrb[0].mxu0 %v698
      %v781 = vpop.f32.mrb[0].mxu0
      %v782 = vadd.f32 0.0, %v781
      %v783 = vpop.f32.mrb[0].mxu0
      %784 = vmatprep.mubr.f32.mxu0 %v711
      %785 = vmatmul.mubr.f32.gmra.mrb[0].mxu0 %v703
      %v786 = vpop.f32.mrb[0].mxu0
      %v787 = vadd.f32 0.0, %v786
      %v788 = vpop.f32.mrb[0].mxu0
      %789 = vmatprep.mubr.f32.mxu0 %v713
      %790 = vmatmul.mubr.f32.gmra.mrb[0].mxu0 %v702
      %v791 = vpop.f32.mrb[0].mxu0
      %v792 = vadd.f32 0.0, %v791
      %v793 = vpop.f32.mrb[0].mxu0
      %794 = vdwg.mxu0
      %v795 = vadd.f32 %v666, %v782
      %v796 = vadd.f32 %v667, %v787
      %v797 = vadd.f32 %v668, %v792
      %v798 = vld [vmem:[%s2] sm:$0x1]
      %v800 = vlaneseq
      %v801 = vshrl.u32 %v800, 7
      %v802 = vsub.s32 0, %v801
      %v803 = vrot.slane %v798, %v802
      %v805 = vadd.f32 %v795, %v803
      %v806 = vadd.f32 %v796, %v803
      %v807 = vadd.f32 %v797, %v803
      %v808 = vmax.f32 %v805, 0.0
      %v809 = vmax.f32 %v806, 0.0
      %v810 = vmax.f32 %v807, 0.0
      %vm811 = vcmask 850944
      %812 = vst.msk [vmem:[%s170] sm:$0xff] %vm811, %v808
      %813 = vst.msk [vmem:[%s170 + $0x8] sm:$0xff] %vm811, %v809
      %vm814 = vcmask 843776
      %815 = vst.msk [vmem:[%s170 + $0x10] sm:$0x1] %vm814, %v810
      %p816 = scmp.lt.s32.totalorder %s14, 1
      %s817 = scalar_select %p816, %s14, 1
      %s818 = smul.addr %s817, 3
      %s819 = smul.addr %s818, 8
      %s820 = scalar_lea.vmem %s3, %s819
      // Predicated region
      $region33: #{cvae_forward.15} parent=31 // pred_check
        %p821 = pneg %p100
      $region34: #{cvae_forward.15} parent=31 // pred_check_branch
        %823 = sbr.rel (%p821) target = $region36
      $region35: #{cvae_forward.15} parent=31 // pred_region
        _
      $region36: #{cvae_forward.15} parent=31 // pred_fallthru
        _
    $region32: #{cvae_forward.15} parent=5 // pred_fallthru
      _
    %p824 = scmp.le.s32.totalorder 2, %s9
    // Predicated region
    $region37: #{cvae_forward.15} parent=5 // pred_check
      %p825 = pneg %p824
    $region38: #{cvae_forward.15} parent=5 // pred_check_branch
      %827 = sbr.rel (%p825) target = $region40
    $region39: #{cvae_forward.15} parent=5 // pred_region
      %s828 = ssub.s32 %s9, 2
      // Predicated region
      $region41: #{cvae_forward.15} parent=39 // pred_check
        %p829 = pneg %p106
      $region42: #{cvae_forward.15} parent=39 // pred_check_branch
        %831 = sbr.rel (%p829) target = $region44
      $region43: #{cvae_forward.15} parent=39 // pred_region
        %p832 = scmp.lt.s32.totalorder %s15, 1
        %s833 = scalar_select %p832, %s15, 1
        %s834 = smul.addr %s833, 3
        %s835 = smul.addr %s834, 8
        %s836 = scalar_lea.vmem %s3, %s835
      $region44: #{cvae_forward.15} parent=39 // pred_fallthru
        _
    $region40: #{cvae_forward.15} parent=5 // pred_fallthru
      _
  $region6: #{cvae_forward.15} parent=0 // loop_footer
    %s13 = sadd.s32 1, %s9
  $region7: #{cvae_forward.15} parent=0 // loop_footer_branch
    %8 = sbr.rel target = $region3
  $region8: #{cvae_forward.15} parent=0 // loop_exit
    _

// kernel: cvae_forward.16
$region0: #{cvae_forward.16}
  #allocation0 [shape = 'u32[]', space=smem, size = 0x4, offset = 0x4, fixed_abs, tag = 'smem constant byte address 0x4 - core index']
  #allocation1 [shape = 'u32[144,128]{1,0:T(1,128)}', space=vmem, size = 0x12000, scoped, tag = 'internal scratch']
  %s0 = inlined_call_operand.vmem [shape: f32[2,23,152], index: 0, kind: input, shape index: {}]
  %s1 = inlined_call_operand.vmem [shape: f32[5,152,120], index: 1, kind: input, shape index: {}]
  %s2 = inlined_call_operand.vmem [shape: f32[1,120], index: 2, kind: input, shape index: {}]
  %s3 = inlined_call_operand.vmem [shape: f32[2,19,120], index: 3, kind: output, shape index: {}]
  %s4 = sld [smem:[#allocation0]]
  $region45: #{cvae_forward.16} parent=0
    _
  %s6 = ssub.s32 1, %s4
  %s7 = scalar_select 0, %s6, %s4
  loop: start=0, step=1, limit=4
  $region2: #{cvae_forward.16} parent=0 // loop_pre_header
    _
  $region3: #{cvae_forward.16} parent=0 // loop_header
    %s9 = sphi 0, %s13
    %p10 = scmp.ge.s32.totalorder %s9, 4
    %s19 = sphi 0, %s21
    %s22 = sphi 0, %s19
    %s23 = sphi 0, %s22
    %s39 = sphi 0, %s23
    %s43 = sphi 0, %s43
    %s45 = sphi 0, %s43
    %s46 = sphi 0, %s45
    %s60 = sphi 0, %s46
    %s64 = sphi 0, %s64
    %s66 = sphi 0, %s64
    %s67 = sphi 0, %s66
    %s81 = sphi 0, %s67
    %s87 = sphi 0, %s89
    %s90 = sphi 0, %s87
    %s91 = sphi 0, %s90
    %s107 = sphi 0, %s91
  $region4: #{cvae_forward.16} parent=0 // loop_header_branch
    %12 = sbr.rel (%p10) target = $region8
  $region5: #{cvae_forward.16} parent=0 // loop_body
    %s14 = ssub.s32 %s9, 1
    %s15 = ssub.s32 %s9, 2
    %s16 = sadd.s32 %s9, 1
    %s17 = ssub.s32 %s9, %s16
    %p18 = scmp.eq.s32.totalorder %s17, 0
    %s20 = sadd.s32 %s19, 1
    %s21 = scalar_select %p18, %s19, %s20
    %p24 = pneg %p18
    %p25 = scmp.eq.s32.totalorder %s9, 1
    %p26 = por %p24, %p25
    %p27 = scmp.ne.s32.totalorder %s19, %s22
    %p28 = scmp.eq.s32.totalorder %s9, 0
    %p29 = por %p27, %p28
    %p30 = scmp.ne.s32.totalorder %s19, %s22
    %p31 = scmp.eq.s32.totalorder %s14, 1
    %p32 = por %p30, %p31
    %p33 = scmp.ne.s32.totalorder %s22, %s23
    %p34 = scmp.eq.s32.totalorder %s14, 0
    %p35 = por %p33, %p34
    %p36 = scmp.ne.s32.totalorder %s22, %s23
    %p37 = scmp.eq.s32.totalorder %s15, 1
    %p38 = por %p36, %p37
    %p40 = scmp.ne.s32.totalorder %s23, %s39
    %p41 = scmp.eq.s32.totalorder %s15, 0
    %p42 = por %p40, %p41
    %s44 = sadd.s32 %s43, 1
    %p47 = scmp.eq.s32.totalorder %s9, 1
    %p48 = scmp.ne.s32.totalorder %s43, %s45
    %p49 = scmp.eq.s32.totalorder %s9, 0
    %p50 = por %p48, %p49
    %p51 = scmp.ne.s32.totalorder %s43, %s45
    %p52 = scmp.eq.s32.totalorder %s14, 1
    %p53 = por %p51, %p52
    %p54 = scmp.ne.s32.totalorder %s45, %s46
    %p55 = scmp.eq.s32.totalorder %s14, 0
    %p56 = por %p54, %p55
    %p57 = scmp.ne.s32.totalorder %s45, %s46
    %p58 = scmp.eq.s32.totalorder %s15, 1
    %p59 = por %p57, %p58
    %p61 = scmp.ne.s32.totalorder %s46, %s60
    %p62 = scmp.eq.s32.totalorder %s15, 0
    %p63 = por %p61, %p62
    %s65 = sadd.s32 %s64, 1
    %p68 = scmp.eq.s32.totalorder %s9, 1
    %p69 = scmp.ne.s32.totalorder %s64, %s66
    %p70 = scmp.eq.s32.totalorder %s9, 0
    %p71 = por %p69, %p70
    %p72 = scmp.ne.s32.totalorder %s64, %s66
    %p73 = scmp.eq.s32.totalorder %s14, 1
    %p74 = por %p72, %p73
    %p75 = scmp.ne.s32.totalorder %s66, %s67
    %p76 = scmp.eq.s32.totalorder %s14, 0
    %p77 = por %p75, %p76
    %p78 = scmp.ne.s32.totalorder %s66, %s67
    %p79 = scmp.eq.s32.totalorder %s15, 1
    %p80 = por %p78, %p79
    %p82 = scmp.ne.s32.totalorder %s67, %s81
    %p83 = scmp.eq.s32.totalorder %s15, 0
    %p84 = por %p82, %p83
    %s85 = ssub.s32 %s9, %s16
    %p86 = scmp.eq.s32.totalorder %s85, 0
    %s88 = sadd.s32 %s87, 1
    %s89 = scalar_select %p86, %s87, %s88
    %p92 = pneg %p86
    %p93 = scmp.eq.s32.totalorder %s9, 1
    %p94 = por %p92, %p93
    %p95 = scmp.ne.s32.totalorder %s87, %s90
    %p96 = scmp.eq.s32.totalorder %s9, 0
    %p97 = por %p95, %p96
    %p98 = scmp.ne.s32.totalorder %s87, %s90
    %p99 = scmp.eq.s32.totalorder %s14, 1
    %p100 = por %p98, %p99
    %p101 = scmp.ne.s32.totalorder %s90, %s91
    %p102 = scmp.eq.s32.totalorder %s14, 0
    %p103 = por %p101, %p102
    %p104 = scmp.ne.s32.totalorder %s90, %s91
    %p105 = scmp.eq.s32.totalorder %s15, 1
    %p106 = por %p104, %p105
    %p108 = scmp.ne.s32.totalorder %s91, %s107
    %p109 = scmp.eq.s32.totalorder %s15, 0
    %p110 = por %p108, %p109
    %p111 = scmp.le.s32.totalorder 1, %s9
    %p112 = scmp.lt.s32.totalorder %s9, 3
    %p113 = pnand %p111, %p112
    %p114 = pneg %p113
    // Predicated region
    $region9: #{cvae_forward.16} parent=5 // pred_check
      _
    $region10: #{cvae_forward.16} parent=5 // pred_check_branch
      %116 = sbr.rel (%p113) target = $region12
    $region11: #{cvae_forward.16} parent=5 // pred_region
      %s117 = ssub.s32 %s9, 1
      // Predicated region
      $region13: #{cvae_forward.16} parent=11 // pred_check
        %p118 = pneg %p56
      $region14: #{cvae_forward.16} parent=11 // pred_check_branch
        %120 = sbr.rel (%p118) target = $region16
      $region15: #{cvae_forward.16} parent=11 // pred_region
        _
      $region16: #{cvae_forward.16} parent=11 // pred_fallthru
        _
      // Predicated region
      $region17: #{cvae_forward.16} parent=11 // pred_check
        %p121 = pneg %p77
      $region18: #{cvae_forward.16} parent=11 // pred_check_branch
        %123 = sbr.rel (%p121) target = $region20
      $region19: #{cvae_forward.16} parent=11 // pred_region
        _
      $region20: #{cvae_forward.16} parent=11 // pred_fallthru
        _
    $region12: #{cvae_forward.16} parent=5 // pred_fallthru
      _
    %p124 = scmp.lt.s32.totalorder %s9, 2
    // Predicated region
    $region21: #{cvae_forward.16} parent=5 // pred_check
      %p125 = pneg %p124
    $region22: #{cvae_forward.16} parent=5 // pred_check_branch
      %127 = sbr.rel (%p125) target = $region24
    $region23: #{cvae_forward.16} parent=5 // pred_region
      // Predicated region
      $region25: #{cvae_forward.16} parent=23 // pred_check
        %p128 = pneg %p29
      $region26: #{cvae_forward.16} parent=23 // pred_check_branch
        %130 = sbr.rel (%p128) target = $region28
      $region27: #{cvae_forward.16} parent=23 // pred_region
        %p131 = scmp.lt.s32.totalorder %s9, 1
        %s132 = scalar_select %p131, %s9, 1
        %s133 = smul.addr %s132, 6
        %s134 = smul.addr %s133, 8
        %s135 = scalar_lea.vmem %s0, %s134
      $region28: #{cvae_forward.16} parent=23 // pred_fallthru
        _
    $region24: #{cvae_forward.16} parent=5 // pred_fallthru
      _
    %p136 = scmp.le.s32.totalorder 1, %s9
    %p137 = scmp.lt.s32.totalorder %s9, 3
    %p138 = pnand %p136, %p137
    %p139 = pneg %p138
    // Predicated region
    $region29: #{cvae_forward.16} parent=5 // pred_check
      _
    $region30: #{cvae_forward.16} parent=5 // pred_check_branch
      %141 = sbr.rel (%p138) target = $region32
    $region31: #{cvae_forward.16} parent=5 // pred_region
      %s142 = ssub.s32 %s9, 1
      %p143 = scmp.lt.s32.totalorder %s14, 1
      %s144 = scalar_select %p143, %s14, 1
      %s145 = smul.addr %s144, 6
      %s146 = smul.addr %s145, 8
      %s147 = scalar_lea.vmem %s0, %s146
      %p148 = pneg %p35
      %p149 = pneg %p32
      %p150 = pneg %p56
      %p151 = pneg %p53
      %p152 = pneg %p77
      %p153 = pneg %p74
      %p154 = pneg %p103
      %p155 = pneg %p100
      %p156 = scmp.lt.s32.totalorder %s14, 1
      %s157 = scalar_select %p156, %s14, 1
      %s158 = smul.addr %s157, 3
      %s159 = smul.addr %s158, 8
      %s160 = scalar_lea.vmem %s3, %s159
      %p161 = scmp.lt.s32.totalorder %s14, 1
      %s162 = scalar_select %p161, %s14, 1
      %s163 = smul.addr %s162, 6
      %s164 = smul.addr %s163, 8
      %s165 = scalar_lea.vmem %s0, %s164
      %p166 = scmp.lt.s32.totalorder %s14, 1
      %s167 = scalar_select %p166, %s14, 1
      %s168 = smul.addr %s167, 3
      %s169 = smul.addr %s168, 8
      %s170 = scalar_lea.vmem %s3, %s169
      %v171 = vld [vmem:[%s165] sm:$0xff]
      %v172 = vld [vmem:[%s165 + $0x8] sm:$0xff]
      %v173 = vld [vmem:[%s165 + $0x10] sm:$0xff]
      %v174 = vld [vmem:[%s165 + $0x18] sm:$0xff]
      %v175 = vld [vmem:[%s165 + $0x20] sm:$0x7]
      %v176 = vld [vmem:[%s165 + $0x28] sm:$0x7]
      %v177 = vld [vmem:[%s1] sm:$0xff]
      %v178 = vld [vmem:[%s1 + $0x8] sm:$0xff]
      %v179 = vld [vmem:[%s1 + $0x10] sm:$0xff]
      %v180 = vld [vmem:[%s1 + $0x18] sm:$0xff]
      %v181 = vld [vmem:[%s1 + $0x20] sm:$0xff]
      %v182 = vld [vmem:[%s1 + $0x28] sm:$0xff]
      %v183 = vld [vmem:[%s1 + $0x30] sm:$0xff]
      %v184 = vld [vmem:[%s1 + $0x38] sm:$0xff]
      %v185 = vld [vmem:[%s1 + $0x40] sm:$0xff]
      %v186 = vld [vmem:[%s1 + $0x48] sm:$0xff]
      %v187 = vld [vmem:[%s1 + $0x50] sm:$0xff]
      %v188 = vld [vmem:[%s1 + $0x58] sm:$0xff]
      %v189 = vld [vmem:[%s1 + $0x60] sm:$0xff]
      %v190 = vld [vmem:[%s1 + $0x68] sm:$0xff]
      %v191 = vld [vmem:[%s1 + $0x70] sm:$0xff]
      %v192 = vld [vmem:[%s1 + $0x78] sm:$0xff]
      %v193 = vld [vmem:[%s1 + $0x80] sm:$0xff]
      %v194 = vld [vmem:[%s1 + $0x88] sm:$0xff]
      %v195 = vld [vmem:[%s1 + $0x90] sm:$0xff]
      %v196 = vld [vmem:[%s165] sm:$0xfe]
      %v197 = vld [vmem:[%s165 + $0x8] sm:$0xfe]
      %v198 = vld [vmem:[%s165 + $0x20] sm:$0xf]
      %v199 = vld [vmem:[%s165 + $0x28] sm:$0xf]
      %s200 = scalar_lea.vmem %s1, 152
      %v201 = vld [vmem:[%s200] sm:$0xff]
      %v202 = vld [vmem:[%s200 + $0x8] sm:$0xff]
      %v203 = vld [vmem:[%s200 + $0x10] sm:$0xff]
      %v204 = vld [vmem:[%s200 + $0x18] sm:$0xff]
      %v205 = vld [vmem:[%s200 + $0x20] sm:$0xff]
      %v206 = vld [vmem:[%s200 + $0x28] sm:$0xff]
      %v207 = vld [vmem:[%s200 + $0x30] sm:$0xff]
      %v208 = vld [vmem:[%s200 + $0x38] sm:$0xff]
      %v209 = vld [vmem:[%s200 + $0x40] sm:$0xff]
      %v210 = vld [vmem:[%s200 + $0x48] sm:$0xff]
      %v211 = vld [vmem:[%s200 + $0x50] sm:$0xff]
      %v212 = vld [vmem:[%s200 + $0x58] sm:$0xff]
      %v213 = vld [vmem:[%s200 + $0x60] sm:$0xff]
      %v214 = vld [vmem:[%s200 + $0x68] sm:$0xff]
      %v215 = vld [vmem:[%s200 + $0x70] sm:$0xff]
      %v216 = vld [vmem:[%s200 + $0x78] sm:$0xff]
      %v217 = vld [vmem:[%s200 + $0x80] sm:$0xff]
      %v218 = vld [vmem:[%s200 + $0x88] sm:$0xff]
      %v219 = vld [vmem:[%s200 + $0x90] sm:$0xff]
      %vm226 = vcmask 1046528
      %v227 = vrot.slane %v196, 1
      %v228 = vrot.slane %v173, 1
      %v229 = vsel %vm226, %v227, %v228
      %v230 = vrot.slane %v197, 1
      %v231 = vrot.slane %v174, 1
      %v232 = vsel %vm226, %v230, %v231
      %v233 = vrot.slane %v198, 1
      %v234 = vsel %vm226, %v228, %v233
      %v235 = vrot.slane %v199, 1
      %v236 = vsel %vm226, %v231, %v235
      %vm240 = vcmask 195584
      %v241 = vsel %vm240, %v232, 0
      %v243 = vsel %vm240, %v236, 0
      %v245 = vsel %vm240, %v235, 0
      %247 = vmatprep.subr.mxu0 0.0
      %248 = vmatpush1.msra.mxu0 %v201
      %249 = vmatprep.subr.mxu0 0.0
      %250 = vmatpush1.msra.mxu0 %v202
      %251 = vmatprep.subr.mxu0 0.0
      %252 = vmatpush1.msra.mxu0 %v203
      %253 = vmatprep.subr.mxu0 0.0
      %254 = vmatpush1.msra.mxu0 %v204
      %255 = vmatprep.subr.mxu0 0.0
      %256 = vmatpush1.msra.mxu0 %v205
      %257 = vmatprep.subr.mxu0 0.0
      %258 = vmatpush1.msra.mxu0 %v206
      %259 = vmatprep.subr.mxu0 0.0
      %260 = vmatpush1.msra.mxu0 %v207
      %261 = vmatprep.subr.mxu0 0.0
      %262 = vmatpush1.msra.mxu0 %v208
      %263 = vmatprep.subr.mxu0 0.0
      %264 = vmatpush1.msra.mxu0 %v209
      %265 = vmatprep.subr.mxu0 0.0
      %266 = vmatpush1.msra.mxu0 %v210
      %267 = vmatprep.subr.mxu0 0.0
      %268 = vmatpush1.msra.mxu0 %v211
      %269 = vmatprep.subr.mxu0 0.0
      %270 = vmatpush1.msra.mxu0 %v212
      %271 = vmatprep.subr.mxu0 0.0
      %272 = vmatpush1.msra.mxu0 %v213
      %273 = vmatprep.subr.mxu0 0.0
      %274 = vmatpush1.msra.mxu0 %v214
      %275 = vmatprep.subr.mxu0 0.0
      %276 = vmatpush1.msra.mxu0 %v215
      %277 = vmatprep.subr.mxu0 0.0
      %278 = vmatpush1.msra.mxu0 %v216
      %279 = vmatprep.subr.mxu0 0.0
      %280 = vmatpush1.msra.mxu0 %v217
      %281 = vmatprep.subr.mxu0 0.0
      %282 = vmatpush1.msra.mxu0 %v218
      %283 = vmatprep.subr.mxu0 0.0
      %284 = vmatpush1.msra.mxu0 %v219
      %285 = vmatprep.subr.mxu0 0.0
      %286 = vmatpush1.msra.mxu0 0.0
      %287 = vmatprep.subr.mxu0 0.0
      %288 = vmatpush1.msra.mxu0 0.0
      %289 = vmatprep.subr.mxu0 0.0
      %290 = vmatpush1.msra.mxu0 0.0
      %291 = vmatprep.subr.mxu0 0.0
      %292 = vmatpush1.msra.mxu0 0.0
      %293 = vmatprep.subr.mxu0 0.0
      %294 = vmatpush1.msra.mxu0 0.0
      %295 = vmatprep.subr.mxu0 0.0
      %296 = vmatpush1.msra.mxu0 0.0
      %297 = vmatprep.subr.mxu0 0.0
      %298 = vmatpush1.msra.mxu0 0.0
      %299 = vmatprep.subr.mxu0 0.0
      %300 = vmatpush1.msra.mxu0 0.0
      %301 = vmatprep.subr.mxu0 0.0
      %302 = vmatpush1.msra.mxu0 0.0
      %303 = vmatprep.subr.mxu0 0.0
      %304 = vmatpush1.msra.mxu0 0.0
      %305 = vmatprep.subr.mxu0 0.0
      %306 = vmatpush1.msra.mxu0 0.0
      %307 = vmatprep.subr.mxu0 0.0
      %308 = vmatpush1.msra.mxu0 0.0
      %309 = vmatprep.subr.mxu0 0.0
      %310 = vmatpush1.msra.mxu0 0.0
      %311 = vmatprep.mubr.f32.mxu0 %v241
      %312 = vmatmul.mubr.f32.gmra.mrb[0].mxu0 %v229
      %v313 = vpop.f32.mrb[0].mxu0
      %v314 = vadd.f32 0.0, %v313
      %v315 = vpop.f32.mrb[0].mxu0
      %316 = vmatprep.mubr.f32.mxu0 %v243
      %317 = vmatmul.mubr.f32.gmra.mrb[0].mxu0 %v234
      %v318 = vpop.f32.mrb[0].mxu0
      %v319 = vadd.f32 0.0, %v318
      %v320 = vpop.f32.mrb[0].mxu0
      %321 = vmatprep.mubr.f32.mxu0 %v245
      %322 = vmatmul.mubr.f32.gmra.mrb[0].mxu0 %v233
      %v323 = vpop.f32.mrb[0].mxu0
      %v324 = vadd.f32 0.0, %v323
      %v325 = vpop.f32.mrb[0].mxu0
      %326 = vdwg.mxu0
      %v328 = vsel %vm240, %v172, 0
      %v330 = vsel %vm240, %v174, 0
      %v333 = vsel %vm240, %v176, 0
      %335 = vmatprep.subr.mxu0 0.0
      %336 = vmatpush1.msra.mxu0 %v177
      %337 = vmatprep.subr.mxu0 0.0
      %338 = vmatpush1.msra.mxu0 %v178
      %339 = vmatprep.subr.mxu0 0.0
      %340 = vmatpush1.msra.mxu0 %v179
      %341 = vmatprep.subr.mxu0 0.0
      %342 = vmatpush1.msra.mxu0 %v180
      %343 = vmatprep.subr.mxu0 0.0
      %344 = vmatpush1.msra.mxu0 %v181
      %345 = vmatprep.subr.mxu0 0.0
      %346 = vmatpush1.msra.mxu0 %v182
      %347 = vmatprep.subr.mxu0 0.0
      %348 = vmatpush1.msra.mxu0 %v183
      %349 = vmatprep.subr.mxu0 0.0
      %350 = vmatpush1.msra.mxu0 %v184
      %351 = vmatprep.subr.mxu0 0.0
      %352 = vmatpush1.msra.mxu0 %v185
      %353 = vmatprep.subr.mxu0 0.0
      %354 = vmatpush1.msra.mxu0 %v186
      %355 = vmatprep.subr.mxu0 0.0
      %356 = vmatpush1.msra.mxu0 %v187
      %357 = vmatprep.subr.mxu0 0.0
      %358 = vmatpush1.msra.mxu0 %v188
      %359 = vmatprep.subr.mxu0 0.0
      %360 = vmatpush1.msra.mxu0 %v189
      %361 = vmatprep.subr.mxu0 0.0
      %362 = vmatpush1.msra.mxu0 %v190
      %363 = vmatprep.subr.mxu0 0.0
      %364 = vmatpush1.msra.mxu0 %v191
      %365 = vmatprep.subr.mxu0 0.0
      %366 = vmatpush1.msra.mxu0 %v192
      %367 = vmatprep.subr.mxu0 0.0
      %368 = vmatpush1.msra.mxu0 %v193
      %369 = vmatprep.subr.mxu0 0.0
      %370 = vmatpush1.msra.mxu0 %v194
      %371 = vmatprep.subr.mxu0 0.0
      %372 = vmatpush1.msra.mxu0 %v195
      %373 = vmatprep.subr.mxu0 0.0
      %374 = vmatpush1.msra.mxu0 0.0
      %375 = vmatprep.subr.mxu0 0.0
      %376 = vmatpush1.msra.mxu0 0.0
      %377 = vmatprep.subr.mxu0 0.0
      %378 = vmatpush1.msra.mxu0 0.0
      %379 = vmatprep.subr.mxu0 0.0
      %380 = vmatpush1.msra.mxu0 0.0
      %381 = vmatprep.subr.mxu0 0.0
      %382 = vmatpush1.msra.mxu0 0.0
      %383 = vmatprep.subr.mxu0 0.0
      %384 = vmatpush1.msra.mxu0 0.0
      %385 = vmatprep.subr.mxu0 0.0
      %386 = vmatpush1.msra.mxu0 0.0
      %387 = vmatprep.subr.mxu0 0.0
      %388 = vmatpush1.msra.mxu0 0.0
      %389 = vmatprep.subr.mxu0 0.0
      %390 = vmatpush1.msra.mxu0 0.0
      %391 = vmatprep.subr.mxu0 0.0
      %392 = vmatpush1.msra.mxu0 0.0
      %393 = vmatprep.subr.mxu0 0.0
      %394 = vmatpush1.msra.mxu0 0.0
      %395 = vmatprep.subr.mxu0 0.0
      %396 = vmatpush1.msra.mxu0 0.0
      %397 = vmatprep.subr.mxu0 0.0
      %398 = vmatpush1.msra.mxu0 0.0
      %399 = vmatprep.mubr.f32.mxu0 %v328
      %400 = vmatmul.mubr.f32.gmra.mrb[0].mxu0 %v171
      %v401 = vpop.f32.mrb[0].mxu0
      %v402 = vadd.f32 %v314, %v401
      %v403 = vpop.f32.mrb[0].mxu0
      %404 = vmatprep.mubr.f32.mxu0 %v330
      %405 = vmatmul.mubr.f32.gmra.mrb[0].mxu0 %v173
      %v406 = vpop.f32.mrb[0].mxu0
      %v407 = vadd.f32 %v319, %v406
      %v408 = vpop.f32.mrb[0].mxu0
      %409 = vmatprep.mubr.f32.mxu0 %v333
      %410 = vmatmul.mubr.f32.gmra.mrb[0].mxu0 %v175
      %v411 = vpop.f32.mrb[0].mxu0
      %v412 = vadd.f32 %v324, %v411
      %v413 = vpop.f32.mrb[0].mxu0
      %414 = vdwg.mxu0
      %v415 = vld [vmem:[%s165] sm:$0xfc]
      %v416 = vld [vmem:[%s165 + $0x8] sm:$0xfc]
      %v417 = vld [vmem:[%s165 + $0x20] sm:$0x1f]
      %v418 = vld [vmem:[%s165 + $0x28] sm:$0x1f]
      %s419 = scalar_lea.vmem %s1, 304
      %v420 = vld [vmem:[%s419] sm:$0xff]
      %v421 = vld [vmem:[%s419 + $0x8] sm:$0xff]
      %v422 = vld [vmem:[%s419 + $0x10] sm:$0xff]
      %v423 = vld [vmem:[%s419 + $0x18] sm:$0xff]
      %v424 = vld [vmem:[%s419 + $0x20] sm:$0xff]
      %v425 = vld [vmem:[%s419 + $0x28] sm:$0xff]
      %v426 = vld [vmem:[%s419 + $0x30] sm:$0xff]
      %v427 = vld [vmem:[%s419 + $0x38] sm:$0xff]
      %v428 = vld [vmem:[%s419 + $0x40] sm:$0xff]
      %v429 = vld [vmem:[%s419 + $0x48] sm:$0xff]
      %v430 = vld [vmem:[%s419 + $0x50] sm:$0xff]
      %v431 = vld [vmem:[%s419 + $0x58] sm:$0xff]
      %v432 = vld [vmem:[%s419 + $0x60] sm:$0xff]
      %v433 = vld [vmem:[%s419 + $0x68] sm:$0xff]
      %v434 = vld [vmem:[%s419 + $0x70] sm:$0xff]
      %v435 = vld [vmem:[%s419 + $0x78] sm:$0xff]
      %v436 = vld [vmem:[%s419 + $0x80] sm:$0xff]
      %v437 = vld [vmem:[%s419 + $0x88] sm:$0xff]
      %v438 = vld [vmem:[%s419 + $0x90] sm:$0xff]
      %vm443 = vcmask 1045504
      %v444 = vrot.slane %v415, 2
      %v445 = vrot.slane %v173, 2
      %v446 = vsel %vm443, %v444, %v445
      %v447 = vrot.slane %v416, 2
      %v448 = vrot.slane %v174, 2
      %v449 = vsel %vm443, %v447, %v448
      %v450 = vrot.slane %v417, 2
      %v451 = vsel %vm443, %v445, %v450
      %v452 = vrot.slane %v418, 2
      %v453 = vsel %vm443, %v448, %v452
      %v457 = vsel %vm240, %v449, 0
      %v459 = vsel %vm240, %v453, 0
      %v461 = vsel %vm240, %v452, 0
      %463 = vmatprep.subr.mxu0 0.0
      %464 = vmatpush1.msra.mxu0 %v420
      %465 = vmatprep.subr.mxu0 0.0
      %466 = vmatpush1.msra.mxu0 %v421
      %467 = vmatprep.subr.mxu0 0.0
      %468 = vmatpush1.msra.mxu0 %v422
      %469 = vmatprep.subr.mxu0 0.0
      %470 = vmatpush1.msra.mxu0 %v423
      %471 = vmatprep.subr.mxu0 0.0
      %472 = vmatpush1.msra.mxu0 %v424
      %473 = vmatprep.subr.mxu0 0.0
      %474 = vmatpush1.msra.mxu0 %v425
      %475 = vmatprep.subr.mxu0 0.0
      %476 = vmatpush1.msra.mxu0 %v426
      %477 = vmatprep.subr.mxu0 0.0
      %478 = vmatpush1.msra.mxu0 %v427
      %479 = vmatprep.subr.mxu0 0.0
      %480 = vmatpush1.msra.mxu0 %v428
      %481 = vmatprep.subr.mxu0 0.0
      %482 = vmatpush1.msra.mxu0 %v429
      %483 = vmatprep.subr.mxu0 0.0
      %484 = vmatpush1.msra.mxu0 %v430
      %485 = vmatprep.subr.mxu0 0.0
      %486 = vmatpush1.msra.mxu0 %v431
      %487 = vmatprep.subr.mxu0 0.0
      %488 = vmatpush1.msra.mxu0 %v432
      %489 = vmatprep.subr.mxu0 0.0
      %490 = vmatpush1.msra.mxu0 %v433
      %491 = vmatprep.subr.mxu0 0.0
      %492 = vmatpush1.msra.mxu0 %v434
      %493 = vmatprep.subr.mxu0 0.0
      %494 = vmatpush1.msra.mxu0 %v435
      %495 = vmatprep.subr.mxu0 0.0
      %496 = vmatpush1.msra.mxu0 %v436
      %497 = vmatprep.subr.mxu0 0.0
      %498 = vmatpush1.msra.mxu0 %v437
      %499 = vmatprep.subr.mxu0 0.0
      %500 = vmatpush1.msra.mxu0 %v438
      %501 = vmatprep.subr.mxu0 0.0
      %502 = vmatpush1.msra.mxu0 0.0
      %503 = vmatprep.subr.mxu0 0.0
      %504 = vmatpush1.msra.mxu0 0.0
      %505 = vmatprep.subr.mxu0 0.0
      %506 = vmatpush1.msra.mxu0 0.0
      %507 = vmatprep.subr.mxu0 0.0
      %508 = vmatpush1.msra.mxu0 0.0
      %509 = vmatprep.subr.mxu0 0.0
      %510 = vmatpush1.msra.mxu0 0.0
      %511 = vmatprep.subr.mxu0 0.0
      %512 = vmatpush1.msra.mxu0 0.0
      %513 = vmatprep.subr.mxu0 0.0
      %514 = vmatpush1.msra.mxu0 0.0
      %515 = vmatprep.subr.mxu0 0.0
      %516 = vmatpush1.msra.mxu0 0.0
      %517 = vmatprep.subr.mxu0 0.0
      %518 = vmatpush1.msra.mxu0 0.0
      %519 = vmatprep.subr.mxu0 0.0
      %520 = vmatpush1.msra.mxu0 0.0
      %521 = vmatprep.subr.mxu0 0.0
      %522 = vmatpush1.msra.mxu0 0.0
      %523 = vmatprep.subr.mxu0 0.0
      %524 = vmatpush1.msra.mxu0 0.0
      %525 = vmatprep.subr.mxu0 0.0
      %526 = vmatpush1.msra.mxu0 0.0
      %527 = vmatprep.mubr.f32.mxu0 %v457
      %528 = vmatmul.mubr.f32.gmra.mrb[0].mxu0 %v446
      %v529 = vpop.f32.mrb[0].mxu0
      %v530 = vadd.f32 0.0, %v529
      %v531 = vpop.f32.mrb[0].mxu0
      %532 = vmatprep.mubr.f32.mxu0 %v459
      %533 = vmatmul.mubr.f32.gmra.mrb[0].mxu0 %v451
      %v534 = vpop.f32.mrb[0].mxu0
      %v535 = vadd.f32 0.0, %v534
      %v536 = vpop.f32.mrb[0].mxu0
      %537 = vmatprep.mubr.f32.mxu0 %v461
      %538 = vmatmul.mubr.f32.gmra.mrb[0].mxu0 %v450
      %v539 = vpop.f32.mrb[0].mxu0
      %v540 = vadd.f32 0.0, %v539
      %v541 = vpop.f32.mrb[0].mxu0
      %542 = vdwg.mxu0
      %v543 = vadd.f32 %v402, %v530
      %v544 = vadd.f32 %v407, %v535
      %v545 = vadd.f32 %v412, %v540
      %v546 = vld [vmem:[%s165] sm:$0xf8]
      %v547 = vld [vmem:[%s165 + $0x8] sm:$0xf8]
      %v548 = vld [vmem:[%s165 + $0x20] sm:$0x3f]
      %v549 = vld [vmem:[%s165 + $0x28] sm:$0x3f]
      %s550 = scalar_lea.vmem %s1, 456
      %v551 = vld [vmem:[%s550] sm:$0xff]
      %v552 = vld [vmem:[%s550 + $0x8] sm:$0xff]
      %v553 = vld [vmem:[%s550 + $0x10] sm:$0xff]
      %v554 = vld [vmem:[%s550 + $0x18] sm:$0xff]
      %v555 = vld [vmem:[%s550 + $0x20] sm:$0xff]
      %v556 = vld [vmem:[%s550 + $0x28] sm:$0xff]
      %v557 = vld [vmem:[%s550 + $0x30] sm:$0xff]
      %v558 = vld [vmem:[%s550 + $0x38] sm:$0xff]
      %v559 = vld [vmem:[%s550 + $0x40] sm:$0xff]
      %v560 = vld [vmem:[%s550 + $0x48] sm:$0xff]
      %v561 = vld [vmem:[%s550 + $0x50] sm:$0xff]
      %v562 = vld [vmem:[%s550 + $0x58] sm:$0xff]
      %v563 = vld [vmem:[%s550 + $0x60] sm:$0xff]
      %v564 = vld [vmem:[%s550 + $0x68] sm:$0xff]
      %v565 = vld [vmem:[%s550 + $0x70] sm:$0xff]
      %v566 = vld [vmem:[%s550 + $0x78] sm:$0xff]
      %v567 = vld [vmem:[%s550 + $0x80] sm:$0xff]
      %v568 = vld [vmem:[%s550 + $0x88] sm:$0xff]
      %v569 = vld [vmem:[%s550 + $0x90] sm:$0xff]
      %vm574 = vcmask 1044480
      %v575 = vrot.slane %v546, 3
      %v576 = vrot.slane %v173, 3
      %v577 = vsel %vm574, %v575, %v576
      %v578 = vrot.slane %v547, 3
      %v579 = vrot.slane %v174, 3
      %v580 = vsel %vm574, %v578, %v579
      %v581 = vrot.slane %v548, 3
      %v582 = vsel %vm574, %v576, %v581
      %v583 = vrot.slane %v549, 3
      %v584 = vsel %vm574, %v579, %v583
      %v588 = vsel %vm240, %v580, 0
      %v590 = vsel %vm240, %v584, 0
      %v592 = vsel %vm240, %v583, 0
      %594 = vmatprep.subr.mxu0 0.0
      %595 = vmatpush1.msra.mxu0 %v551
      %596 = vmatprep.subr.mxu0 0.0
      %597 = vmatpush1.msra.mxu0 %v552
      %598 = vmatprep.subr.mxu0 0.0
      %599 = vmatpush1.msra.mxu0 %v553
      %600 = vmatprep.subr.mxu0 0.0
      %601 = vmatpush1.msra.mxu0 %v554
      %602 = vmatprep.subr.mxu0 0.0
      %603 = vmatpush1.msra.mxu0 %v555
      %604 = vmatprep.subr.mxu0 0.0
      %605 = vmatpush1.msra.mxu0 %v556
      %606 = vmatprep.subr.mxu0 0.0
      %607 = vmatpush1.msra.mxu0 %v557
      %608 = vmatprep.subr.mxu0 0.0
      %609 = vmatpush1.msra.mxu0 %v558
      %610 = vmatprep.subr.mxu0 0.0
      %611 = vmatpush1.msra.mxu0 %v559
      %612 = vmatprep.subr.mxu0 0.0
      %613 = vmatpush1.msra.mxu0 %v560
      %614 = vmatprep.subr.mxu0 0.0
      %615 = vmatpush1.msra.mxu0 %v561
      %616 = vmatprep.subr.mxu0 0.0
      %617 = vmatpush1.msra.mxu0 %v562
      %618 = vmatprep.subr.mxu0 0.0
      %619 = vmatpush1.msra.mxu0 %v563
      %620 = vmatprep.subr.mxu0 0.0
      %621 = vmatpush1.msra.mxu0 %v564
      %622 = vmatprep.subr.mxu0 0.0
      %623 = vmatpush1.msra.mxu0 %v565
      %624 = vmatprep.subr.mxu0 0.0
      %625 = vmatpush1.msra.mxu0 %v566
      %626 = vmatprep.subr.mxu0 0.0
      %627 = vmatpush1.msra.mxu0 %v567
      %628 = vmatprep.subr.mxu0 0.0
      %629 = vmatpush1.msra.mxu0 %v568
      %630 = vmatprep.subr.mxu0 0.0
      %631 = vmatpush1.msra.mxu0 %v569
      %632 = vmatprep.subr.mxu0 0.0
      %633 = vmatpush1.msra.mxu0 0.0
      %634 = vmatprep.subr.mxu0 0.0
      %635 = vmatpush1.msra.mxu0 0.0
      %636 = vmatprep.subr.mxu0 0.0
      %637 = vmatpush1.msra.mxu0 0.0
      %638 = vmatprep.subr.mxu0 0.0
      %639 = vmatpush1.msra.mxu0 0.0
      %640 = vmatprep.subr.mxu0 0.0
      %641 = vmatpush1.msra.mxu0 0.0
      %642 = vmatprep.subr.mxu0 0.0
      %643 = vmatpush1.msra.mxu0 0.0
      %644 = vmatprep.subr.mxu0 0.0
      %645 = vmatpush1.msra.mxu0 0.0
      %646 = vmatprep.subr.mxu0 0.0
      %647 = vmatpush1.msra.mxu0 0.0
      %648 = vmatprep.subr.mxu0 0.0
      %649 = vmatpush1.msra.mxu0 0.0
      %650 = vmatprep.subr.mxu0 0.0
      %651 = vmatpush1.msra.mxu0 0.0
      %652 = vmatprep.subr.mxu0 0.0
      %653 = vmatpush1.msra.mxu0 0.0
      %654 = vmatprep.subr.mxu0 0.0
      %655 = vmatpush1.msra.mxu0 0.0
      %656 = vmatprep.subr.mxu0 0.0
      %657 = vmatpush1.msra.mxu0 0.0
      %658 = vmatprep.mubr.f32.mxu0 %v588
      %659 = vmatmul.mubr.f32.gmra.mrb[0].mxu0 %v577
      %v660 = vpop.f32.mrb[0].mxu0
      %v661 = vadd.f32 0.0, %v660
      %v662 = vpop.f32.mrb[0].mxu0
      %663 = vmatprep.mubr.f32.mxu0 %v590
      %664 = vmatmul.mubr.f32.gmra.mrb[0].mxu0 %v582
      %v665 = vpop.f32.mrb[0].mxu0
      %v666 = vadd.f32 0.0, %v665
      %v667 = vpop.f32.mrb[0].mxu0
      %668 = vmatprep.mubr.f32.mxu0 %v592
      %669 = vmatmul.mubr.f32.gmra.mrb[0].mxu0 %v581
      %v670 = vpop.f32.mrb[0].mxu0
      %v671 = vadd.f32 0.0, %v670
      %v672 = vpop.f32.mrb[0].mxu0
      %673 = vdwg.mxu0
      %v674 = vadd.f32 %v543, %v661
      %v675 = vadd.f32 %v544, %v666
      %v676 = vadd.f32 %v545, %v671
      %v677 = vld [vmem:[%s165] sm:$0xf0]
      %v678 = vld [vmem:[%s165 + $0x8] sm:$0xf0]
      %v679 = vld [vmem:[%s165 + $0x20] sm:$0x7f]
      %v680 = vld [vmem:[%s165 + $0x28] sm:$0x7f]
      %s681 = scalar_lea.vmem %s1, 608
      %v682 = vld [vmem:[%s681] sm:$0xff]
      %v683 = vld [vmem:[%s681 + $0x8] sm:$0xff]
      %v684 = vld [vmem:[%s681 + $0x10] sm:$0xff]
      %v685 = vld [vmem:[%s681 + $0x18] sm:$0xff]
      %v686 = vld [vmem:[%s681 + $0x20] sm:$0xff]
      %v687 = vld [vmem:[%s681 + $0x28] sm:$0xff]
      %v688 = vld [vmem:[%s681 + $0x30] sm:$0xff]
      %v689 = vld [vmem:[%s681 + $0x38] sm:$0xff]
      %v690 = vld [vmem:[%s681 + $0x40] sm:$0xff]
      %v691 = vld [vmem:[%s681 + $0x48] sm:$0xff]
      %v692 = vld [vmem:[%s681 + $0x50] sm:$0xff]
      %v693 = vld [vmem:[%s681 + $0x58] sm:$0xff]
      %v694 = vld [vmem:[%s681 + $0x60] sm:$0xff]
      %v695 = vld [vmem:[%s681 + $0x68] sm:$0xff]
      %v696 = vld [vmem:[%s681 + $0x70] sm:$0xff]
      %v697 = vld [vmem:[%s681 + $0x78] sm:$0xff]
      %v698 = vld [vmem:[%s681 + $0x80] sm:$0xff]
      %v699 = vld [vmem:[%s681 + $0x88] sm:$0xff]
      %v700 = vld [vmem:[%s681 + $0x90] sm:$0xff]
      %vm705 = vcmask 1043456
      %v706 = vrot.slane %v677, 4
      %v707 = vrot.slane %v173, 4
      %v708 = vsel %vm705, %v706, %v707
      %v709 = vrot.slane %v678, 4
      %v710 = vrot.slane %v174, 4
      %v711 = vsel %vm705, %v709, %v710
      %v712 = vrot.slane %v679, 4
      %v713 = vsel %vm705, %v707, %v712
      %v714 = vrot.slane %v680, 4
      %v715 = vsel %vm705, %v710, %v714
      %v719 = vsel %vm240, %v711, 0
      %v721 = vsel %vm240, %v715, 0
      %v723 = vsel %vm240, %v714, 0
      %725 = vmatprep.subr.mxu0 0.0
      %726 = vmatpush1.msra.mxu0 %v682
      %727 = vmatprep.subr.mxu0 0.0
      %728 = vmatpush1.msra.mxu0 %v683
      %729 = vmatprep.subr.mxu0 0.0
      %730 = vmatpush1.msra.mxu0 %v684
      %731 = vmatprep.subr.mxu0 0.0
      %732 = vmatpush1.msra.mxu0 %v685
      %733 = vmatprep.subr.mxu0 0.0
      %734 = vmatpush1.msra.mxu0 %v686
      %735 = vmatprep.subr.mxu0 0.0
      %736 = vmatpush1.msra.mxu0 %v687
      %737 = vmatprep.subr.mxu0 0.0
      %738 = vmatpush1.msra.mxu0 %v688
      %739 = vmatprep.subr.mxu0 0.0
      %740 = vmatpush1.msra.mxu0 %v689
      %741 = vmatprep.subr.mxu0 0.0
      %742 = vmatpush1.msra.mxu0 %v690
      %743 = vmatprep.subr.mxu0 0.0
      %744 = vmatpush1.msra.mxu0 %v691
      %745 = vmatprep.subr.mxu0 0.0
      %746 = vmatpush1.msra.mxu0 %v692
      %747 = vmatprep.subr.mxu0 0.0
      %748 = vmatpush1.msra.mxu0 %v693
      %749 = vmatprep.subr.mxu0 0.0
      %750 = vmatpush1.msra.mxu0 %v694
      %751 = vmatprep.subr.mxu0 0.0
      %752 = vmatpush1.msra.mxu0 %v695
      %753 = vmatprep.subr.mxu0 0.0
      %754 = vmatpush1.msra.mxu0 %v696
      %755 = vmatprep.subr.mxu0 0.0
      %756 = vmatpush1.msra.mxu0 %v697
      %757 = vmatprep.subr.mxu0 0.0
      %758 = vmatpush1.msra.mxu0 %v698
      %759 = vmatprep.subr.mxu0 0.0
      %760 = vmatpush1.msra.mxu0 %v699
      %761 = vmatprep.subr.mxu0 0.0
      %762 = vmatpush1.msra.mxu0 %v700
      %763 = vmatprep.subr.mxu0 0.0
      %764 = vmatpush1.msra.mxu0 0.0
      %765 = vmatprep.subr.mxu0 0.0
      %766 = vmatpush1.msra.mxu0 0.0
      %767 = vmatprep.subr.mxu0 0.0
      %768 = vmatpush1.msra.mxu0 0.0
      %769 = vmatprep.subr.mxu0 0.0
      %770 = vmatpush1.msra.mxu0 0.0
      %771 = vmatprep.subr.mxu0 0.0
      %772 = vmatpush1.msra.mxu0 0.0
      %773 = vmatprep.subr.mxu0 0.0
      %774 = vmatpush1.msra.mxu0 0.0
      %775 = vmatprep.subr.mxu0 0.0
      %776 = vmatpush1.msra.mxu0 0.0
      %777 = vmatprep.subr.mxu0 0.0
      %778 = vmatpush1.msra.mxu0 0.0
      %779 = vmatprep.subr.mxu0 0.0
      %780 = vmatpush1.msra.mxu0 0.0
      %781 = vmatprep.subr.mxu0 0.0
      %782 = vmatpush1.msra.mxu0 0.0
      %783 = vmatprep.subr.mxu0 0.0
      %784 = vmatpush1.msra.mxu0 0.0
      %785 = vmatprep.subr.mxu0 0.0
      %786 = vmatpush1.msra.mxu0 0.0
      %787 = vmatprep.subr.mxu0 0.0
      %788 = vmatpush1.msra.mxu0 0.0
      %789 = vmatprep.mubr.f32.mxu0 %v719
      %790 = vmatmul.mubr.f32.gmra.mrb[0].mxu0 %v708
      %v791 = vpop.f32.mrb[0].mxu0
      %v792 = vadd.f32 0.0, %v791
      %v793 = vpop.f32.mrb[0].mxu0
      %794 = vmatprep.mubr.f32.mxu0 %v721
      %795 = vmatmul.mubr.f32.gmra.mrb[0].mxu0 %v713
      %v796 = vpop.f32.mrb[0].mxu0
      %v797 = vadd.f32 0.0, %v796
      %v798 = vpop.f32.mrb[0].mxu0
      %799 = vmatprep.mubr.f32.mxu0 %v723
      %800 = vmatmul.mubr.f32.gmra.mrb[0].mxu0 %v712
      %v801 = vpop.f32.mrb[0].mxu0
      %v802 = vadd.f32 0.0, %v801
      %v803 = vpop.f32.mrb[0].mxu0
      %804 = vdwg.mxu0
      %v805 = vadd.f32 %v674, %v792
      %v806 = vadd.f32 %v675, %v797
      %v807 = vadd.f32 %v676, %v802
      %v808 = vld [vmem:[%s2] sm:$0x1]
      %v810 = vlaneseq
      %v811 = vshrl.u32 %v810, 7
      %v812 = vsub.s32 0, %v811
      %v813 = vrot.slane %v808, %v812
      %v815 = vadd.f32 %v805, %v813
      %v816 = vadd.f32 %v806, %v813
      %v817 = vadd.f32 %v807, %v813
      %v818 = vmax.f32 %v815, 0.0
      %v819 = vmax.f32 %v816, 0.0
      %v820 = vmax.f32 %v817, 0.0
      %vm821 = vcmask 982016
      %822 = vst.msk [vmem:[%s170] sm:$0xff] %vm821, %v818
      %823 = vst.msk [vmem:[%s170 + $0x8] sm:$0xff] %vm821, %v819
      %vm824 = vcmask 976896
      %825 = vst.msk [vmem:[%s170 + $0x10] sm:$0x7] %vm824, %v820
      %p826 = scmp.lt.s32.totalorder %s14, 1
      %s827 = scalar_select %p826, %s14, 1
      %s828 = smul.addr %s827, 3
      %s829 = smul.addr %s828, 8
      %s830 = scalar_lea.vmem %s3, %s829
      // Predicated region
      $region33: #{cvae_forward.16} parent=31 // pred_check
        %p831 = pneg %p100
      $region34: #{cvae_forward.16} parent=31 // pred_check_branch
        %833 = sbr.rel (%p831) target = $region36
      $region35: #{cvae_forward.16} parent=31 // pred_region
        _
      $region36: #{cvae_forward.16} parent=31 // pred_fallthru
        _
    $region32: #{cvae_forward.16} parent=5 // pred_fallthru
      _
    %p834 = scmp.le.s32.totalorder 2, %s9
    // Predicated region
    $region37: #{cvae_forward.16} parent=5 // pred_check
      %p835 = pneg %p834
    $region38: #{cvae_forward.16} parent=5 // pred_check_branch
      %837 = sbr.rel (%p835) target = $region40
    $region39: #{cvae_forward.16} parent=5 // pred_region
      %s838 = ssub.s32 %s9, 2
      // Predicated region
      $region41: #{cvae_forward.16} parent=39 // pred_check
        %p839 = pneg %p106
      $region42: #{cvae_forward.16} parent=39 // pred_check_branch
        %841 = sbr.rel (%p839) target = $region44
      $region43: #{cvae_forward.16} parent=39 // pred_region
        %p842 = scmp.lt.s32.totalorder %s15, 1
        %s843 = scalar_select %p842, %s15, 1
        %s844 = smul.addr %s843, 3
        %s845 = smul.addr %s844, 8
        %s846 = scalar_lea.vmem %s3, %s845
      $region44: #{cvae_forward.16} parent=39 // pred_fallthru
        _
    $region40: #{cvae_forward.16} parent=5 // pred_fallthru
      _
  $region6: #{cvae_forward.16} parent=0 // loop_footer
    %s13 = sadd.s32 1, %s9
  $region7: #{cvae_forward.16} parent=0 // loop_footer_branch
    %8 = sbr.rel target = $region3
  $region8: #{cvae_forward.16} parent=0 // loop_exit
    _

// kernel: cvae_forward.17
$region0: #{cvae_forward.17}
  #allocation0 [shape = 'u32[]', space=smem, size = 0x4, offset = 0x4, fixed_abs, tag = 'smem constant byte address 0x4 - core index']
  #allocation1 [shape = 'u32[144,128]{1,0:T(1,128)}', space=vmem, size = 0x12000, scoped, tag = 'internal scratch']
  %s0 = inlined_call_operand.vmem [shape: f32[2,25,168], index: 0, kind: input, shape index: {}]
  %s1 = inlined_call_operand.vmem [shape: f32[5,168,17], index: 1, kind: input, shape index: {}]
  %s2 = inlined_call_operand.vmem [shape: f32[1,17], index: 2, kind: input, shape index: {}]
  %s3 = inlined_call_operand.vmem [shape: f32[2,21,17], index: 3, kind: output, shape index: {}]
  %s4 = sld [smem:[#allocation0]]
  $region45: #{cvae_forward.17} parent=0
    _
  %s6 = ssub.s32 1, %s4
  %s7 = scalar_select 0, %s6, %s4
  loop: start=0, step=1, limit=4
  $region2: #{cvae_forward.17} parent=0 // loop_pre_header
    _
  $region3: #{cvae_forward.17} parent=0 // loop_header
    %s9 = sphi 0, %s13
    %p10 = scmp.ge.s32.totalorder %s9, 4
    %s19 = sphi 0, %s21
    %s22 = sphi 0, %s19
    %s23 = sphi 0, %s22
    %s39 = sphi 0, %s23
    %s43 = sphi 0, %s43
    %s45 = sphi 0, %s43
    %s46 = sphi 0, %s45
    %s60 = sphi 0, %s46
    %s64 = sphi 0, %s64
    %s66 = sphi 0, %s64
    %s67 = sphi 0, %s66
    %s81 = sphi 0, %s67
    %s87 = sphi 0, %s89
    %s90 = sphi 0, %s87
    %s91 = sphi 0, %s90
    %s107 = sphi 0, %s91
  $region4: #{cvae_forward.17} parent=0 // loop_header_branch
    %12 = sbr.rel (%p10) target = $region8
  $region5: #{cvae_forward.17} parent=0 // loop_body
    %s14 = ssub.s32 %s9, 1
    %s15 = ssub.s32 %s9, 2
    %s16 = sadd.s32 %s9, 1
    %s17 = ssub.s32 %s9, %s16
    %p18 = scmp.eq.s32.totalorder %s17, 0
    %s20 = sadd.s32 %s19, 1
    %s21 = scalar_select %p18, %s19, %s20
    %p24 = pneg %p18
    %p25 = scmp.eq.s32.totalorder %s9, 1
    %p26 = por %p24, %p25
    %p27 = scmp.ne.s32.totalorder %s19, %s22
    %p28 = scmp.eq.s32.totalorder %s9, 0
    %p29 = por %p27, %p28
    %p30 = scmp.ne.s32.totalorder %s19, %s22
    %p31 = scmp.eq.s32.totalorder %s14, 1
    %p32 = por %p30, %p31
    %p33 = scmp.ne.s32.totalorder %s22, %s23
    %p34 = scmp.eq.s32.totalorder %s14, 0
    %p35 = por %p33, %p34
    %p36 = scmp.ne.s32.totalorder %s22, %s23
    %p37 = scmp.eq.s32.totalorder %s15, 1
    %p38 = por %p36, %p37
    %p40 = scmp.ne.s32.totalorder %s23, %s39
    %p41 = scmp.eq.s32.totalorder %s15, 0
    %p42 = por %p40, %p41
    %s44 = sadd.s32 %s43, 1
    %p47 = scmp.eq.s32.totalorder %s9, 1
    %p48 = scmp.ne.s32.totalorder %s43, %s45
    %p49 = scmp.eq.s32.totalorder %s9, 0
    %p50 = por %p48, %p49
    %p51 = scmp.ne.s32.totalorder %s43, %s45
    %p52 = scmp.eq.s32.totalorder %s14, 1
    %p53 = por %p51, %p52
    %p54 = scmp.ne.s32.totalorder %s45, %s46
    %p55 = scmp.eq.s32.totalorder %s14, 0
    %p56 = por %p54, %p55
    %p57 = scmp.ne.s32.totalorder %s45, %s46
    %p58 = scmp.eq.s32.totalorder %s15, 1
    %p59 = por %p57, %p58
    %p61 = scmp.ne.s32.totalorder %s46, %s60
    %p62 = scmp.eq.s32.totalorder %s15, 0
    %p63 = por %p61, %p62
    %s65 = sadd.s32 %s64, 1
    %p68 = scmp.eq.s32.totalorder %s9, 1
    %p69 = scmp.ne.s32.totalorder %s64, %s66
    %p70 = scmp.eq.s32.totalorder %s9, 0
    %p71 = por %p69, %p70
    %p72 = scmp.ne.s32.totalorder %s64, %s66
    %p73 = scmp.eq.s32.totalorder %s14, 1
    %p74 = por %p72, %p73
    %p75 = scmp.ne.s32.totalorder %s66, %s67
    %p76 = scmp.eq.s32.totalorder %s14, 0
    %p77 = por %p75, %p76
    %p78 = scmp.ne.s32.totalorder %s66, %s67
    %p79 = scmp.eq.s32.totalorder %s15, 1
    %p80 = por %p78, %p79
    %p82 = scmp.ne.s32.totalorder %s67, %s81
    %p83 = scmp.eq.s32.totalorder %s15, 0
    %p84 = por %p82, %p83
    %s85 = ssub.s32 %s9, %s16
    %p86 = scmp.eq.s32.totalorder %s85, 0
    %s88 = sadd.s32 %s87, 1
    %s89 = scalar_select %p86, %s87, %s88
    %p92 = pneg %p86
    %p93 = scmp.eq.s32.totalorder %s9, 1
    %p94 = por %p92, %p93
    %p95 = scmp.ne.s32.totalorder %s87, %s90
    %p96 = scmp.eq.s32.totalorder %s9, 0
    %p97 = por %p95, %p96
    %p98 = scmp.ne.s32.totalorder %s87, %s90
    %p99 = scmp.eq.s32.totalorder %s14, 1
    %p100 = por %p98, %p99
    %p101 = scmp.ne.s32.totalorder %s90, %s91
    %p102 = scmp.eq.s32.totalorder %s14, 0
    %p103 = por %p101, %p102
    %p104 = scmp.ne.s32.totalorder %s90, %s91
    %p105 = scmp.eq.s32.totalorder %s15, 1
    %p106 = por %p104, %p105
    %p108 = scmp.ne.s32.totalorder %s91, %s107
    %p109 = scmp.eq.s32.totalorder %s15, 0
    %p110 = por %p108, %p109
    %p111 = scmp.le.s32.totalorder 1, %s9
    %p112 = scmp.lt.s32.totalorder %s9, 3
    %p113 = pnand %p111, %p112
    %p114 = pneg %p113
    // Predicated region
    $region9: #{cvae_forward.17} parent=5 // pred_check
      _
    $region10: #{cvae_forward.17} parent=5 // pred_check_branch
      %116 = sbr.rel (%p113) target = $region12
    $region11: #{cvae_forward.17} parent=5 // pred_region
      %s117 = ssub.s32 %s9, 1
      // Predicated region
      $region13: #{cvae_forward.17} parent=11 // pred_check
        %p118 = pneg %p56
      $region14: #{cvae_forward.17} parent=11 // pred_check_branch
        %120 = sbr.rel (%p118) target = $region16
      $region15: #{cvae_forward.17} parent=11 // pred_region
        _
      $region16: #{cvae_forward.17} parent=11 // pred_fallthru
        _
      // Predicated region
      $region17: #{cvae_forward.17} parent=11 // pred_check
        %p121 = pneg %p77
      $region18: #{cvae_forward.17} parent=11 // pred_check_branch
        %123 = sbr.rel (%p121) target = $region20
      $region19: #{cvae_forward.17} parent=11 // pred_region
        _
      $region20: #{cvae_forward.17} parent=11 // pred_fallthru
        _
    $region12: #{cvae_forward.17} parent=5 // pred_fallthru
      _
    %p124 = scmp.lt.s32.totalorder %s9, 2
    // Predicated region
    $region21: #{cvae_forward.17} parent=5 // pred_check
      %p125 = pneg %p124
    $region22: #{cvae_forward.17} parent=5 // pred_check_branch
      %127 = sbr.rel (%p125) target = $region24
    $region23: #{cvae_forward.17} parent=5 // pred_region
      // Predicated region
      $region25: #{cvae_forward.17} parent=23 // pred_check
        %p128 = pneg %p29
      $region26: #{cvae_forward.17} parent=23 // pred_check_branch
        %130 = sbr.rel (%p128) target = $region28
      $region27: #{cvae_forward.17} parent=23 // pred_region
        %p131 = scmp.lt.s32.totalorder %s9, 1
        %s132 = scalar_select %p131, %s9, 1
        %s133 = smul.addr %s132, 8
        %s134 = smul.addr %s133, 8
        %s135 = scalar_lea.vmem %s0, %s134
      $region28: #{cvae_forward.17} parent=23 // pred_fallthru
        _
    $region24: #{cvae_forward.17} parent=5 // pred_fallthru
      _
    %p136 = scmp.le.s32.totalorder 1, %s9
    %p137 = scmp.lt.s32.totalorder %s9, 3
    %p138 = pnand %p136, %p137
    %p139 = pneg %p138
    // Predicated region
    $region29: #{cvae_forward.17} parent=5 // pred_check
      _
    $region30: #{cvae_forward.17} parent=5 // pred_check_branch
      %141 = sbr.rel (%p138) target = $region32
    $region31: #{cvae_forward.17} parent=5 // pred_region
      %s142 = ssub.s32 %s9, 1
      %p143 = scmp.lt.s32.totalorder %s14, 1
      %s144 = scalar_select %p143, %s14, 1
      %s145 = smul.addr %s144, 8
      %s146 = smul.addr %s145, 8
      %s147 = scalar_lea.vmem %s0, %s146
      %p148 = pneg %p35
      %p149 = pneg %p32
      %p150 = pneg %p56
      %p151 = pneg %p53
      %p152 = pneg %p77
      %p153 = pneg %p74
      %p154 = pneg %p103
      %p155 = pneg %p100
      %p156 = scmp.lt.s32.totalorder %s14, 1
      %s157 = scalar_select %p156, %s14, 1
      %s158 = smul.addr %s157, 3
      %s159 = smul.addr %s158, 8
      %s160 = scalar_lea.vmem %s3, %s159
      %p161 = scmp.lt.s32.totalorder %s14, 1
      %s162 = scalar_select %p161, %s14, 1
      %s163 = smul.addr %s162, 8
      %s164 = smul.addr %s163, 8
      %s165 = scalar_lea.vmem %s0, %s164
      %p166 = scmp.lt.s32.totalorder %s14, 1
      %s167 = scalar_select %p166, %s14, 1
      %s168 = smul.addr %s167, 3
      %s169 = smul.addr %s168, 8
      %s170 = scalar_lea.vmem %s3, %s169
      %v171 = vld [vmem:[%s165] sm:$0xff]
      %v172 = vld [vmem:[%s165 + $0x8] sm:$0xff]
      %v173 = vld [vmem:[%s165 + $0x10] sm:$0xff]
      %v174 = vld [vmem:[%s165 + $0x18] sm:$0xff]
      %v175 = vld [vmem:[%s165 + $0x20] sm:$0x1f]
      %v176 = vld [vmem:[%s165 + $0x28] sm:$0x1f]
      %v177 = vld [vmem:[%s1] sm:$0xff]
      %v178 = vld [vmem:[%s1 + $0x8] sm:$0xff]
      %v179 = vld [vmem:[%s1 + $0x10] sm:$0xff]
      %v180 = vld [vmem:[%s1 + $0x18] sm:$0xff]
      %v181 = vld [vmem:[%s1 + $0x20] sm:$0xff]
      %v182 = vld [vmem:[%s1 + $0x28] sm:$0xff]
      %v183 = vld [vmem:[%s1 + $0x30] sm:$0xff]
      %v184 = vld [vmem:[%s1 + $0x38] sm:$0xff]
      %v185 = vld [vmem:[%s1 + $0x40] sm:$0xff]
      %v186 = vld [vmem:[%s1 + $0x48] sm:$0xff]
      %v187 = vld [vmem:[%s1 + $0x50] sm:$0xff]
      %v188 = vld [vmem:[%s1 + $0x58] sm:$0xff]
      %v189 = vld [vmem:[%s1 + $0x60] sm:$0xff]
      %v190 = vld [vmem:[%s1 + $0x68] sm:$0xff]
      %v191 = vld [vmem:[%s1 + $0x70] sm:$0xff]
      %v192 = vld [vmem:[%s1 + $0x78] sm:$0xff]
      %v193 = vld [vmem:[%s1 + $0x80] sm:$0xff]
      %v194 = vld [vmem:[%s1 + $0x88] sm:$0xff]
      %v195 = vld [vmem:[%s1 + $0x90] sm:$0xff]
      %v196 = vld [vmem:[%s1 + $0x98] sm:$0xff]
      %v197 = vld [vmem:[%s1 + $0xa0] sm:$0xff]
      %v198 = vld [vmem:[%s165] sm:$0xfe]
      %v199 = vld [vmem:[%s165 + $0x8] sm:$0xfe]
      %v200 = vld [vmem:[%s165 + $0x20] sm:$0x3f]
      %v201 = vld [vmem:[%s165 + $0x28] sm:$0x3f]
      %s202 = scalar_lea.vmem %s1, 168
      %v203 = vld [vmem:[%s202] sm:$0xff]
      %v204 = vld [vmem:[%s202 + $0x8] sm:$0xff]
      %v205 = vld [vmem:[%s202 + $0x10] sm:$0xff]
      %v206 = vld [vmem:[%s202 + $0x18] sm:$0xff]
      %v207 = vld [vmem:[%s202 + $0x20] sm:$0xff]
      %v208 = vld [vmem:[%s202 + $0x28] sm:$0xff]
      %v209 = vld [vmem:[%s202 + $0x30] sm:$0xff]
      %v210 = vld [vmem:[%s202 + $0x38] sm:$0xff]
      %v211 = vld [vmem:[%s202 + $0x40] sm:$0xff]
      %v212 = vld [vmem:[%s202 + $0x48] sm:$0xff]
      %v213 = vld [vmem:[%s202 + $0x50] sm:$0xff]
      %v214 = vld [vmem:[%s202 + $0x58] sm:$0xff]
      %v215 = vld [vmem:[%s202 + $0x60] sm:$0xff]
      %v216 = vld [vmem:[%s202 + $0x68] sm:$0xff]
      %v217 = vld [vmem:[%s202 + $0x70] sm:$0xff]
      %v218 = vld [vmem:[%s202 + $0x78] sm:$0xff]
      %v219 = vld [vmem:[%s202 + $0x80] sm:$0xff]
      %v220 = vld [vmem:[%s202 + $0x88] sm:$0xff]
      %v221 = vld [vmem:[%s202 + $0x90] sm:$0xff]
      %v222 = vld [vmem:[%s202 + $0x98] sm:$0xff]
      %v223 = vld [vmem:[%s202 + $0xa0] sm:$0xff]
      %vm230 = vcmask 1046528
      %v231 = vrot.slane %v198, 1
      %v232 = vrot.slane %v173, 1
      %v233 = vsel %vm230, %v231, %v232
      %v234 = vrot.slane %v199, 1
      %v235 = vrot.slane %v174, 1
      %v236 = vsel %vm230, %v234, %v235
      %v237 = vrot.slane %v200, 1
      %v238 = vsel %vm230, %v232, %v237
      %v239 = vrot.slane %v201, 1
      %v240 = vsel %vm230, %v235, %v239
      %vm244 = vcmask 326656
      %v245 = vsel %vm244, %v236, 0
      %v247 = vsel %vm244, %v240, 0
      %v249 = vsel %vm244, %v239, 0
      %251 = vmatprep.subr.mxu0 0.0
      %252 = vmatpush1.msra.mxu0 %v203
      %253 = vmatprep.subr.mxu0 0.0
      %254 = vmatpush1.msra.mxu0 %v204
      %255 = vmatprep.subr.mxu0 0.0
      %256 = vmatpush1.msra.mxu0 %v205
      %257 = vmatprep.subr.mxu0 0.0
      %258 = vmatpush1.msra.mxu0 %v206
      %259 = vmatprep.subr.mxu0 0.0
      %260 = vmatpush1.msra.mxu0 %v207
      %261 = vmatprep.subr.mxu0 0.0
      %262 = vmatpush1.msra.mxu0 %v208
      %263 = vmatprep.subr.mxu0 0.0
      %264 = vmatpush1.msra.mxu0 %v209
      %265 = vmatprep.subr.mxu0 0.0
      %266 = vmatpush1.msra.mxu0 %v210
      %267 = vmatprep.subr.mxu0 0.0
      %268 = vmatpush1.msra.mxu0 %v211
      %269 = vmatprep.subr.mxu0 0.0
      %270 = vmatpush1.msra.mxu0 %v212
      %271 = vmatprep.subr.mxu0 0.0
      %272 = vmatpush1.msra.mxu0 %v213
      %273 = vmatprep.subr.mxu0 0.0
      %274 = vmatpush1.msra.mxu0 %v214
      %275 = vmatprep.subr.mxu0 0.0
      %276 = vmatpush1.msra.mxu0 %v215
      %277 = vmatprep.subr.mxu0 0.0
      %278 = vmatpush1.msra.mxu0 %v216
      %279 = vmatprep.subr.mxu0 0.0
      %280 = vmatpush1.msra.mxu0 %v217
      %281 = vmatprep.subr.mxu0 0.0
      %282 = vmatpush1.msra.mxu0 %v218
      %283 = vmatprep.subr.mxu0 0.0
      %284 = vmatpush1.msra.mxu0 %v219
      %285 = vmatprep.subr.mxu0 0.0
      %286 = vmatpush1.msra.mxu0 %v220
      %287 = vmatprep.subr.mxu0 0.0
      %288 = vmatpush1.msra.mxu0 %v221
      %289 = vmatprep.subr.mxu0 0.0
      %290 = vmatpush1.msra.mxu0 %v222
      %291 = vmatprep.subr.mxu0 0.0
      %292 = vmatpush1.msra.mxu0 %v223
      %293 = vmatprep.subr.mxu0 0.0
      %294 = vmatpush1.msra.mxu0 0.0
      %295 = vmatprep.subr.mxu0 0.0
      %296 = vmatpush1.msra.mxu0 0.0
      %297 = vmatprep.subr.mxu0 0.0
      %298 = vmatpush1.msra.mxu0 0.0
      %299 = vmatprep.subr.mxu0 0.0
      %300 = vmatpush1.msra.mxu0 0.0
      %301 = vmatprep.subr.mxu0 0.0
      %302 = vmatpush1.msra.mxu0 0.0
      %303 = vmatprep.subr.mxu0 0.0
      %304 = vmatpush1.msra.mxu0 0.0
      %305 = vmatprep.subr.mxu0 0.0
      %306 = vmatpush1.msra.mxu0 0.0
      %307 = vmatprep.subr.mxu0 0.0
      %308 = vmatpush1.msra.mxu0 0.0
      %309 = vmatprep.subr.mxu0 0.0
      %310 = vmatpush1.msra.mxu0 0.0
      %311 = vmatprep.subr.mxu0 0.0
      %312 = vmatpush1.msra.mxu0 0.0
      %313 = vmatprep.subr.mxu0 0.0
      %314 = vmatpush1.msra.mxu0 0.0
      %315 = vmatprep.mubr.f32.mxu0 %v245
      %316 = vmatmul.mubr.f32.gmra.mrb[0].mxu0 %v233
      %v317 = vpop.f32.mrb[0].mxu0
      %v318 = vadd.f32 0.0, %v317
      %v319 = vpop.f32.mrb[0].mxu0
      %320 = vmatprep.mubr.f32.mxu0 %v247
      %321 = vmatmul.mubr.f32.gmra.mrb[0].mxu0 %v238
      %v322 = vpop.f32.mrb[0].mxu0
      %v323 = vadd.f32 0.0, %v322
      %v324 = vpop.f32.mrb[0].mxu0
      %325 = vmatprep.mubr.f32.mxu0 %v249
      %326 = vmatmul.mubr.f32.gmra.mrb[0].mxu0 %v237
      %v327 = vpop.f32.mrb[0].mxu0
      %v328 = vadd.f32 0.0, %v327
      %v329 = vpop.f32.mrb[0].mxu0
      %330 = vdwg.mxu0
      %v332 = vsel %vm244, %v172, 0
      %v334 = vsel %vm244, %v174, 0
      %v337 = vsel %vm244, %v176, 0
      %339 = vmatprep.subr.mxu0 0.0
      %340 = vmatpush1.msra.mxu0 %v177
      %341 = vmatprep.subr.mxu0 0.0
      %342 = vmatpush1.msra.mxu0 %v178
      %343 = vmatprep.subr.mxu0 0.0
      %344 = vmatpush1.msra.mxu0 %v179
      %345 = vmatprep.subr.mxu0 0.0
      %346 = vmatpush1.msra.mxu0 %v180
      %347 = vmatprep.subr.mxu0 0.0
      %348 = vmatpush1.msra.mxu0 %v181
      %349 = vmatprep.subr.mxu0 0.0
      %350 = vmatpush1.msra.mxu0 %v182
      %351 = vmatprep.subr.mxu0 0.0
      %352 = vmatpush1.msra.mxu0 %v183
      %353 = vmatprep.subr.mxu0 0.0
      %354 = vmatpush1.msra.mxu0 %v184
      %355 = vmatprep.subr.mxu0 0.0
      %356 = vmatpush1.msra.mxu0 %v185
      %357 = vmatprep.subr.mxu0 0.0
      %358 = vmatpush1.msra.mxu0 %v186
      %359 = vmatprep.subr.mxu0 0.0
      %360 = vmatpush1.msra.mxu0 %v187
      %361 = vmatprep.subr.mxu0 0.0
      %362 = vmatpush1.msra.mxu0 %v188
      %363 = vmatprep.subr.mxu0 0.0
      %364 = vmatpush1.msra.mxu0 %v189
      %365 = vmatprep.subr.mxu0 0.0
      %366 = vmatpush1.msra.mxu0 %v190
      %367 = vmatprep.subr.mxu0 0.0
      %368 = vmatpush1.msra.mxu0 %v191
      %369 = vmatprep.subr.mxu0 0.0
      %370 = vmatpush1.msra.mxu0 %v192
      %371 = vmatprep.subr.mxu0 0.0
      %372 = vmatpush1.msra.mxu0 %v193
      %373 = vmatprep.subr.mxu0 0.0
      %374 = vmatpush1.msra.mxu0 %v194
      %375 = vmatprep.subr.mxu0 0.0
      %376 = vmatpush1.msra.mxu0 %v195
      %377 = vmatprep.subr.mxu0 0.0
      %378 = vmatpush1.msra.mxu0 %v196
      %379 = vmatprep.subr.mxu0 0.0
      %380 = vmatpush1.msra.mxu0 %v197
      %381 = vmatprep.subr.mxu0 0.0
      %382 = vmatpush1.msra.mxu0 0.0
      %383 = vmatprep.subr.mxu0 0.0
      %384 = vmatpush1.msra.mxu0 0.0
      %385 = vmatprep.subr.mxu0 0.0
      %386 = vmatpush1.msra.mxu0 0.0
      %387 = vmatprep.subr.mxu0 0.0
      %388 = vmatpush1.msra.mxu0 0.0
      %389 = vmatprep.subr.mxu0 0.0
      %390 = vmatpush1.msra.mxu0 0.0
      %391 = vmatprep.subr.mxu0 0.0
      %392 = vmatpush1.msra.mxu0 0.0
      %393 = vmatprep.subr.mxu0 0.0
      %394 = vmatpush1.msra.mxu0 0.0
      %395 = vmatprep.subr.mxu0 0.0
      %396 = vmatpush1.msra.mxu0 0.0
      %397 = vmatprep.subr.mxu0 0.0
      %398 = vmatpush1.msra.mxu0 0.0
      %399 = vmatprep.subr.mxu0 0.0
      %400 = vmatpush1.msra.mxu0 0.0
      %401 = vmatprep.subr.mxu0 0.0
      %402 = vmatpush1.msra.mxu0 0.0
      %403 = vmatprep.mubr.f32.mxu0 %v332
      %404 = vmatmul.mubr.f32.gmra.mrb[0].mxu0 %v171
      %v405 = vpop.f32.mrb[0].mxu0
      %v406 = vadd.f32 %v318, %v405
      %v407 = vpop.f32.mrb[0].mxu0
      %408 = vmatprep.mubr.f32.mxu0 %v334
      %409 = vmatmul.mubr.f32.gmra.mrb[0].mxu0 %v173
      %v410 = vpop.f32.mrb[0].mxu0
      %v411 = vadd.f32 %v323, %v410
      %v412 = vpop.f32.mrb[0].mxu0
      %413 = vmatprep.mubr.f32.mxu0 %v337
      %414 = vmatmul.mubr.f32.gmra.mrb[0].mxu0 %v175
      %v415 = vpop.f32.mrb[0].mxu0
      %v416 = vadd.f32 %v328, %v415
      %v417 = vpop.f32.mrb[0].mxu0
      %418 = vdwg.mxu0
      %v419 = vld [vmem:[%s165] sm:$0xfc]
      %v420 = vld [vmem:[%s165 + $0x8] sm:$0xfc]
      %v421 = vld [vmem:[%s165 + $0x20] sm:$0x7f]
      %v422 = vld [vmem:[%s165 + $0x28] sm:$0x7f]
      %s423 = scalar_lea.vmem %s1, 336
      %v424 = vld [vmem:[%s423] sm:$0xff]
      %v425 = vld [vmem:[%s423 + $0x8] sm:$0xff]
      %v426 = vld [vmem:[%s423 + $0x10] sm:$0xff]
      %v427 = vld [vmem:[%s423 + $0x18] sm:$0xff]
      %v428 = vld [vmem:[%s423 + $0x20] sm:$0xff]
      %v429 = vld [vmem:[%s423 + $0x28] sm:$0xff]
      %v430 = vld [vmem:[%s423 + $0x30] sm:$0xff]
      %v431 = vld [vmem:[%s423 + $0x38] sm:$0xff]
      %v432 = vld [vmem:[%s423 + $0x40] sm:$0xff]
      %v433 = vld [vmem:[%s423 + $0x48] sm:$0xff]
      %v434 = vld [vmem:[%s423 + $0x50] sm:$0xff]
      %v435 = vld [vmem:[%s423 + $0x58] sm:$0xff]
      %v436 = vld [vmem:[%s423 + $0x60] sm:$0xff]
      %v437 = vld [vmem:[%s423 + $0x68] sm:$0xff]
      %v438 = vld [vmem:[%s423 + $0x70] sm:$0xff]
      %v439 = vld [vmem:[%s423 + $0x78] sm:$0xff]
      %v440 = vld [vmem:[%s423 + $0x80] sm:$0xff]
      %v441 = vld [vmem:[%s423 + $0x88] sm:$0xff]
      %v442 = vld [vmem:[%s423 + $0x90] sm:$0xff]
      %v443 = vld [vmem:[%s423 + $0x98] sm:$0xff]
      %v444 = vld [vmem:[%s423 + $0xa0] sm:$0xff]
      %vm449 = vcmask 1045504
      %v450 = vrot.slane %v419, 2
      %v451 = vrot.slane %v173, 2
      %v452 = vsel %vm449, %v450, %v451
      %v453 = vrot.slane %v420, 2
      %v454 = vrot.slane %v174, 2
      %v455 = vsel %vm449, %v453, %v454
      %v456 = vrot.slane %v421, 2
      %v457 = vsel %vm449, %v451, %v456
      %v458 = vrot.slane %v422, 2
      %v459 = vsel %vm449, %v454, %v458
      %v463 = vsel %vm244, %v455, 0
      %v465 = vsel %vm244, %v459, 0
      %v467 = vsel %vm244, %v458, 0
      %469 = vmatprep.subr.mxu0 0.0
      %470 = vmatpush1.msra.mxu0 %v424
      %471 = vmatprep.subr.mxu0 0.0
      %472 = vmatpush1.msra.mxu0 %v425
      %473 = vmatprep.subr.mxu0 0.0
      %474 = vmatpush1.msra.mxu0 %v426
      %475 = vmatprep.subr.mxu0 0.0
      %476 = vmatpush1.msra.mxu0 %v427
      %477 = vmatprep.subr.mxu0 0.0
      %478 = vmatpush1.msra.mxu0 %v428
      %479 = vmatprep.subr.mxu0 0.0
      %480 = vmatpush1.msra.mxu0 %v429
      %481 = vmatprep.subr.mxu0 0.0
      %482 = vmatpush1.msra.mxu0 %v430
      %483 = vmatprep.subr.mxu0 0.0
      %484 = vmatpush1.msra.mxu0 %v431
      %485 = vmatprep.subr.mxu0 0.0
      %486 = vmatpush1.msra.mxu0 %v432
      %487 = vmatprep.subr.mxu0 0.0
      %488 = vmatpush1.msra.mxu0 %v433
      %489 = vmatprep.subr.mxu0 0.0
      %490 = vmatpush1.msra.mxu0 %v434
      %491 = vmatprep.subr.mxu0 0.0
      %492 = vmatpush1.msra.mxu0 %v435
      %493 = vmatprep.subr.mxu0 0.0
      %494 = vmatpush1.msra.mxu0 %v436
      %495 = vmatprep.subr.mxu0 0.0
      %496 = vmatpush1.msra.mxu0 %v437
      %497 = vmatprep.subr.mxu0 0.0
      %498 = vmatpush1.msra.mxu0 %v438
      %499 = vmatprep.subr.mxu0 0.0
      %500 = vmatpush1.msra.mxu0 %v439
      %501 = vmatprep.subr.mxu0 0.0
      %502 = vmatpush1.msra.mxu0 %v440
      %503 = vmatprep.subr.mxu0 0.0
      %504 = vmatpush1.msra.mxu0 %v441
      %505 = vmatprep.subr.mxu0 0.0
      %506 = vmatpush1.msra.mxu0 %v442
      %507 = vmatprep.subr.mxu0 0.0
      %508 = vmatpush1.msra.mxu0 %v443
      %509 = vmatprep.subr.mxu0 0.0
      %510 = vmatpush1.msra.mxu0 %v444
      %511 = vmatprep.subr.mxu0 0.0
      %512 = vmatpush1.msra.mxu0 0.0
      %513 = vmatprep.subr.mxu0 0.0
      %514 = vmatpush1.msra.mxu0 0.0
      %515 = vmatprep.subr.mxu0 0.0
      %516 = vmatpush1.msra.mxu0 0.0
      %517 = vmatprep.subr.mxu0 0.0
      %518 = vmatpush1.msra.mxu0 0.0
      %519 = vmatprep.subr.mxu0 0.0
      %520 = vmatpush1.msra.mxu0 0.0
      %521 = vmatprep.subr.mxu0 0.0
      %522 = vmatpush1.msra.mxu0 0.0
      %523 = vmatprep.subr.mxu0 0.0
      %524 = vmatpush1.msra.mxu0 0.0
      %525 = vmatprep.subr.mxu0 0.0
      %526 = vmatpush1.msra.mxu0 0.0
      %527 = vmatprep.subr.mxu0 0.0
      %528 = vmatpush1.msra.mxu0 0.0
      %529 = vmatprep.subr.mxu0 0.0
      %530 = vmatpush1.msra.mxu0 0.0
      %531 = vmatprep.subr.mxu0 0.0
      %532 = vmatpush1.msra.mxu0 0.0
      %533 = vmatprep.mubr.f32.mxu0 %v463
      %534 = vmatmul.mubr.f32.gmra.mrb[0].mxu0 %v452
      %v535 = vpop.f32.mrb[0].mxu0
      %v536 = vadd.f32 0.0, %v535
      %v537 = vpop.f32.mrb[0].mxu0
      %538 = vmatprep.mubr.f32.mxu0 %v465
      %539 = vmatmul.mubr.f32.gmra.mrb[0].mxu0 %v457
      %v540 = vpop.f32.mrb[0].mxu0
      %v541 = vadd.f32 0.0, %v540
      %v542 = vpop.f32.mrb[0].mxu0
      %543 = vmatprep.mubr.f32.mxu0 %v467
      %544 = vmatmul.mubr.f32.gmra.mrb[0].mxu0 %v456
      %v545 = vpop.f32.mrb[0].mxu0
      %v546 = vadd.f32 0.0, %v545
      %v547 = vpop.f32.mrb[0].mxu0
      %548 = vdwg.mxu0
      %v549 = vadd.f32 %v406, %v536
      %v550 = vadd.f32 %v411, %v541
      %v551 = vadd.f32 %v416, %v546
      %v552 = vld [vmem:[%s165] sm:$0xf8]
      %v553 = vld [vmem:[%s165 + $0x8] sm:$0xf8]
      %v554 = vld [vmem:[%s165 + $0x20] sm:$0xff]
      %v555 = vld [vmem:[%s165 + $0x28] sm:$0xff]
      %s556 = scalar_lea.vmem %s1, 504
      %v557 = vld [vmem:[%s556] sm:$0xff]
      %v558 = vld [vmem:[%s556 + $0x8] sm:$0xff]
      %v559 = vld [vmem:[%s556 + $0x10] sm:$0xff]
      %v560 = vld [vmem:[%s556 + $0x18] sm:$0xff]
      %v561 = vld [vmem:[%s556 + $0x20] sm:$0xff]
      %v562 = vld [vmem:[%s556 + $0x28] sm:$0xff]
      %v563 = vld [vmem:[%s556 + $0x30] sm:$0xff]
      %v564 = vld [vmem:[%s556 + $0x38] sm:$0xff]
      %v565 = vld [vmem:[%s556 + $0x40] sm:$0xff]
      %v566 = vld [vmem:[%s556 + $0x48] sm:$0xff]
      %v567 = vld [vmem:[%s556 + $0x50] sm:$0xff]
      %v568 = vld [vmem:[%s556 + $0x58] sm:$0xff]
      %v569 = vld [vmem:[%s556 + $0x60] sm:$0xff]
      %v570 = vld [vmem:[%s556 + $0x68] sm:$0xff]
      %v571 = vld [vmem:[%s556 + $0x70] sm:$0xff]
      %v572 = vld [vmem:[%s556 + $0x78] sm:$0xff]
      %v573 = vld [vmem:[%s556 + $0x80] sm:$0xff]
      %v574 = vld [vmem:[%s556 + $0x88] sm:$0xff]
      %v575 = vld [vmem:[%s556 + $0x90] sm:$0xff]
      %v576 = vld [vmem:[%s556 + $0x98] sm:$0xff]
      %v577 = vld [vmem:[%s556 + $0xa0] sm:$0xff]
      %vm582 = vcmask 1044480
      %v583 = vrot.slane %v552, 3
      %v584 = vrot.slane %v173, 3
      %v585 = vsel %vm582, %v583, %v584
      %v586 = vrot.slane %v553, 3
      %v587 = vrot.slane %v174, 3
      %v588 = vsel %vm582, %v586, %v587
      %v589 = vrot.slane %v554, 3
      %v590 = vsel %vm582, %v584, %v589
      %v591 = vrot.slane %v555, 3
      %v592 = vsel %vm582, %v587, %v591
      %v596 = vsel %vm244, %v588, 0
      %v598 = vsel %vm244, %v592, 0
      %v600 = vsel %vm244, %v591, 0
      %602 = vmatprep.subr.mxu0 0.0
      %603 = vmatpush1.msra.mxu0 %v557
      %604 = vmatprep.subr.mxu0 0.0
      %605 = vmatpush1.msra.mxu0 %v558
      %606 = vmatprep.subr.mxu0 0.0
      %607 = vmatpush1.msra.mxu0 %v559
      %608 = vmatprep.subr.mxu0 0.0
      %609 = vmatpush1.msra.mxu0 %v560
      %610 = vmatprep.subr.mxu0 0.0
      %611 = vmatpush1.msra.mxu0 %v561
      %612 = vmatprep.subr.mxu0 0.0
      %613 = vmatpush1.msra.mxu0 %v562
      %614 = vmatprep.subr.mxu0 0.0
      %615 = vmatpush1.msra.mxu0 %v563
      %616 = vmatprep.subr.mxu0 0.0
      %617 = vmatpush1.msra.mxu0 %v564
      %618 = vmatprep.subr.mxu0 0.0
      %619 = vmatpush1.msra.mxu0 %v565
      %620 = vmatprep.subr.mxu0 0.0
      %621 = vmatpush1.msra.mxu0 %v566
      %622 = vmatprep.subr.mxu0 0.0
      %623 = vmatpush1.msra.mxu0 %v567
      %624 = vmatprep.subr.mxu0 0.0
      %625 = vmatpush1.msra.mxu0 %v568
      %626 = vmatprep.subr.mxu0 0.0
      %627 = vmatpush1.msra.mxu0 %v569
      %628 = vmatprep.subr.mxu0 0.0
      %629 = vmatpush1.msra.mxu0 %v570
      %630 = vmatprep.subr.mxu0 0.0
      %631 = vmatpush1.msra.mxu0 %v571
      %632 = vmatprep.subr.mxu0 0.0
      %633 = vmatpush1.msra.mxu0 %v572
      %634 = vmatprep.subr.mxu0 0.0
      %635 = vmatpush1.msra.mxu0 %v573
      %636 = vmatprep.subr.mxu0 0.0
      %637 = vmatpush1.msra.mxu0 %v574
      %638 = vmatprep.subr.mxu0 0.0
      %639 = vmatpush1.msra.mxu0 %v575
      %640 = vmatprep.subr.mxu0 0.0
      %641 = vmatpush1.msra.mxu0 %v576
      %642 = vmatprep.subr.mxu0 0.0
      %643 = vmatpush1.msra.mxu0 %v577
      %644 = vmatprep.subr.mxu0 0.0
      %645 = vmatpush1.msra.mxu0 0.0
      %646 = vmatprep.subr.mxu0 0.0
      %647 = vmatpush1.msra.mxu0 0.0
      %648 = vmatprep.subr.mxu0 0.0
      %649 = vmatpush1.msra.mxu0 0.0
      %650 = vmatprep.subr.mxu0 0.0
      %651 = vmatpush1.msra.mxu0 0.0
      %652 = vmatprep.subr.mxu0 0.0
      %653 = vmatpush1.msra.mxu0 0.0
      %654 = vmatprep.subr.mxu0 0.0
      %655 = vmatpush1.msra.mxu0 0.0
      %656 = vmatprep.subr.mxu0 0.0
      %657 = vmatpush1.msra.mxu0 0.0
      %658 = vmatprep.subr.mxu0 0.0
      %659 = vmatpush1.msra.mxu0 0.0
      %660 = vmatprep.subr.mxu0 0.0
      %661 = vmatpush1.msra.mxu0 0.0
      %662 = vmatprep.subr.mxu0 0.0
      %663 = vmatpush1.msra.mxu0 0.0
      %664 = vmatprep.subr.mxu0 0.0
      %665 = vmatpush1.msra.mxu0 0.0
      %666 = vmatprep.mubr.f32.mxu0 %v596
      %667 = vmatmul.mubr.f32.gmra.mrb[0].mxu0 %v585
      %v668 = vpop.f32.mrb[0].mxu0
      %v669 = vadd.f32 0.0, %v668
      %v670 = vpop.f32.mrb[0].mxu0
      %671 = vmatprep.mubr.f32.mxu0 %v598
      %672 = vmatmul.mubr.f32.gmra.mrb[0].mxu0 %v590
      %v673 = vpop.f32.mrb[0].mxu0
      %v674 = vadd.f32 0.0, %v673
      %v675 = vpop.f32.mrb[0].mxu0
      %676 = vmatprep.mubr.f32.mxu0 %v600
      %677 = vmatmul.mubr.f32.gmra.mrb[0].mxu0 %v589
      %v678 = vpop.f32.mrb[0].mxu0
      %v679 = vadd.f32 0.0, %v678
      %v680 = vpop.f32.mrb[0].mxu0
      %681 = vdwg.mxu0
      %v682 = vadd.f32 %v549, %v669
      %v683 = vadd.f32 %v550, %v674
      %v684 = vadd.f32 %v551, %v679
      %v685 = vld [vmem:[%s165] sm:$0xf0]
      %v686 = vld [vmem:[%s165 + $0x8] sm:$0xf0]
      %v687 = vld [vmem:[%s165 + $0x10] sm:$0xff]
      %v688 = vld [vmem:[%s165 + $0x18] sm:$0xff]
      %v689 = vld [vmem:[%s165 + $0x20] sm:$0xff]
      %v690 = vld [vmem:[%s165 + $0x28] sm:$0xff]
      %v691 = vld [vmem:[%s165 + $0x30] sm:$0x1]
      %v692 = vld [vmem:[%s165 + $0x38] sm:$0x1]
      %s693 = scalar_lea.vmem %s1, 672
      %v694 = vld [vmem:[%s693] sm:$0xff]
      %v695 = vld [vmem:[%s693 + $0x8] sm:$0xff]
      %v696 = vld [vmem:[%s693 + $0x10] sm:$0xff]
      %v697 = vld [vmem:[%s693 + $0x18] sm:$0xff]
      %v698 = vld [vmem:[%s693 + $0x20] sm:$0xff]
      %v699 = vld [vmem:[%s693 + $0x28] sm:$0xff]
      %v700 = vld [vmem:[%s693 + $0x30] sm:$0xff]
      %v701 = vld [vmem:[%s693 + $0x38] sm:$0xff]
      %v702 = vld [vmem:[%s693 + $0x40] sm:$0xff]
      %v703 = vld [vmem:[%s693 + $0x48] sm:$0xff]
      %v704 = vld [vmem:[%s693 + $0x50] sm:$0xff]
      %v705 = vld [vmem:[%s693 + $0x58] sm:$0xff]
      %v706 = vld [vmem:[%s693 + $0x60] sm:$0xff]
      %v707 = vld [vmem:[%s693 + $0x68] sm:$0xff]
      %v708 = vld [vmem:[%s693 + $0x70] sm:$0xff]
      %v709 = vld [vmem:[%s693 + $0x78] sm:$0xff]
      %v710 = vld [vmem:[%s693 + $0x80] sm:$0xff]
      %v711 = vld [vmem:[%s693 + $0x88] sm:$0xff]
      %v712 = vld [vmem:[%s693 + $0x90] sm:$0xff]
      %v713 = vld [vmem:[%s693 + $0x98] sm:$0xff]
      %v714 = vld [vmem:[%s693 + $0xa0] sm:$0xff]
      %vm723 = vcmask 1043456
      %v724 = vrot.slane %v685, 4
      %v725 = vrot.slane %v687, 4
      %v726 = vsel %vm723, %v724, %v725
      %v727 = vrot.slane %v686, 4
      %v728 = vrot.slane %v688, 4
      %v729 = vsel %vm723, %v727, %v728
      %v730 = vrot.slane %v689, 4
      %v731 = vsel %vm723, %v725, %v730
      %v732 = vrot.slane %v690, 4
      %v733 = vsel %vm723, %v728, %v732
      %v734 = vrot.slane %v691, 4
      %v735 = vsel %vm723, %v730, %v734
      %v736 = vrot.slane %v692, 4
      %v737 = vsel %vm723, %v732, %v736
      %v741 = vsel %vm244, %v729, 0
      %v743 = vsel %vm244, %v733, 0
      %v745 = vsel %vm244, %v737, 0
      %747 = vmatprep.subr.mxu0 0.0
      %748 = vmatpush1.msra.mxu0 %v694
      %749 = vmatprep.subr.mxu0 0.0
      %750 = vmatpush1.msra.mxu0 %v695
      %751 = vmatprep.subr.mxu0 0.0
      %752 = vmatpush1.msra.mxu0 %v696
      %753 = vmatprep.subr.mxu0 0.0
      %754 = vmatpush1.msra.mxu0 %v697
      %755 = vmatprep.subr.mxu0 0.0
      %756 = vmatpush1.msra.mxu0 %v698
      %757 = vmatprep.subr.mxu0 0.0
      %758 = vmatpush1.msra.mxu0 %v699
      %759 = vmatprep.subr.mxu0 0.0
      %760 = vmatpush1.msra.mxu0 %v700
      %761 = vmatprep.subr.mxu0 0.0
      %762 = vmatpush1.msra.mxu0 %v701
      %763 = vmatprep.subr.mxu0 0.0
      %764 = vmatpush1.msra.mxu0 %v702
      %765 = vmatprep.subr.mxu0 0.0
      %766 = vmatpush1.msra.mxu0 %v703
      %767 = vmatprep.subr.mxu0 0.0
      %768 = vmatpush1.msra.mxu0 %v704
      %769 = vmatprep.subr.mxu0 0.0
      %770 = vmatpush1.msra.mxu0 %v705
      %771 = vmatprep.subr.mxu0 0.0
      %772 = vmatpush1.msra.mxu0 %v706
      %773 = vmatprep.subr.mxu0 0.0
      %774 = vmatpush1.msra.mxu0 %v707
      %775 = vmatprep.subr.mxu0 0.0
      %776 = vmatpush1.msra.mxu0 %v708
      %777 = vmatprep.subr.mxu0 0.0
      %778 = vmatpush1.msra.mxu0 %v709
      %779 = vmatprep.subr.mxu0 0.0
      %780 = vmatpush1.msra.mxu0 %v710
      %781 = vmatprep.subr.mxu0 0.0
      %782 = vmatpush1.msra.mxu0 %v711
      %783 = vmatprep.subr.mxu0 0.0
      %784 = vmatpush1.msra.mxu0 %v712
      %785 = vmatprep.subr.mxu0 0.0
      %786 = vmatpush1.msra.mxu0 %v713
      %787 = vmatprep.subr.mxu0 0.0
      %788 = vmatpush1.msra.mxu0 %v714
      %789 = vmatprep.subr.mxu0 0.0
      %790 = vmatpush1.msra.mxu0 0.0
      %791 = vmatprep.subr.mxu0 0.0
      %792 = vmatpush1.msra.mxu0 0.0
      %793 = vmatprep.subr.mxu0 0.0
      %794 = vmatpush1.msra.mxu0 0.0
      %795 = vmatprep.subr.mxu0 0.0
      %796 = vmatpush1.msra.mxu0 0.0
      %797 = vmatprep.subr.mxu0 0.0
      %798 = vmatpush1.msra.mxu0 0.0
      %799 = vmatprep.subr.mxu0 0.0
      %800 = vmatpush1.msra.mxu0 0.0
      %801 = vmatprep.subr.mxu0 0.0
      %802 = vmatpush1.msra.mxu0 0.0
      %803 = vmatprep.subr.mxu0 0.0
      %804 = vmatpush1.msra.mxu0 0.0
      %805 = vmatprep.subr.mxu0 0.0
      %806 = vmatpush1.msra.mxu0 0.0
      %807 = vmatprep.subr.mxu0 0.0
      %808 = vmatpush1.msra.mxu0 0.0
      %809 = vmatprep.subr.mxu0 0.0
      %810 = vmatpush1.msra.mxu0 0.0
      %811 = vmatprep.mubr.f32.mxu0 %v741
      %812 = vmatmul.mubr.f32.gmra.mrb[0].mxu0 %v726
      %v813 = vpop.f32.mrb[0].mxu0
      %v814 = vadd.f32 0.0, %v813
      %v815 = vpop.f32.mrb[0].mxu0
      %816 = vmatprep.mubr.f32.mxu0 %v743
      %817 = vmatmul.mubr.f32.gmra.mrb[0].mxu0 %v731
      %v818 = vpop.f32.mrb[0].mxu0
      %v819 = vadd.f32 0.0, %v818
      %v820 = vpop.f32.mrb[0].mxu0
      %821 = vmatprep.mubr.f32.mxu0 %v745
      %822 = vmatmul.mubr.f32.gmra.mrb[0].mxu0 %v735
      %v823 = vpop.f32.mrb[0].mxu0
      %v824 = vadd.f32 0.0, %v823
      %v825 = vpop.f32.mrb[0].mxu0
      %826 = vdwg.mxu0
      %v827 = vadd.f32 %v682, %v814
      %v828 = vadd.f32 %v683, %v819
      %v829 = vadd.f32 %v684, %v824
      %v830 = vld [vmem:[%s2] sm:$0x1]
      %v832 = vlaneseq
      %v833 = vshrl.u32 %v832, 7
      %v834 = vsub.s32 0, %v833
      %v835 = vrot.slane %v830, %v834
      %v837 = vadd.f32 %v827, %v835
      %v838 = vadd.f32 %v828, %v835
      %v839 = vadd.f32 %v829, %v835
      %vm840 = vcmask 138240
      %841 = vst.msk [vmem:[%s170] sm:$0xff] %vm840, %v837
      %842 = vst.msk [vmem:[%s170 + $0x8] sm:$0xff] %vm840, %v838
      %vm843 = vcmask 135168
      %844 = vst.msk [vmem:[%s170 + $0x10] sm:$0x1f] %vm843, %v839
      %p845 = scmp.lt.s32.totalorder %s14, 1
      %s846 = scalar_select %p845, %s14, 1
      %s847 = smul.addr %s846, 3
      %s848 = smul.addr %s847, 8
      %s849 = scalar_lea.vmem %s3, %s848
      // Predicated region
      $region33: #{cvae_forward.17} parent=31 // pred_check
        %p850 = pneg %p100
      $region34: #{cvae_forward.17} parent=31 // pred_check_branch
        %852 = sbr.rel (%p850) target = $region36
      $region35: #{cvae_forward.17} parent=31 // pred_region
        _
      $region36: #{cvae_forward.17} parent=31 // pred_fallthru
        _
    $region32: #{cvae_forward.17} parent=5 // pred_fallthru
      _
    %p853 = scmp.le.s32.totalorder 2, %s9
    // Predicated region
    $region37: #{cvae_forward.17} parent=5 // pred_check
      %p854 = pneg %p853
    $region38: #{cvae_forward.17} parent=5 // pred_check_branch
      %856 = sbr.rel (%p854) target = $region40
    $region39: #{cvae_forward.17} parent=5 // pred_region
      %s857 = ssub.s32 %s9, 2
      // Predicated region
      $region41: #{cvae_forward.17} parent=39 // pred_check
        %p858 = pneg %p106
      $region42: #{cvae_forward.17} parent=39 // pred_check_branch
        %860 = sbr.rel (%p858) target = $region44
      $region43: #{cvae_forward.17} parent=39 // pred_region
        %p861 = scmp.lt.s32.totalorder %s15, 1
        %s862 = scalar_select %p861, %s15, 1
        %s863 = smul.addr %s862, 3
        %s864 = smul.addr %s863, 8
        %s865 = scalar_lea.vmem %s3, %s864
      $region44: #{cvae_forward.17} parent=39 // pred_fallthru
        _
    $region40: #{cvae_forward.17} parent=5 // pred_fallthru
      _
  $region6: #{cvae_forward.17} parent=0 // loop_footer
    %s13 = sadd.s32 1, %s9
  $region7: #{cvae_forward.17} parent=0 // loop_footer_branch
    %8 = sbr.rel target = $region3
  $region8: #{cvae_forward.17} parent=0 // loop_exit
    _

</llo_original>
